<compile_context>
chip_gen: v7x
topology: tpu7x:2x2x1
jax: 0.10.0
libtpu: 0.0.40
codegen_flags: <defaults>
</compile_context>

<pallas_src>
import jax
import jax.numpy as jnp
from jax.experimental import pallas as pl
from jax.experimental.pallas import tpu as pltpu

M = 250          # 10 * 25  (flattened batch)
K = 9344         # 73 * 128 (flattened features)
N = 5            # Linear output features
TM = 128         # M tile (2 grid steps; second one is a masked partial block)


def _linear_kernel(x_ref, w_ref, b_ref, o_ref):
    """One M-tile of  O = X @ W + b  with the full K reduction in-block."""
    o_ref[...] = (
        jnp.dot(x_ref[...], w_ref[...], preferred_element_type=jnp.float32)
        + b_ref[...]
    ).astype(o_ref.dtype)


def pallas_linear(x2d, w, b):
    """x2d: (M, K), w: (K, N), b: (N,) -> (M, N)."""
    assert x2d.shape == (M, K) and w.shape == (K, N) and b.shape == (N,)
    b2d = b.reshape(1, N)
    grid_m = pl.cdiv(M, TM)  # 2; rows 250..255 of the last block are masked on store

    return pl.pallas_call(
        _linear_kernel,
        out_shape=jax.ShapeDtypeStruct((M, N), jnp.float32),
        grid_spec=pltpu.PrefetchScalarGridSpec(
            num_scalar_prefetch=0,
            grid=(grid_m,),
            in_specs=[
                pl.BlockSpec((TM, K), lambda i: (i, 0)),   # X tile (full K reduction)
                pl.BlockSpec((K, N), lambda i: (0, 0)),    # W resident across grid
                pl.BlockSpec((1, N), lambda i: (0, 0)),    # bias resident across grid
            ],
            out_specs=pl.BlockSpec((TM, N), lambda i: (i, 0)),
        ),
        compiler_params=pltpu.CompilerParams(
            # M tiles are independent -> shard across v7x's 2 TensorCores; on
            # single-TC chips this is just the sequential double-buffered loop.
            dimension_semantics=("parallel",),
            # Full-K blocks (double-buffered X + lane-padded W) need ~19 MB of VMEM,
            # above v5e's 16 MiB default scoped limit; 48 MB fits every chip's VMEM.
            vmem_limit_bytes=48 << 20,
        ),
        cost_estimate=pl.CostEstimate(
            flops=2 * M * K * N,
            bytes_accessed=(M * K + K * N + M * N + N) * 4,
            transcendentals=0,
        ),
    )(x2d, w, b2d)


def deep_sleep_net_forward(x, w, b):
    """Replicates DeepSleepNet.forward.

    x : (B0, B1, C, T) with B0*B1 == 250, C*T == 9344
    returns (10, 5, 25)
    """
    # glue: the two torch.flatten calls (row-major -> pure reshape, no copy)
    x2d = x.reshape(M, K)
    # hot path: Linear(9344, 5) in the Pallas kernel
    out = pallas_linear(x2d, w, b)
    # glue: view(10, 25, 5) + transpose(1, 2)
    y = out.reshape(10, 25, 5)
    y = jnp.transpose(y, (0, 2, 1))
    return y


deep_sleep_net_forward_jit = jax.jit(deep_sleep_net_forward)


def init_params(key):
    """Deterministic nn.Linear(9344, 5) init (PyTorch default: U(-1/sqrt(K), 1/sqrt(K)))."""
    kw, kb = jax.random.split(key)
    bound = 1.0 / jnp.sqrt(jnp.float32(K))
    # PyTorch stores weight as (out, in); we keep it as (in, out) for the GEMM.
    w = jax.random.uniform(kw, (K, N), jnp.float32, minval=-bound, maxval=bound)
    b = jax.random.uniform(kb, (N,), jnp.float32, minval=-bound, maxval=bound)
    return w, b


if __name__ == "__main__":
    key = jax.random.PRNGKey(0)
    kx, kp = jax.random.split(key)

    # Shapes are pinned by the module (view(10,25,5) and Linear(9344,5)):
    # (B0=10, B1=25, C=73, T=128) -> flatten -> (250, 9344)
    x = jax.random.normal(kx, (10, 25, 73, 128), dtype=jnp.float32)
    w, b = init_params(kp)

    y = deep_sleep_net_forward_jit(x, w, b)
    y = jax.block_until_ready(y)

    # sanity check against plain-JAX reference of the same math
    ref = (x.reshape(M, K) @ w + b).reshape(10, 25, 5).transpose(0, 2, 1)
    assert y.shape == (10, 5, 25)
    assert jnp.allclose(y, ref, atol=1e-4, rtol=1e-4)

    print("KERNEL_OK")
</pallas_src>

<mosaic_0001>
module attributes {stable_mosaic.version = 11 : i64} {
  func.func @_linear_kernel(%arg0: i32, %arg1: memref<128x9344xf32, #tpu.memory_space<vmem>>, %arg2: memref<9344x5xf32, #tpu.memory_space<vmem>>, %arg3: memref<1x5xf32, #tpu.memory_space<vmem>>, %arg4: memref<128x5xf32, #tpu.memory_space<vmem>>) attributes {dimension_semantics = [#tpu.dimension_semantics<parallel>], iteration_bounds = array<i64: 2>, scalar_prefetch = 0 : i64, scratch_operands = 0 : i64, tpu.core_type = #tpu.core_type<tc>, window_params = [{transform_indices = @transform_0, window_bounds = array<i64: 128, 9344>}, {pipeline_mode = #tpu.pipeline_mode<synchronous>, transform_indices = @transform_1, window_bounds = array<i64: 9344, 5>}, {pipeline_mode = #tpu.pipeline_mode<synchronous>, transform_indices = @transform_2, window_bounds = array<i64: 1, 5>}, {transform_indices = @transform_3, window_bounds = array<i64: 128, 5>}]} {
    %c0 = arith.constant 0 : index
    %c0_0 = arith.constant 0 : index
    %0 = vector.load %arg1[%c0, %c0_0] : memref<128x9344xf32, #tpu.memory_space<vmem>>, vector<128x9344xf32>
    %c0_1 = arith.constant 0 : index
    %c0_2 = arith.constant 0 : index
    %1 = vector.load %arg2[%c0_1, %c0_2] : memref<9344x5xf32, #tpu.memory_space<vmem>>, vector<9344x5xf32>
    %cst = arith.constant dense<0.000000e+00> : vector<128x5xf32>
    %2 = tpu.matmul %0, %1, %cst {dimension_numbers = #tpu.dot_dimension_numbers<[1], [0], [0], [1], [0, 0, 1, 1], [], []>} : vector<128x9344xf32>, vector<9344x5xf32>, vector<128x5xf32> -> vector<128x5xf32>
    %c0_3 = arith.constant 0 : index
    %c0_4 = arith.constant 0 : index
    %3 = vector.load %arg3[%c0_3, %c0_4] : memref<1x5xf32, #tpu.memory_space<vmem>>, vector<1x5xf32>
    %4 = vector.broadcast %3 : vector<1x5xf32> to vector<128x5xf32>
    %5 = arith.addf %2, %4 : vector<128x5xf32>
    %c0_5 = arith.constant 0 : index
    %c0_6 = arith.constant 0 : index
    %6 = vector.load %arg4[%c0_5, %c0_6] : memref<128x5xf32, #tpu.memory_space<vmem>>, vector<128x5xf32>
    tpu.vector_store %arg4[%c0_5, %c0_6], %5 {strides = array<i32>} : memref<128x5xf32, #tpu.memory_space<vmem>>, vector<128x5xf32>,
    return
  }
  func.func @transform_0(%arg0: i32) -> (i32, i32) {
    %c0_i32 = arith.constant 0 : i32
    %c0_i32_0 = arith.constant 0 : i32
    return %arg0, %c0_i32 : i32, i32
  }
  func.func @transform_1(%arg0: i32) -> (i32, i32) {
    %c0_i32 = arith.constant 0 : i32
    %c0_i32_0 = arith.constant 0 : i32
    %c0_i32_1 = arith.constant 0 : i32
    return %c0_i32, %c0_i32_0 : i32, i32
  }
  func.func @transform_2(%arg0: i32) -> (i32, i32) {
    %c0_i32 = arith.constant 0 : i32
    %c0_i32_0 = arith.constant 0 : i32
    %c0_i32_1 = arith.constant 0 : i32
    return %c0_i32, %c0_i32_0 : i32, i32
  }
  func.func @transform_3(%arg0: i32) -> (i32, i32) {
    %c0_i32 = arith.constant 0 : i32
    %c0_i32_0 = arith.constant 0 : i32
    return %arg0, %c0_i32 : i32, i32
  }
}

</mosaic_0001>

<llo_original>
// kernel: deep_sleep_net_forward.1
$region0: #{deep_sleep_net_forward.1}
  #allocation0 [shape = 'u32[]', space=smem, size = 0x4, offset = 0x4, fixed_abs, tag = 'smem constant byte address 0x4 - core index']
  #allocation1 [shape = 'u32[144,128]{1,0:T(1,128)}', space=vmem, size = 0x12000, scoped, tag = 'internal scratch']
  %s0 = inlined_call_operand.vmem [shape: f32[250,9344], index: 0, kind: input, shape index: {}]
  %s1 = inlined_call_operand.vmem [shape: f32[9344,5], index: 1, kind: input, shape index: {}]
  %s2 = inlined_call_operand.vmem [shape: f32[1,5], index: 2, kind: input, shape index: {}]
  %s3 = inlined_call_operand.vmem [shape: f32[250,5], index: 3, kind: output, shape index: {}]
  %s4 = sld [smem:[#allocation0]]
  $region45: #{deep_sleep_net_forward.1} parent=0
    _
  %s6 = ssub.s32 1, %s4
  %s7 = scalar_select 0, %s6, %s4
  loop: start=0, step=1, limit=4
  $region2: #{deep_sleep_net_forward.1} parent=0 // loop_pre_header
    _
  $region3: #{deep_sleep_net_forward.1} parent=0 // loop_header
    %s9 = sphi 0, %s13
    %p10 = scmp.ge.s32.totalorder %s9, 4
    %s19 = sphi 0, %s21
    %s22 = sphi 0, %s19
    %s23 = sphi 0, %s22
    %s39 = sphi 0, %s23
    %s43 = sphi 0, %s43
    %s45 = sphi 0, %s43
    %s46 = sphi 0, %s45
    %s60 = sphi 0, %s46
    %s64 = sphi 0, %s64
    %s66 = sphi 0, %s64
    %s67 = sphi 0, %s66
    %s81 = sphi 0, %s67
    %s87 = sphi 0, %s89
    %s90 = sphi 0, %s87
    %s91 = sphi 0, %s90
    %s107 = sphi 0, %s91
  $region4: #{deep_sleep_net_forward.1} parent=0 // loop_header_branch
    %12 = sbr.rel (%p10) target = $region8
  $region5: #{deep_sleep_net_forward.1} parent=0 // loop_body
    %s14 = ssub.s32 %s9, 1
    %s15 = ssub.s32 %s9, 2
    %s16 = sadd.s32 %s9, 1
    %s17 = ssub.s32 %s9, %s16
    %p18 = scmp.eq.s32.totalorder %s17, 0
    %s20 = sadd.s32 %s19, 1
    %s21 = scalar_select %p18, %s19, %s20
    %p24 = pneg %p18
    %p25 = scmp.eq.s32.totalorder %s9, 1
    %p26 = por %p24, %p25
    %p27 = scmp.ne.s32.totalorder %s19, %s22
    %p28 = scmp.eq.s32.totalorder %s9, 0
    %p29 = por %p27, %p28
    %p30 = scmp.ne.s32.totalorder %s19, %s22
    %p31 = scmp.eq.s32.totalorder %s14, 1
    %p32 = por %p30, %p31
    %p33 = scmp.ne.s32.totalorder %s22, %s23
    %p34 = scmp.eq.s32.totalorder %s14, 0
    %p35 = por %p33, %p34
    %p36 = scmp.ne.s32.totalorder %s22, %s23
    %p37 = scmp.eq.s32.totalorder %s15, 1
    %p38 = por %p36, %p37
    %p40 = scmp.ne.s32.totalorder %s23, %s39
    %p41 = scmp.eq.s32.totalorder %s15, 0
    %p42 = por %p40, %p41
    %s44 = sadd.s32 %s43, 1
    %p47 = scmp.eq.s32.totalorder %s9, 1
    %p48 = scmp.ne.s32.totalorder %s43, %s45
    %p49 = scmp.eq.s32.totalorder %s9, 0
    %p50 = por %p48, %p49
    %p51 = scmp.ne.s32.totalorder %s43, %s45
    %p52 = scmp.eq.s32.totalorder %s14, 1
    %p53 = por %p51, %p52
    %p54 = scmp.ne.s32.totalorder %s45, %s46
    %p55 = scmp.eq.s32.totalorder %s14, 0
    %p56 = por %p54, %p55
    %p57 = scmp.ne.s32.totalorder %s45, %s46
    %p58 = scmp.eq.s32.totalorder %s15, 1
    %p59 = por %p57, %p58
    %p61 = scmp.ne.s32.totalorder %s46, %s60
    %p62 = scmp.eq.s32.totalorder %s15, 0
    %p63 = por %p61, %p62
    %s65 = sadd.s32 %s64, 1
    %p68 = scmp.eq.s32.totalorder %s9, 1
    %p69 = scmp.ne.s32.totalorder %s64, %s66
    %p70 = scmp.eq.s32.totalorder %s9, 0
    %p71 = por %p69, %p70
    %p72 = scmp.ne.s32.totalorder %s64, %s66
    %p73 = scmp.eq.s32.totalorder %s14, 1
    %p74 = por %p72, %p73
    %p75 = scmp.ne.s32.totalorder %s66, %s67
    %p76 = scmp.eq.s32.totalorder %s14, 0
    %p77 = por %p75, %p76
    %p78 = scmp.ne.s32.totalorder %s66, %s67
    %p79 = scmp.eq.s32.totalorder %s15, 1
    %p80 = por %p78, %p79
    %p82 = scmp.ne.s32.totalorder %s67, %s81
    %p83 = scmp.eq.s32.totalorder %s15, 0
    %p84 = por %p82, %p83
    %s85 = ssub.s32 %s9, %s16
    %p86 = scmp.eq.s32.totalorder %s85, 0
    %s88 = sadd.s32 %s87, 1
    %s89 = scalar_select %p86, %s87, %s88
    %p92 = pneg %p86
    %p93 = scmp.eq.s32.totalorder %s9, 1
    %p94 = por %p92, %p93
    %p95 = scmp.ne.s32.totalorder %s87, %s90
    %p96 = scmp.eq.s32.totalorder %s9, 0
    %p97 = por %p95, %p96
    %p98 = scmp.ne.s32.totalorder %s87, %s90
    %p99 = scmp.eq.s32.totalorder %s14, 1
    %p100 = por %p98, %p99
    %p101 = scmp.ne.s32.totalorder %s90, %s91
    %p102 = scmp.eq.s32.totalorder %s14, 0
    %p103 = por %p101, %p102
    %p104 = scmp.ne.s32.totalorder %s90, %s91
    %p105 = scmp.eq.s32.totalorder %s15, 1
    %p106 = por %p104, %p105
    %p108 = scmp.ne.s32.totalorder %s91, %s107
    %p109 = scmp.eq.s32.totalorder %s15, 0
    %p110 = por %p108, %p109
    %p111 = scmp.le.s32.totalorder 1, %s9
    %p112 = scmp.lt.s32.totalorder %s9, 3
    %p113 = pnand %p111, %p112
    %p114 = pneg %p113
    // Predicated region
    $region9: #{deep_sleep_net_forward.1} parent=5 // pred_check
      _
    $region10: #{deep_sleep_net_forward.1} parent=5 // pred_check_branch
      %116 = sbr.rel (%p113) target = $region12
    $region11: #{deep_sleep_net_forward.1} parent=5 // pred_region
      %s117 = ssub.s32 %s9, 1
      // Predicated region
      $region13: #{deep_sleep_net_forward.1} parent=11 // pred_check
        %p118 = pneg %p56
      $region14: #{deep_sleep_net_forward.1} parent=11 // pred_check_branch
        %120 = sbr.rel (%p118) target = $region16
      $region15: #{deep_sleep_net_forward.1} parent=11 // pred_region
        _
      $region16: #{deep_sleep_net_forward.1} parent=11 // pred_fallthru
        _
      // Predicated region
      $region17: #{deep_sleep_net_forward.1} parent=11 // pred_check
        %p121 = pneg %p77
      $region18: #{deep_sleep_net_forward.1} parent=11 // pred_check_branch
        %123 = sbr.rel (%p121) target = $region20
      $region19: #{deep_sleep_net_forward.1} parent=11 // pred_region
        _
      $region20: #{deep_sleep_net_forward.1} parent=11 // pred_fallthru
        _
    $region12: #{deep_sleep_net_forward.1} parent=5 // pred_fallthru
      _
    %p124 = scmp.lt.s32.totalorder %s9, 2
    // Predicated region
    $region21: #{deep_sleep_net_forward.1} parent=5 // pred_check
      %p125 = pneg %p124
    $region22: #{deep_sleep_net_forward.1} parent=5 // pred_check_branch
      %127 = sbr.rel (%p125) target = $region24
    $region23: #{deep_sleep_net_forward.1} parent=5 // pred_region
      // Predicated region
      $region25: #{deep_sleep_net_forward.1} parent=23 // pred_check
        %p128 = pneg %p29
      $region26: #{deep_sleep_net_forward.1} parent=23 // pred_check_branch
        %130 = sbr.rel (%p128) target = $region28
      $region27: #{deep_sleep_net_forward.1} parent=23 // pred_region
        %s131 = smul.u32 16, %s9
        %p132 = scmp.lt.s32.totalorder %s131, 31
        %s133 = scalar_select %p132, %s131, 31
        %s134 = smul.addr %s133, 73
        %s135 = smul.addr %s134, 8
        %s136 = scalar_lea.vmem %s0, %s135
        %s137 = smul.u32 16, %s9
      $region28: #{deep_sleep_net_forward.1} parent=23 // pred_fallthru
        _
    $region24: #{deep_sleep_net_forward.1} parent=5 // pred_fallthru
      _
    %p138 = scmp.le.s32.totalorder 1, %s9
    %p139 = scmp.lt.s32.totalorder %s9, 3
    %p140 = pnand %p138, %p139
    %p141 = pneg %p140
    // Predicated region
    $region29: #{deep_sleep_net_forward.1} parent=5 // pred_check
      _
    $region30: #{deep_sleep_net_forward.1} parent=5 // pred_check_branch
      %143 = sbr.rel (%p140) target = $region32
    $region31: #{deep_sleep_net_forward.1} parent=5 // pred_region
      %s144 = ssub.s32 %s9, 1
      %s145 = smul.u32 16, %s14
      %p146 = scmp.lt.s32.totalorder %s145, 31
      %s147 = scalar_select %p146, %s145, 31
      %s148 = smul.addr %s147, 73
      %s149 = smul.addr %s148, 8
      %s150 = scalar_lea.vmem %s0, %s149
      %p151 = pneg %p35
      %p152 = pneg %p32
      %p153 = pneg %p56
      %p154 = pneg %p53
      %p155 = pneg %p77
      %p156 = pneg %p74
      %p157 = pneg %p103
      %p158 = pneg %p100
      %s159 = smul.u32 16, %s14
      %p160 = scmp.lt.s32.totalorder %s159, 31
      %s161 = scalar_select %p160, %s159, 31
      %s162 = smul.addr %s161, 8
      %s163 = scalar_lea.vmem %s3, %s162
      %s164 = smul.u32 16, %s14
      %p165 = scmp.lt.s32.totalorder %s164, 31
      %s166 = scalar_select %p165, %s164, 31
      %s167 = smul.addr %s166, 73
      %s168 = smul.addr %s167, 8
      %s169 = scalar_lea.vmem %s0, %s168
      %s170 = smul.u32 16, %s14
      %s171 = smul.u32 16, %s14
      %p172 = scmp.lt.s32.totalorder %s171, 31
      %s173 = scalar_select %p172, %s171, 31
      %s174 = smul.addr %s173, 8
      %s175 = scalar_lea.vmem %s3, %s174
      %s176 = smul.u32 16, %s14
      %v177 = vld [vmem:[%s169] sm:$0xff]
      %v178 = vld [vmem:[%s169 + $0x8] sm:$0xff]
      %v179 = vld [vmem:[%s169 + $0x10] sm:$0xff]
      %v180 = vld [vmem:[%s169 + $0x18] sm:$0xff]
      %v181 = vld [vmem:[%s169 + $0x20] sm:$0xff]
      %v182 = vld [vmem:[%s169 + $0x28] sm:$0xff]
      %v183 = vld [vmem:[%s169 + $0x30] sm:$0xff]
      %v184 = vld [vmem:[%s169 + $0x38] sm:$0xff]
      %v185 = vld [vmem:[%s169 + $0x40] sm:$0xff]
      %v186 = vld [vmem:[%s169 + $0x48] sm:$0xff]
      %v187 = vld [vmem:[%s169 + $0x50] sm:$0xff]
      %v188 = vld [vmem:[%s169 + $0x58] sm:$0xff]
      %v189 = vld [vmem:[%s169 + $0x60] sm:$0xff]
      %v190 = vld [vmem:[%s169 + $0x68] sm:$0xff]
      %v191 = vld [vmem:[%s169 + $0x70] sm:$0xff]
      %v192 = vld [vmem:[%s169 + $0x78] sm:$0xff]
      %v193 = vld [vmem:[%s169 + $0x80] sm:$0xff]
      %v194 = vld [vmem:[%s169 + $0x88] sm:$0xff]
      %v195 = vld [vmem:[%s169 + $0x90] sm:$0xff]
      %v196 = vld [vmem:[%s169 + $0x98] sm:$0xff]
      %v197 = vld [vmem:[%s169 + $0xa0] sm:$0xff]
      %v198 = vld [vmem:[%s169 + $0xa8] sm:$0xff]
      %v199 = vld [vmem:[%s169 + $0xb0] sm:$0xff]
      %v200 = vld [vmem:[%s169 + $0xb8] sm:$0xff]
      %v201 = vld [vmem:[%s169 + $0xc0] sm:$0xff]
      %v202 = vld [vmem:[%s169 + $0xc8] sm:$0xff]
      %v203 = vld [vmem:[%s169 + $0xd0] sm:$0xff]
      %v204 = vld [vmem:[%s169 + $0xd8] sm:$0xff]
      %v205 = vld [vmem:[%s169 + $0xe0] sm:$0xff]
      %v206 = vld [vmem:[%s169 + $0xe8] sm:$0xff]
      %v207 = vld [vmem:[%s169 + $0xf0] sm:$0xff]
      %v208 = vld [vmem:[%s169 + $0xf8] sm:$0xff]
      %v209 = vld [vmem:[%s169 + $0x100] sm:$0xff]
      %v210 = vld [vmem:[%s169 + $0x108] sm:$0xff]
      %v211 = vld [vmem:[%s169 + $0x110] sm:$0xff]
      %v212 = vld [vmem:[%s169 + $0x118] sm:$0xff]
      %v213 = vld [vmem:[%s169 + $0x120] sm:$0xff]
      %v214 = vld [vmem:[%s169 + $0x128] sm:$0xff]
      %v215 = vld [vmem:[%s169 + $0x130] sm:$0xff]
      %v216 = vld [vmem:[%s169 + $0x138] sm:$0xff]
      %v217 = vld [vmem:[%s169 + $0x140] sm:$0xff]
      %v218 = vld [vmem:[%s169 + $0x148] sm:$0xff]
      %v219 = vld [vmem:[%s169 + $0x150] sm:$0xff]
      %v220 = vld [vmem:[%s169 + $0x158] sm:$0xff]
      %v221 = vld [vmem:[%s169 + $0x160] sm:$0xff]
      %v222 = vld [vmem:[%s169 + $0x168] sm:$0xff]
      %v223 = vld [vmem:[%s169 + $0x170] sm:$0xff]
      %v224 = vld [vmem:[%s169 + $0x178] sm:$0xff]
      %v225 = vld [vmem:[%s169 + $0x180] sm:$0xff]
      %v226 = vld [vmem:[%s169 + $0x188] sm:$0xff]
      %v227 = vld [vmem:[%s169 + $0x190] sm:$0xff]
      %v228 = vld [vmem:[%s169 + $0x198] sm:$0xff]
      %v229 = vld [vmem:[%s169 + $0x1a0] sm:$0xff]
      %v230 = vld [vmem:[%s169 + $0x1a8] sm:$0xff]
      %v231 = vld [vmem:[%s169 + $0x1b0] sm:$0xff]
      %v232 = vld [vmem:[%s169 + $0x1b8] sm:$0xff]
      %v233 = vld [vmem:[%s169 + $0x1c0] sm:$0xff]
      %v234 = vld [vmem:[%s169 + $0x1c8] sm:$0xff]
      %v235 = vld [vmem:[%s169 + $0x1d0] sm:$0xff]
      %v236 = vld [vmem:[%s169 + $0x1d8] sm:$0xff]
      %v237 = vld [vmem:[%s169 + $0x1e0] sm:$0xff]
      %v238 = vld [vmem:[%s169 + $0x1e8] sm:$0xff]
      %v239 = vld [vmem:[%s169 + $0x1f0] sm:$0xff]
      %v240 = vld [vmem:[%s169 + $0x1f8] sm:$0xff]
      %v241 = vld [vmem:[%s169 + $0x200] sm:$0xff]
      %v242 = vld [vmem:[%s169 + $0x208] sm:$0xff]
      %v243 = vld [vmem:[%s169 + $0x210] sm:$0xff]
      %v244 = vld [vmem:[%s169 + $0x218] sm:$0xff]
      %v245 = vld [vmem:[%s169 + $0x220] sm:$0xff]
      %v246 = vld [vmem:[%s169 + $0x228] sm:$0xff]
      %v247 = vld [vmem:[%s169 + $0x230] sm:$0xff]
      %v248 = vld [vmem:[%s169 + $0x238] sm:$0xff]
      %v249 = vld [vmem:[%s169 + $0x240] sm:$0xff]
      %v250 = vld [vmem:[%s169 + $0x248] sm:$0xff]
      %v251 = vld [vmem:[%s169 + $0x250] sm:$0xff]
      %v252 = vld [vmem:[%s169 + $0x258] sm:$0xff]
      %v253 = vld [vmem:[%s169 + $0x260] sm:$0xff]
      %v254 = vld [vmem:[%s169 + $0x268] sm:$0xff]
      %v255 = vld [vmem:[%s169 + $0x270] sm:$0xff]
      %v256 = vld [vmem:[%s169 + $0x278] sm:$0xff]
      %v257 = vld [vmem:[%s169 + $0x280] sm:$0xff]
      %v258 = vld [vmem:[%s169 + $0x288] sm:$0xff]
      %v259 = vld [vmem:[%s169 + $0x290] sm:$0xff]
      %v260 = vld [vmem:[%s169 + $0x298] sm:$0xff]
      %v261 = vld [vmem:[%s169 + $0x2a0] sm:$0xff]
      %v262 = vld [vmem:[%s169 + $0x2a8] sm:$0xff]
      %v263 = vld [vmem:[%s169 + $0x2b0] sm:$0xff]
      %v264 = vld [vmem:[%s169 + $0x2b8] sm:$0xff]
      %v265 = vld [vmem:[%s169 + $0x2c0] sm:$0xff]
      %v266 = vld [vmem:[%s169 + $0x2c8] sm:$0xff]
      %v267 = vld [vmem:[%s169 + $0x2d0] sm:$0xff]
      %v268 = vld [vmem:[%s169 + $0x2d8] sm:$0xff]
      %v269 = vld [vmem:[%s169 + $0x2e0] sm:$0xff]
      %v270 = vld [vmem:[%s169 + $0x2e8] sm:$0xff]
      %v271 = vld [vmem:[%s169 + $0x2f0] sm:$0xff]
      %v272 = vld [vmem:[%s169 + $0x2f8] sm:$0xff]
      %v273 = vld [vmem:[%s169 + $0x300] sm:$0xff]
      %v274 = vld [vmem:[%s169 + $0x308] sm:$0xff]
      %v275 = vld [vmem:[%s169 + $0x310] sm:$0xff]
      %v276 = vld [vmem:[%s169 + $0x318] sm:$0xff]
      %v277 = vld [vmem:[%s169 + $0x320] sm:$0xff]
      %v278 = vld [vmem:[%s169 + $0x328] sm:$0xff]
      %v279 = vld [vmem:[%s169 + $0x330] sm:$0xff]
      %v280 = vld [vmem:[%s169 + $0x338] sm:$0xff]
      %v281 = vld [vmem:[%s169 + $0x340] sm:$0xff]
      %v282 = vld [vmem:[%s169 + $0x348] sm:$0xff]
      %v283 = vld [vmem:[%s169 + $0x350] sm:$0xff]
      %v284 = vld [vmem:[%s169 + $0x358] sm:$0xff]
      %v285 = vld [vmem:[%s169 + $0x360] sm:$0xff]
      %v286 = vld [vmem:[%s169 + $0x368] sm:$0xff]
      %v287 = vld [vmem:[%s169 + $0x370] sm:$0xff]
      %v288 = vld [vmem:[%s169 + $0x378] sm:$0xff]
      %v289 = vld [vmem:[%s169 + $0x380] sm:$0xff]
      %v290 = vld [vmem:[%s169 + $0x388] sm:$0xff]
      %v291 = vld [vmem:[%s169 + $0x390] sm:$0xff]
      %v292 = vld [vmem:[%s169 + $0x398] sm:$0xff]
      %v293 = vld [vmem:[%s169 + $0x3a0] sm:$0xff]
      %v294 = vld [vmem:[%s169 + $0x3a8] sm:$0xff]
      %v295 = vld [vmem:[%s169 + $0x3b0] sm:$0xff]
      %v296 = vld [vmem:[%s169 + $0x3b8] sm:$0xff]
      %v297 = vld [vmem:[%s169 + $0x3c0] sm:$0xff]
      %v298 = vld [vmem:[%s169 + $0x3c8] sm:$0xff]
      %v299 = vld [vmem:[%s169 + $0x3d0] sm:$0xff]
      %v300 = vld [vmem:[%s169 + $0x3d8] sm:$0xff]
      %v301 = vld [vmem:[%s169 + $0x3e0] sm:$0xff]
      %v302 = vld [vmem:[%s169 + $0x3e8] sm:$0xff]
      %v303 = vld [vmem:[%s169 + $0x3f0] sm:$0xff]
      %v304 = vld [vmem:[%s169 + $0x3f8] sm:$0xff]
      %v305 = vld [vmem:[%s169 + $0x400] sm:$0xff]
      %v306 = vld [vmem:[%s169 + $0x408] sm:$0xff]
      %v307 = vld [vmem:[%s169 + $0x410] sm:$0xff]
      %v308 = vld [vmem:[%s169 + $0x418] sm:$0xff]
      %v309 = vld [vmem:[%s169 + $0x420] sm:$0xff]
      %v310 = vld [vmem:[%s169 + $0x428] sm:$0xff]
      %v311 = vld [vmem:[%s169 + $0x430] sm:$0xff]
      %v312 = vld [vmem:[%s169 + $0x438] sm:$0xff]
      %v313 = vld [vmem:[%s169 + $0x440] sm:$0xff]
      %v314 = vld [vmem:[%s169 + $0x448] sm:$0xff]
      %v315 = vld [vmem:[%s169 + $0x450] sm:$0xff]
      %v316 = vld [vmem:[%s169 + $0x458] sm:$0xff]
      %v317 = vld [vmem:[%s169 + $0x460] sm:$0xff]
      %v318 = vld [vmem:[%s169 + $0x468] sm:$0xff]
      %v319 = vld [vmem:[%s169 + $0x470] sm:$0xff]
      %v320 = vld [vmem:[%s169 + $0x478] sm:$0xff]
      %v321 = vld [vmem:[%s169 + $0x480] sm:$0xff]
      %v322 = vld [vmem:[%s169 + $0x488] sm:$0xff]
      %v323 = vld [vmem:[%s169 + $0x490] sm:$0xff]
      %v324 = vld [vmem:[%s169 + $0x498] sm:$0xff]
      %v325 = vld [vmem:[%s169 + $0x4a0] sm:$0xff]
      %v326 = vld [vmem:[%s169 + $0x4a8] sm:$0xff]
      %v327 = vld [vmem:[%s169 + $0x4b0] sm:$0xff]
      %v328 = vld [vmem:[%s169 + $0x4b8] sm:$0xff]
      %v329 = vld [vmem:[%s169 + $0x4c0] sm:$0xff]
      %v330 = vld [vmem:[%s169 + $0x4c8] sm:$0xff]
      %v331 = vld [vmem:[%s169 + $0x4d0] sm:$0xff]
      %v332 = vld [vmem:[%s169 + $0x4d8] sm:$0xff]
      %v333 = vld [vmem:[%s169 + $0x4e0] sm:$0xff]
      %v334 = vld [vmem:[%s169 + $0x4e8] sm:$0xff]
      %v335 = vld [vmem:[%s169 + $0x4f0] sm:$0xff]
      %v336 = vld [vmem:[%s169 + $0x4f8] sm:$0xff]
      %v337 = vld [vmem:[%s169 + $0x500] sm:$0xff]
      %v338 = vld [vmem:[%s169 + $0x508] sm:$0xff]
      %v339 = vld [vmem:[%s169 + $0x510] sm:$0xff]
      %v340 = vld [vmem:[%s169 + $0x518] sm:$0xff]
      %v341 = vld [vmem:[%s169 + $0x520] sm:$0xff]
      %v342 = vld [vmem:[%s169 + $0x528] sm:$0xff]
      %v343 = vld [vmem:[%s169 + $0x530] sm:$0xff]
      %v344 = vld [vmem:[%s169 + $0x538] sm:$0xff]
      %v345 = vld [vmem:[%s169 + $0x540] sm:$0xff]
      %v346 = vld [vmem:[%s169 + $0x548] sm:$0xff]
      %v347 = vld [vmem:[%s169 + $0x550] sm:$0xff]
      %v348 = vld [vmem:[%s169 + $0x558] sm:$0xff]
      %v349 = vld [vmem:[%s169 + $0x560] sm:$0xff]
      %v350 = vld [vmem:[%s169 + $0x568] sm:$0xff]
      %v351 = vld [vmem:[%s169 + $0x570] sm:$0xff]
      %v352 = vld [vmem:[%s169 + $0x578] sm:$0xff]
      %v353 = vld [vmem:[%s169 + $0x580] sm:$0xff]
      %v354 = vld [vmem:[%s169 + $0x588] sm:$0xff]
      %v355 = vld [vmem:[%s169 + $0x590] sm:$0xff]
      %v356 = vld [vmem:[%s169 + $0x598] sm:$0xff]
      %v357 = vld [vmem:[%s169 + $0x5a0] sm:$0xff]
      %v358 = vld [vmem:[%s169 + $0x5a8] sm:$0xff]
      %v359 = vld [vmem:[%s169 + $0x5b0] sm:$0xff]
      %v360 = vld [vmem:[%s169 + $0x5b8] sm:$0xff]
      %v361 = vld [vmem:[%s169 + $0x5c0] sm:$0xff]
      %v362 = vld [vmem:[%s169 + $0x5c8] sm:$0xff]
      %v363 = vld [vmem:[%s169 + $0x5d0] sm:$0xff]
      %v364 = vld [vmem:[%s169 + $0x5d8] sm:$0xff]
      %v365 = vld [vmem:[%s169 + $0x5e0] sm:$0xff]
      %v366 = vld [vmem:[%s169 + $0x5e8] sm:$0xff]
      %v367 = vld [vmem:[%s169 + $0x5f0] sm:$0xff]
      %v368 = vld [vmem:[%s169 + $0x5f8] sm:$0xff]
      %v369 = vld [vmem:[%s169 + $0x600] sm:$0xff]
      %v370 = vld [vmem:[%s169 + $0x608] sm:$0xff]
      %v371 = vld [vmem:[%s169 + $0x610] sm:$0xff]
      %v372 = vld [vmem:[%s169 + $0x618] sm:$0xff]
      %v373 = vld [vmem:[%s169 + $0x620] sm:$0xff]
      %v374 = vld [vmem:[%s169 + $0x628] sm:$0xff]
      %v375 = vld [vmem:[%s169 + $0x630] sm:$0xff]
      %v376 = vld [vmem:[%s169 + $0x638] sm:$0xff]
      %v377 = vld [vmem:[%s169 + $0x640] sm:$0xff]
      %v378 = vld [vmem:[%s169 + $0x648] sm:$0xff]
      %v379 = vld [vmem:[%s169 + $0x650] sm:$0xff]
      %v380 = vld [vmem:[%s169 + $0x658] sm:$0xff]
      %v381 = vld [vmem:[%s169 + $0x660] sm:$0xff]
      %v382 = vld [vmem:[%s169 + $0x668] sm:$0xff]
      %v383 = vld [vmem:[%s169 + $0x670] sm:$0xff]
      %v384 = vld [vmem:[%s169 + $0x678] sm:$0xff]
      %v385 = vld [vmem:[%s169 + $0x680] sm:$0xff]
      %v386 = vld [vmem:[%s169 + $0x688] sm:$0xff]
      %v387 = vld [vmem:[%s169 + $0x690] sm:$0xff]
      %v388 = vld [vmem:[%s169 + $0x698] sm:$0xff]
      %v389 = vld [vmem:[%s169 + $0x6a0] sm:$0xff]
      %v390 = vld [vmem:[%s169 + $0x6a8] sm:$0xff]
      %v391 = vld [vmem:[%s169 + $0x6b0] sm:$0xff]
      %v392 = vld [vmem:[%s169 + $0x6b8] sm:$0xff]
      %v393 = vld [vmem:[%s169 + $0x6c0] sm:$0xff]
      %v394 = vld [vmem:[%s169 + $0x6c8] sm:$0xff]
      %v395 = vld [vmem:[%s169 + $0x6d0] sm:$0xff]
      %v396 = vld [vmem:[%s169 + $0x6d8] sm:$0xff]
      %v397 = vld [vmem:[%s169 + $0x6e0] sm:$0xff]
      %v398 = vld [vmem:[%s169 + $0x6e8] sm:$0xff]
      %v399 = vld [vmem:[%s169 + $0x6f0] sm:$0xff]
      %v400 = vld [vmem:[%s169 + $0x6f8] sm:$0xff]
      %v401 = vld [vmem:[%s169 + $0x700] sm:$0xff]
      %v402 = vld [vmem:[%s169 + $0x708] sm:$0xff]
      %v403 = vld [vmem:[%s169 + $0x710] sm:$0xff]
      %v404 = vld [vmem:[%s169 + $0x718] sm:$0xff]
      %v405 = vld [vmem:[%s169 + $0x720] sm:$0xff]
      %v406 = vld [vmem:[%s169 + $0x728] sm:$0xff]
      %v407 = vld [vmem:[%s169 + $0x730] sm:$0xff]
      %v408 = vld [vmem:[%s169 + $0x738] sm:$0xff]
      %v409 = vld [vmem:[%s169 + $0x740] sm:$0xff]
      %v410 = vld [vmem:[%s169 + $0x748] sm:$0xff]
      %v411 = vld [vmem:[%s169 + $0x750] sm:$0xff]
      %v412 = vld [vmem:[%s169 + $0x758] sm:$0xff]
      %v413 = vld [vmem:[%s169 + $0x760] sm:$0xff]
      %v414 = vld [vmem:[%s169 + $0x768] sm:$0xff]
      %v415 = vld [vmem:[%s169 + $0x770] sm:$0xff]
      %v416 = vld [vmem:[%s169 + $0x778] sm:$0xff]
      %v417 = vld [vmem:[%s169 + $0x780] sm:$0xff]
      %v418 = vld [vmem:[%s169 + $0x788] sm:$0xff]
      %v419 = vld [vmem:[%s169 + $0x790] sm:$0xff]
      %v420 = vld [vmem:[%s169 + $0x798] sm:$0xff]
      %v421 = vld [vmem:[%s169 + $0x7a0] sm:$0xff]
      %v422 = vld [vmem:[%s169 + $0x7a8] sm:$0xff]
      %v423 = vld [vmem:[%s169 + $0x7b0] sm:$0xff]
      %v424 = vld [vmem:[%s169 + $0x7b8] sm:$0xff]
      %v425 = vld [vmem:[%s169 + $0x7c0] sm:$0xff]
      %v426 = vld [vmem:[%s169 + $0x7c8] sm:$0xff]
      %v427 = vld [vmem:[%s169 + $0x7d0] sm:$0xff]
      %v428 = vld [vmem:[%s169 + $0x7d8] sm:$0xff]
      %v429 = vld [vmem:[%s169 + $0x7e0] sm:$0xff]
      %v430 = vld [vmem:[%s169 + $0x7e8] sm:$0xff]
      %v431 = vld [vmem:[%s169 + $0x7f0] sm:$0xff]
      %v432 = vld [vmem:[%s169 + $0x7f8] sm:$0xff]
      %v433 = vld [vmem:[%s169 + $0x800] sm:$0xff]
      %v434 = vld [vmem:[%s169 + $0x808] sm:$0xff]
      %v435 = vld [vmem:[%s169 + $0x810] sm:$0xff]
      %v436 = vld [vmem:[%s169 + $0x818] sm:$0xff]
      %v437 = vld [vmem:[%s169 + $0x820] sm:$0xff]
      %v438 = vld [vmem:[%s169 + $0x828] sm:$0xff]
      %v439 = vld [vmem:[%s169 + $0x830] sm:$0xff]
      %v440 = vld [vmem:[%s169 + $0x838] sm:$0xff]
      %v441 = vld [vmem:[%s169 + $0x840] sm:$0xff]
      %v442 = vld [vmem:[%s169 + $0x848] sm:$0xff]
      %v443 = vld [vmem:[%s169 + $0x850] sm:$0xff]
      %v444 = vld [vmem:[%s169 + $0x858] sm:$0xff]
      %v445 = vld [vmem:[%s169 + $0x860] sm:$0xff]
      %v446 = vld [vmem:[%s169 + $0x868] sm:$0xff]
      %v447 = vld [vmem:[%s169 + $0x870] sm:$0xff]
      %v448 = vld [vmem:[%s169 + $0x878] sm:$0xff]
      %v449 = vld [vmem:[%s169 + $0x880] sm:$0xff]
      %v450 = vld [vmem:[%s169 + $0x888] sm:$0xff]
      %v451 = vld [vmem:[%s169 + $0x890] sm:$0xff]
      %v452 = vld [vmem:[%s169 + $0x898] sm:$0xff]
      %v453 = vld [vmem:[%s169 + $0x8a0] sm:$0xff]
      %v454 = vld [vmem:[%s169 + $0x8a8] sm:$0xff]
      %v455 = vld [vmem:[%s169 + $0x8b0] sm:$0xff]
      %v456 = vld [vmem:[%s169 + $0x8b8] sm:$0xff]
      %v457 = vld [vmem:[%s169 + $0x8c0] sm:$0xff]
      %v458 = vld [vmem:[%s169 + $0x8c8] sm:$0xff]
      %v459 = vld [vmem:[%s169 + $0x8d0] sm:$0xff]
      %v460 = vld [vmem:[%s169 + $0x8d8] sm:$0xff]
      %v461 = vld [vmem:[%s169 + $0x8e0] sm:$0xff]
      %v462 = vld [vmem:[%s169 + $0x8e8] sm:$0xff]
      %v463 = vld [vmem:[%s169 + $0x8f0] sm:$0xff]
      %v464 = vld [vmem:[%s169 + $0x8f8] sm:$0xff]
      %v465 = vld [vmem:[%s169 + $0x900] sm:$0xff]
      %v466 = vld [vmem:[%s169 + $0x908] sm:$0xff]
      %v467 = vld [vmem:[%s169 + $0x910] sm:$0xff]
      %v468 = vld [vmem:[%s169 + $0x918] sm:$0xff]
      %v469 = vld [vmem:[%s169 + $0x920] sm:$0xff]
      %v470 = vld [vmem:[%s169 + $0x928] sm:$0xff]
      %v471 = vld [vmem:[%s169 + $0x930] sm:$0xff]
      %v472 = vld [vmem:[%s169 + $0x938] sm:$0xff]
      %v473 = vld [vmem:[%s169 + $0x940] sm:$0xff]
      %v474 = vld [vmem:[%s169 + $0x948] sm:$0xff]
      %v475 = vld [vmem:[%s169 + $0x950] sm:$0xff]
      %v476 = vld [vmem:[%s169 + $0x958] sm:$0xff]
      %v477 = vld [vmem:[%s169 + $0x960] sm:$0xff]
      %v478 = vld [vmem:[%s169 + $0x968] sm:$0xff]
      %v479 = vld [vmem:[%s169 + $0x970] sm:$0xff]
      %v480 = vld [vmem:[%s169 + $0x978] sm:$0xff]
      %v481 = vld [vmem:[%s169 + $0x980] sm:$0xff]
      %v482 = vld [vmem:[%s169 + $0x988] sm:$0xff]
      %v483 = vld [vmem:[%s169 + $0x990] sm:$0xff]
      %v484 = vld [vmem:[%s169 + $0x998] sm:$0xff]
      %v485 = vld [vmem:[%s169 + $0x9a0] sm:$0xff]
      %v486 = vld [vmem:[%s169 + $0x9a8] sm:$0xff]
      %v487 = vld [vmem:[%s169 + $0x9b0] sm:$0xff]
      %v488 = vld [vmem:[%s169 + $0x9b8] sm:$0xff]
      %v489 = vld [vmem:[%s169 + $0x9c0] sm:$0xff]
      %v490 = vld [vmem:[%s169 + $0x9c8] sm:$0xff]
      %v491 = vld [vmem:[%s169 + $0x9d0] sm:$0xff]
      %v492 = vld [vmem:[%s169 + $0x9d8] sm:$0xff]
      %v493 = vld [vmem:[%s169 + $0x9e0] sm:$0xff]
      %v494 = vld [vmem:[%s169 + $0x9e8] sm:$0xff]
      %v495 = vld [vmem:[%s169 + $0x9f0] sm:$0xff]
      %v496 = vld [vmem:[%s169 + $0x9f8] sm:$0xff]
      %v497 = vld [vmem:[%s169 + $0xa00] sm:$0xff]
      %v498 = vld [vmem:[%s169 + $0xa08] sm:$0xff]
      %v499 = vld [vmem:[%s169 + $0xa10] sm:$0xff]
      %v500 = vld [vmem:[%s169 + $0xa18] sm:$0xff]
      %v501 = vld [vmem:[%s169 + $0xa20] sm:$0xff]
      %v502 = vld [vmem:[%s169 + $0xa28] sm:$0xff]
      %v503 = vld [vmem:[%s169 + $0xa30] sm:$0xff]
      %v504 = vld [vmem:[%s169 + $0xa38] sm:$0xff]
      %v505 = vld [vmem:[%s169 + $0xa40] sm:$0xff]
      %v506 = vld [vmem:[%s169 + $0xa48] sm:$0xff]
      %v507 = vld [vmem:[%s169 + $0xa50] sm:$0xff]
      %v508 = vld [vmem:[%s169 + $0xa58] sm:$0xff]
      %v509 = vld [vmem:[%s169 + $0xa60] sm:$0xff]
      %v510 = vld [vmem:[%s169 + $0xa68] sm:$0xff]
      %v511 = vld [vmem:[%s169 + $0xa70] sm:$0xff]
      %v512 = vld [vmem:[%s169 + $0xa78] sm:$0xff]
      %v513 = vld [vmem:[%s169 + $0xa80] sm:$0xff]
      %v514 = vld [vmem:[%s169 + $0xa88] sm:$0xff]
      %v515 = vld [vmem:[%s169 + $0xa90] sm:$0xff]
      %v516 = vld [vmem:[%s169 + $0xa98] sm:$0xff]
      %v517 = vld [vmem:[%s169 + $0xaa0] sm:$0xff]
      %v518 = vld [vmem:[%s169 + $0xaa8] sm:$0xff]
      %v519 = vld [vmem:[%s169 + $0xab0] sm:$0xff]
      %v520 = vld [vmem:[%s169 + $0xab8] sm:$0xff]
      %v521 = vld [vmem:[%s169 + $0xac0] sm:$0xff]
      %v522 = vld [vmem:[%s169 + $0xac8] sm:$0xff]
      %v523 = vld [vmem:[%s169 + $0xad0] sm:$0xff]
      %v524 = vld [vmem:[%s169 + $0xad8] sm:$0xff]
      %v525 = vld [vmem:[%s169 + $0xae0] sm:$0xff]
      %v526 = vld [vmem:[%s169 + $0xae8] sm:$0xff]
      %v527 = vld [vmem:[%s169 + $0xaf0] sm:$0xff]
      %v528 = vld [vmem:[%s169 + $0xaf8] sm:$0xff]
      %v529 = vld [vmem:[%s169 + $0xb00] sm:$0xff]
      %v530 = vld [vmem:[%s169 + $0xb08] sm:$0xff]
      %v531 = vld [vmem:[%s169 + $0xb10] sm:$0xff]
      %v532 = vld [vmem:[%s169 + $0xb18] sm:$0xff]
      %v533 = vld [vmem:[%s169 + $0xb20] sm:$0xff]
      %v534 = vld [vmem:[%s169 + $0xb28] sm:$0xff]
      %v535 = vld [vmem:[%s169 + $0xb30] sm:$0xff]
      %v536 = vld [vmem:[%s169 + $0xb38] sm:$0xff]
      %v537 = vld [vmem:[%s169 + $0xb40] sm:$0xff]
      %v538 = vld [vmem:[%s169 + $0xb48] sm:$0xff]
      %v539 = vld [vmem:[%s169 + $0xb50] sm:$0xff]
      %v540 = vld [vmem:[%s169 + $0xb58] sm:$0xff]
      %v541 = vld [vmem:[%s169 + $0xb60] sm:$0xff]
      %v542 = vld [vmem:[%s169 + $0xb68] sm:$0xff]
      %v543 = vld [vmem:[%s169 + $0xb70] sm:$0xff]
      %v544 = vld [vmem:[%s169 + $0xb78] sm:$0xff]
      %v545 = vld [vmem:[%s169 + $0xb80] sm:$0xff]
      %v546 = vld [vmem:[%s169 + $0xb88] sm:$0xff]
      %v547 = vld [vmem:[%s169 + $0xb90] sm:$0xff]
      %v548 = vld [vmem:[%s169 + $0xb98] sm:$0xff]
      %v549 = vld [vmem:[%s169 + $0xba0] sm:$0xff]
      %v550 = vld [vmem:[%s169 + $0xba8] sm:$0xff]
      %v551 = vld [vmem:[%s169 + $0xbb0] sm:$0xff]
      %v552 = vld [vmem:[%s169 + $0xbb8] sm:$0xff]
      %v553 = vld [vmem:[%s169 + $0xbc0] sm:$0xff]
      %v554 = vld [vmem:[%s169 + $0xbc8] sm:$0xff]
      %v555 = vld [vmem:[%s169 + $0xbd0] sm:$0xff]
      %v556 = vld [vmem:[%s169 + $0xbd8] sm:$0xff]
      %v557 = vld [vmem:[%s169 + $0xbe0] sm:$0xff]
      %v558 = vld [vmem:[%s169 + $0xbe8] sm:$0xff]
      %v559 = vld [vmem:[%s169 + $0xbf0] sm:$0xff]
      %v560 = vld [vmem:[%s169 + $0xbf8] sm:$0xff]
      %v561 = vld [vmem:[%s169 + $0xc00] sm:$0xff]
      %v562 = vld [vmem:[%s169 + $0xc08] sm:$0xff]
      %v563 = vld [vmem:[%s169 + $0xc10] sm:$0xff]
      %v564 = vld [vmem:[%s169 + $0xc18] sm:$0xff]
      %v565 = vld [vmem:[%s169 + $0xc20] sm:$0xff]
      %v566 = vld [vmem:[%s169 + $0xc28] sm:$0xff]
      %v567 = vld [vmem:[%s169 + $0xc30] sm:$0xff]
      %v568 = vld [vmem:[%s169 + $0xc38] sm:$0xff]
      %v569 = vld [vmem:[%s169 + $0xc40] sm:$0xff]
      %v570 = vld [vmem:[%s169 + $0xc48] sm:$0xff]
      %v571 = vld [vmem:[%s169 + $0xc50] sm:$0xff]
      %v572 = vld [vmem:[%s169 + $0xc58] sm:$0xff]
      %v573 = vld [vmem:[%s169 + $0xc60] sm:$0xff]
      %v574 = vld [vmem:[%s169 + $0xc68] sm:$0xff]
      %v575 = vld [vmem:[%s169 + $0xc70] sm:$0xff]
      %v576 = vld [vmem:[%s169 + $0xc78] sm:$0xff]
      %v577 = vld [vmem:[%s169 + $0xc80] sm:$0xff]
      %v578 = vld [vmem:[%s169 + $0xc88] sm:$0xff]
      %v579 = vld [vmem:[%s169 + $0xc90] sm:$0xff]
      %v580 = vld [vmem:[%s169 + $0xc98] sm:$0xff]
      %v581 = vld [vmem:[%s169 + $0xca0] sm:$0xff]
      %v582 = vld [vmem:[%s169 + $0xca8] sm:$0xff]
      %v583 = vld [vmem:[%s169 + $0xcb0] sm:$0xff]
      %v584 = vld [vmem:[%s169 + $0xcb8] sm:$0xff]
      %v585 = vld [vmem:[%s169 + $0xcc0] sm:$0xff]
      %v586 = vld [vmem:[%s169 + $0xcc8] sm:$0xff]
      %v587 = vld [vmem:[%s169 + $0xcd0] sm:$0xff]
      %v588 = vld [vmem:[%s169 + $0xcd8] sm:$0xff]
      %v589 = vld [vmem:[%s169 + $0xce0] sm:$0xff]
      %v590 = vld [vmem:[%s169 + $0xce8] sm:$0xff]
      %v591 = vld [vmem:[%s169 + $0xcf0] sm:$0xff]
      %v592 = vld [vmem:[%s169 + $0xcf8] sm:$0xff]
      %v593 = vld [vmem:[%s169 + $0xd00] sm:$0xff]
      %v594 = vld [vmem:[%s169 + $0xd08] sm:$0xff]
      %v595 = vld [vmem:[%s169 + $0xd10] sm:$0xff]
      %v596 = vld [vmem:[%s169 + $0xd18] sm:$0xff]
      %v597 = vld [vmem:[%s169 + $0xd20] sm:$0xff]
      %v598 = vld [vmem:[%s169 + $0xd28] sm:$0xff]
      %v599 = vld [vmem:[%s169 + $0xd30] sm:$0xff]
      %v600 = vld [vmem:[%s169 + $0xd38] sm:$0xff]
      %v601 = vld [vmem:[%s169 + $0xd40] sm:$0xff]
      %v602 = vld [vmem:[%s169 + $0xd48] sm:$0xff]
      %v603 = vld [vmem:[%s169 + $0xd50] sm:$0xff]
      %v604 = vld [vmem:[%s169 + $0xd58] sm:$0xff]
      %v605 = vld [vmem:[%s169 + $0xd60] sm:$0xff]
      %v606 = vld [vmem:[%s169 + $0xd68] sm:$0xff]
      %v607 = vld [vmem:[%s169 + $0xd70] sm:$0xff]
      %v608 = vld [vmem:[%s169 + $0xd78] sm:$0xff]
      %v609 = vld [vmem:[%s169 + $0xd80] sm:$0xff]
      %v610 = vld [vmem:[%s169 + $0xd88] sm:$0xff]
      %v611 = vld [vmem:[%s169 + $0xd90] sm:$0xff]
      %v612 = vld [vmem:[%s169 + $0xd98] sm:$0xff]
      %v613 = vld [vmem:[%s169 + $0xda0] sm:$0xff]
      %v614 = vld [vmem:[%s169 + $0xda8] sm:$0xff]
      %v615 = vld [vmem:[%s169 + $0xdb0] sm:$0xff]
      %v616 = vld [vmem:[%s169 + $0xdb8] sm:$0xff]
      %v617 = vld [vmem:[%s169 + $0xdc0] sm:$0xff]
      %v618 = vld [vmem:[%s169 + $0xdc8] sm:$0xff]
      %v619 = vld [vmem:[%s169 + $0xdd0] sm:$0xff]
      %v620 = vld [vmem:[%s169 + $0xdd8] sm:$0xff]
      %v621 = vld [vmem:[%s169 + $0xde0] sm:$0xff]
      %v622 = vld [vmem:[%s169 + $0xde8] sm:$0xff]
      %v623 = vld [vmem:[%s169 + $0xdf0] sm:$0xff]
      %v624 = vld [vmem:[%s169 + $0xdf8] sm:$0xff]
      %v625 = vld [vmem:[%s169 + $0xe00] sm:$0xff]
      %v626 = vld [vmem:[%s169 + $0xe08] sm:$0xff]
      %v627 = vld [vmem:[%s169 + $0xe10] sm:$0xff]
      %v628 = vld [vmem:[%s169 + $0xe18] sm:$0xff]
      %v629 = vld [vmem:[%s169 + $0xe20] sm:$0xff]
      %v630 = vld [vmem:[%s169 + $0xe28] sm:$0xff]
      %v631 = vld [vmem:[%s169 + $0xe30] sm:$0xff]
      %v632 = vld [vmem:[%s169 + $0xe38] sm:$0xff]
      %v633 = vld [vmem:[%s169 + $0xe40] sm:$0xff]
      %v634 = vld [vmem:[%s169 + $0xe48] sm:$0xff]
      %v635 = vld [vmem:[%s169 + $0xe50] sm:$0xff]
      %v636 = vld [vmem:[%s169 + $0xe58] sm:$0xff]
      %v637 = vld [vmem:[%s169 + $0xe60] sm:$0xff]
      %v638 = vld [vmem:[%s169 + $0xe68] sm:$0xff]
      %v639 = vld [vmem:[%s169 + $0xe70] sm:$0xff]
      %v640 = vld [vmem:[%s169 + $0xe78] sm:$0xff]
      %v641 = vld [vmem:[%s169 + $0xe80] sm:$0xff]
      %v642 = vld [vmem:[%s169 + $0xe88] sm:$0xff]
      %v643 = vld [vmem:[%s169 + $0xe90] sm:$0xff]
      %v644 = vld [vmem:[%s169 + $0xe98] sm:$0xff]
      %v645 = vld [vmem:[%s169 + $0xea0] sm:$0xff]
      %v646 = vld [vmem:[%s169 + $0xea8] sm:$0xff]
      %v647 = vld [vmem:[%s169 + $0xeb0] sm:$0xff]
      %v648 = vld [vmem:[%s169 + $0xeb8] sm:$0xff]
      %v649 = vld [vmem:[%s169 + $0xec0] sm:$0xff]
      %v650 = vld [vmem:[%s169 + $0xec8] sm:$0xff]
      %v651 = vld [vmem:[%s169 + $0xed0] sm:$0xff]
      %v652 = vld [vmem:[%s169 + $0xed8] sm:$0xff]
      %v653 = vld [vmem:[%s169 + $0xee0] sm:$0xff]
      %v654 = vld [vmem:[%s169 + $0xee8] sm:$0xff]
      %v655 = vld [vmem:[%s169 + $0xef0] sm:$0xff]
      %v656 = vld [vmem:[%s169 + $0xef8] sm:$0xff]
      %v657 = vld [vmem:[%s169 + $0xf00] sm:$0xff]
      %v658 = vld [vmem:[%s169 + $0xf08] sm:$0xff]
      %v659 = vld [vmem:[%s169 + $0xf10] sm:$0xff]
      %v660 = vld [vmem:[%s169 + $0xf18] sm:$0xff]
      %v661 = vld [vmem:[%s169 + $0xf20] sm:$0xff]
      %v662 = vld [vmem:[%s169 + $0xf28] sm:$0xff]
      %v663 = vld [vmem:[%s169 + $0xf30] sm:$0xff]
      %v664 = vld [vmem:[%s169 + $0xf38] sm:$0xff]
      %v665 = vld [vmem:[%s169 + $0xf40] sm:$0xff]
      %v666 = vld [vmem:[%s169 + $0xf48] sm:$0xff]
      %v667 = vld [vmem:[%s169 + $0xf50] sm:$0xff]
      %v668 = vld [vmem:[%s169 + $0xf58] sm:$0xff]
      %v669 = vld [vmem:[%s169 + $0xf60] sm:$0xff]
      %v670 = vld [vmem:[%s169 + $0xf68] sm:$0xff]
      %v671 = vld [vmem:[%s169 + $0xf70] sm:$0xff]
      %v672 = vld [vmem:[%s169 + $0xf78] sm:$0xff]
      %v673 = vld [vmem:[%s169 + $0xf80] sm:$0xff]
      %v674 = vld [vmem:[%s169 + $0xf88] sm:$0xff]
      %v675 = vld [vmem:[%s169 + $0xf90] sm:$0xff]
      %v676 = vld [vmem:[%s169 + $0xf98] sm:$0xff]
      %v677 = vld [vmem:[%s169 + $0xfa0] sm:$0xff]
      %v678 = vld [vmem:[%s169 + $0xfa8] sm:$0xff]
      %v679 = vld [vmem:[%s169 + $0xfb0] sm:$0xff]
      %v680 = vld [vmem:[%s169 + $0xfb8] sm:$0xff]
      %v681 = vld [vmem:[%s169 + $0xfc0] sm:$0xff]
      %v682 = vld [vmem:[%s169 + $0xfc8] sm:$0xff]
      %v683 = vld [vmem:[%s169 + $0xfd0] sm:$0xff]
      %v684 = vld [vmem:[%s169 + $0xfd8] sm:$0xff]
      %v685 = vld [vmem:[%s169 + $0xfe0] sm:$0xff]
      %v686 = vld [vmem:[%s169 + $0xfe8] sm:$0xff]
      %v687 = vld [vmem:[%s169 + $0xff0] sm:$0xff]
      %v688 = vld [vmem:[%s169 + $0xff8] sm:$0xff]
      %v689 = vld [vmem:[%s169 + $0x1000] sm:$0xff]
      %v690 = vld [vmem:[%s169 + $0x1008] sm:$0xff]
      %v691 = vld [vmem:[%s169 + $0x1010] sm:$0xff]
      %v692 = vld [vmem:[%s169 + $0x1018] sm:$0xff]
      %v693 = vld [vmem:[%s169 + $0x1020] sm:$0xff]
      %v694 = vld [vmem:[%s169 + $0x1028] sm:$0xff]
      %v695 = vld [vmem:[%s169 + $0x1030] sm:$0xff]
      %v696 = vld [vmem:[%s169 + $0x1038] sm:$0xff]
      %v697 = vld [vmem:[%s169 + $0x1040] sm:$0xff]
      %v698 = vld [vmem:[%s169 + $0x1048] sm:$0xff]
      %v699 = vld [vmem:[%s169 + $0x1050] sm:$0xff]
      %v700 = vld [vmem:[%s169 + $0x1058] sm:$0xff]
      %v701 = vld [vmem:[%s169 + $0x1060] sm:$0xff]
      %v702 = vld [vmem:[%s169 + $0x1068] sm:$0xff]
      %v703 = vld [vmem:[%s169 + $0x1070] sm:$0xff]
      %v704 = vld [vmem:[%s169 + $0x1078] sm:$0xff]
      %v705 = vld [vmem:[%s169 + $0x1080] sm:$0xff]
      %v706 = vld [vmem:[%s169 + $0x1088] sm:$0xff]
      %v707 = vld [vmem:[%s169 + $0x1090] sm:$0xff]
      %v708 = vld [vmem:[%s169 + $0x1098] sm:$0xff]
      %v709 = vld [vmem:[%s169 + $0x10a0] sm:$0xff]
      %v710 = vld [vmem:[%s169 + $0x10a8] sm:$0xff]
      %v711 = vld [vmem:[%s169 + $0x10b0] sm:$0xff]
      %v712 = vld [vmem:[%s169 + $0x10b8] sm:$0xff]
      %v713 = vld [vmem:[%s169 + $0x10c0] sm:$0xff]
      %v714 = vld [vmem:[%s169 + $0x10c8] sm:$0xff]
      %v715 = vld [vmem:[%s169 + $0x10d0] sm:$0xff]
      %v716 = vld [vmem:[%s169 + $0x10d8] sm:$0xff]
      %v717 = vld [vmem:[%s169 + $0x10e0] sm:$0xff]
      %v718 = vld [vmem:[%s169 + $0x10e8] sm:$0xff]
      %v719 = vld [vmem:[%s169 + $0x10f0] sm:$0xff]
      %v720 = vld [vmem:[%s169 + $0x10f8] sm:$0xff]
      %v721 = vld [vmem:[%s169 + $0x1100] sm:$0xff]
      %v722 = vld [vmem:[%s169 + $0x1108] sm:$0xff]
      %v723 = vld [vmem:[%s169 + $0x1110] sm:$0xff]
      %v724 = vld [vmem:[%s169 + $0x1118] sm:$0xff]
      %v725 = vld [vmem:[%s169 + $0x1120] sm:$0xff]
      %v726 = vld [vmem:[%s169 + $0x1128] sm:$0xff]
      %v727 = vld [vmem:[%s169 + $0x1130] sm:$0xff]
      %v728 = vld [vmem:[%s169 + $0x1138] sm:$0xff]
      %v729 = vld [vmem:[%s169 + $0x1140] sm:$0xff]
      %v730 = vld [vmem:[%s169 + $0x1148] sm:$0xff]
      %v731 = vld [vmem:[%s169 + $0x1150] sm:$0xff]
      %v732 = vld [vmem:[%s169 + $0x1158] sm:$0xff]
      %v733 = vld [vmem:[%s169 + $0x1160] sm:$0xff]
      %v734 = vld [vmem:[%s169 + $0x1168] sm:$0xff]
      %v735 = vld [vmem:[%s169 + $0x1170] sm:$0xff]
      %v736 = vld [vmem:[%s169 + $0x1178] sm:$0xff]
      %v737 = vld [vmem:[%s169 + $0x1180] sm:$0xff]
      %v738 = vld [vmem:[%s169 + $0x1188] sm:$0xff]
      %v739 = vld [vmem:[%s169 + $0x1190] sm:$0xff]
      %v740 = vld [vmem:[%s169 + $0x1198] sm:$0xff]
      %v741 = vld [vmem:[%s169 + $0x11a0] sm:$0xff]
      %v742 = vld [vmem:[%s169 + $0x11a8] sm:$0xff]
      %v743 = vld [vmem:[%s169 + $0x11b0] sm:$0xff]
      %v744 = vld [vmem:[%s169 + $0x11b8] sm:$0xff]
      %v745 = vld [vmem:[%s169 + $0x11c0] sm:$0xff]
      %v746 = vld [vmem:[%s169 + $0x11c8] sm:$0xff]
      %v747 = vld [vmem:[%s169 + $0x11d0] sm:$0xff]
      %v748 = vld [vmem:[%s169 + $0x11d8] sm:$0xff]
      %v749 = vld [vmem:[%s169 + $0x11e0] sm:$0xff]
      %v750 = vld [vmem:[%s169 + $0x11e8] sm:$0xff]
      %v751 = vld [vmem:[%s169 + $0x11f0] sm:$0xff]
      %v752 = vld [vmem:[%s169 + $0x11f8] sm:$0xff]
      %v753 = vld [vmem:[%s169 + $0x1200] sm:$0xff]
      %v754 = vld [vmem:[%s169 + $0x1208] sm:$0xff]
      %v755 = vld [vmem:[%s169 + $0x1210] sm:$0xff]
      %v756 = vld [vmem:[%s169 + $0x1218] sm:$0xff]
      %v757 = vld [vmem:[%s169 + $0x1220] sm:$0xff]
      %v758 = vld [vmem:[%s169 + $0x1228] sm:$0xff]
      %v759 = vld [vmem:[%s169 + $0x1230] sm:$0xff]
      %v760 = vld [vmem:[%s169 + $0x1238] sm:$0xff]
      %v761 = vld [vmem:[%s169 + $0x1240] sm:$0xff]
      %v762 = vld [vmem:[%s169 + $0x1248] sm:$0xff]
      %v763 = vld [vmem:[%s169 + $0x1250] sm:$0xff]
      %v764 = vld [vmem:[%s169 + $0x1258] sm:$0xff]
      %v765 = vld [vmem:[%s169 + $0x1260] sm:$0xff]
      %v766 = vld [vmem:[%s169 + $0x1268] sm:$0xff]
      %v767 = vld [vmem:[%s169 + $0x1270] sm:$0xff]
      %v768 = vld [vmem:[%s169 + $0x1278] sm:$0xff]
      %v769 = vld [vmem:[%s169 + $0x1280] sm:$0xff]
      %v770 = vld [vmem:[%s169 + $0x1288] sm:$0xff]
      %v771 = vld [vmem:[%s169 + $0x1290] sm:$0xff]
      %v772 = vld [vmem:[%s169 + $0x1298] sm:$0xff]
      %v773 = vld [vmem:[%s169 + $0x12a0] sm:$0xff]
      %v774 = vld [vmem:[%s169 + $0x12a8] sm:$0xff]
      %v775 = vld [vmem:[%s169 + $0x12b0] sm:$0xff]
      %v776 = vld [vmem:[%s169 + $0x12b8] sm:$0xff]
      %v777 = vld [vmem:[%s169 + $0x12c0] sm:$0xff]
      %v778 = vld [vmem:[%s169 + $0x12c8] sm:$0xff]
      %v779 = vld [vmem:[%s169 + $0x12d0] sm:$0xff]
      %v780 = vld [vmem:[%s169 + $0x12d8] sm:$0xff]
      %v781 = vld [vmem:[%s169 + $0x12e0] sm:$0xff]
      %v782 = vld [vmem:[%s169 + $0x12e8] sm:$0xff]
      %v783 = vld [vmem:[%s169 + $0x12f0] sm:$0xff]
      %v784 = vld [vmem:[%s169 + $0x12f8] sm:$0xff]
      %v785 = vld [vmem:[%s169 + $0x1300] sm:$0xff]
      %v786 = vld [vmem:[%s169 + $0x1308] sm:$0xff]
      %v787 = vld [vmem:[%s169 + $0x1310] sm:$0xff]
      %v788 = vld [vmem:[%s169 + $0x1318] sm:$0xff]
      %v789 = vld [vmem:[%s169 + $0x1320] sm:$0xff]
      %v790 = vld [vmem:[%s169 + $0x1328] sm:$0xff]
      %v791 = vld [vmem:[%s169 + $0x1330] sm:$0xff]
      %v792 = vld [vmem:[%s169 + $0x1338] sm:$0xff]
      %v793 = vld [vmem:[%s169 + $0x1340] sm:$0xff]
      %v794 = vld [vmem:[%s169 + $0x1348] sm:$0xff]
      %v795 = vld [vmem:[%s169 + $0x1350] sm:$0xff]
      %v796 = vld [vmem:[%s169 + $0x1358] sm:$0xff]
      %v797 = vld [vmem:[%s169 + $0x1360] sm:$0xff]
      %v798 = vld [vmem:[%s169 + $0x1368] sm:$0xff]
      %v799 = vld [vmem:[%s169 + $0x1370] sm:$0xff]
      %v800 = vld [vmem:[%s169 + $0x1378] sm:$0xff]
      %v801 = vld [vmem:[%s169 + $0x1380] sm:$0xff]
      %v802 = vld [vmem:[%s169 + $0x1388] sm:$0xff]
      %v803 = vld [vmem:[%s169 + $0x1390] sm:$0xff]
      %v804 = vld [vmem:[%s169 + $0x1398] sm:$0xff]
      %v805 = vld [vmem:[%s169 + $0x13a0] sm:$0xff]
      %v806 = vld [vmem:[%s169 + $0x13a8] sm:$0xff]
      %v807 = vld [vmem:[%s169 + $0x13b0] sm:$0xff]
      %v808 = vld [vmem:[%s169 + $0x13b8] sm:$0xff]
      %v809 = vld [vmem:[%s169 + $0x13c0] sm:$0xff]
      %v810 = vld [vmem:[%s169 + $0x13c8] sm:$0xff]
      %v811 = vld [vmem:[%s169 + $0x13d0] sm:$0xff]
      %v812 = vld [vmem:[%s169 + $0x13d8] sm:$0xff]
      %v813 = vld [vmem:[%s169 + $0x13e0] sm:$0xff]
      %v814 = vld [vmem:[%s169 + $0x13e8] sm:$0xff]
      %v815 = vld [vmem:[%s169 + $0x13f0] sm:$0xff]
      %v816 = vld [vmem:[%s169 + $0x13f8] sm:$0xff]
      %v817 = vld [vmem:[%s169 + $0x1400] sm:$0xff]
      %v818 = vld [vmem:[%s169 + $0x1408] sm:$0xff]
      %v819 = vld [vmem:[%s169 + $0x1410] sm:$0xff]
      %v820 = vld [vmem:[%s169 + $0x1418] sm:$0xff]
      %v821 = vld [vmem:[%s169 + $0x1420] sm:$0xff]
      %v822 = vld [vmem:[%s169 + $0x1428] sm:$0xff]
      %v823 = vld [vmem:[%s169 + $0x1430] sm:$0xff]
      %v824 = vld [vmem:[%s169 + $0x1438] sm:$0xff]
      %v825 = vld [vmem:[%s169 + $0x1440] sm:$0xff]
      %v826 = vld [vmem:[%s169 + $0x1448] sm:$0xff]
      %v827 = vld [vmem:[%s169 + $0x1450] sm:$0xff]
      %v828 = vld [vmem:[%s169 + $0x1458] sm:$0xff]
      %v829 = vld [vmem:[%s169 + $0x1460] sm:$0xff]
      %v830 = vld [vmem:[%s169 + $0x1468] sm:$0xff]
      %v831 = vld [vmem:[%s169 + $0x1470] sm:$0xff]
      %v832 = vld [vmem:[%s169 + $0x1478] sm:$0xff]
      %v833 = vld [vmem:[%s169 + $0x1480] sm:$0xff]
      %v834 = vld [vmem:[%s169 + $0x1488] sm:$0xff]
      %v835 = vld [vmem:[%s169 + $0x1490] sm:$0xff]
      %v836 = vld [vmem:[%s169 + $0x1498] sm:$0xff]
      %v837 = vld [vmem:[%s169 + $0x14a0] sm:$0xff]
      %v838 = vld [vmem:[%s169 + $0x14a8] sm:$0xff]
      %v839 = vld [vmem:[%s169 + $0x14b0] sm:$0xff]
      %v840 = vld [vmem:[%s169 + $0x14b8] sm:$0xff]
      %v841 = vld [vmem:[%s169 + $0x14c0] sm:$0xff]
      %v842 = vld [vmem:[%s169 + $0x14c8] sm:$0xff]
      %v843 = vld [vmem:[%s169 + $0x14d0] sm:$0xff]
      %v844 = vld [vmem:[%s169 + $0x14d8] sm:$0xff]
      %v845 = vld [vmem:[%s169 + $0x14e0] sm:$0xff]
      %v846 = vld [vmem:[%s169 + $0x14e8] sm:$0xff]
      %v847 = vld [vmem:[%s169 + $0x14f0] sm:$0xff]
      %v848 = vld [vmem:[%s169 + $0x14f8] sm:$0xff]
      %v849 = vld [vmem:[%s169 + $0x1500] sm:$0xff]
      %v850 = vld [vmem:[%s169 + $0x1508] sm:$0xff]
      %v851 = vld [vmem:[%s169 + $0x1510] sm:$0xff]
      %v852 = vld [vmem:[%s169 + $0x1518] sm:$0xff]
      %v853 = vld [vmem:[%s169 + $0x1520] sm:$0xff]
      %v854 = vld [vmem:[%s169 + $0x1528] sm:$0xff]
      %v855 = vld [vmem:[%s169 + $0x1530] sm:$0xff]
      %v856 = vld [vmem:[%s169 + $0x1538] sm:$0xff]
      %v857 = vld [vmem:[%s169 + $0x1540] sm:$0xff]
      %v858 = vld [vmem:[%s169 + $0x1548] sm:$0xff]
      %v859 = vld [vmem:[%s169 + $0x1550] sm:$0xff]
      %v860 = vld [vmem:[%s169 + $0x1558] sm:$0xff]
      %v861 = vld [vmem:[%s169 + $0x1560] sm:$0xff]
      %v862 = vld [vmem:[%s169 + $0x1568] sm:$0xff]
      %v863 = vld [vmem:[%s169 + $0x1570] sm:$0xff]
      %v864 = vld [vmem:[%s169 + $0x1578] sm:$0xff]
      %v865 = vld [vmem:[%s169 + $0x1580] sm:$0xff]
      %v866 = vld [vmem:[%s169 + $0x1588] sm:$0xff]
      %v867 = vld [vmem:[%s169 + $0x1590] sm:$0xff]
      %v868 = vld [vmem:[%s169 + $0x1598] sm:$0xff]
      %v869 = vld [vmem:[%s169 + $0x15a0] sm:$0xff]
      %v870 = vld [vmem:[%s169 + $0x15a8] sm:$0xff]
      %v871 = vld [vmem:[%s169 + $0x15b0] sm:$0xff]
      %v872 = vld [vmem:[%s169 + $0x15b8] sm:$0xff]
      %v873 = vld [vmem:[%s169 + $0x15c0] sm:$0xff]
      %v874 = vld [vmem:[%s169 + $0x15c8] sm:$0xff]
      %v875 = vld [vmem:[%s169 + $0x15d0] sm:$0xff]
      %v876 = vld [vmem:[%s169 + $0x15d8] sm:$0xff]
      %v877 = vld [vmem:[%s169 + $0x15e0] sm:$0xff]
      %v878 = vld [vmem:[%s169 + $0x15e8] sm:$0xff]
      %v879 = vld [vmem:[%s169 + $0x15f0] sm:$0xff]
      %v880 = vld [vmem:[%s169 + $0x15f8] sm:$0xff]
      %v881 = vld [vmem:[%s169 + $0x1600] sm:$0xff]
      %v882 = vld [vmem:[%s169 + $0x1608] sm:$0xff]
      %v883 = vld [vmem:[%s169 + $0x1610] sm:$0xff]
      %v884 = vld [vmem:[%s169 + $0x1618] sm:$0xff]
      %v885 = vld [vmem:[%s169 + $0x1620] sm:$0xff]
      %v886 = vld [vmem:[%s169 + $0x1628] sm:$0xff]
      %v887 = vld [vmem:[%s169 + $0x1630] sm:$0xff]
      %v888 = vld [vmem:[%s169 + $0x1638] sm:$0xff]
      %v889 = vld [vmem:[%s169 + $0x1640] sm:$0xff]
      %v890 = vld [vmem:[%s169 + $0x1648] sm:$0xff]
      %v891 = vld [vmem:[%s169 + $0x1650] sm:$0xff]
      %v892 = vld [vmem:[%s169 + $0x1658] sm:$0xff]
      %v893 = vld [vmem:[%s169 + $0x1660] sm:$0xff]
      %v894 = vld [vmem:[%s169 + $0x1668] sm:$0xff]
      %v895 = vld [vmem:[%s169 + $0x1670] sm:$0xff]
      %v896 = vld [vmem:[%s169 + $0x1678] sm:$0xff]
      %v897 = vld [vmem:[%s169 + $0x1680] sm:$0xff]
      %v898 = vld [vmem:[%s169 + $0x1688] sm:$0xff]
      %v899 = vld [vmem:[%s169 + $0x1690] sm:$0xff]
      %v900 = vld [vmem:[%s169 + $0x1698] sm:$0xff]
      %v901 = vld [vmem:[%s169 + $0x16a0] sm:$0xff]
      %v902 = vld [vmem:[%s169 + $0x16a8] sm:$0xff]
      %v903 = vld [vmem:[%s169 + $0x16b0] sm:$0xff]
      %v904 = vld [vmem:[%s169 + $0x16b8] sm:$0xff]
      %v905 = vld [vmem:[%s169 + $0x16c0] sm:$0xff]
      %v906 = vld [vmem:[%s169 + $0x16c8] sm:$0xff]
      %v907 = vld [vmem:[%s169 + $0x16d0] sm:$0xff]
      %v908 = vld [vmem:[%s169 + $0x16d8] sm:$0xff]
      %v909 = vld [vmem:[%s169 + $0x16e0] sm:$0xff]
      %v910 = vld [vmem:[%s169 + $0x16e8] sm:$0xff]
      %v911 = vld [vmem:[%s169 + $0x16f0] sm:$0xff]
      %v912 = vld [vmem:[%s169 + $0x16f8] sm:$0xff]
      %v913 = vld [vmem:[%s169 + $0x1700] sm:$0xff]
      %v914 = vld [vmem:[%s169 + $0x1708] sm:$0xff]
      %v915 = vld [vmem:[%s169 + $0x1710] sm:$0xff]
      %v916 = vld [vmem:[%s169 + $0x1718] sm:$0xff]
      %v917 = vld [vmem:[%s169 + $0x1720] sm:$0xff]
      %v918 = vld [vmem:[%s169 + $0x1728] sm:$0xff]
      %v919 = vld [vmem:[%s169 + $0x1730] sm:$0xff]
      %v920 = vld [vmem:[%s169 + $0x1738] sm:$0xff]
      %v921 = vld [vmem:[%s169 + $0x1740] sm:$0xff]
      %v922 = vld [vmem:[%s169 + $0x1748] sm:$0xff]
      %v923 = vld [vmem:[%s169 + $0x1750] sm:$0xff]
      %v924 = vld [vmem:[%s169 + $0x1758] sm:$0xff]
      %v925 = vld [vmem:[%s169 + $0x1760] sm:$0xff]
      %v926 = vld [vmem:[%s169 + $0x1768] sm:$0xff]
      %v927 = vld [vmem:[%s169 + $0x1770] sm:$0xff]
      %v928 = vld [vmem:[%s169 + $0x1778] sm:$0xff]
      %v929 = vld [vmem:[%s169 + $0x1780] sm:$0xff]
      %v930 = vld [vmem:[%s169 + $0x1788] sm:$0xff]
      %v931 = vld [vmem:[%s169 + $0x1790] sm:$0xff]
      %v932 = vld [vmem:[%s169 + $0x1798] sm:$0xff]
      %v933 = vld [vmem:[%s169 + $0x17a0] sm:$0xff]
      %v934 = vld [vmem:[%s169 + $0x17a8] sm:$0xff]
      %v935 = vld [vmem:[%s169 + $0x17b0] sm:$0xff]
      %v936 = vld [vmem:[%s169 + $0x17b8] sm:$0xff]
      %v937 = vld [vmem:[%s169 + $0x17c0] sm:$0xff]
      %v938 = vld [vmem:[%s169 + $0x17c8] sm:$0xff]
      %v939 = vld [vmem:[%s169 + $0x17d0] sm:$0xff]
      %v940 = vld [vmem:[%s169 + $0x17d8] sm:$0xff]
      %v941 = vld [vmem:[%s169 + $0x17e0] sm:$0xff]
      %v942 = vld [vmem:[%s169 + $0x17e8] sm:$0xff]
      %v943 = vld [vmem:[%s169 + $0x17f0] sm:$0xff]
      %v944 = vld [vmem:[%s169 + $0x17f8] sm:$0xff]
      %v945 = vld [vmem:[%s169 + $0x1800] sm:$0xff]
      %v946 = vld [vmem:[%s169 + $0x1808] sm:$0xff]
      %v947 = vld [vmem:[%s169 + $0x1810] sm:$0xff]
      %v948 = vld [vmem:[%s169 + $0x1818] sm:$0xff]
      %v949 = vld [vmem:[%s169 + $0x1820] sm:$0xff]
      %v950 = vld [vmem:[%s169 + $0x1828] sm:$0xff]
      %v951 = vld [vmem:[%s169 + $0x1830] sm:$0xff]
      %v952 = vld [vmem:[%s169 + $0x1838] sm:$0xff]
      %v953 = vld [vmem:[%s169 + $0x1840] sm:$0xff]
      %v954 = vld [vmem:[%s169 + $0x1848] sm:$0xff]
      %v955 = vld [vmem:[%s169 + $0x1850] sm:$0xff]
      %v956 = vld [vmem:[%s169 + $0x1858] sm:$0xff]
      %v957 = vld [vmem:[%s169 + $0x1860] sm:$0xff]
      %v958 = vld [vmem:[%s169 + $0x1868] sm:$0xff]
      %v959 = vld [vmem:[%s169 + $0x1870] sm:$0xff]
      %v960 = vld [vmem:[%s169 + $0x1878] sm:$0xff]
      %v961 = vld [vmem:[%s169 + $0x1880] sm:$0xff]
      %v962 = vld [vmem:[%s169 + $0x1888] sm:$0xff]
      %v963 = vld [vmem:[%s169 + $0x1890] sm:$0xff]
      %v964 = vld [vmem:[%s169 + $0x1898] sm:$0xff]
      %v965 = vld [vmem:[%s169 + $0x18a0] sm:$0xff]
      %v966 = vld [vmem:[%s169 + $0x18a8] sm:$0xff]
      %v967 = vld [vmem:[%s169 + $0x18b0] sm:$0xff]
      %v968 = vld [vmem:[%s169 + $0x18b8] sm:$0xff]
      %v969 = vld [vmem:[%s169 + $0x18c0] sm:$0xff]
      %v970 = vld [vmem:[%s169 + $0x18c8] sm:$0xff]
      %v971 = vld [vmem:[%s169 + $0x18d0] sm:$0xff]
      %v972 = vld [vmem:[%s169 + $0x18d8] sm:$0xff]
      %v973 = vld [vmem:[%s169 + $0x18e0] sm:$0xff]
      %v974 = vld [vmem:[%s169 + $0x18e8] sm:$0xff]
      %v975 = vld [vmem:[%s169 + $0x18f0] sm:$0xff]
      %v976 = vld [vmem:[%s169 + $0x18f8] sm:$0xff]
      %v977 = vld [vmem:[%s169 + $0x1900] sm:$0xff]
      %v978 = vld [vmem:[%s169 + $0x1908] sm:$0xff]
      %v979 = vld [vmem:[%s169 + $0x1910] sm:$0xff]
      %v980 = vld [vmem:[%s169 + $0x1918] sm:$0xff]
      %v981 = vld [vmem:[%s169 + $0x1920] sm:$0xff]
      %v982 = vld [vmem:[%s169 + $0x1928] sm:$0xff]
      %v983 = vld [vmem:[%s169 + $0x1930] sm:$0xff]
      %v984 = vld [vmem:[%s169 + $0x1938] sm:$0xff]
      %v985 = vld [vmem:[%s169 + $0x1940] sm:$0xff]
      %v986 = vld [vmem:[%s169 + $0x1948] sm:$0xff]
      %v987 = vld [vmem:[%s169 + $0x1950] sm:$0xff]
      %v988 = vld [vmem:[%s169 + $0x1958] sm:$0xff]
      %v989 = vld [vmem:[%s169 + $0x1960] sm:$0xff]
      %v990 = vld [vmem:[%s169 + $0x1968] sm:$0xff]
      %v991 = vld [vmem:[%s169 + $0x1970] sm:$0xff]
      %v992 = vld [vmem:[%s169 + $0x1978] sm:$0xff]
      %v993 = vld [vmem:[%s169 + $0x1980] sm:$0xff]
      %v994 = vld [vmem:[%s169 + $0x1988] sm:$0xff]
      %v995 = vld [vmem:[%s169 + $0x1990] sm:$0xff]
      %v996 = vld [vmem:[%s169 + $0x1998] sm:$0xff]
      %v997 = vld [vmem:[%s169 + $0x19a0] sm:$0xff]
      %v998 = vld [vmem:[%s169 + $0x19a8] sm:$0xff]
      %v999 = vld [vmem:[%s169 + $0x19b0] sm:$0xff]
      %v1000 = vld [vmem:[%s169 + $0x19b8] sm:$0xff]
      %v1001 = vld [vmem:[%s169 + $0x19c0] sm:$0xff]
      %v1002 = vld [vmem:[%s169 + $0x19c8] sm:$0xff]
      %v1003 = vld [vmem:[%s169 + $0x19d0] sm:$0xff]
      %v1004 = vld [vmem:[%s169 + $0x19d8] sm:$0xff]
      %v1005 = vld [vmem:[%s169 + $0x19e0] sm:$0xff]
      %v1006 = vld [vmem:[%s169 + $0x19e8] sm:$0xff]
      %v1007 = vld [vmem:[%s169 + $0x19f0] sm:$0xff]
      %v1008 = vld [vmem:[%s169 + $0x19f8] sm:$0xff]
      %v1009 = vld [vmem:[%s169 + $0x1a00] sm:$0xff]
      %v1010 = vld [vmem:[%s169 + $0x1a08] sm:$0xff]
      %v1011 = vld [vmem:[%s169 + $0x1a10] sm:$0xff]
      %v1012 = vld [vmem:[%s169 + $0x1a18] sm:$0xff]
      %v1013 = vld [vmem:[%s169 + $0x1a20] sm:$0xff]
      %v1014 = vld [vmem:[%s169 + $0x1a28] sm:$0xff]
      %v1015 = vld [vmem:[%s169 + $0x1a30] sm:$0xff]
      %v1016 = vld [vmem:[%s169 + $0x1a38] sm:$0xff]
      %v1017 = vld [vmem:[%s169 + $0x1a40] sm:$0xff]
      %v1018 = vld [vmem:[%s169 + $0x1a48] sm:$0xff]
      %v1019 = vld [vmem:[%s169 + $0x1a50] sm:$0xff]
      %v1020 = vld [vmem:[%s169 + $0x1a58] sm:$0xff]
      %v1021 = vld [vmem:[%s169 + $0x1a60] sm:$0xff]
      %v1022 = vld [vmem:[%s169 + $0x1a68] sm:$0xff]
      %v1023 = vld [vmem:[%s169 + $0x1a70] sm:$0xff]
      %v1024 = vld [vmem:[%s169 + $0x1a78] sm:$0xff]
      %v1025 = vld [vmem:[%s169 + $0x1a80] sm:$0xff]
      %v1026 = vld [vmem:[%s169 + $0x1a88] sm:$0xff]
      %v1027 = vld [vmem:[%s169 + $0x1a90] sm:$0xff]
      %v1028 = vld [vmem:[%s169 + $0x1a98] sm:$0xff]
      %v1029 = vld [vmem:[%s169 + $0x1aa0] sm:$0xff]
      %v1030 = vld [vmem:[%s169 + $0x1aa8] sm:$0xff]
      %v1031 = vld [vmem:[%s169 + $0x1ab0] sm:$0xff]
      %v1032 = vld [vmem:[%s169 + $0x1ab8] sm:$0xff]
      %v1033 = vld [vmem:[%s169 + $0x1ac0] sm:$0xff]
      %v1034 = vld [vmem:[%s169 + $0x1ac8] sm:$0xff]
      %v1035 = vld [vmem:[%s169 + $0x1ad0] sm:$0xff]
      %v1036 = vld [vmem:[%s169 + $0x1ad8] sm:$0xff]
      %v1037 = vld [vmem:[%s169 + $0x1ae0] sm:$0xff]
      %v1038 = vld [vmem:[%s169 + $0x1ae8] sm:$0xff]
      %v1039 = vld [vmem:[%s169 + $0x1af0] sm:$0xff]
      %v1040 = vld [vmem:[%s169 + $0x1af8] sm:$0xff]
      %v1041 = vld [vmem:[%s169 + $0x1b00] sm:$0xff]
      %v1042 = vld [vmem:[%s169 + $0x1b08] sm:$0xff]
      %v1043 = vld [vmem:[%s169 + $0x1b10] sm:$0xff]
      %v1044 = vld [vmem:[%s169 + $0x1b18] sm:$0xff]
      %v1045 = vld [vmem:[%s169 + $0x1b20] sm:$0xff]
      %v1046 = vld [vmem:[%s169 + $0x1b28] sm:$0xff]
      %v1047 = vld [vmem:[%s169 + $0x1b30] sm:$0xff]
      %v1048 = vld [vmem:[%s169 + $0x1b38] sm:$0xff]
      %v1049 = vld [vmem:[%s169 + $0x1b40] sm:$0xff]
      %v1050 = vld [vmem:[%s169 + $0x1b48] sm:$0xff]
      %v1051 = vld [vmem:[%s169 + $0x1b50] sm:$0xff]
      %v1052 = vld [vmem:[%s169 + $0x1b58] sm:$0xff]
      %v1053 = vld [vmem:[%s169 + $0x1b60] sm:$0xff]
      %v1054 = vld [vmem:[%s169 + $0x1b68] sm:$0xff]
      %v1055 = vld [vmem:[%s169 + $0x1b70] sm:$0xff]
      %v1056 = vld [vmem:[%s169 + $0x1b78] sm:$0xff]
      %v1057 = vld [vmem:[%s169 + $0x1b80] sm:$0xff]
      %v1058 = vld [vmem:[%s169 + $0x1b88] sm:$0xff]
      %v1059 = vld [vmem:[%s169 + $0x1b90] sm:$0xff]
      %v1060 = vld [vmem:[%s169 + $0x1b98] sm:$0xff]
      %v1061 = vld [vmem:[%s169 + $0x1ba0] sm:$0xff]
      %v1062 = vld [vmem:[%s169 + $0x1ba8] sm:$0xff]
      %v1063 = vld [vmem:[%s169 + $0x1bb0] sm:$0xff]
      %v1064 = vld [vmem:[%s169 + $0x1bb8] sm:$0xff]
      %v1065 = vld [vmem:[%s169 + $0x1bc0] sm:$0xff]
      %v1066 = vld [vmem:[%s169 + $0x1bc8] sm:$0xff]
      %v1067 = vld [vmem:[%s169 + $0x1bd0] sm:$0xff]
      %v1068 = vld [vmem:[%s169 + $0x1bd8] sm:$0xff]
      %v1069 = vld [vmem:[%s169 + $0x1be0] sm:$0xff]
      %v1070 = vld [vmem:[%s169 + $0x1be8] sm:$0xff]
      %v1071 = vld [vmem:[%s169 + $0x1bf0] sm:$0xff]
      %v1072 = vld [vmem:[%s169 + $0x1bf8] sm:$0xff]
      %v1073 = vld [vmem:[%s169 + $0x1c00] sm:$0xff]
      %v1074 = vld [vmem:[%s169 + $0x1c08] sm:$0xff]
      %v1075 = vld [vmem:[%s169 + $0x1c10] sm:$0xff]
      %v1076 = vld [vmem:[%s169 + $0x1c18] sm:$0xff]
      %v1077 = vld [vmem:[%s169 + $0x1c20] sm:$0xff]
      %v1078 = vld [vmem:[%s169 + $0x1c28] sm:$0xff]
      %v1079 = vld [vmem:[%s169 + $0x1c30] sm:$0xff]
      %v1080 = vld [vmem:[%s169 + $0x1c38] sm:$0xff]
      %v1081 = vld [vmem:[%s169 + $0x1c40] sm:$0xff]
      %v1082 = vld [vmem:[%s169 + $0x1c48] sm:$0xff]
      %v1083 = vld [vmem:[%s169 + $0x1c50] sm:$0xff]
      %v1084 = vld [vmem:[%s169 + $0x1c58] sm:$0xff]
      %v1085 = vld [vmem:[%s169 + $0x1c60] sm:$0xff]
      %v1086 = vld [vmem:[%s169 + $0x1c68] sm:$0xff]
      %v1087 = vld [vmem:[%s169 + $0x1c70] sm:$0xff]
      %v1088 = vld [vmem:[%s169 + $0x1c78] sm:$0xff]
      %v1089 = vld [vmem:[%s169 + $0x1c80] sm:$0xff]
      %v1090 = vld [vmem:[%s169 + $0x1c88] sm:$0xff]
      %v1091 = vld [vmem:[%s169 + $0x1c90] sm:$0xff]
      %v1092 = vld [vmem:[%s169 + $0x1c98] sm:$0xff]
      %v1093 = vld [vmem:[%s169 + $0x1ca0] sm:$0xff]
      %v1094 = vld [vmem:[%s169 + $0x1ca8] sm:$0xff]
      %v1095 = vld [vmem:[%s169 + $0x1cb0] sm:$0xff]
      %v1096 = vld [vmem:[%s169 + $0x1cb8] sm:$0xff]
      %v1097 = vld [vmem:[%s169 + $0x1cc0] sm:$0xff]
      %v1098 = vld [vmem:[%s169 + $0x1cc8] sm:$0xff]
      %v1099 = vld [vmem:[%s169 + $0x1cd0] sm:$0xff]
      %v1100 = vld [vmem:[%s169 + $0x1cd8] sm:$0xff]
      %v1101 = vld [vmem:[%s169 + $0x1ce0] sm:$0xff]
      %v1102 = vld [vmem:[%s169 + $0x1ce8] sm:$0xff]
      %v1103 = vld [vmem:[%s169 + $0x1cf0] sm:$0xff]
      %v1104 = vld [vmem:[%s169 + $0x1cf8] sm:$0xff]
      %v1105 = vld [vmem:[%s169 + $0x1d00] sm:$0xff]
      %v1106 = vld [vmem:[%s169 + $0x1d08] sm:$0xff]
      %v1107 = vld [vmem:[%s169 + $0x1d10] sm:$0xff]
      %v1108 = vld [vmem:[%s169 + $0x1d18] sm:$0xff]
      %v1109 = vld [vmem:[%s169 + $0x1d20] sm:$0xff]
      %v1110 = vld [vmem:[%s169 + $0x1d28] sm:$0xff]
      %v1111 = vld [vmem:[%s169 + $0x1d30] sm:$0xff]
      %v1112 = vld [vmem:[%s169 + $0x1d38] sm:$0xff]
      %v1113 = vld [vmem:[%s169 + $0x1d40] sm:$0xff]
      %v1114 = vld [vmem:[%s169 + $0x1d48] sm:$0xff]
      %v1115 = vld [vmem:[%s169 + $0x1d50] sm:$0xff]
      %v1116 = vld [vmem:[%s169 + $0x1d58] sm:$0xff]
      %v1117 = vld [vmem:[%s169 + $0x1d60] sm:$0xff]
      %v1118 = vld [vmem:[%s169 + $0x1d68] sm:$0xff]
      %v1119 = vld [vmem:[%s169 + $0x1d70] sm:$0xff]
      %v1120 = vld [vmem:[%s169 + $0x1d78] sm:$0xff]
      %v1121 = vld [vmem:[%s169 + $0x1d80] sm:$0xff]
      %v1122 = vld [vmem:[%s169 + $0x1d88] sm:$0xff]
      %v1123 = vld [vmem:[%s169 + $0x1d90] sm:$0xff]
      %v1124 = vld [vmem:[%s169 + $0x1d98] sm:$0xff]
      %v1125 = vld [vmem:[%s169 + $0x1da0] sm:$0xff]
      %v1126 = vld [vmem:[%s169 + $0x1da8] sm:$0xff]
      %v1127 = vld [vmem:[%s169 + $0x1db0] sm:$0xff]
      %v1128 = vld [vmem:[%s169 + $0x1db8] sm:$0xff]
      %v1129 = vld [vmem:[%s169 + $0x1dc0] sm:$0xff]
      %v1130 = vld [vmem:[%s169 + $0x1dc8] sm:$0xff]
      %v1131 = vld [vmem:[%s169 + $0x1dd0] sm:$0xff]
      %v1132 = vld [vmem:[%s169 + $0x1dd8] sm:$0xff]
      %v1133 = vld [vmem:[%s169 + $0x1de0] sm:$0xff]
      %v1134 = vld [vmem:[%s169 + $0x1de8] sm:$0xff]
      %v1135 = vld [vmem:[%s169 + $0x1df0] sm:$0xff]
      %v1136 = vld [vmem:[%s169 + $0x1df8] sm:$0xff]
      %v1137 = vld [vmem:[%s169 + $0x1e00] sm:$0xff]
      %v1138 = vld [vmem:[%s169 + $0x1e08] sm:$0xff]
      %v1139 = vld [vmem:[%s169 + $0x1e10] sm:$0xff]
      %v1140 = vld [vmem:[%s169 + $0x1e18] sm:$0xff]
      %v1141 = vld [vmem:[%s169 + $0x1e20] sm:$0xff]
      %v1142 = vld [vmem:[%s169 + $0x1e28] sm:$0xff]
      %v1143 = vld [vmem:[%s169 + $0x1e30] sm:$0xff]
      %v1144 = vld [vmem:[%s169 + $0x1e38] sm:$0xff]
      %v1145 = vld [vmem:[%s169 + $0x1e40] sm:$0xff]
      %v1146 = vld [vmem:[%s169 + $0x1e48] sm:$0xff]
      %v1147 = vld [vmem:[%s169 + $0x1e50] sm:$0xff]
      %v1148 = vld [vmem:[%s169 + $0x1e58] sm:$0xff]
      %v1149 = vld [vmem:[%s169 + $0x1e60] sm:$0xff]
      %v1150 = vld [vmem:[%s169 + $0x1e68] sm:$0xff]
      %v1151 = vld [vmem:[%s169 + $0x1e70] sm:$0xff]
      %v1152 = vld [vmem:[%s169 + $0x1e78] sm:$0xff]
      %v1153 = vld [vmem:[%s169 + $0x1e80] sm:$0xff]
      %v1154 = vld [vmem:[%s169 + $0x1e88] sm:$0xff]
      %v1155 = vld [vmem:[%s169 + $0x1e90] sm:$0xff]
      %v1156 = vld [vmem:[%s169 + $0x1e98] sm:$0xff]
      %v1157 = vld [vmem:[%s169 + $0x1ea0] sm:$0xff]
      %v1158 = vld [vmem:[%s169 + $0x1ea8] sm:$0xff]
      %v1159 = vld [vmem:[%s169 + $0x1eb0] sm:$0xff]
      %v1160 = vld [vmem:[%s169 + $0x1eb8] sm:$0xff]
      %v1161 = vld [vmem:[%s169 + $0x1ec0] sm:$0xff]
      %v1162 = vld [vmem:[%s169 + $0x1ec8] sm:$0xff]
      %v1163 = vld [vmem:[%s169 + $0x1ed0] sm:$0xff]
      %v1164 = vld [vmem:[%s169 + $0x1ed8] sm:$0xff]
      %v1165 = vld [vmem:[%s169 + $0x1ee0] sm:$0xff]
      %v1166 = vld [vmem:[%s169 + $0x1ee8] sm:$0xff]
      %v1167 = vld [vmem:[%s169 + $0x1ef0] sm:$0xff]
      %v1168 = vld [vmem:[%s169 + $0x1ef8] sm:$0xff]
      %v1169 = vld [vmem:[%s169 + $0x1f00] sm:$0xff]
      %v1170 = vld [vmem:[%s169 + $0x1f08] sm:$0xff]
      %v1171 = vld [vmem:[%s169 + $0x1f10] sm:$0xff]
      %v1172 = vld [vmem:[%s169 + $0x1f18] sm:$0xff]
      %v1173 = vld [vmem:[%s169 + $0x1f20] sm:$0xff]
      %v1174 = vld [vmem:[%s169 + $0x1f28] sm:$0xff]
      %v1175 = vld [vmem:[%s169 + $0x1f30] sm:$0xff]
      %v1176 = vld [vmem:[%s169 + $0x1f38] sm:$0xff]
      %v1177 = vld [vmem:[%s169 + $0x1f40] sm:$0xff]
      %v1178 = vld [vmem:[%s169 + $0x1f48] sm:$0xff]
      %v1179 = vld [vmem:[%s169 + $0x1f50] sm:$0xff]
      %v1180 = vld [vmem:[%s169 + $0x1f58] sm:$0xff]
      %v1181 = vld [vmem:[%s169 + $0x1f60] sm:$0xff]
      %v1182 = vld [vmem:[%s169 + $0x1f68] sm:$0xff]
      %v1183 = vld [vmem:[%s169 + $0x1f70] sm:$0xff]
      %v1184 = vld [vmem:[%s169 + $0x1f78] sm:$0xff]
      %v1185 = vld [vmem:[%s169 + $0x1f80] sm:$0xff]
      %v1186 = vld [vmem:[%s169 + $0x1f88] sm:$0xff]
      %v1187 = vld [vmem:[%s169 + $0x1f90] sm:$0xff]
      %v1188 = vld [vmem:[%s169 + $0x1f98] sm:$0xff]
      %v1189 = vld [vmem:[%s169 + $0x1fa0] sm:$0xff]
      %v1190 = vld [vmem:[%s169 + $0x1fa8] sm:$0xff]
      %v1191 = vld [vmem:[%s169 + $0x1fb0] sm:$0xff]
      %v1192 = vld [vmem:[%s169 + $0x1fb8] sm:$0xff]
      %v1193 = vld [vmem:[%s169 + $0x1fc0] sm:$0xff]
      %v1194 = vld [vmem:[%s169 + $0x1fc8] sm:$0xff]
      %v1195 = vld [vmem:[%s169 + $0x1fd0] sm:$0xff]
      %v1196 = vld [vmem:[%s169 + $0x1fd8] sm:$0xff]
      %v1197 = vld [vmem:[%s169 + $0x1fe0] sm:$0xff]
      %v1198 = vld [vmem:[%s169 + $0x1fe8] sm:$0xff]
      %v1199 = vld [vmem:[%s169 + $0x1ff0] sm:$0xff]
      %v1200 = vld [vmem:[%s169 + $0x1ff8] sm:$0xff]
      %v1201 = vld [vmem:[%s169 + $0x2000] sm:$0xff]
      %v1202 = vld [vmem:[%s169 + $0x2008] sm:$0xff]
      %v1203 = vld [vmem:[%s169 + $0x2010] sm:$0xff]
      %v1204 = vld [vmem:[%s169 + $0x2018] sm:$0xff]
      %v1205 = vld [vmem:[%s169 + $0x2020] sm:$0xff]
      %v1206 = vld [vmem:[%s169 + $0x2028] sm:$0xff]
      %v1207 = vld [vmem:[%s169 + $0x2030] sm:$0xff]
      %v1208 = vld [vmem:[%s169 + $0x2038] sm:$0xff]
      %v1209 = vld [vmem:[%s169 + $0x2040] sm:$0xff]
      %v1210 = vld [vmem:[%s169 + $0x2048] sm:$0xff]
      %v1211 = vld [vmem:[%s169 + $0x2050] sm:$0xff]
      %v1212 = vld [vmem:[%s169 + $0x2058] sm:$0xff]
      %v1213 = vld [vmem:[%s169 + $0x2060] sm:$0xff]
      %v1214 = vld [vmem:[%s169 + $0x2068] sm:$0xff]
      %v1215 = vld [vmem:[%s169 + $0x2070] sm:$0xff]
      %v1216 = vld [vmem:[%s169 + $0x2078] sm:$0xff]
      %v1217 = vld [vmem:[%s169 + $0x2080] sm:$0xff]
      %v1218 = vld [vmem:[%s169 + $0x2088] sm:$0xff]
      %v1219 = vld [vmem:[%s169 + $0x2090] sm:$0xff]
      %v1220 = vld [vmem:[%s169 + $0x2098] sm:$0xff]
      %v1221 = vld [vmem:[%s169 + $0x20a0] sm:$0xff]
      %v1222 = vld [vmem:[%s169 + $0x20a8] sm:$0xff]
      %v1223 = vld [vmem:[%s169 + $0x20b0] sm:$0xff]
      %v1224 = vld [vmem:[%s169 + $0x20b8] sm:$0xff]
      %v1225 = vld [vmem:[%s169 + $0x20c0] sm:$0xff]
      %v1226 = vld [vmem:[%s169 + $0x20c8] sm:$0xff]
      %v1227 = vld [vmem:[%s169 + $0x20d0] sm:$0xff]
      %v1228 = vld [vmem:[%s169 + $0x20d8] sm:$0xff]
      %v1229 = vld [vmem:[%s169 + $0x20e0] sm:$0xff]
      %v1230 = vld [vmem:[%s169 + $0x20e8] sm:$0xff]
      %v1231 = vld [vmem:[%s169 + $0x20f0] sm:$0xff]
      %v1232 = vld [vmem:[%s169 + $0x20f8] sm:$0xff]
      %v1233 = vld [vmem:[%s169 + $0x2100] sm:$0xff]
      %v1234 = vld [vmem:[%s169 + $0x2108] sm:$0xff]
      %v1235 = vld [vmem:[%s169 + $0x2110] sm:$0xff]
      %v1236 = vld [vmem:[%s169 + $0x2118] sm:$0xff]
      %v1237 = vld [vmem:[%s169 + $0x2120] sm:$0xff]
      %v1238 = vld [vmem:[%s169 + $0x2128] sm:$0xff]
      %v1239 = vld [vmem:[%s169 + $0x2130] sm:$0xff]
      %v1240 = vld [vmem:[%s169 + $0x2138] sm:$0xff]
      %v1241 = vld [vmem:[%s169 + $0x2140] sm:$0xff]
      %v1242 = vld [vmem:[%s169 + $0x2148] sm:$0xff]
      %v1243 = vld [vmem:[%s169 + $0x2150] sm:$0xff]
      %v1244 = vld [vmem:[%s169 + $0x2158] sm:$0xff]
      %v1245 = vld [vmem:[%s169 + $0x2160] sm:$0xff]
      %v1246 = vld [vmem:[%s169 + $0x2168] sm:$0xff]
      %v1247 = vld [vmem:[%s169 + $0x2170] sm:$0xff]
      %v1248 = vld [vmem:[%s169 + $0x2178] sm:$0xff]
      %v1249 = vld [vmem:[%s169 + $0x2180] sm:$0xff]
      %v1250 = vld [vmem:[%s169 + $0x2188] sm:$0xff]
      %v1251 = vld [vmem:[%s169 + $0x2190] sm:$0xff]
      %v1252 = vld [vmem:[%s169 + $0x2198] sm:$0xff]
      %v1253 = vld [vmem:[%s169 + $0x21a0] sm:$0xff]
      %v1254 = vld [vmem:[%s169 + $0x21a8] sm:$0xff]
      %v1255 = vld [vmem:[%s169 + $0x21b0] sm:$0xff]
      %v1256 = vld [vmem:[%s169 + $0x21b8] sm:$0xff]
      %v1257 = vld [vmem:[%s169 + $0x21c0] sm:$0xff]
      %v1258 = vld [vmem:[%s169 + $0x21c8] sm:$0xff]
      %v1259 = vld [vmem:[%s169 + $0x21d0] sm:$0xff]
      %v1260 = vld [vmem:[%s169 + $0x21d8] sm:$0xff]
      %v1261 = vld [vmem:[%s169 + $0x21e0] sm:$0xff]
      %v1262 = vld [vmem:[%s169 + $0x21e8] sm:$0xff]
      %v1263 = vld [vmem:[%s169 + $0x21f0] sm:$0xff]
      %v1264 = vld [vmem:[%s169 + $0x21f8] sm:$0xff]
      %v1265 = vld [vmem:[%s169 + $0x2200] sm:$0xff]
      %v1266 = vld [vmem:[%s169 + $0x2208] sm:$0xff]
      %v1267 = vld [vmem:[%s169 + $0x2210] sm:$0xff]
      %v1268 = vld [vmem:[%s169 + $0x2218] sm:$0xff]
      %v1269 = vld [vmem:[%s169 + $0x2220] sm:$0xff]
      %v1270 = vld [vmem:[%s169 + $0x2228] sm:$0xff]
      %v1271 = vld [vmem:[%s169 + $0x2230] sm:$0xff]
      %v1272 = vld [vmem:[%s169 + $0x2238] sm:$0xff]
      %v1273 = vld [vmem:[%s169 + $0x2240] sm:$0xff]
      %v1274 = vld [vmem:[%s169 + $0x2248] sm:$0xff]
      %v1275 = vld [vmem:[%s169 + $0x2250] sm:$0xff]
      %v1276 = vld [vmem:[%s169 + $0x2258] sm:$0xff]
      %v1277 = vld [vmem:[%s169 + $0x2260] sm:$0xff]
      %v1278 = vld [vmem:[%s169 + $0x2268] sm:$0xff]
      %v1279 = vld [vmem:[%s169 + $0x2270] sm:$0xff]
      %v1280 = vld [vmem:[%s169 + $0x2278] sm:$0xff]
      %v1281 = vld [vmem:[%s169 + $0x2280] sm:$0xff]
      %v1282 = vld [vmem:[%s169 + $0x2288] sm:$0xff]
      %v1283 = vld [vmem:[%s169 + $0x2290] sm:$0xff]
      %v1284 = vld [vmem:[%s169 + $0x2298] sm:$0xff]
      %v1285 = vld [vmem:[%s169 + $0x22a0] sm:$0xff]
      %v1286 = vld [vmem:[%s169 + $0x22a8] sm:$0xff]
      %v1287 = vld [vmem:[%s169 + $0x22b0] sm:$0xff]
      %v1288 = vld [vmem:[%s169 + $0x22b8] sm:$0xff]
      %v1289 = vld [vmem:[%s169 + $0x22c0] sm:$0xff]
      %v1290 = vld [vmem:[%s169 + $0x22c8] sm:$0xff]
      %v1291 = vld [vmem:[%s169 + $0x22d0] sm:$0xff]
      %v1292 = vld [vmem:[%s169 + $0x22d8] sm:$0xff]
      %v1293 = vld [vmem:[%s169 + $0x22e0] sm:$0xff]
      %v1294 = vld [vmem:[%s169 + $0x22e8] sm:$0xff]
      %v1295 = vld [vmem:[%s169 + $0x22f0] sm:$0xff]
      %v1296 = vld [vmem:[%s169 + $0x22f8] sm:$0xff]
      %v1297 = vld [vmem:[%s169 + $0x2300] sm:$0xff]
      %v1298 = vld [vmem:[%s169 + $0x2308] sm:$0xff]
      %v1299 = vld [vmem:[%s169 + $0x2310] sm:$0xff]
      %v1300 = vld [vmem:[%s169 + $0x2318] sm:$0xff]
      %v1301 = vld [vmem:[%s169 + $0x2320] sm:$0xff]
      %v1302 = vld [vmem:[%s169 + $0x2328] sm:$0xff]
      %v1303 = vld [vmem:[%s169 + $0x2330] sm:$0xff]
      %v1304 = vld [vmem:[%s169 + $0x2338] sm:$0xff]
      %v1305 = vld [vmem:[%s169 + $0x2340] sm:$0xff]
      %v1306 = vld [vmem:[%s169 + $0x2348] sm:$0xff]
      %v1307 = vld [vmem:[%s169 + $0x2350] sm:$0xff]
      %v1308 = vld [vmem:[%s169 + $0x2358] sm:$0xff]
      %v1309 = vld [vmem:[%s169 + $0x2360] sm:$0xff]
      %v1310 = vld [vmem:[%s169 + $0x2368] sm:$0xff]
      %v1311 = vld [vmem:[%s169 + $0x2370] sm:$0xff]
      %v1312 = vld [vmem:[%s169 + $0x2378] sm:$0xff]
      %v1313 = vld [vmem:[%s169 + $0x2380] sm:$0xff]
      %v1314 = vld [vmem:[%s169 + $0x2388] sm:$0xff]
      %v1315 = vld [vmem:[%s169 + $0x2390] sm:$0xff]
      %v1316 = vld [vmem:[%s169 + $0x2398] sm:$0xff]
      %v1317 = vld [vmem:[%s169 + $0x23a0] sm:$0xff]
      %v1318 = vld [vmem:[%s169 + $0x23a8] sm:$0xff]
      %v1319 = vld [vmem:[%s169 + $0x23b0] sm:$0xff]
      %v1320 = vld [vmem:[%s169 + $0x23b8] sm:$0xff]
      %v1321 = vld [vmem:[%s169 + $0x23c0] sm:$0xff]
      %v1322 = vld [vmem:[%s169 + $0x23c8] sm:$0xff]
      %v1323 = vld [vmem:[%s169 + $0x23d0] sm:$0xff]
      %v1324 = vld [vmem:[%s169 + $0x23d8] sm:$0xff]
      %v1325 = vld [vmem:[%s169 + $0x23e0] sm:$0xff]
      %v1326 = vld [vmem:[%s169 + $0x23e8] sm:$0xff]
      %v1327 = vld [vmem:[%s169 + $0x23f0] sm:$0xff]
      %v1328 = vld [vmem:[%s169 + $0x23f8] sm:$0xff]
      %v1329 = vld [vmem:[%s169 + $0x2400] sm:$0xff]
      %v1330 = vld [vmem:[%s169 + $0x2408] sm:$0xff]
      %v1331 = vld [vmem:[%s169 + $0x2410] sm:$0xff]
      %v1332 = vld [vmem:[%s169 + $0x2418] sm:$0xff]
      %v1333 = vld [vmem:[%s169 + $0x2420] sm:$0xff]
      %v1334 = vld [vmem:[%s169 + $0x2428] sm:$0xff]
      %v1335 = vld [vmem:[%s169 + $0x2430] sm:$0xff]
      %v1336 = vld [vmem:[%s169 + $0x2438] sm:$0xff]
      %v1337 = vld [vmem:[%s169 + $0x2440] sm:$0xff]
      %v1338 = vld [vmem:[%s169 + $0x2448] sm:$0xff]
      %v1339 = vld [vmem:[%s169 + $0x2450] sm:$0xff]
      %v1340 = vld [vmem:[%s169 + $0x2458] sm:$0xff]
      %v1341 = vld [vmem:[%s169 + $0x2460] sm:$0xff]
      %v1342 = vld [vmem:[%s169 + $0x2468] sm:$0xff]
      %v1343 = vld [vmem:[%s169 + $0x2470] sm:$0xff]
      %v1344 = vld [vmem:[%s169 + $0x2478] sm:$0xff]
      %v1345 = vld [vmem:[%s1] sm:$0xff]
      %v1346 = vld [vmem:[%s1 + $0x8] sm:$0xff]
      %v1347 = vld [vmem:[%s1 + $0x10] sm:$0xff]
      %v1348 = vld [vmem:[%s1 + $0x18] sm:$0xff]
      %v1349 = vld [vmem:[%s1 + $0x20] sm:$0xff]
      %v1350 = vld [vmem:[%s1 + $0x28] sm:$0xff]
      %v1351 = vld [vmem:[%s1 + $0x30] sm:$0xff]
      %v1352 = vld [vmem:[%s1 + $0x38] sm:$0xff]
      %v1353 = vld [vmem:[%s1 + $0x40] sm:$0xff]
      %v1354 = vld [vmem:[%s1 + $0x48] sm:$0xff]
      %v1355 = vld [vmem:[%s1 + $0x50] sm:$0xff]
      %v1356 = vld [vmem:[%s1 + $0x58] sm:$0xff]
      %v1357 = vld [vmem:[%s1 + $0x60] sm:$0xff]
      %v1358 = vld [vmem:[%s1 + $0x68] sm:$0xff]
      %v1359 = vld [vmem:[%s1 + $0x70] sm:$0xff]
      %v1360 = vld [vmem:[%s1 + $0x78] sm:$0xff]
      %v1361 = vld [vmem:[%s1 + $0x80] sm:$0xff]
      %v1362 = vld [vmem:[%s1 + $0x88] sm:$0xff]
      %v1363 = vld [vmem:[%s1 + $0x90] sm:$0xff]
      %v1364 = vld [vmem:[%s1 + $0x98] sm:$0xff]
      %v1365 = vld [vmem:[%s1 + $0xa0] sm:$0xff]
      %v1366 = vld [vmem:[%s1 + $0xa8] sm:$0xff]
      %v1367 = vld [vmem:[%s1 + $0xb0] sm:$0xff]
      %v1368 = vld [vmem:[%s1 + $0xb8] sm:$0xff]
      %v1369 = vld [vmem:[%s1 + $0xc0] sm:$0xff]
      %v1370 = vld [vmem:[%s1 + $0xc8] sm:$0xff]
      %v1371 = vld [vmem:[%s1 + $0xd0] sm:$0xff]
      %v1372 = vld [vmem:[%s1 + $0xd8] sm:$0xff]
      %v1373 = vld [vmem:[%s1 + $0xe0] sm:$0xff]
      %v1374 = vld [vmem:[%s1 + $0xe8] sm:$0xff]
      %v1375 = vld [vmem:[%s1 + $0xf0] sm:$0xff]
      %v1376 = vld [vmem:[%s1 + $0xf8] sm:$0xff]
      %v1377 = vld [vmem:[%s1 + $0x100] sm:$0xff]
      %v1378 = vld [vmem:[%s1 + $0x108] sm:$0xff]
      %v1379 = vld [vmem:[%s1 + $0x110] sm:$0xff]
      %v1380 = vld [vmem:[%s1 + $0x118] sm:$0xff]
      %v1381 = vld [vmem:[%s1 + $0x120] sm:$0xff]
      %v1382 = vld [vmem:[%s1 + $0x128] sm:$0xff]
      %v1383 = vld [vmem:[%s1 + $0x130] sm:$0xff]
      %v1384 = vld [vmem:[%s1 + $0x138] sm:$0xff]
      %v1385 = vld [vmem:[%s1 + $0x140] sm:$0xff]
      %v1386 = vld [vmem:[%s1 + $0x148] sm:$0xff]
      %v1387 = vld [vmem:[%s1 + $0x150] sm:$0xff]
      %v1388 = vld [vmem:[%s1 + $0x158] sm:$0xff]
      %v1389 = vld [vmem:[%s1 + $0x160] sm:$0xff]
      %v1390 = vld [vmem:[%s1 + $0x168] sm:$0xff]
      %v1391 = vld [vmem:[%s1 + $0x170] sm:$0xff]
      %v1392 = vld [vmem:[%s1 + $0x178] sm:$0xff]
      %v1393 = vld [vmem:[%s1 + $0x180] sm:$0xff]
      %v1394 = vld [vmem:[%s1 + $0x188] sm:$0xff]
      %v1395 = vld [vmem:[%s1 + $0x190] sm:$0xff]
      %v1396 = vld [vmem:[%s1 + $0x198] sm:$0xff]
      %v1397 = vld [vmem:[%s1 + $0x1a0] sm:$0xff]
      %v1398 = vld [vmem:[%s1 + $0x1a8] sm:$0xff]
      %v1399 = vld [vmem:[%s1 + $0x1b0] sm:$0xff]
      %v1400 = vld [vmem:[%s1 + $0x1b8] sm:$0xff]
      %v1401 = vld [vmem:[%s1 + $0x1c0] sm:$0xff]
      %v1402 = vld [vmem:[%s1 + $0x1c8] sm:$0xff]
      %v1403 = vld [vmem:[%s1 + $0x1d0] sm:$0xff]
      %v1404 = vld [vmem:[%s1 + $0x1d8] sm:$0xff]
      %v1405 = vld [vmem:[%s1 + $0x1e0] sm:$0xff]
      %v1406 = vld [vmem:[%s1 + $0x1e8] sm:$0xff]
      %v1407 = vld [vmem:[%s1 + $0x1f0] sm:$0xff]
      %v1408 = vld [vmem:[%s1 + $0x1f8] sm:$0xff]
      %v1409 = vld [vmem:[%s1 + $0x200] sm:$0xff]
      %v1410 = vld [vmem:[%s1 + $0x208] sm:$0xff]
      %v1411 = vld [vmem:[%s1 + $0x210] sm:$0xff]
      %v1412 = vld [vmem:[%s1 + $0x218] sm:$0xff]
      %v1413 = vld [vmem:[%s1 + $0x220] sm:$0xff]
      %v1414 = vld [vmem:[%s1 + $0x228] sm:$0xff]
      %v1415 = vld [vmem:[%s1 + $0x230] sm:$0xff]
      %v1416 = vld [vmem:[%s1 + $0x238] sm:$0xff]
      %v1417 = vld [vmem:[%s1 + $0x240] sm:$0xff]
      %v1418 = vld [vmem:[%s1 + $0x248] sm:$0xff]
      %v1419 = vld [vmem:[%s1 + $0x250] sm:$0xff]
      %v1420 = vld [vmem:[%s1 + $0x258] sm:$0xff]
      %v1421 = vld [vmem:[%s1 + $0x260] sm:$0xff]
      %v1422 = vld [vmem:[%s1 + $0x268] sm:$0xff]
      %v1423 = vld [vmem:[%s1 + $0x270] sm:$0xff]
      %v1424 = vld [vmem:[%s1 + $0x278] sm:$0xff]
      %v1425 = vld [vmem:[%s1 + $0x280] sm:$0xff]
      %v1426 = vld [vmem:[%s1 + $0x288] sm:$0xff]
      %v1427 = vld [vmem:[%s1 + $0x290] sm:$0xff]
      %v1428 = vld [vmem:[%s1 + $0x298] sm:$0xff]
      %v1429 = vld [vmem:[%s1 + $0x2a0] sm:$0xff]
      %v1430 = vld [vmem:[%s1 + $0x2a8] sm:$0xff]
      %v1431 = vld [vmem:[%s1 + $0x2b0] sm:$0xff]
      %v1432 = vld [vmem:[%s1 + $0x2b8] sm:$0xff]
      %v1433 = vld [vmem:[%s1 + $0x2c0] sm:$0xff]
      %v1434 = vld [vmem:[%s1 + $0x2c8] sm:$0xff]
      %v1435 = vld [vmem:[%s1 + $0x2d0] sm:$0xff]
      %v1436 = vld [vmem:[%s1 + $0x2d8] sm:$0xff]
      %v1437 = vld [vmem:[%s1 + $0x2e0] sm:$0xff]
      %v1438 = vld [vmem:[%s1 + $0x2e8] sm:$0xff]
      %v1439 = vld [vmem:[%s1 + $0x2f0] sm:$0xff]
      %v1440 = vld [vmem:[%s1 + $0x2f8] sm:$0xff]
      %v1441 = vld [vmem:[%s1 + $0x300] sm:$0xff]
      %v1442 = vld [vmem:[%s1 + $0x308] sm:$0xff]
      %v1443 = vld [vmem:[%s1 + $0x310] sm:$0xff]
      %v1444 = vld [vmem:[%s1 + $0x318] sm:$0xff]
      %v1445 = vld [vmem:[%s1 + $0x320] sm:$0xff]
      %v1446 = vld [vmem:[%s1 + $0x328] sm:$0xff]
      %v1447 = vld [vmem:[%s1 + $0x330] sm:$0xff]
      %v1448 = vld [vmem:[%s1 + $0x338] sm:$0xff]
      %v1449 = vld [vmem:[%s1 + $0x340] sm:$0xff]
      %v1450 = vld [vmem:[%s1 + $0x348] sm:$0xff]
      %v1451 = vld [vmem:[%s1 + $0x350] sm:$0xff]
      %v1452 = vld [vmem:[%s1 + $0x358] sm:$0xff]
      %v1453 = vld [vmem:[%s1 + $0x360] sm:$0xff]
      %v1454 = vld [vmem:[%s1 + $0x368] sm:$0xff]
      %v1455 = vld [vmem:[%s1 + $0x370] sm:$0xff]
      %v1456 = vld [vmem:[%s1 + $0x378] sm:$0xff]
      %v1457 = vld [vmem:[%s1 + $0x380] sm:$0xff]
      %v1458 = vld [vmem:[%s1 + $0x388] sm:$0xff]
      %v1459 = vld [vmem:[%s1 + $0x390] sm:$0xff]
      %v1460 = vld [vmem:[%s1 + $0x398] sm:$0xff]
      %v1461 = vld [vmem:[%s1 + $0x3a0] sm:$0xff]
      %v1462 = vld [vmem:[%s1 + $0x3a8] sm:$0xff]
      %v1463 = vld [vmem:[%s1 + $0x3b0] sm:$0xff]
      %v1464 = vld [vmem:[%s1 + $0x3b8] sm:$0xff]
      %v1465 = vld [vmem:[%s1 + $0x3c0] sm:$0xff]
      %v1466 = vld [vmem:[%s1 + $0x3c8] sm:$0xff]
      %v1467 = vld [vmem:[%s1 + $0x3d0] sm:$0xff]
      %v1468 = vld [vmem:[%s1 + $0x3d8] sm:$0xff]
      %v1469 = vld [vmem:[%s1 + $0x3e0] sm:$0xff]
      %v1470 = vld [vmem:[%s1 + $0x3e8] sm:$0xff]
      %v1471 = vld [vmem:[%s1 + $0x3f0] sm:$0xff]
      %v1472 = vld [vmem:[%s1 + $0x3f8] sm:$0xff]
      %v1473 = vld [vmem:[%s1 + $0x400] sm:$0xff]
      %v1474 = vld [vmem:[%s1 + $0x408] sm:$0xff]
      %v1475 = vld [vmem:[%s1 + $0x410] sm:$0xff]
      %v1476 = vld [vmem:[%s1 + $0x418] sm:$0xff]
      %v1477 = vld [vmem:[%s1 + $0x420] sm:$0xff]
      %v1478 = vld [vmem:[%s1 + $0x428] sm:$0xff]
      %v1479 = vld [vmem:[%s1 + $0x430] sm:$0xff]
      %v1480 = vld [vmem:[%s1 + $0x438] sm:$0xff]
      %v1481 = vld [vmem:[%s1 + $0x440] sm:$0xff]
      %v1482 = vld [vmem:[%s1 + $0x448] sm:$0xff]
      %v1483 = vld [vmem:[%s1 + $0x450] sm:$0xff]
      %v1484 = vld [vmem:[%s1 + $0x458] sm:$0xff]
      %v1485 = vld [vmem:[%s1 + $0x460] sm:$0xff]
      %v1486 = vld [vmem:[%s1 + $0x468] sm:$0xff]
      %v1487 = vld [vmem:[%s1 + $0x470] sm:$0xff]
      %v1488 = vld [vmem:[%s1 + $0x478] sm:$0xff]
      %v1489 = vld [vmem:[%s1 + $0x480] sm:$0xff]
      %v1490 = vld [vmem:[%s1 + $0x488] sm:$0xff]
      %v1491 = vld [vmem:[%s1 + $0x490] sm:$0xff]
      %v1492 = vld [vmem:[%s1 + $0x498] sm:$0xff]
      %v1493 = vld [vmem:[%s1 + $0x4a0] sm:$0xff]
      %v1494 = vld [vmem:[%s1 + $0x4a8] sm:$0xff]
      %v1495 = vld [vmem:[%s1 + $0x4b0] sm:$0xff]
      %v1496 = vld [vmem:[%s1 + $0x4b8] sm:$0xff]
      %v1497 = vld [vmem:[%s1 + $0x4c0] sm:$0xff]
      %v1498 = vld [vmem:[%s1 + $0x4c8] sm:$0xff]
      %v1499 = vld [vmem:[%s1 + $0x4d0] sm:$0xff]
      %v1500 = vld [vmem:[%s1 + $0x4d8] sm:$0xff]
      %v1501 = vld [vmem:[%s1 + $0x4e0] sm:$0xff]
      %v1502 = vld [vmem:[%s1 + $0x4e8] sm:$0xff]
      %v1503 = vld [vmem:[%s1 + $0x4f0] sm:$0xff]
      %v1504 = vld [vmem:[%s1 + $0x4f8] sm:$0xff]
      %v1505 = vld [vmem:[%s1 + $0x500] sm:$0xff]
      %v1506 = vld [vmem:[%s1 + $0x508] sm:$0xff]
      %v1507 = vld [vmem:[%s1 + $0x510] sm:$0xff]
      %v1508 = vld [vmem:[%s1 + $0x518] sm:$0xff]
      %v1509 = vld [vmem:[%s1 + $0x520] sm:$0xff]
      %v1510 = vld [vmem:[%s1 + $0x528] sm:$0xff]
      %v1511 = vld [vmem:[%s1 + $0x530] sm:$0xff]
      %v1512 = vld [vmem:[%s1 + $0x538] sm:$0xff]
      %v1513 = vld [vmem:[%s1 + $0x540] sm:$0xff]
      %v1514 = vld [vmem:[%s1 + $0x548] sm:$0xff]
      %v1515 = vld [vmem:[%s1 + $0x550] sm:$0xff]
      %v1516 = vld [vmem:[%s1 + $0x558] sm:$0xff]
      %v1517 = vld [vmem:[%s1 + $0x560] sm:$0xff]
      %v1518 = vld [vmem:[%s1 + $0x568] sm:$0xff]
      %v1519 = vld [vmem:[%s1 + $0x570] sm:$0xff]
      %v1520 = vld [vmem:[%s1 + $0x578] sm:$0xff]
      %v1521 = vld [vmem:[%s1 + $0x580] sm:$0xff]
      %v1522 = vld [vmem:[%s1 + $0x588] sm:$0xff]
      %v1523 = vld [vmem:[%s1 + $0x590] sm:$0xff]
      %v1524 = vld [vmem:[%s1 + $0x598] sm:$0xff]
      %v1525 = vld [vmem:[%s1 + $0x5a0] sm:$0xff]
      %v1526 = vld [vmem:[%s1 + $0x5a8] sm:$0xff]
      %v1527 = vld [vmem:[%s1 + $0x5b0] sm:$0xff]
      %v1528 = vld [vmem:[%s1 + $0x5b8] sm:$0xff]
      %v1529 = vld [vmem:[%s1 + $0x5c0] sm:$0xff]
      %v1530 = vld [vmem:[%s1 + $0x5c8] sm:$0xff]
      %v1531 = vld [vmem:[%s1 + $0x5d0] sm:$0xff]
      %v1532 = vld [vmem:[%s1 + $0x5d8] sm:$0xff]
      %v1533 = vld [vmem:[%s1 + $0x5e0] sm:$0xff]
      %v1534 = vld [vmem:[%s1 + $0x5e8] sm:$0xff]
      %v1535 = vld [vmem:[%s1 + $0x5f0] sm:$0xff]
      %v1536 = vld [vmem:[%s1 + $0x5f8] sm:$0xff]
      %v1537 = vld [vmem:[%s1 + $0x600] sm:$0xff]
      %v1538 = vld [vmem:[%s1 + $0x608] sm:$0xff]
      %v1539 = vld [vmem:[%s1 + $0x610] sm:$0xff]
      %v1540 = vld [vmem:[%s1 + $0x618] sm:$0xff]
      %v1541 = vld [vmem:[%s1 + $0x620] sm:$0xff]
      %v1542 = vld [vmem:[%s1 + $0x628] sm:$0xff]
      %v1543 = vld [vmem:[%s1 + $0x630] sm:$0xff]
      %v1544 = vld [vmem:[%s1 + $0x638] sm:$0xff]
      %v1545 = vld [vmem:[%s1 + $0x640] sm:$0xff]
      %v1546 = vld [vmem:[%s1 + $0x648] sm:$0xff]
      %v1547 = vld [vmem:[%s1 + $0x650] sm:$0xff]
      %v1548 = vld [vmem:[%s1 + $0x658] sm:$0xff]
      %v1549 = vld [vmem:[%s1 + $0x660] sm:$0xff]
      %v1550 = vld [vmem:[%s1 + $0x668] sm:$0xff]
      %v1551 = vld [vmem:[%s1 + $0x670] sm:$0xff]
      %v1552 = vld [vmem:[%s1 + $0x678] sm:$0xff]
      %v1553 = vld [vmem:[%s1 + $0x680] sm:$0xff]
      %v1554 = vld [vmem:[%s1 + $0x688] sm:$0xff]
      %v1555 = vld [vmem:[%s1 + $0x690] sm:$0xff]
      %v1556 = vld [vmem:[%s1 + $0x698] sm:$0xff]
      %v1557 = vld [vmem:[%s1 + $0x6a0] sm:$0xff]
      %v1558 = vld [vmem:[%s1 + $0x6a8] sm:$0xff]
      %v1559 = vld [vmem:[%s1 + $0x6b0] sm:$0xff]
      %v1560 = vld [vmem:[%s1 + $0x6b8] sm:$0xff]
      %v1561 = vld [vmem:[%s1 + $0x6c0] sm:$0xff]
      %v1562 = vld [vmem:[%s1 + $0x6c8] sm:$0xff]
      %v1563 = vld [vmem:[%s1 + $0x6d0] sm:$0xff]
      %v1564 = vld [vmem:[%s1 + $0x6d8] sm:$0xff]
      %v1565 = vld [vmem:[%s1 + $0x6e0] sm:$0xff]
      %v1566 = vld [vmem:[%s1 + $0x6e8] sm:$0xff]
      %v1567 = vld [vmem:[%s1 + $0x6f0] sm:$0xff]
      %v1568 = vld [vmem:[%s1 + $0x6f8] sm:$0xff]
      %v1569 = vld [vmem:[%s1 + $0x700] sm:$0xff]
      %v1570 = vld [vmem:[%s1 + $0x708] sm:$0xff]
      %v1571 = vld [vmem:[%s1 + $0x710] sm:$0xff]
      %v1572 = vld [vmem:[%s1 + $0x718] sm:$0xff]
      %v1573 = vld [vmem:[%s1 + $0x720] sm:$0xff]
      %v1574 = vld [vmem:[%s1 + $0x728] sm:$0xff]
      %v1575 = vld [vmem:[%s1 + $0x730] sm:$0xff]
      %v1576 = vld [vmem:[%s1 + $0x738] sm:$0xff]
      %v1577 = vld [vmem:[%s1 + $0x740] sm:$0xff]
      %v1578 = vld [vmem:[%s1 + $0x748] sm:$0xff]
      %v1579 = vld [vmem:[%s1 + $0x750] sm:$0xff]
      %v1580 = vld [vmem:[%s1 + $0x758] sm:$0xff]
      %v1581 = vld [vmem:[%s1 + $0x760] sm:$0xff]
      %v1582 = vld [vmem:[%s1 + $0x768] sm:$0xff]
      %v1583 = vld [vmem:[%s1 + $0x770] sm:$0xff]
      %v1584 = vld [vmem:[%s1 + $0x778] sm:$0xff]
      %v1585 = vld [vmem:[%s1 + $0x780] sm:$0xff]
      %v1586 = vld [vmem:[%s1 + $0x788] sm:$0xff]
      %v1587 = vld [vmem:[%s1 + $0x790] sm:$0xff]
      %v1588 = vld [vmem:[%s1 + $0x798] sm:$0xff]
      %v1589 = vld [vmem:[%s1 + $0x7a0] sm:$0xff]
      %v1590 = vld [vmem:[%s1 + $0x7a8] sm:$0xff]
      %v1591 = vld [vmem:[%s1 + $0x7b0] sm:$0xff]
      %v1592 = vld [vmem:[%s1 + $0x7b8] sm:$0xff]
      %v1593 = vld [vmem:[%s1 + $0x7c0] sm:$0xff]
      %v1594 = vld [vmem:[%s1 + $0x7c8] sm:$0xff]
      %v1595 = vld [vmem:[%s1 + $0x7d0] sm:$0xff]
      %v1596 = vld [vmem:[%s1 + $0x7d8] sm:$0xff]
      %v1597 = vld [vmem:[%s1 + $0x7e0] sm:$0xff]
      %v1598 = vld [vmem:[%s1 + $0x7e8] sm:$0xff]
      %v1599 = vld [vmem:[%s1 + $0x7f0] sm:$0xff]
      %v1600 = vld [vmem:[%s1 + $0x7f8] sm:$0xff]
      %v1601 = vld [vmem:[%s1 + $0x800] sm:$0xff]
      %v1602 = vld [vmem:[%s1 + $0x808] sm:$0xff]
      %v1603 = vld [vmem:[%s1 + $0x810] sm:$0xff]
      %v1604 = vld [vmem:[%s1 + $0x818] sm:$0xff]
      %v1605 = vld [vmem:[%s1 + $0x820] sm:$0xff]
      %v1606 = vld [vmem:[%s1 + $0x828] sm:$0xff]
      %v1607 = vld [vmem:[%s1 + $0x830] sm:$0xff]
      %v1608 = vld [vmem:[%s1 + $0x838] sm:$0xff]
      %v1609 = vld [vmem:[%s1 + $0x840] sm:$0xff]
      %v1610 = vld [vmem:[%s1 + $0x848] sm:$0xff]
      %v1611 = vld [vmem:[%s1 + $0x850] sm:$0xff]
      %v1612 = vld [vmem:[%s1 + $0x858] sm:$0xff]
      %v1613 = vld [vmem:[%s1 + $0x860] sm:$0xff]
      %v1614 = vld [vmem:[%s1 + $0x868] sm:$0xff]
      %v1615 = vld [vmem:[%s1 + $0x870] sm:$0xff]
      %v1616 = vld [vmem:[%s1 + $0x878] sm:$0xff]
      %v1617 = vld [vmem:[%s1 + $0x880] sm:$0xff]
      %v1618 = vld [vmem:[%s1 + $0x888] sm:$0xff]
      %v1619 = vld [vmem:[%s1 + $0x890] sm:$0xff]
      %v1620 = vld [vmem:[%s1 + $0x898] sm:$0xff]
      %v1621 = vld [vmem:[%s1 + $0x8a0] sm:$0xff]
      %v1622 = vld [vmem:[%s1 + $0x8a8] sm:$0xff]
      %v1623 = vld [vmem:[%s1 + $0x8b0] sm:$0xff]
      %v1624 = vld [vmem:[%s1 + $0x8b8] sm:$0xff]
      %v1625 = vld [vmem:[%s1 + $0x8c0] sm:$0xff]
      %v1626 = vld [vmem:[%s1 + $0x8c8] sm:$0xff]
      %v1627 = vld [vmem:[%s1 + $0x8d0] sm:$0xff]
      %v1628 = vld [vmem:[%s1 + $0x8d8] sm:$0xff]
      %v1629 = vld [vmem:[%s1 + $0x8e0] sm:$0xff]
      %v1630 = vld [vmem:[%s1 + $0x8e8] sm:$0xff]
      %v1631 = vld [vmem:[%s1 + $0x8f0] sm:$0xff]
      %v1632 = vld [vmem:[%s1 + $0x8f8] sm:$0xff]
      %v1633 = vld [vmem:[%s1 + $0x900] sm:$0xff]
      %v1634 = vld [vmem:[%s1 + $0x908] sm:$0xff]
      %v1635 = vld [vmem:[%s1 + $0x910] sm:$0xff]
      %v1636 = vld [vmem:[%s1 + $0x918] sm:$0xff]
      %v1637 = vld [vmem:[%s1 + $0x920] sm:$0xff]
      %v1638 = vld [vmem:[%s1 + $0x928] sm:$0xff]
      %v1639 = vld [vmem:[%s1 + $0x930] sm:$0xff]
      %v1640 = vld [vmem:[%s1 + $0x938] sm:$0xff]
      %v1641 = vld [vmem:[%s1 + $0x940] sm:$0xff]
      %v1642 = vld [vmem:[%s1 + $0x948] sm:$0xff]
      %v1643 = vld [vmem:[%s1 + $0x950] sm:$0xff]
      %v1644 = vld [vmem:[%s1 + $0x958] sm:$0xff]
      %v1645 = vld [vmem:[%s1 + $0x960] sm:$0xff]
      %v1646 = vld [vmem:[%s1 + $0x968] sm:$0xff]
      %v1647 = vld [vmem:[%s1 + $0x970] sm:$0xff]
      %v1648 = vld [vmem:[%s1 + $0x978] sm:$0xff]
      %v1649 = vld [vmem:[%s1 + $0x980] sm:$0xff]
      %v1650 = vld [vmem:[%s1 + $0x988] sm:$0xff]
      %v1651 = vld [vmem:[%s1 + $0x990] sm:$0xff]
      %v1652 = vld [vmem:[%s1 + $0x998] sm:$0xff]
      %v1653 = vld [vmem:[%s1 + $0x9a0] sm:$0xff]
      %v1654 = vld [vmem:[%s1 + $0x9a8] sm:$0xff]
      %v1655 = vld [vmem:[%s1 + $0x9b0] sm:$0xff]
      %v1656 = vld [vmem:[%s1 + $0x9b8] sm:$0xff]
      %v1657 = vld [vmem:[%s1 + $0x9c0] sm:$0xff]
      %v1658 = vld [vmem:[%s1 + $0x9c8] sm:$0xff]
      %v1659 = vld [vmem:[%s1 + $0x9d0] sm:$0xff]
      %v1660 = vld [vmem:[%s1 + $0x9d8] sm:$0xff]
      %v1661 = vld [vmem:[%s1 + $0x9e0] sm:$0xff]
      %v1662 = vld [vmem:[%s1 + $0x9e8] sm:$0xff]
      %v1663 = vld [vmem:[%s1 + $0x9f0] sm:$0xff]
      %v1664 = vld [vmem:[%s1 + $0x9f8] sm:$0xff]
      %v1665 = vld [vmem:[%s1 + $0xa00] sm:$0xff]
      %v1666 = vld [vmem:[%s1 + $0xa08] sm:$0xff]
      %v1667 = vld [vmem:[%s1 + $0xa10] sm:$0xff]
      %v1668 = vld [vmem:[%s1 + $0xa18] sm:$0xff]
      %v1669 = vld [vmem:[%s1 + $0xa20] sm:$0xff]
      %v1670 = vld [vmem:[%s1 + $0xa28] sm:$0xff]
      %v1671 = vld [vmem:[%s1 + $0xa30] sm:$0xff]
      %v1672 = vld [vmem:[%s1 + $0xa38] sm:$0xff]
      %v1673 = vld [vmem:[%s1 + $0xa40] sm:$0xff]
      %v1674 = vld [vmem:[%s1 + $0xa48] sm:$0xff]
      %v1675 = vld [vmem:[%s1 + $0xa50] sm:$0xff]
      %v1676 = vld [vmem:[%s1 + $0xa58] sm:$0xff]
      %v1677 = vld [vmem:[%s1 + $0xa60] sm:$0xff]
      %v1678 = vld [vmem:[%s1 + $0xa68] sm:$0xff]
      %v1679 = vld [vmem:[%s1 + $0xa70] sm:$0xff]
      %v1680 = vld [vmem:[%s1 + $0xa78] sm:$0xff]
      %v1681 = vld [vmem:[%s1 + $0xa80] sm:$0xff]
      %v1682 = vld [vmem:[%s1 + $0xa88] sm:$0xff]
      %v1683 = vld [vmem:[%s1 + $0xa90] sm:$0xff]
      %v1684 = vld [vmem:[%s1 + $0xa98] sm:$0xff]
      %v1685 = vld [vmem:[%s1 + $0xaa0] sm:$0xff]
      %v1686 = vld [vmem:[%s1 + $0xaa8] sm:$0xff]
      %v1687 = vld [vmem:[%s1 + $0xab0] sm:$0xff]
      %v1688 = vld [vmem:[%s1 + $0xab8] sm:$0xff]
      %v1689 = vld [vmem:[%s1 + $0xac0] sm:$0xff]
      %v1690 = vld [vmem:[%s1 + $0xac8] sm:$0xff]
      %v1691 = vld [vmem:[%s1 + $0xad0] sm:$0xff]
      %v1692 = vld [vmem:[%s1 + $0xad8] sm:$0xff]
      %v1693 = vld [vmem:[%s1 + $0xae0] sm:$0xff]
      %v1694 = vld [vmem:[%s1 + $0xae8] sm:$0xff]
      %v1695 = vld [vmem:[%s1 + $0xaf0] sm:$0xff]
      %v1696 = vld [vmem:[%s1 + $0xaf8] sm:$0xff]
      %v1697 = vld [vmem:[%s1 + $0xb00] sm:$0xff]
      %v1698 = vld [vmem:[%s1 + $0xb08] sm:$0xff]
      %v1699 = vld [vmem:[%s1 + $0xb10] sm:$0xff]
      %v1700 = vld [vmem:[%s1 + $0xb18] sm:$0xff]
      %v1701 = vld [vmem:[%s1 + $0xb20] sm:$0xff]
      %v1702 = vld [vmem:[%s1 + $0xb28] sm:$0xff]
      %v1703 = vld [vmem:[%s1 + $0xb30] sm:$0xff]
      %v1704 = vld [vmem:[%s1 + $0xb38] sm:$0xff]
      %v1705 = vld [vmem:[%s1 + $0xb40] sm:$0xff]
      %v1706 = vld [vmem:[%s1 + $0xb48] sm:$0xff]
      %v1707 = vld [vmem:[%s1 + $0xb50] sm:$0xff]
      %v1708 = vld [vmem:[%s1 + $0xb58] sm:$0xff]
      %v1709 = vld [vmem:[%s1 + $0xb60] sm:$0xff]
      %v1710 = vld [vmem:[%s1 + $0xb68] sm:$0xff]
      %v1711 = vld [vmem:[%s1 + $0xb70] sm:$0xff]
      %v1712 = vld [vmem:[%s1 + $0xb78] sm:$0xff]
      %v1713 = vld [vmem:[%s1 + $0xb80] sm:$0xff]
      %v1714 = vld [vmem:[%s1 + $0xb88] sm:$0xff]
      %v1715 = vld [vmem:[%s1 + $0xb90] sm:$0xff]
      %v1716 = vld [vmem:[%s1 + $0xb98] sm:$0xff]
      %v1717 = vld [vmem:[%s1 + $0xba0] sm:$0xff]
      %v1718 = vld [vmem:[%s1 + $0xba8] sm:$0xff]
      %v1719 = vld [vmem:[%s1 + $0xbb0] sm:$0xff]
      %v1720 = vld [vmem:[%s1 + $0xbb8] sm:$0xff]
      %v1721 = vld [vmem:[%s1 + $0xbc0] sm:$0xff]
      %v1722 = vld [vmem:[%s1 + $0xbc8] sm:$0xff]
      %v1723 = vld [vmem:[%s1 + $0xbd0] sm:$0xff]
      %v1724 = vld [vmem:[%s1 + $0xbd8] sm:$0xff]
      %v1725 = vld [vmem:[%s1 + $0xbe0] sm:$0xff]
      %v1726 = vld [vmem:[%s1 + $0xbe8] sm:$0xff]
      %v1727 = vld [vmem:[%s1 + $0xbf0] sm:$0xff]
      %v1728 = vld [vmem:[%s1 + $0xbf8] sm:$0xff]
      %v1729 = vld [vmem:[%s1 + $0xc00] sm:$0xff]
      %v1730 = vld [vmem:[%s1 + $0xc08] sm:$0xff]
      %v1731 = vld [vmem:[%s1 + $0xc10] sm:$0xff]
      %v1732 = vld [vmem:[%s1 + $0xc18] sm:$0xff]
      %v1733 = vld [vmem:[%s1 + $0xc20] sm:$0xff]
      %v1734 = vld [vmem:[%s1 + $0xc28] sm:$0xff]
      %v1735 = vld [vmem:[%s1 + $0xc30] sm:$0xff]
      %v1736 = vld [vmem:[%s1 + $0xc38] sm:$0xff]
      %v1737 = vld [vmem:[%s1 + $0xc40] sm:$0xff]
      %v1738 = vld [vmem:[%s1 + $0xc48] sm:$0xff]
      %v1739 = vld [vmem:[%s1 + $0xc50] sm:$0xff]
      %v1740 = vld [vmem:[%s1 + $0xc58] sm:$0xff]
      %v1741 = vld [vmem:[%s1 + $0xc60] sm:$0xff]
      %v1742 = vld [vmem:[%s1 + $0xc68] sm:$0xff]
      %v1743 = vld [vmem:[%s1 + $0xc70] sm:$0xff]
      %v1744 = vld [vmem:[%s1 + $0xc78] sm:$0xff]
      %v1745 = vld [vmem:[%s1 + $0xc80] sm:$0xff]
      %v1746 = vld [vmem:[%s1 + $0xc88] sm:$0xff]
      %v1747 = vld [vmem:[%s1 + $0xc90] sm:$0xff]
      %v1748 = vld [vmem:[%s1 + $0xc98] sm:$0xff]
      %v1749 = vld [vmem:[%s1 + $0xca0] sm:$0xff]
      %v1750 = vld [vmem:[%s1 + $0xca8] sm:$0xff]
      %v1751 = vld [vmem:[%s1 + $0xcb0] sm:$0xff]
      %v1752 = vld [vmem:[%s1 + $0xcb8] sm:$0xff]
      %v1753 = vld [vmem:[%s1 + $0xcc0] sm:$0xff]
      %v1754 = vld [vmem:[%s1 + $0xcc8] sm:$0xff]
      %v1755 = vld [vmem:[%s1 + $0xcd0] sm:$0xff]
      %v1756 = vld [vmem:[%s1 + $0xcd8] sm:$0xff]
      %v1757 = vld [vmem:[%s1 + $0xce0] sm:$0xff]
      %v1758 = vld [vmem:[%s1 + $0xce8] sm:$0xff]
      %v1759 = vld [vmem:[%s1 + $0xcf0] sm:$0xff]
      %v1760 = vld [vmem:[%s1 + $0xcf8] sm:$0xff]
      %v1761 = vld [vmem:[%s1 + $0xd00] sm:$0xff]
      %v1762 = vld [vmem:[%s1 + $0xd08] sm:$0xff]
      %v1763 = vld [vmem:[%s1 + $0xd10] sm:$0xff]
      %v1764 = vld [vmem:[%s1 + $0xd18] sm:$0xff]
      %v1765 = vld [vmem:[%s1 + $0xd20] sm:$0xff]
      %v1766 = vld [vmem:[%s1 + $0xd28] sm:$0xff]
      %v1767 = vld [vmem:[%s1 + $0xd30] sm:$0xff]
      %v1768 = vld [vmem:[%s1 + $0xd38] sm:$0xff]
      %v1769 = vld [vmem:[%s1 + $0xd40] sm:$0xff]
      %v1770 = vld [vmem:[%s1 + $0xd48] sm:$0xff]
      %v1771 = vld [vmem:[%s1 + $0xd50] sm:$0xff]
      %v1772 = vld [vmem:[%s1 + $0xd58] sm:$0xff]
      %v1773 = vld [vmem:[%s1 + $0xd60] sm:$0xff]
      %v1774 = vld [vmem:[%s1 + $0xd68] sm:$0xff]
      %v1775 = vld [vmem:[%s1 + $0xd70] sm:$0xff]
      %v1776 = vld [vmem:[%s1 + $0xd78] sm:$0xff]
      %v1777 = vld [vmem:[%s1 + $0xd80] sm:$0xff]
      %v1778 = vld [vmem:[%s1 + $0xd88] sm:$0xff]
      %v1779 = vld [vmem:[%s1 + $0xd90] sm:$0xff]
      %v1780 = vld [vmem:[%s1 + $0xd98] sm:$0xff]
      %v1781 = vld [vmem:[%s1 + $0xda0] sm:$0xff]
      %v1782 = vld [vmem:[%s1 + $0xda8] sm:$0xff]
      %v1783 = vld [vmem:[%s1 + $0xdb0] sm:$0xff]
      %v1784 = vld [vmem:[%s1 + $0xdb8] sm:$0xff]
      %v1785 = vld [vmem:[%s1 + $0xdc0] sm:$0xff]
      %v1786 = vld [vmem:[%s1 + $0xdc8] sm:$0xff]
      %v1787 = vld [vmem:[%s1 + $0xdd0] sm:$0xff]
      %v1788 = vld [vmem:[%s1 + $0xdd8] sm:$0xff]
      %v1789 = vld [vmem:[%s1 + $0xde0] sm:$0xff]
      %v1790 = vld [vmem:[%s1 + $0xde8] sm:$0xff]
      %v1791 = vld [vmem:[%s1 + $0xdf0] sm:$0xff]
      %v1792 = vld [vmem:[%s1 + $0xdf8] sm:$0xff]
      %v1793 = vld [vmem:[%s1 + $0xe00] sm:$0xff]
      %v1794 = vld [vmem:[%s1 + $0xe08] sm:$0xff]
      %v1795 = vld [vmem:[%s1 + $0xe10] sm:$0xff]
      %v1796 = vld [vmem:[%s1 + $0xe18] sm:$0xff]
      %v1797 = vld [vmem:[%s1 + $0xe20] sm:$0xff]
      %v1798 = vld [vmem:[%s1 + $0xe28] sm:$0xff]
      %v1799 = vld [vmem:[%s1 + $0xe30] sm:$0xff]
      %v1800 = vld [vmem:[%s1 + $0xe38] sm:$0xff]
      %v1801 = vld [vmem:[%s1 + $0xe40] sm:$0xff]
      %v1802 = vld [vmem:[%s1 + $0xe48] sm:$0xff]
      %v1803 = vld [vmem:[%s1 + $0xe50] sm:$0xff]
      %v1804 = vld [vmem:[%s1 + $0xe58] sm:$0xff]
      %v1805 = vld [vmem:[%s1 + $0xe60] sm:$0xff]
      %v1806 = vld [vmem:[%s1 + $0xe68] sm:$0xff]
      %v1807 = vld [vmem:[%s1 + $0xe70] sm:$0xff]
      %v1808 = vld [vmem:[%s1 + $0xe78] sm:$0xff]
      %v1809 = vld [vmem:[%s1 + $0xe80] sm:$0xff]
      %v1810 = vld [vmem:[%s1 + $0xe88] sm:$0xff]
      %v1811 = vld [vmem:[%s1 + $0xe90] sm:$0xff]
      %v1812 = vld [vmem:[%s1 + $0xe98] sm:$0xff]
      %v1813 = vld [vmem:[%s1 + $0xea0] sm:$0xff]
      %v1814 = vld [vmem:[%s1 + $0xea8] sm:$0xff]
      %v1815 = vld [vmem:[%s1 + $0xeb0] sm:$0xff]
      %v1816 = vld [vmem:[%s1 + $0xeb8] sm:$0xff]
      %v1817 = vld [vmem:[%s1 + $0xec0] sm:$0xff]
      %v1818 = vld [vmem:[%s1 + $0xec8] sm:$0xff]
      %v1819 = vld [vmem:[%s1 + $0xed0] sm:$0xff]
      %v1820 = vld [vmem:[%s1 + $0xed8] sm:$0xff]
      %v1821 = vld [vmem:[%s1 + $0xee0] sm:$0xff]
      %v1822 = vld [vmem:[%s1 + $0xee8] sm:$0xff]
      %v1823 = vld [vmem:[%s1 + $0xef0] sm:$0xff]
      %v1824 = vld [vmem:[%s1 + $0xef8] sm:$0xff]
      %v1825 = vld [vmem:[%s1 + $0xf00] sm:$0xff]
      %v1826 = vld [vmem:[%s1 + $0xf08] sm:$0xff]
      %v1827 = vld [vmem:[%s1 + $0xf10] sm:$0xff]
      %v1828 = vld [vmem:[%s1 + $0xf18] sm:$0xff]
      %v1829 = vld [vmem:[%s1 + $0xf20] sm:$0xff]
      %v1830 = vld [vmem:[%s1 + $0xf28] sm:$0xff]
      %v1831 = vld [vmem:[%s1 + $0xf30] sm:$0xff]
      %v1832 = vld [vmem:[%s1 + $0xf38] sm:$0xff]
      %v1833 = vld [vmem:[%s1 + $0xf40] sm:$0xff]
      %v1834 = vld [vmem:[%s1 + $0xf48] sm:$0xff]
      %v1835 = vld [vmem:[%s1 + $0xf50] sm:$0xff]
      %v1836 = vld [vmem:[%s1 + $0xf58] sm:$0xff]
      %v1837 = vld [vmem:[%s1 + $0xf60] sm:$0xff]
      %v1838 = vld [vmem:[%s1 + $0xf68] sm:$0xff]
      %v1839 = vld [vmem:[%s1 + $0xf70] sm:$0xff]
      %v1840 = vld [vmem:[%s1 + $0xf78] sm:$0xff]
      %v1841 = vld [vmem:[%s1 + $0xf80] sm:$0xff]
      %v1842 = vld [vmem:[%s1 + $0xf88] sm:$0xff]
      %v1843 = vld [vmem:[%s1 + $0xf90] sm:$0xff]
      %v1844 = vld [vmem:[%s1 + $0xf98] sm:$0xff]
      %v1845 = vld [vmem:[%s1 + $0xfa0] sm:$0xff]
      %v1846 = vld [vmem:[%s1 + $0xfa8] sm:$0xff]
      %v1847 = vld [vmem:[%s1 + $0xfb0] sm:$0xff]
      %v1848 = vld [vmem:[%s1 + $0xfb8] sm:$0xff]
      %v1849 = vld [vmem:[%s1 + $0xfc0] sm:$0xff]
      %v1850 = vld [vmem:[%s1 + $0xfc8] sm:$0xff]
      %v1851 = vld [vmem:[%s1 + $0xfd0] sm:$0xff]
      %v1852 = vld [vmem:[%s1 + $0xfd8] sm:$0xff]
      %v1853 = vld [vmem:[%s1 + $0xfe0] sm:$0xff]
      %v1854 = vld [vmem:[%s1 + $0xfe8] sm:$0xff]
      %v1855 = vld [vmem:[%s1 + $0xff0] sm:$0xff]
      %v1856 = vld [vmem:[%s1 + $0xff8] sm:$0xff]
      %v1857 = vld [vmem:[%s1 + $0x1000] sm:$0xff]
      %v1858 = vld [vmem:[%s1 + $0x1008] sm:$0xff]
      %v1859 = vld [vmem:[%s1 + $0x1010] sm:$0xff]
      %v1860 = vld [vmem:[%s1 + $0x1018] sm:$0xff]
      %v1861 = vld [vmem:[%s1 + $0x1020] sm:$0xff]
      %v1862 = vld [vmem:[%s1 + $0x1028] sm:$0xff]
      %v1863 = vld [vmem:[%s1 + $0x1030] sm:$0xff]
      %v1864 = vld [vmem:[%s1 + $0x1038] sm:$0xff]
      %v1865 = vld [vmem:[%s1 + $0x1040] sm:$0xff]
      %v1866 = vld [vmem:[%s1 + $0x1048] sm:$0xff]
      %v1867 = vld [vmem:[%s1 + $0x1050] sm:$0xff]
      %v1868 = vld [vmem:[%s1 + $0x1058] sm:$0xff]
      %v1869 = vld [vmem:[%s1 + $0x1060] sm:$0xff]
      %v1870 = vld [vmem:[%s1 + $0x1068] sm:$0xff]
      %v1871 = vld [vmem:[%s1 + $0x1070] sm:$0xff]
      %v1872 = vld [vmem:[%s1 + $0x1078] sm:$0xff]
      %v1873 = vld [vmem:[%s1 + $0x1080] sm:$0xff]
      %v1874 = vld [vmem:[%s1 + $0x1088] sm:$0xff]
      %v1875 = vld [vmem:[%s1 + $0x1090] sm:$0xff]
      %v1876 = vld [vmem:[%s1 + $0x1098] sm:$0xff]
      %v1877 = vld [vmem:[%s1 + $0x10a0] sm:$0xff]
      %v1878 = vld [vmem:[%s1 + $0x10a8] sm:$0xff]
      %v1879 = vld [vmem:[%s1 + $0x10b0] sm:$0xff]
      %v1880 = vld [vmem:[%s1 + $0x10b8] sm:$0xff]
      %v1881 = vld [vmem:[%s1 + $0x10c0] sm:$0xff]
      %v1882 = vld [vmem:[%s1 + $0x10c8] sm:$0xff]
      %v1883 = vld [vmem:[%s1 + $0x10d0] sm:$0xff]
      %v1884 = vld [vmem:[%s1 + $0x10d8] sm:$0xff]
      %v1885 = vld [vmem:[%s1 + $0x10e0] sm:$0xff]
      %v1886 = vld [vmem:[%s1 + $0x10e8] sm:$0xff]
      %v1887 = vld [vmem:[%s1 + $0x10f0] sm:$0xff]
      %v1888 = vld [vmem:[%s1 + $0x10f8] sm:$0xff]
      %v1889 = vld [vmem:[%s1 + $0x1100] sm:$0xff]
      %v1890 = vld [vmem:[%s1 + $0x1108] sm:$0xff]
      %v1891 = vld [vmem:[%s1 + $0x1110] sm:$0xff]
      %v1892 = vld [vmem:[%s1 + $0x1118] sm:$0xff]
      %v1893 = vld [vmem:[%s1 + $0x1120] sm:$0xff]
      %v1894 = vld [vmem:[%s1 + $0x1128] sm:$0xff]
      %v1895 = vld [vmem:[%s1 + $0x1130] sm:$0xff]
      %v1896 = vld [vmem:[%s1 + $0x1138] sm:$0xff]
      %v1897 = vld [vmem:[%s1 + $0x1140] sm:$0xff]
      %v1898 = vld [vmem:[%s1 + $0x1148] sm:$0xff]
      %v1899 = vld [vmem:[%s1 + $0x1150] sm:$0xff]
      %v1900 = vld [vmem:[%s1 + $0x1158] sm:$0xff]
      %v1901 = vld [vmem:[%s1 + $0x1160] sm:$0xff]
      %v1902 = vld [vmem:[%s1 + $0x1168] sm:$0xff]
      %v1903 = vld [vmem:[%s1 + $0x1170] sm:$0xff]
      %v1904 = vld [vmem:[%s1 + $0x1178] sm:$0xff]
      %v1905 = vld [vmem:[%s1 + $0x1180] sm:$0xff]
      %v1906 = vld [vmem:[%s1 + $0x1188] sm:$0xff]
      %v1907 = vld [vmem:[%s1 + $0x1190] sm:$0xff]
      %v1908 = vld [vmem:[%s1 + $0x1198] sm:$0xff]
      %v1909 = vld [vmem:[%s1 + $0x11a0] sm:$0xff]
      %v1910 = vld [vmem:[%s1 + $0x11a8] sm:$0xff]
      %v1911 = vld [vmem:[%s1 + $0x11b0] sm:$0xff]
      %v1912 = vld [vmem:[%s1 + $0x11b8] sm:$0xff]
      %v1913 = vld [vmem:[%s1 + $0x11c0] sm:$0xff]
      %v1914 = vld [vmem:[%s1 + $0x11c8] sm:$0xff]
      %v1915 = vld [vmem:[%s1 + $0x11d0] sm:$0xff]
      %v1916 = vld [vmem:[%s1 + $0x11d8] sm:$0xff]
      %v1917 = vld [vmem:[%s1 + $0x11e0] sm:$0xff]
      %v1918 = vld [vmem:[%s1 + $0x11e8] sm:$0xff]
      %v1919 = vld [vmem:[%s1 + $0x11f0] sm:$0xff]
      %v1920 = vld [vmem:[%s1 + $0x11f8] sm:$0xff]
      %v1921 = vld [vmem:[%s1 + $0x1200] sm:$0xff]
      %v1922 = vld [vmem:[%s1 + $0x1208] sm:$0xff]
      %v1923 = vld [vmem:[%s1 + $0x1210] sm:$0xff]
      %v1924 = vld [vmem:[%s1 + $0x1218] sm:$0xff]
      %v1925 = vld [vmem:[%s1 + $0x1220] sm:$0xff]
      %v1926 = vld [vmem:[%s1 + $0x1228] sm:$0xff]
      %v1927 = vld [vmem:[%s1 + $0x1230] sm:$0xff]
      %v1928 = vld [vmem:[%s1 + $0x1238] sm:$0xff]
      %v1929 = vld [vmem:[%s1 + $0x1240] sm:$0xff]
      %v1930 = vld [vmem:[%s1 + $0x1248] sm:$0xff]
      %v1931 = vld [vmem:[%s1 + $0x1250] sm:$0xff]
      %v1932 = vld [vmem:[%s1 + $0x1258] sm:$0xff]
      %v1933 = vld [vmem:[%s1 + $0x1260] sm:$0xff]
      %v1934 = vld [vmem:[%s1 + $0x1268] sm:$0xff]
      %v1935 = vld [vmem:[%s1 + $0x1270] sm:$0xff]
      %v1936 = vld [vmem:[%s1 + $0x1278] sm:$0xff]
      %v1937 = vld [vmem:[%s1 + $0x1280] sm:$0xff]
      %v1938 = vld [vmem:[%s1 + $0x1288] sm:$0xff]
      %v1939 = vld [vmem:[%s1 + $0x1290] sm:$0xff]
      %v1940 = vld [vmem:[%s1 + $0x1298] sm:$0xff]
      %v1941 = vld [vmem:[%s1 + $0x12a0] sm:$0xff]
      %v1942 = vld [vmem:[%s1 + $0x12a8] sm:$0xff]
      %v1943 = vld [vmem:[%s1 + $0x12b0] sm:$0xff]
      %v1944 = vld [vmem:[%s1 + $0x12b8] sm:$0xff]
      %v1945 = vld [vmem:[%s1 + $0x12c0] sm:$0xff]
      %v1946 = vld [vmem:[%s1 + $0x12c8] sm:$0xff]
      %v1947 = vld [vmem:[%s1 + $0x12d0] sm:$0xff]
      %v1948 = vld [vmem:[%s1 + $0x12d8] sm:$0xff]
      %v1949 = vld [vmem:[%s1 + $0x12e0] sm:$0xff]
      %v1950 = vld [vmem:[%s1 + $0x12e8] sm:$0xff]
      %v1951 = vld [vmem:[%s1 + $0x12f0] sm:$0xff]
      %v1952 = vld [vmem:[%s1 + $0x12f8] sm:$0xff]
      %v1953 = vld [vmem:[%s1 + $0x1300] sm:$0xff]
      %v1954 = vld [vmem:[%s1 + $0x1308] sm:$0xff]
      %v1955 = vld [vmem:[%s1 + $0x1310] sm:$0xff]
      %v1956 = vld [vmem:[%s1 + $0x1318] sm:$0xff]
      %v1957 = vld [vmem:[%s1 + $0x1320] sm:$0xff]
      %v1958 = vld [vmem:[%s1 + $0x1328] sm:$0xff]
      %v1959 = vld [vmem:[%s1 + $0x1330] sm:$0xff]
      %v1960 = vld [vmem:[%s1 + $0x1338] sm:$0xff]
      %v1961 = vld [vmem:[%s1 + $0x1340] sm:$0xff]
      %v1962 = vld [vmem:[%s1 + $0x1348] sm:$0xff]
      %v1963 = vld [vmem:[%s1 + $0x1350] sm:$0xff]
      %v1964 = vld [vmem:[%s1 + $0x1358] sm:$0xff]
      %v1965 = vld [vmem:[%s1 + $0x1360] sm:$0xff]
      %v1966 = vld [vmem:[%s1 + $0x1368] sm:$0xff]
      %v1967 = vld [vmem:[%s1 + $0x1370] sm:$0xff]
      %v1968 = vld [vmem:[%s1 + $0x1378] sm:$0xff]
      %v1969 = vld [vmem:[%s1 + $0x1380] sm:$0xff]
      %v1970 = vld [vmem:[%s1 + $0x1388] sm:$0xff]
      %v1971 = vld [vmem:[%s1 + $0x1390] sm:$0xff]
      %v1972 = vld [vmem:[%s1 + $0x1398] sm:$0xff]
      %v1973 = vld [vmem:[%s1 + $0x13a0] sm:$0xff]
      %v1974 = vld [vmem:[%s1 + $0x13a8] sm:$0xff]
      %v1975 = vld [vmem:[%s1 + $0x13b0] sm:$0xff]
      %v1976 = vld [vmem:[%s1 + $0x13b8] sm:$0xff]
      %v1977 = vld [vmem:[%s1 + $0x13c0] sm:$0xff]
      %v1978 = vld [vmem:[%s1 + $0x13c8] sm:$0xff]
      %v1979 = vld [vmem:[%s1 + $0x13d0] sm:$0xff]
      %v1980 = vld [vmem:[%s1 + $0x13d8] sm:$0xff]
      %v1981 = vld [vmem:[%s1 + $0x13e0] sm:$0xff]
      %v1982 = vld [vmem:[%s1 + $0x13e8] sm:$0xff]
      %v1983 = vld [vmem:[%s1 + $0x13f0] sm:$0xff]
      %v1984 = vld [vmem:[%s1 + $0x13f8] sm:$0xff]
      %v1985 = vld [vmem:[%s1 + $0x1400] sm:$0xff]
      %v1986 = vld [vmem:[%s1 + $0x1408] sm:$0xff]
      %v1987 = vld [vmem:[%s1 + $0x1410] sm:$0xff]
      %v1988 = vld [vmem:[%s1 + $0x1418] sm:$0xff]
      %v1989 = vld [vmem:[%s1 + $0x1420] sm:$0xff]
      %v1990 = vld [vmem:[%s1 + $0x1428] sm:$0xff]
      %v1991 = vld [vmem:[%s1 + $0x1430] sm:$0xff]
      %v1992 = vld [vmem:[%s1 + $0x1438] sm:$0xff]
      %v1993 = vld [vmem:[%s1 + $0x1440] sm:$0xff]
      %v1994 = vld [vmem:[%s1 + $0x1448] sm:$0xff]
      %v1995 = vld [vmem:[%s1 + $0x1450] sm:$0xff]
      %v1996 = vld [vmem:[%s1 + $0x1458] sm:$0xff]
      %v1997 = vld [vmem:[%s1 + $0x1460] sm:$0xff]
      %v1998 = vld [vmem:[%s1 + $0x1468] sm:$0xff]
      %v1999 = vld [vmem:[%s1 + $0x1470] sm:$0xff]
      %v2000 = vld [vmem:[%s1 + $0x1478] sm:$0xff]
      %v2001 = vld [vmem:[%s1 + $0x1480] sm:$0xff]
      %v2002 = vld [vmem:[%s1 + $0x1488] sm:$0xff]
      %v2003 = vld [vmem:[%s1 + $0x1490] sm:$0xff]
      %v2004 = vld [vmem:[%s1 + $0x1498] sm:$0xff]
      %v2005 = vld [vmem:[%s1 + $0x14a0] sm:$0xff]
      %v2006 = vld [vmem:[%s1 + $0x14a8] sm:$0xff]
      %v2007 = vld [vmem:[%s1 + $0x14b0] sm:$0xff]
      %v2008 = vld [vmem:[%s1 + $0x14b8] sm:$0xff]
      %v2009 = vld [vmem:[%s1 + $0x14c0] sm:$0xff]
      %v2010 = vld [vmem:[%s1 + $0x14c8] sm:$0xff]
      %v2011 = vld [vmem:[%s1 + $0x14d0] sm:$0xff]
      %v2012 = vld [vmem:[%s1 + $0x14d8] sm:$0xff]
      %v2013 = vld [vmem:[%s1 + $0x14e0] sm:$0xff]
      %v2014 = vld [vmem:[%s1 + $0x14e8] sm:$0xff]
      %v2015 = vld [vmem:[%s1 + $0x14f0] sm:$0xff]
      %v2016 = vld [vmem:[%s1 + $0x14f8] sm:$0xff]
      %v2017 = vld [vmem:[%s1 + $0x1500] sm:$0xff]
      %v2018 = vld [vmem:[%s1 + $0x1508] sm:$0xff]
      %v2019 = vld [vmem:[%s1 + $0x1510] sm:$0xff]
      %v2020 = vld [vmem:[%s1 + $0x1518] sm:$0xff]
      %v2021 = vld [vmem:[%s1 + $0x1520] sm:$0xff]
      %v2022 = vld [vmem:[%s1 + $0x1528] sm:$0xff]
      %v2023 = vld [vmem:[%s1 + $0x1530] sm:$0xff]
      %v2024 = vld [vmem:[%s1 + $0x1538] sm:$0xff]
      %v2025 = vld [vmem:[%s1 + $0x1540] sm:$0xff]
      %v2026 = vld [vmem:[%s1 + $0x1548] sm:$0xff]
      %v2027 = vld [vmem:[%s1 + $0x1550] sm:$0xff]
      %v2028 = vld [vmem:[%s1 + $0x1558] sm:$0xff]
      %v2029 = vld [vmem:[%s1 + $0x1560] sm:$0xff]
      %v2030 = vld [vmem:[%s1 + $0x1568] sm:$0xff]
      %v2031 = vld [vmem:[%s1 + $0x1570] sm:$0xff]
      %v2032 = vld [vmem:[%s1 + $0x1578] sm:$0xff]
      %v2033 = vld [vmem:[%s1 + $0x1580] sm:$0xff]
      %v2034 = vld [vmem:[%s1 + $0x1588] sm:$0xff]
      %v2035 = vld [vmem:[%s1 + $0x1590] sm:$0xff]
      %v2036 = vld [vmem:[%s1 + $0x1598] sm:$0xff]
      %v2037 = vld [vmem:[%s1 + $0x15a0] sm:$0xff]
      %v2038 = vld [vmem:[%s1 + $0x15a8] sm:$0xff]
      %v2039 = vld [vmem:[%s1 + $0x15b0] sm:$0xff]
      %v2040 = vld [vmem:[%s1 + $0x15b8] sm:$0xff]
      %v2041 = vld [vmem:[%s1 + $0x15c0] sm:$0xff]
      %v2042 = vld [vmem:[%s1 + $0x15c8] sm:$0xff]
      %v2043 = vld [vmem:[%s1 + $0x15d0] sm:$0xff]
      %v2044 = vld [vmem:[%s1 + $0x15d8] sm:$0xff]
      %v2045 = vld [vmem:[%s1 + $0x15e0] sm:$0xff]
      %v2046 = vld [vmem:[%s1 + $0x15e8] sm:$0xff]
      %v2047 = vld [vmem:[%s1 + $0x15f0] sm:$0xff]
      %v2048 = vld [vmem:[%s1 + $0x15f8] sm:$0xff]
      %v2049 = vld [vmem:[%s1 + $0x1600] sm:$0xff]
      %v2050 = vld [vmem:[%s1 + $0x1608] sm:$0xff]
      %v2051 = vld [vmem:[%s1 + $0x1610] sm:$0xff]
      %v2052 = vld [vmem:[%s1 + $0x1618] sm:$0xff]
      %v2053 = vld [vmem:[%s1 + $0x1620] sm:$0xff]
      %v2054 = vld [vmem:[%s1 + $0x1628] sm:$0xff]
      %v2055 = vld [vmem:[%s1 + $0x1630] sm:$0xff]
      %v2056 = vld [vmem:[%s1 + $0x1638] sm:$0xff]
      %v2057 = vld [vmem:[%s1 + $0x1640] sm:$0xff]
      %v2058 = vld [vmem:[%s1 + $0x1648] sm:$0xff]
      %v2059 = vld [vmem:[%s1 + $0x1650] sm:$0xff]
      %v2060 = vld [vmem:[%s1 + $0x1658] sm:$0xff]
      %v2061 = vld [vmem:[%s1 + $0x1660] sm:$0xff]
      %v2062 = vld [vmem:[%s1 + $0x1668] sm:$0xff]
      %v2063 = vld [vmem:[%s1 + $0x1670] sm:$0xff]
      %v2064 = vld [vmem:[%s1 + $0x1678] sm:$0xff]
      %v2065 = vld [vmem:[%s1 + $0x1680] sm:$0xff]
      %v2066 = vld [vmem:[%s1 + $0x1688] sm:$0xff]
      %v2067 = vld [vmem:[%s1 + $0x1690] sm:$0xff]
      %v2068 = vld [vmem:[%s1 + $0x1698] sm:$0xff]
      %v2069 = vld [vmem:[%s1 + $0x16a0] sm:$0xff]
      %v2070 = vld [vmem:[%s1 + $0x16a8] sm:$0xff]
      %v2071 = vld [vmem:[%s1 + $0x16b0] sm:$0xff]
      %v2072 = vld [vmem:[%s1 + $0x16b8] sm:$0xff]
      %v2073 = vld [vmem:[%s1 + $0x16c0] sm:$0xff]
      %v2074 = vld [vmem:[%s1 + $0x16c8] sm:$0xff]
      %v2075 = vld [vmem:[%s1 + $0x16d0] sm:$0xff]
      %v2076 = vld [vmem:[%s1 + $0x16d8] sm:$0xff]
      %v2077 = vld [vmem:[%s1 + $0x16e0] sm:$0xff]
      %v2078 = vld [vmem:[%s1 + $0x16e8] sm:$0xff]
      %v2079 = vld [vmem:[%s1 + $0x16f0] sm:$0xff]
      %v2080 = vld [vmem:[%s1 + $0x16f8] sm:$0xff]
      %v2081 = vld [vmem:[%s1 + $0x1700] sm:$0xff]
      %v2082 = vld [vmem:[%s1 + $0x1708] sm:$0xff]
      %v2083 = vld [vmem:[%s1 + $0x1710] sm:$0xff]
      %v2084 = vld [vmem:[%s1 + $0x1718] sm:$0xff]
      %v2085 = vld [vmem:[%s1 + $0x1720] sm:$0xff]
      %v2086 = vld [vmem:[%s1 + $0x1728] sm:$0xff]
      %v2087 = vld [vmem:[%s1 + $0x1730] sm:$0xff]
      %v2088 = vld [vmem:[%s1 + $0x1738] sm:$0xff]
      %v2089 = vld [vmem:[%s1 + $0x1740] sm:$0xff]
      %v2090 = vld [vmem:[%s1 + $0x1748] sm:$0xff]
      %v2091 = vld [vmem:[%s1 + $0x1750] sm:$0xff]
      %v2092 = vld [vmem:[%s1 + $0x1758] sm:$0xff]
      %v2093 = vld [vmem:[%s1 + $0x1760] sm:$0xff]
      %v2094 = vld [vmem:[%s1 + $0x1768] sm:$0xff]
      %v2095 = vld [vmem:[%s1 + $0x1770] sm:$0xff]
      %v2096 = vld [vmem:[%s1 + $0x1778] sm:$0xff]
      %v2097 = vld [vmem:[%s1 + $0x1780] sm:$0xff]
      %v2098 = vld [vmem:[%s1 + $0x1788] sm:$0xff]
      %v2099 = vld [vmem:[%s1 + $0x1790] sm:$0xff]
      %v2100 = vld [vmem:[%s1 + $0x1798] sm:$0xff]
      %v2101 = vld [vmem:[%s1 + $0x17a0] sm:$0xff]
      %v2102 = vld [vmem:[%s1 + $0x17a8] sm:$0xff]
      %v2103 = vld [vmem:[%s1 + $0x17b0] sm:$0xff]
      %v2104 = vld [vmem:[%s1 + $0x17b8] sm:$0xff]
      %v2105 = vld [vmem:[%s1 + $0x17c0] sm:$0xff]
      %v2106 = vld [vmem:[%s1 + $0x17c8] sm:$0xff]
      %v2107 = vld [vmem:[%s1 + $0x17d0] sm:$0xff]
      %v2108 = vld [vmem:[%s1 + $0x17d8] sm:$0xff]
      %v2109 = vld [vmem:[%s1 + $0x17e0] sm:$0xff]
      %v2110 = vld [vmem:[%s1 + $0x17e8] sm:$0xff]
      %v2111 = vld [vmem:[%s1 + $0x17f0] sm:$0xff]
      %v2112 = vld [vmem:[%s1 + $0x17f8] sm:$0xff]
      %v2113 = vld [vmem:[%s1 + $0x1800] sm:$0xff]
      %v2114 = vld [vmem:[%s1 + $0x1808] sm:$0xff]
      %v2115 = vld [vmem:[%s1 + $0x1810] sm:$0xff]
      %v2116 = vld [vmem:[%s1 + $0x1818] sm:$0xff]
      %v2117 = vld [vmem:[%s1 + $0x1820] sm:$0xff]
      %v2118 = vld [vmem:[%s1 + $0x1828] sm:$0xff]
      %v2119 = vld [vmem:[%s1 + $0x1830] sm:$0xff]
      %v2120 = vld [vmem:[%s1 + $0x1838] sm:$0xff]
      %v2121 = vld [vmem:[%s1 + $0x1840] sm:$0xff]
      %v2122 = vld [vmem:[%s1 + $0x1848] sm:$0xff]
      %v2123 = vld [vmem:[%s1 + $0x1850] sm:$0xff]
      %v2124 = vld [vmem:[%s1 + $0x1858] sm:$0xff]
      %v2125 = vld [vmem:[%s1 + $0x1860] sm:$0xff]
      %v2126 = vld [vmem:[%s1 + $0x1868] sm:$0xff]
      %v2127 = vld [vmem:[%s1 + $0x1870] sm:$0xff]
      %v2128 = vld [vmem:[%s1 + $0x1878] sm:$0xff]
      %v2129 = vld [vmem:[%s1 + $0x1880] sm:$0xff]
      %v2130 = vld [vmem:[%s1 + $0x1888] sm:$0xff]
      %v2131 = vld [vmem:[%s1 + $0x1890] sm:$0xff]
      %v2132 = vld [vmem:[%s1 + $0x1898] sm:$0xff]
      %v2133 = vld [vmem:[%s1 + $0x18a0] sm:$0xff]
      %v2134 = vld [vmem:[%s1 + $0x18a8] sm:$0xff]
      %v2135 = vld [vmem:[%s1 + $0x18b0] sm:$0xff]
      %v2136 = vld [vmem:[%s1 + $0x18b8] sm:$0xff]
      %v2137 = vld [vmem:[%s1 + $0x18c0] sm:$0xff]
      %v2138 = vld [vmem:[%s1 + $0x18c8] sm:$0xff]
      %v2139 = vld [vmem:[%s1 + $0x18d0] sm:$0xff]
      %v2140 = vld [vmem:[%s1 + $0x18d8] sm:$0xff]
      %v2141 = vld [vmem:[%s1 + $0x18e0] sm:$0xff]
      %v2142 = vld [vmem:[%s1 + $0x18e8] sm:$0xff]
      %v2143 = vld [vmem:[%s1 + $0x18f0] sm:$0xff]
      %v2144 = vld [vmem:[%s1 + $0x18f8] sm:$0xff]
      %v2145 = vld [vmem:[%s1 + $0x1900] sm:$0xff]
      %v2146 = vld [vmem:[%s1 + $0x1908] sm:$0xff]
      %v2147 = vld [vmem:[%s1 + $0x1910] sm:$0xff]
      %v2148 = vld [vmem:[%s1 + $0x1918] sm:$0xff]
      %v2149 = vld [vmem:[%s1 + $0x1920] sm:$0xff]
      %v2150 = vld [vmem:[%s1 + $0x1928] sm:$0xff]
      %v2151 = vld [vmem:[%s1 + $0x1930] sm:$0xff]
      %v2152 = vld [vmem:[%s1 + $0x1938] sm:$0xff]
      %v2153 = vld [vmem:[%s1 + $0x1940] sm:$0xff]
      %v2154 = vld [vmem:[%s1 + $0x1948] sm:$0xff]
      %v2155 = vld [vmem:[%s1 + $0x1950] sm:$0xff]
      %v2156 = vld [vmem:[%s1 + $0x1958] sm:$0xff]
      %v2157 = vld [vmem:[%s1 + $0x1960] sm:$0xff]
      %v2158 = vld [vmem:[%s1 + $0x1968] sm:$0xff]
      %v2159 = vld [vmem:[%s1 + $0x1970] sm:$0xff]
      %v2160 = vld [vmem:[%s1 + $0x1978] sm:$0xff]
      %v2161 = vld [vmem:[%s1 + $0x1980] sm:$0xff]
      %v2162 = vld [vmem:[%s1 + $0x1988] sm:$0xff]
      %v2163 = vld [vmem:[%s1 + $0x1990] sm:$0xff]
      %v2164 = vld [vmem:[%s1 + $0x1998] sm:$0xff]
      %v2165 = vld [vmem:[%s1 + $0x19a0] sm:$0xff]
      %v2166 = vld [vmem:[%s1 + $0x19a8] sm:$0xff]
      %v2167 = vld [vmem:[%s1 + $0x19b0] sm:$0xff]
      %v2168 = vld [vmem:[%s1 + $0x19b8] sm:$0xff]
      %v2169 = vld [vmem:[%s1 + $0x19c0] sm:$0xff]
      %v2170 = vld [vmem:[%s1 + $0x19c8] sm:$0xff]
      %v2171 = vld [vmem:[%s1 + $0x19d0] sm:$0xff]
      %v2172 = vld [vmem:[%s1 + $0x19d8] sm:$0xff]
      %v2173 = vld [vmem:[%s1 + $0x19e0] sm:$0xff]
      %v2174 = vld [vmem:[%s1 + $0x19e8] sm:$0xff]
      %v2175 = vld [vmem:[%s1 + $0x19f0] sm:$0xff]
      %v2176 = vld [vmem:[%s1 + $0x19f8] sm:$0xff]
      %v2177 = vld [vmem:[%s1 + $0x1a00] sm:$0xff]
      %v2178 = vld [vmem:[%s1 + $0x1a08] sm:$0xff]
      %v2179 = vld [vmem:[%s1 + $0x1a10] sm:$0xff]
      %v2180 = vld [vmem:[%s1 + $0x1a18] sm:$0xff]
      %v2181 = vld [vmem:[%s1 + $0x1a20] sm:$0xff]
      %v2182 = vld [vmem:[%s1 + $0x1a28] sm:$0xff]
      %v2183 = vld [vmem:[%s1 + $0x1a30] sm:$0xff]
      %v2184 = vld [vmem:[%s1 + $0x1a38] sm:$0xff]
      %v2185 = vld [vmem:[%s1 + $0x1a40] sm:$0xff]
      %v2186 = vld [vmem:[%s1 + $0x1a48] sm:$0xff]
      %v2187 = vld [vmem:[%s1 + $0x1a50] sm:$0xff]
      %v2188 = vld [vmem:[%s1 + $0x1a58] sm:$0xff]
      %v2189 = vld [vmem:[%s1 + $0x1a60] sm:$0xff]
      %v2190 = vld [vmem:[%s1 + $0x1a68] sm:$0xff]
      %v2191 = vld [vmem:[%s1 + $0x1a70] sm:$0xff]
      %v2192 = vld [vmem:[%s1 + $0x1a78] sm:$0xff]
      %v2193 = vld [vmem:[%s1 + $0x1a80] sm:$0xff]
      %v2194 = vld [vmem:[%s1 + $0x1a88] sm:$0xff]
      %v2195 = vld [vmem:[%s1 + $0x1a90] sm:$0xff]
      %v2196 = vld [vmem:[%s1 + $0x1a98] sm:$0xff]
      %v2197 = vld [vmem:[%s1 + $0x1aa0] sm:$0xff]
      %v2198 = vld [vmem:[%s1 + $0x1aa8] sm:$0xff]
      %v2199 = vld [vmem:[%s1 + $0x1ab0] sm:$0xff]
      %v2200 = vld [vmem:[%s1 + $0x1ab8] sm:$0xff]
      %v2201 = vld [vmem:[%s1 + $0x1ac0] sm:$0xff]
      %v2202 = vld [vmem:[%s1 + $0x1ac8] sm:$0xff]
      %v2203 = vld [vmem:[%s1 + $0x1ad0] sm:$0xff]
      %v2204 = vld [vmem:[%s1 + $0x1ad8] sm:$0xff]
      %v2205 = vld [vmem:[%s1 + $0x1ae0] sm:$0xff]
      %v2206 = vld [vmem:[%s1 + $0x1ae8] sm:$0xff]
      %v2207 = vld [vmem:[%s1 + $0x1af0] sm:$0xff]
      %v2208 = vld [vmem:[%s1 + $0x1af8] sm:$0xff]
      %v2209 = vld [vmem:[%s1 + $0x1b00] sm:$0xff]
      %v2210 = vld [vmem:[%s1 + $0x1b08] sm:$0xff]
      %v2211 = vld [vmem:[%s1 + $0x1b10] sm:$0xff]
      %v2212 = vld [vmem:[%s1 + $0x1b18] sm:$0xff]
      %v2213 = vld [vmem:[%s1 + $0x1b20] sm:$0xff]
      %v2214 = vld [vmem:[%s1 + $0x1b28] sm:$0xff]
      %v2215 = vld [vmem:[%s1 + $0x1b30] sm:$0xff]
      %v2216 = vld [vmem:[%s1 + $0x1b38] sm:$0xff]
      %v2217 = vld [vmem:[%s1 + $0x1b40] sm:$0xff]
      %v2218 = vld [vmem:[%s1 + $0x1b48] sm:$0xff]
      %v2219 = vld [vmem:[%s1 + $0x1b50] sm:$0xff]
      %v2220 = vld [vmem:[%s1 + $0x1b58] sm:$0xff]
      %v2221 = vld [vmem:[%s1 + $0x1b60] sm:$0xff]
      %v2222 = vld [vmem:[%s1 + $0x1b68] sm:$0xff]
      %v2223 = vld [vmem:[%s1 + $0x1b70] sm:$0xff]
      %v2224 = vld [vmem:[%s1 + $0x1b78] sm:$0xff]
      %v2225 = vld [vmem:[%s1 + $0x1b80] sm:$0xff]
      %v2226 = vld [vmem:[%s1 + $0x1b88] sm:$0xff]
      %v2227 = vld [vmem:[%s1 + $0x1b90] sm:$0xff]
      %v2228 = vld [vmem:[%s1 + $0x1b98] sm:$0xff]
      %v2229 = vld [vmem:[%s1 + $0x1ba0] sm:$0xff]
      %v2230 = vld [vmem:[%s1 + $0x1ba8] sm:$0xff]
      %v2231 = vld [vmem:[%s1 + $0x1bb0] sm:$0xff]
      %v2232 = vld [vmem:[%s1 + $0x1bb8] sm:$0xff]
      %v2233 = vld [vmem:[%s1 + $0x1bc0] sm:$0xff]
      %v2234 = vld [vmem:[%s1 + $0x1bc8] sm:$0xff]
      %v2235 = vld [vmem:[%s1 + $0x1bd0] sm:$0xff]
      %v2236 = vld [vmem:[%s1 + $0x1bd8] sm:$0xff]
      %v2237 = vld [vmem:[%s1 + $0x1be0] sm:$0xff]
      %v2238 = vld [vmem:[%s1 + $0x1be8] sm:$0xff]
      %v2239 = vld [vmem:[%s1 + $0x1bf0] sm:$0xff]
      %v2240 = vld [vmem:[%s1 + $0x1bf8] sm:$0xff]
      %v2241 = vld [vmem:[%s1 + $0x1c00] sm:$0xff]
      %v2242 = vld [vmem:[%s1 + $0x1c08] sm:$0xff]
      %v2243 = vld [vmem:[%s1 + $0x1c10] sm:$0xff]
      %v2244 = vld [vmem:[%s1 + $0x1c18] sm:$0xff]
      %v2245 = vld [vmem:[%s1 + $0x1c20] sm:$0xff]
      %v2246 = vld [vmem:[%s1 + $0x1c28] sm:$0xff]
      %v2247 = vld [vmem:[%s1 + $0x1c30] sm:$0xff]
      %v2248 = vld [vmem:[%s1 + $0x1c38] sm:$0xff]
      %v2249 = vld [vmem:[%s1 + $0x1c40] sm:$0xff]
      %v2250 = vld [vmem:[%s1 + $0x1c48] sm:$0xff]
      %v2251 = vld [vmem:[%s1 + $0x1c50] sm:$0xff]
      %v2252 = vld [vmem:[%s1 + $0x1c58] sm:$0xff]
      %v2253 = vld [vmem:[%s1 + $0x1c60] sm:$0xff]
      %v2254 = vld [vmem:[%s1 + $0x1c68] sm:$0xff]
      %v2255 = vld [vmem:[%s1 + $0x1c70] sm:$0xff]
      %v2256 = vld [vmem:[%s1 + $0x1c78] sm:$0xff]
      %v2257 = vld [vmem:[%s1 + $0x1c80] sm:$0xff]
      %v2258 = vld [vmem:[%s1 + $0x1c88] sm:$0xff]
      %v2259 = vld [vmem:[%s1 + $0x1c90] sm:$0xff]
      %v2260 = vld [vmem:[%s1 + $0x1c98] sm:$0xff]
      %v2261 = vld [vmem:[%s1 + $0x1ca0] sm:$0xff]
      %v2262 = vld [vmem:[%s1 + $0x1ca8] sm:$0xff]
      %v2263 = vld [vmem:[%s1 + $0x1cb0] sm:$0xff]
      %v2264 = vld [vmem:[%s1 + $0x1cb8] sm:$0xff]
      %v2265 = vld [vmem:[%s1 + $0x1cc0] sm:$0xff]
      %v2266 = vld [vmem:[%s1 + $0x1cc8] sm:$0xff]
      %v2267 = vld [vmem:[%s1 + $0x1cd0] sm:$0xff]
      %v2268 = vld [vmem:[%s1 + $0x1cd8] sm:$0xff]
      %v2269 = vld [vmem:[%s1 + $0x1ce0] sm:$0xff]
      %v2270 = vld [vmem:[%s1 + $0x1ce8] sm:$0xff]
      %v2271 = vld [vmem:[%s1 + $0x1cf0] sm:$0xff]
      %v2272 = vld [vmem:[%s1 + $0x1cf8] sm:$0xff]
      %v2273 = vld [vmem:[%s1 + $0x1d00] sm:$0xff]
      %v2274 = vld [vmem:[%s1 + $0x1d08] sm:$0xff]
      %v2275 = vld [vmem:[%s1 + $0x1d10] sm:$0xff]
      %v2276 = vld [vmem:[%s1 + $0x1d18] sm:$0xff]
      %v2277 = vld [vmem:[%s1 + $0x1d20] sm:$0xff]
      %v2278 = vld [vmem:[%s1 + $0x1d28] sm:$0xff]
      %v2279 = vld [vmem:[%s1 + $0x1d30] sm:$0xff]
      %v2280 = vld [vmem:[%s1 + $0x1d38] sm:$0xff]
      %v2281 = vld [vmem:[%s1 + $0x1d40] sm:$0xff]
      %v2282 = vld [vmem:[%s1 + $0x1d48] sm:$0xff]
      %v2283 = vld [vmem:[%s1 + $0x1d50] sm:$0xff]
      %v2284 = vld [vmem:[%s1 + $0x1d58] sm:$0xff]
      %v2285 = vld [vmem:[%s1 + $0x1d60] sm:$0xff]
      %v2286 = vld [vmem:[%s1 + $0x1d68] sm:$0xff]
      %v2287 = vld [vmem:[%s1 + $0x1d70] sm:$0xff]
      %v2288 = vld [vmem:[%s1 + $0x1d78] sm:$0xff]
      %v2289 = vld [vmem:[%s1 + $0x1d80] sm:$0xff]
      %v2290 = vld [vmem:[%s1 + $0x1d88] sm:$0xff]
      %v2291 = vld [vmem:[%s1 + $0x1d90] sm:$0xff]
      %v2292 = vld [vmem:[%s1 + $0x1d98] sm:$0xff]
      %v2293 = vld [vmem:[%s1 + $0x1da0] sm:$0xff]
      %v2294 = vld [vmem:[%s1 + $0x1da8] sm:$0xff]
      %v2295 = vld [vmem:[%s1 + $0x1db0] sm:$0xff]
      %v2296 = vld [vmem:[%s1 + $0x1db8] sm:$0xff]
      %v2297 = vld [vmem:[%s1 + $0x1dc0] sm:$0xff]
      %v2298 = vld [vmem:[%s1 + $0x1dc8] sm:$0xff]
      %v2299 = vld [vmem:[%s1 + $0x1dd0] sm:$0xff]
      %v2300 = vld [vmem:[%s1 + $0x1dd8] sm:$0xff]
      %v2301 = vld [vmem:[%s1 + $0x1de0] sm:$0xff]
      %v2302 = vld [vmem:[%s1 + $0x1de8] sm:$0xff]
      %v2303 = vld [vmem:[%s1 + $0x1df0] sm:$0xff]
      %v2304 = vld [vmem:[%s1 + $0x1df8] sm:$0xff]
      %v2305 = vld [vmem:[%s1 + $0x1e00] sm:$0xff]
      %v2306 = vld [vmem:[%s1 + $0x1e08] sm:$0xff]
      %v2307 = vld [vmem:[%s1 + $0x1e10] sm:$0xff]
      %v2308 = vld [vmem:[%s1 + $0x1e18] sm:$0xff]
      %v2309 = vld [vmem:[%s1 + $0x1e20] sm:$0xff]
      %v2310 = vld [vmem:[%s1 + $0x1e28] sm:$0xff]
      %v2311 = vld [vmem:[%s1 + $0x1e30] sm:$0xff]
      %v2312 = vld [vmem:[%s1 + $0x1e38] sm:$0xff]
      %v2313 = vld [vmem:[%s1 + $0x1e40] sm:$0xff]
      %v2314 = vld [vmem:[%s1 + $0x1e48] sm:$0xff]
      %v2315 = vld [vmem:[%s1 + $0x1e50] sm:$0xff]
      %v2316 = vld [vmem:[%s1 + $0x1e58] sm:$0xff]
      %v2317 = vld [vmem:[%s1 + $0x1e60] sm:$0xff]
      %v2318 = vld [vmem:[%s1 + $0x1e68] sm:$0xff]
      %v2319 = vld [vmem:[%s1 + $0x1e70] sm:$0xff]
      %v2320 = vld [vmem:[%s1 + $0x1e78] sm:$0xff]
      %v2321 = vld [vmem:[%s1 + $0x1e80] sm:$0xff]
      %v2322 = vld [vmem:[%s1 + $0x1e88] sm:$0xff]
      %v2323 = vld [vmem:[%s1 + $0x1e90] sm:$0xff]
      %v2324 = vld [vmem:[%s1 + $0x1e98] sm:$0xff]
      %v2325 = vld [vmem:[%s1 + $0x1ea0] sm:$0xff]
      %v2326 = vld [vmem:[%s1 + $0x1ea8] sm:$0xff]
      %v2327 = vld [vmem:[%s1 + $0x1eb0] sm:$0xff]
      %v2328 = vld [vmem:[%s1 + $0x1eb8] sm:$0xff]
      %v2329 = vld [vmem:[%s1 + $0x1ec0] sm:$0xff]
      %v2330 = vld [vmem:[%s1 + $0x1ec8] sm:$0xff]
      %v2331 = vld [vmem:[%s1 + $0x1ed0] sm:$0xff]
      %v2332 = vld [vmem:[%s1 + $0x1ed8] sm:$0xff]
      %v2333 = vld [vmem:[%s1 + $0x1ee0] sm:$0xff]
      %v2334 = vld [vmem:[%s1 + $0x1ee8] sm:$0xff]
      %v2335 = vld [vmem:[%s1 + $0x1ef0] sm:$0xff]
      %v2336 = vld [vmem:[%s1 + $0x1ef8] sm:$0xff]
      %v2337 = vld [vmem:[%s1 + $0x1f00] sm:$0xff]
      %v2338 = vld [vmem:[%s1 + $0x1f08] sm:$0xff]
      %v2339 = vld [vmem:[%s1 + $0x1f10] sm:$0xff]
      %v2340 = vld [vmem:[%s1 + $0x1f18] sm:$0xff]
      %v2341 = vld [vmem:[%s1 + $0x1f20] sm:$0xff]
      %v2342 = vld [vmem:[%s1 + $0x1f28] sm:$0xff]
      %v2343 = vld [vmem:[%s1 + $0x1f30] sm:$0xff]
      %v2344 = vld [vmem:[%s1 + $0x1f38] sm:$0xff]
      %v2345 = vld [vmem:[%s1 + $0x1f40] sm:$0xff]
      %v2346 = vld [vmem:[%s1 + $0x1f48] sm:$0xff]
      %v2347 = vld [vmem:[%s1 + $0x1f50] sm:$0xff]
      %v2348 = vld [vmem:[%s1 + $0x1f58] sm:$0xff]
      %v2349 = vld [vmem:[%s1 + $0x1f60] sm:$0xff]
      %v2350 = vld [vmem:[%s1 + $0x1f68] sm:$0xff]
      %v2351 = vld [vmem:[%s1 + $0x1f70] sm:$0xff]
      %v2352 = vld [vmem:[%s1 + $0x1f78] sm:$0xff]
      %v2353 = vld [vmem:[%s1 + $0x1f80] sm:$0xff]
      %v2354 = vld [vmem:[%s1 + $0x1f88] sm:$0xff]
      %v2355 = vld [vmem:[%s1 + $0x1f90] sm:$0xff]
      %v2356 = vld [vmem:[%s1 + $0x1f98] sm:$0xff]
      %v2357 = vld [vmem:[%s1 + $0x1fa0] sm:$0xff]
      %v2358 = vld [vmem:[%s1 + $0x1fa8] sm:$0xff]
      %v2359 = vld [vmem:[%s1 + $0x1fb0] sm:$0xff]
      %v2360 = vld [vmem:[%s1 + $0x1fb8] sm:$0xff]
      %v2361 = vld [vmem:[%s1 + $0x1fc0] sm:$0xff]
      %v2362 = vld [vmem:[%s1 + $0x1fc8] sm:$0xff]
      %v2363 = vld [vmem:[%s1 + $0x1fd0] sm:$0xff]
      %v2364 = vld [vmem:[%s1 + $0x1fd8] sm:$0xff]
      %v2365 = vld [vmem:[%s1 + $0x1fe0] sm:$0xff]
      %v2366 = vld [vmem:[%s1 + $0x1fe8] sm:$0xff]
      %v2367 = vld [vmem:[%s1 + $0x1ff0] sm:$0xff]
      %v2368 = vld [vmem:[%s1 + $0x1ff8] sm:$0xff]
      %v2369 = vld [vmem:[%s1 + $0x2000] sm:$0xff]
      %v2370 = vld [vmem:[%s1 + $0x2008] sm:$0xff]
      %v2371 = vld [vmem:[%s1 + $0x2010] sm:$0xff]
      %v2372 = vld [vmem:[%s1 + $0x2018] sm:$0xff]
      %v2373 = vld [vmem:[%s1 + $0x2020] sm:$0xff]
      %v2374 = vld [vmem:[%s1 + $0x2028] sm:$0xff]
      %v2375 = vld [vmem:[%s1 + $0x2030] sm:$0xff]
      %v2376 = vld [vmem:[%s1 + $0x2038] sm:$0xff]
      %v2377 = vld [vmem:[%s1 + $0x2040] sm:$0xff]
      %v2378 = vld [vmem:[%s1 + $0x2048] sm:$0xff]
      %v2379 = vld [vmem:[%s1 + $0x2050] sm:$0xff]
      %v2380 = vld [vmem:[%s1 + $0x2058] sm:$0xff]
      %v2381 = vld [vmem:[%s1 + $0x2060] sm:$0xff]
      %v2382 = vld [vmem:[%s1 + $0x2068] sm:$0xff]
      %v2383 = vld [vmem:[%s1 + $0x2070] sm:$0xff]
      %v2384 = vld [vmem:[%s1 + $0x2078] sm:$0xff]
      %v2385 = vld [vmem:[%s1 + $0x2080] sm:$0xff]
      %v2386 = vld [vmem:[%s1 + $0x2088] sm:$0xff]
      %v2387 = vld [vmem:[%s1 + $0x2090] sm:$0xff]
      %v2388 = vld [vmem:[%s1 + $0x2098] sm:$0xff]
      %v2389 = vld [vmem:[%s1 + $0x20a0] sm:$0xff]
      %v2390 = vld [vmem:[%s1 + $0x20a8] sm:$0xff]
      %v2391 = vld [vmem:[%s1 + $0x20b0] sm:$0xff]
      %v2392 = vld [vmem:[%s1 + $0x20b8] sm:$0xff]
      %v2393 = vld [vmem:[%s1 + $0x20c0] sm:$0xff]
      %v2394 = vld [vmem:[%s1 + $0x20c8] sm:$0xff]
      %v2395 = vld [vmem:[%s1 + $0x20d0] sm:$0xff]
      %v2396 = vld [vmem:[%s1 + $0x20d8] sm:$0xff]
      %v2397 = vld [vmem:[%s1 + $0x20e0] sm:$0xff]
      %v2398 = vld [vmem:[%s1 + $0x20e8] sm:$0xff]
      %v2399 = vld [vmem:[%s1 + $0x20f0] sm:$0xff]
      %v2400 = vld [vmem:[%s1 + $0x20f8] sm:$0xff]
      %v2401 = vld [vmem:[%s1 + $0x2100] sm:$0xff]
      %v2402 = vld [vmem:[%s1 + $0x2108] sm:$0xff]
      %v2403 = vld [vmem:[%s1 + $0x2110] sm:$0xff]
      %v2404 = vld [vmem:[%s1 + $0x2118] sm:$0xff]
      %v2405 = vld [vmem:[%s1 + $0x2120] sm:$0xff]
      %v2406 = vld [vmem:[%s1 + $0x2128] sm:$0xff]
      %v2407 = vld [vmem:[%s1 + $0x2130] sm:$0xff]
      %v2408 = vld [vmem:[%s1 + $0x2138] sm:$0xff]
      %v2409 = vld [vmem:[%s1 + $0x2140] sm:$0xff]
      %v2410 = vld [vmem:[%s1 + $0x2148] sm:$0xff]
      %v2411 = vld [vmem:[%s1 + $0x2150] sm:$0xff]
      %v2412 = vld [vmem:[%s1 + $0x2158] sm:$0xff]
      %v2413 = vld [vmem:[%s1 + $0x2160] sm:$0xff]
      %v2414 = vld [vmem:[%s1 + $0x2168] sm:$0xff]
      %v2415 = vld [vmem:[%s1 + $0x2170] sm:$0xff]
      %v2416 = vld [vmem:[%s1 + $0x2178] sm:$0xff]
      %v2417 = vld [vmem:[%s1 + $0x2180] sm:$0xff]
      %v2418 = vld [vmem:[%s1 + $0x2188] sm:$0xff]
      %v2419 = vld [vmem:[%s1 + $0x2190] sm:$0xff]
      %v2420 = vld [vmem:[%s1 + $0x2198] sm:$0xff]
      %v2421 = vld [vmem:[%s1 + $0x21a0] sm:$0xff]
      %v2422 = vld [vmem:[%s1 + $0x21a8] sm:$0xff]
      %v2423 = vld [vmem:[%s1 + $0x21b0] sm:$0xff]
      %v2424 = vld [vmem:[%s1 + $0x21b8] sm:$0xff]
      %v2425 = vld [vmem:[%s1 + $0x21c0] sm:$0xff]
      %v2426 = vld [vmem:[%s1 + $0x21c8] sm:$0xff]
      %v2427 = vld [vmem:[%s1 + $0x21d0] sm:$0xff]
      %v2428 = vld [vmem:[%s1 + $0x21d8] sm:$0xff]
      %v2429 = vld [vmem:[%s1 + $0x21e0] sm:$0xff]
      %v2430 = vld [vmem:[%s1 + $0x21e8] sm:$0xff]
      %v2431 = vld [vmem:[%s1 + $0x21f0] sm:$0xff]
      %v2432 = vld [vmem:[%s1 + $0x21f8] sm:$0xff]
      %v2433 = vld [vmem:[%s1 + $0x2200] sm:$0xff]
      %v2434 = vld [vmem:[%s1 + $0x2208] sm:$0xff]
      %v2435 = vld [vmem:[%s1 + $0x2210] sm:$0xff]
      %v2436 = vld [vmem:[%s1 + $0x2218] sm:$0xff]
      %v2437 = vld [vmem:[%s1 + $0x2220] sm:$0xff]
      %v2438 = vld [vmem:[%s1 + $0x2228] sm:$0xff]
      %v2439 = vld [vmem:[%s1 + $0x2230] sm:$0xff]
      %v2440 = vld [vmem:[%s1 + $0x2238] sm:$0xff]
      %v2441 = vld [vmem:[%s1 + $0x2240] sm:$0xff]
      %v2442 = vld [vmem:[%s1 + $0x2248] sm:$0xff]
      %v2443 = vld [vmem:[%s1 + $0x2250] sm:$0xff]
      %v2444 = vld [vmem:[%s1 + $0x2258] sm:$0xff]
      %v2445 = vld [vmem:[%s1 + $0x2260] sm:$0xff]
      %v2446 = vld [vmem:[%s1 + $0x2268] sm:$0xff]
      %v2447 = vld [vmem:[%s1 + $0x2270] sm:$0xff]
      %v2448 = vld [vmem:[%s1 + $0x2278] sm:$0xff]
      %v2449 = vld [vmem:[%s1 + $0x2280] sm:$0xff]
      %v2450 = vld [vmem:[%s1 + $0x2288] sm:$0xff]
      %v2451 = vld [vmem:[%s1 + $0x2290] sm:$0xff]
      %v2452 = vld [vmem:[%s1 + $0x2298] sm:$0xff]
      %v2453 = vld [vmem:[%s1 + $0x22a0] sm:$0xff]
      %v2454 = vld [vmem:[%s1 + $0x22a8] sm:$0xff]
      %v2455 = vld [vmem:[%s1 + $0x22b0] sm:$0xff]
      %v2456 = vld [vmem:[%s1 + $0x22b8] sm:$0xff]
      %v2457 = vld [vmem:[%s1 + $0x22c0] sm:$0xff]
      %v2458 = vld [vmem:[%s1 + $0x22c8] sm:$0xff]
      %v2459 = vld [vmem:[%s1 + $0x22d0] sm:$0xff]
      %v2460 = vld [vmem:[%s1 + $0x22d8] sm:$0xff]
      %v2461 = vld [vmem:[%s1 + $0x22e0] sm:$0xff]
      %v2462 = vld [vmem:[%s1 + $0x22e8] sm:$0xff]
      %v2463 = vld [vmem:[%s1 + $0x22f0] sm:$0xff]
      %v2464 = vld [vmem:[%s1 + $0x22f8] sm:$0xff]
      %v2465 = vld [vmem:[%s1 + $0x2300] sm:$0xff]
      %v2466 = vld [vmem:[%s1 + $0x2308] sm:$0xff]
      %v2467 = vld [vmem:[%s1 + $0x2310] sm:$0xff]
      %v2468 = vld [vmem:[%s1 + $0x2318] sm:$0xff]
      %v2469 = vld [vmem:[%s1 + $0x2320] sm:$0xff]
      %v2470 = vld [vmem:[%s1 + $0x2328] sm:$0xff]
      %v2471 = vld [vmem:[%s1 + $0x2330] sm:$0xff]
      %v2472 = vld [vmem:[%s1 + $0x2338] sm:$0xff]
      %v2473 = vld [vmem:[%s1 + $0x2340] sm:$0xff]
      %v2474 = vld [vmem:[%s1 + $0x2348] sm:$0xff]
      %v2475 = vld [vmem:[%s1 + $0x2350] sm:$0xff]
      %v2476 = vld [vmem:[%s1 + $0x2358] sm:$0xff]
      %v2477 = vld [vmem:[%s1 + $0x2360] sm:$0xff]
      %v2478 = vld [vmem:[%s1 + $0x2368] sm:$0xff]
      %v2479 = vld [vmem:[%s1 + $0x2370] sm:$0xff]
      %v2480 = vld [vmem:[%s1 + $0x2378] sm:$0xff]
      %v2481 = vld [vmem:[%s1 + $0x2380] sm:$0xff]
      %v2482 = vld [vmem:[%s1 + $0x2388] sm:$0xff]
      %v2483 = vld [vmem:[%s1 + $0x2390] sm:$0xff]
      %v2484 = vld [vmem:[%s1 + $0x2398] sm:$0xff]
      %v2485 = vld [vmem:[%s1 + $0x23a0] sm:$0xff]
      %v2486 = vld [vmem:[%s1 + $0x23a8] sm:$0xff]
      %v2487 = vld [vmem:[%s1 + $0x23b0] sm:$0xff]
      %v2488 = vld [vmem:[%s1 + $0x23b8] sm:$0xff]
      %v2489 = vld [vmem:[%s1 + $0x23c0] sm:$0xff]
      %v2490 = vld [vmem:[%s1 + $0x23c8] sm:$0xff]
      %v2491 = vld [vmem:[%s1 + $0x23d0] sm:$0xff]
      %v2492 = vld [vmem:[%s1 + $0x23d8] sm:$0xff]
      %v2493 = vld [vmem:[%s1 + $0x23e0] sm:$0xff]
      %v2494 = vld [vmem:[%s1 + $0x23e8] sm:$0xff]
      %v2495 = vld [vmem:[%s1 + $0x23f0] sm:$0xff]
      %v2496 = vld [vmem:[%s1 + $0x23f8] sm:$0xff]
      %v2497 = vld [vmem:[%s1 + $0x2400] sm:$0xff]
      %v2498 = vld [vmem:[%s1 + $0x2408] sm:$0xff]
      %v2499 = vld [vmem:[%s1 + $0x2410] sm:$0xff]
      %v2500 = vld [vmem:[%s1 + $0x2418] sm:$0xff]
      %v2501 = vld [vmem:[%s1 + $0x2420] sm:$0xff]
      %v2502 = vld [vmem:[%s1 + $0x2428] sm:$0xff]
      %v2503 = vld [vmem:[%s1 + $0x2430] sm:$0xff]
      %v2504 = vld [vmem:[%s1 + $0x2438] sm:$0xff]
      %v2505 = vld [vmem:[%s1 + $0x2440] sm:$0xff]
      %v2506 = vld [vmem:[%s1 + $0x2448] sm:$0xff]
      %v2507 = vld [vmem:[%s1 + $0x2450] sm:$0xff]
      %v2508 = vld [vmem:[%s1 + $0x2458] sm:$0xff]
      %v2509 = vld [vmem:[%s1 + $0x2460] sm:$0xff]
      %v2510 = vld [vmem:[%s1 + $0x2468] sm:$0xff]
      %v2511 = vld [vmem:[%s1 + $0x2470] sm:$0xff]
      %v2512 = vld [vmem:[%s1 + $0x2478] sm:$0xff]
      %v2513 = vld [vmem:[%s2] sm:$0x1]
      %v2515 = vlaneseq
      %v2516 = vshrl.u32 %v2515, 7
      %v2517 = vsub.s32 0, %v2516
      %v2518 = vrot.slane %v2513, %v2517
      %2520 = vmatprep.subr.mxu0 0.0
      %2521 = vmatpush1.msra.mxu0 %v1345
      %2522 = vmatprep.subr.mxu0 0.0
      %2523 = vmatpush1.msra.mxu0 %v1346
      %2524 = vmatprep.subr.mxu0 0.0
      %2525 = vmatpush1.msra.mxu0 %v1347
      %2526 = vmatprep.subr.mxu0 0.0
      %2527 = vmatpush1.msra.mxu0 %v1348
      %2528 = vmatprep.subr.mxu0 0.0
      %2529 = vmatpush1.msra.mxu0 %v1349
      %2530 = vmatprep.subr.mxu0 0.0
      %2531 = vmatpush1.msra.mxu0 %v1350
      %2532 = vmatprep.subr.mxu0 0.0
      %2533 = vmatpush1.msra.mxu0 %v1351
      %2534 = vmatprep.subr.mxu0 0.0
      %2535 = vmatpush1.msra.mxu0 %v1352
      %2536 = vmatprep.subr.mxu0 0.0
      %2537 = vmatpush1.msra.mxu0 %v1353
      %2538 = vmatprep.subr.mxu0 0.0
      %2539 = vmatpush1.msra.mxu0 %v1354
      %2540 = vmatprep.subr.mxu0 0.0
      %2541 = vmatpush1.msra.mxu0 %v1355
      %2542 = vmatprep.subr.mxu0 0.0
      %2543 = vmatpush1.msra.mxu0 %v1356
      %2544 = vmatprep.subr.mxu0 0.0
      %2545 = vmatpush1.msra.mxu0 %v1357
      %2546 = vmatprep.subr.mxu0 0.0
      %2547 = vmatpush1.msra.mxu0 %v1358
      %2548 = vmatprep.subr.mxu0 0.0
      %2549 = vmatpush1.msra.mxu0 %v1359
      %2550 = vmatprep.subr.mxu0 0.0
      %2551 = vmatpush1.msra.mxu0 %v1360
      %2552 = vmatprep.subr.mxu0 0.0
      %2553 = vmatpush1.msra.mxu0 %v1361
      %2554 = vmatprep.subr.mxu0 0.0
      %2555 = vmatpush1.msra.mxu0 %v1362
      %2556 = vmatprep.subr.mxu0 0.0
      %2557 = vmatpush1.msra.mxu0 %v1363
      %2558 = vmatprep.subr.mxu0 0.0
      %2559 = vmatpush1.msra.mxu0 %v1364
      %2560 = vmatprep.subr.mxu0 0.0
      %2561 = vmatpush1.msra.mxu0 %v1365
      %2562 = vmatprep.subr.mxu0 0.0
      %2563 = vmatpush1.msra.mxu0 %v1366
      %2564 = vmatprep.subr.mxu0 0.0
      %2565 = vmatpush1.msra.mxu0 %v1367
      %2566 = vmatprep.subr.mxu0 0.0
      %2567 = vmatpush1.msra.mxu0 %v1368
      %2568 = vmatprep.subr.mxu0 0.0
      %2569 = vmatpush1.msra.mxu0 %v1369
      %2570 = vmatprep.subr.mxu0 0.0
      %2571 = vmatpush1.msra.mxu0 %v1370
      %2572 = vmatprep.subr.mxu0 0.0
      %2573 = vmatpush1.msra.mxu0 %v1371
      %2574 = vmatprep.subr.mxu0 0.0
      %2575 = vmatpush1.msra.mxu0 %v1372
      %2576 = vmatprep.subr.mxu0 0.0
      %2577 = vmatpush1.msra.mxu0 %v1373
      %2578 = vmatprep.subr.mxu0 0.0
      %2579 = vmatpush1.msra.mxu0 %v1374
      %2580 = vmatprep.subr.mxu0 0.0
      %2581 = vmatpush1.msra.mxu0 %v1375
      %2582 = vmatprep.subr.mxu0 0.0
      %2583 = vmatpush1.msra.mxu0 %v1376
      %2584 = vmatprep.mubr.f32.mxu0 %v178
      %2585 = vmatmul.mubr.f32.gmra.mrb[0].mxu0 %v177
      %v2586 = vpop.f32.mrb[0].mxu0
      %v2587 = vadd.f32 %v2518, %v2586
      %v2588 = vpop.f32.mrb[0].mxu0
      %2589 = vmatprep.mubr.f32.mxu0 %v251
      %2590 = vmatmul.mubr.f32.gmra.mrb[0].mxu0 %v250
      %v2591 = vpop.f32.mrb[0].mxu0
      %v2592 = vadd.f32 %v2518, %v2591
      %v2593 = vpop.f32.mrb[0].mxu0
      %2594 = vmatprep.mubr.f32.mxu0 %v324
      %2595 = vmatmul.mubr.f32.gmra.mrb[0].mxu0 %v323
      %v2596 = vpop.f32.mrb[0].mxu0
      %v2597 = vadd.f32 %v2518, %v2596
      %v2598 = vpop.f32.mrb[0].mxu0
      %2599 = vmatprep.mubr.f32.mxu0 %v397
      %2600 = vmatmul.mubr.f32.gmra.mrb[0].mxu0 %v396
      %v2601 = vpop.f32.mrb[0].mxu0
      %v2602 = vadd.f32 %v2518, %v2601
      %v2603 = vpop.f32.mrb[0].mxu0
      %2604 = vmatprep.mubr.f32.mxu0 %v470
      %2605 = vmatmul.mubr.f32.gmra.mrb[0].mxu0 %v469
      %v2606 = vpop.f32.mrb[0].mxu0
      %v2607 = vadd.f32 %v2518, %v2606
      %v2608 = vpop.f32.mrb[0].mxu0
      %2609 = vmatprep.mubr.f32.mxu0 %v543
      %2610 = vmatmul.mubr.f32.gmra.mrb[0].mxu0 %v542
      %v2611 = vpop.f32.mrb[0].mxu0
      %v2612 = vadd.f32 %v2518, %v2611
      %v2613 = vpop.f32.mrb[0].mxu0
      %2614 = vmatprep.mubr.f32.mxu0 %v616
      %2615 = vmatmul.mubr.f32.gmra.mrb[0].mxu0 %v615
      %v2616 = vpop.f32.mrb[0].mxu0
      %v2617 = vadd.f32 %v2518, %v2616
      %v2618 = vpop.f32.mrb[0].mxu0
      %2619 = vmatprep.mubr.f32.mxu0 %v689
      %2620 = vmatmul.mubr.f32.gmra.mrb[0].mxu0 %v688
      %v2621 = vpop.f32.mrb[0].mxu0
      %v2622 = vadd.f32 %v2518, %v2621
      %v2623 = vpop.f32.mrb[0].mxu0
      %2624 = vmatprep.mubr.f32.mxu0 %v762
      %2625 = vmatmul.mubr.f32.gmra.mrb[0].mxu0 %v761
      %v2626 = vpop.f32.mrb[0].mxu0
      %v2627 = vadd.f32 %v2518, %v2626
      %v2628 = vpop.f32.mrb[0].mxu0
      %2629 = vmatprep.mubr.f32.mxu0 %v835
      %2630 = vmatmul.mubr.f32.gmra.mrb[0].mxu0 %v834
      %v2631 = vpop.f32.mrb[0].mxu0
      %v2632 = vadd.f32 %v2518, %v2631
      %v2633 = vpop.f32.mrb[0].mxu0
      %2634 = vmatprep.mubr.f32.mxu0 %v908
      %2635 = vmatmul.mubr.f32.gmra.mrb[0].mxu0 %v907
      %v2636 = vpop.f32.mrb[0].mxu0
      %v2637 = vadd.f32 %v2518, %v2636
      %v2638 = vpop.f32.mrb[0].mxu0
      %2639 = vmatprep.mubr.f32.mxu0 %v981
      %2640 = vmatmul.mubr.f32.gmra.mrb[0].mxu0 %v980
      %v2641 = vpop.f32.mrb[0].mxu0
      %v2642 = vadd.f32 %v2518, %v2641
      %v2643 = vpop.f32.mrb[0].mxu0
      %2644 = vmatprep.mubr.f32.mxu0 %v1054
      %2645 = vmatmul.mubr.f32.gmra.mrb[0].mxu0 %v1053
      %v2646 = vpop.f32.mrb[0].mxu0
      %v2647 = vadd.f32 %v2518, %v2646
      %v2648 = vpop.f32.mrb[0].mxu0
      %2649 = vmatprep.mubr.f32.mxu0 %v1127
      %2650 = vmatmul.mubr.f32.gmra.mrb[0].mxu0 %v1126
      %v2651 = vpop.f32.mrb[0].mxu0
      %v2652 = vadd.f32 %v2518, %v2651
      %v2653 = vpop.f32.mrb[0].mxu0
      %2654 = vmatprep.mubr.f32.mxu0 %v1200
      %2655 = vmatmul.mubr.f32.gmra.mrb[0].mxu0 %v1199
      %v2656 = vpop.f32.mrb[0].mxu0
      %v2657 = vadd.f32 %v2518, %v2656
      %v2658 = vpop.f32.mrb[0].mxu0
      %2659 = vmatprep.mubr.f32.mxu0 %v1273
      %2660 = vmatmul.mubr.f32.gmra.mrb[0].mxu0 %v1272
      %v2661 = vpop.f32.mrb[0].mxu0
      %v2662 = vadd.f32 %v2518, %v2661
      %v2663 = vpop.f32.mrb[0].mxu0
      %2664 = vdwg.mxu0
      %2665 = vmatprep.subr.mxu0 0.0
      %2666 = vmatpush1.msra.mxu0 %v1377
      %2667 = vmatprep.subr.mxu0 0.0
      %2668 = vmatpush1.msra.mxu0 %v1378
      %2669 = vmatprep.subr.mxu0 0.0
      %2670 = vmatpush1.msra.mxu0 %v1379
      %2671 = vmatprep.subr.mxu0 0.0
      %2672 = vmatpush1.msra.mxu0 %v1380
      %2673 = vmatprep.subr.mxu0 0.0
      %2674 = vmatpush1.msra.mxu0 %v1381
      %2675 = vmatprep.subr.mxu0 0.0
      %2676 = vmatpush1.msra.mxu0 %v1382
      %2677 = vmatprep.subr.mxu0 0.0
      %2678 = vmatpush1.msra.mxu0 %v1383
      %2679 = vmatprep.subr.mxu0 0.0
      %2680 = vmatpush1.msra.mxu0 %v1384
      %2681 = vmatprep.subr.mxu0 0.0
      %2682 = vmatpush1.msra.mxu0 %v1385
      %2683 = vmatprep.subr.mxu0 0.0
      %2684 = vmatpush1.msra.mxu0 %v1386
      %2685 = vmatprep.subr.mxu0 0.0
      %2686 = vmatpush1.msra.mxu0 %v1387
      %2687 = vmatprep.subr.mxu0 0.0
      %2688 = vmatpush1.msra.mxu0 %v1388
      %2689 = vmatprep.subr.mxu0 0.0
      %2690 = vmatpush1.msra.mxu0 %v1389
      %2691 = vmatprep.subr.mxu0 0.0
      %2692 = vmatpush1.msra.mxu0 %v1390
      %2693 = vmatprep.subr.mxu0 0.0
      %2694 = vmatpush1.msra.mxu0 %v1391
      %2695 = vmatprep.subr.mxu0 0.0
      %2696 = vmatpush1.msra.mxu0 %v1392
      %2697 = vmatprep.subr.mxu0 0.0
      %2698 = vmatpush1.msra.mxu0 %v1393
      %2699 = vmatprep.subr.mxu0 0.0
      %2700 = vmatpush1.msra.mxu0 %v1394
      %2701 = vmatprep.subr.mxu0 0.0
      %2702 = vmatpush1.msra.mxu0 %v1395
      %2703 = vmatprep.subr.mxu0 0.0
      %2704 = vmatpush1.msra.mxu0 %v1396
      %2705 = vmatprep.subr.mxu0 0.0
      %2706 = vmatpush1.msra.mxu0 %v1397
      %2707 = vmatprep.subr.mxu0 0.0
      %2708 = vmatpush1.msra.mxu0 %v1398
      %2709 = vmatprep.subr.mxu0 0.0
      %2710 = vmatpush1.msra.mxu0 %v1399
      %2711 = vmatprep.subr.mxu0 0.0
      %2712 = vmatpush1.msra.mxu0 %v1400
      %2713 = vmatprep.subr.mxu0 0.0
      %2714 = vmatpush1.msra.mxu0 %v1401
      %2715 = vmatprep.subr.mxu0 0.0
      %2716 = vmatpush1.msra.mxu0 %v1402
      %2717 = vmatprep.subr.mxu0 0.0
      %2718 = vmatpush1.msra.mxu0 %v1403
      %2719 = vmatprep.subr.mxu0 0.0
      %2720 = vmatpush1.msra.mxu0 %v1404
      %2721 = vmatprep.subr.mxu0 0.0
      %2722 = vmatpush1.msra.mxu0 %v1405
      %2723 = vmatprep.subr.mxu0 0.0
      %2724 = vmatpush1.msra.mxu0 %v1406
      %2725 = vmatprep.subr.mxu0 0.0
      %2726 = vmatpush1.msra.mxu0 %v1407
      %2727 = vmatprep.subr.mxu0 0.0
      %2728 = vmatpush1.msra.mxu0 %v1408
      %2729 = vmatprep.mubr.f32.mxu0 %v180
      %2730 = vmatmul.mubr.f32.gmra.mrb[0].mxu0 %v179
      %v2731 = vpop.f32.mrb[0].mxu0
      %v2732 = vadd.f32 %v2587, %v2731
      %v2733 = vpop.f32.mrb[0].mxu0
      %2734 = vmatprep.mubr.f32.mxu0 %v253
      %2735 = vmatmul.mubr.f32.gmra.mrb[0].mxu0 %v252
      %v2736 = vpop.f32.mrb[0].mxu0
      %v2737 = vadd.f32 %v2592, %v2736
      %v2738 = vpop.f32.mrb[0].mxu0
      %2739 = vmatprep.mubr.f32.mxu0 %v326
      %2740 = vmatmul.mubr.f32.gmra.mrb[0].mxu0 %v325
      %v2741 = vpop.f32.mrb[0].mxu0
      %v2742 = vadd.f32 %v2597, %v2741
      %v2743 = vpop.f32.mrb[0].mxu0
      %2744 = vmatprep.mubr.f32.mxu0 %v399
      %2745 = vmatmul.mubr.f32.gmra.mrb[0].mxu0 %v398
      %v2746 = vpop.f32.mrb[0].mxu0
      %v2747 = vadd.f32 %v2602, %v2746
      %v2748 = vpop.f32.mrb[0].mxu0
      %2749 = vmatprep.mubr.f32.mxu0 %v472
      %2750 = vmatmul.mubr.f32.gmra.mrb[0].mxu0 %v471
      %v2751 = vpop.f32.mrb[0].mxu0
      %v2752 = vadd.f32 %v2607, %v2751
      %v2753 = vpop.f32.mrb[0].mxu0
      %2754 = vmatprep.mubr.f32.mxu0 %v545
      %2755 = vmatmul.mubr.f32.gmra.mrb[0].mxu0 %v544
      %v2756 = vpop.f32.mrb[0].mxu0
      %v2757 = vadd.f32 %v2612, %v2756
      %v2758 = vpop.f32.mrb[0].mxu0
      %2759 = vmatprep.mubr.f32.mxu0 %v618
      %2760 = vmatmul.mubr.f32.gmra.mrb[0].mxu0 %v617
      %v2761 = vpop.f32.mrb[0].mxu0
      %v2762 = vadd.f32 %v2617, %v2761
      %v2763 = vpop.f32.mrb[0].mxu0
      %2764 = vmatprep.mubr.f32.mxu0 %v691
      %2765 = vmatmul.mubr.f32.gmra.mrb[0].mxu0 %v690
      %v2766 = vpop.f32.mrb[0].mxu0
      %v2767 = vadd.f32 %v2622, %v2766
      %v2768 = vpop.f32.mrb[0].mxu0
      %2769 = vmatprep.mubr.f32.mxu0 %v764
      %2770 = vmatmul.mubr.f32.gmra.mrb[0].mxu0 %v763
      %v2771 = vpop.f32.mrb[0].mxu0
      %v2772 = vadd.f32 %v2627, %v2771
      %v2773 = vpop.f32.mrb[0].mxu0
      %2774 = vmatprep.mubr.f32.mxu0 %v837
      %2775 = vmatmul.mubr.f32.gmra.mrb[0].mxu0 %v836
      %v2776 = vpop.f32.mrb[0].mxu0
      %v2777 = vadd.f32 %v2632, %v2776
      %v2778 = vpop.f32.mrb[0].mxu0
      %2779 = vmatprep.mubr.f32.mxu0 %v910
      %2780 = vmatmul.mubr.f32.gmra.mrb[0].mxu0 %v909
      %v2781 = vpop.f32.mrb[0].mxu0
      %v2782 = vadd.f32 %v2637, %v2781
      %v2783 = vpop.f32.mrb[0].mxu0
      %2784 = vmatprep.mubr.f32.mxu0 %v983
      %2785 = vmatmul.mubr.f32.gmra.mrb[0].mxu0 %v982
      %v2786 = vpop.f32.mrb[0].mxu0
      %v2787 = vadd.f32 %v2642, %v2786
      %v2788 = vpop.f32.mrb[0].mxu0
      %2789 = vmatprep.mubr.f32.mxu0 %v1056
      %2790 = vmatmul.mubr.f32.gmra.mrb[0].mxu0 %v1055
      %v2791 = vpop.f32.mrb[0].mxu0
      %v2792 = vadd.f32 %v2647, %v2791
      %v2793 = vpop.f32.mrb[0].mxu0
      %2794 = vmatprep.mubr.f32.mxu0 %v1129
      %2795 = vmatmul.mubr.f32.gmra.mrb[0].mxu0 %v1128
      %v2796 = vpop.f32.mrb[0].mxu0
      %v2797 = vadd.f32 %v2652, %v2796
      %v2798 = vpop.f32.mrb[0].mxu0
      %2799 = vmatprep.mubr.f32.mxu0 %v1202
      %2800 = vmatmul.mubr.f32.gmra.mrb[0].mxu0 %v1201
      %v2801 = vpop.f32.mrb[0].mxu0
      %v2802 = vadd.f32 %v2657, %v2801
      %v2803 = vpop.f32.mrb[0].mxu0
      %2804 = vmatprep.mubr.f32.mxu0 %v1275
      %2805 = vmatmul.mubr.f32.gmra.mrb[0].mxu0 %v1274
      %v2806 = vpop.f32.mrb[0].mxu0
      %v2807 = vadd.f32 %v2662, %v2806
      %v2808 = vpop.f32.mrb[0].mxu0
      %2809 = vdwg.mxu0
      %2810 = vmatprep.subr.mxu0 0.0
      %2811 = vmatpush1.msra.mxu0 %v1409
      %2812 = vmatprep.subr.mxu0 0.0
      %2813 = vmatpush1.msra.mxu0 %v1410
      %2814 = vmatprep.subr.mxu0 0.0
      %2815 = vmatpush1.msra.mxu0 %v1411
      %2816 = vmatprep.subr.mxu0 0.0
      %2817 = vmatpush1.msra.mxu0 %v1412
      %2818 = vmatprep.subr.mxu0 0.0
      %2819 = vmatpush1.msra.mxu0 %v1413
      %2820 = vmatprep.subr.mxu0 0.0
      %2821 = vmatpush1.msra.mxu0 %v1414
      %2822 = vmatprep.subr.mxu0 0.0
      %2823 = vmatpush1.msra.mxu0 %v1415
      %2824 = vmatprep.subr.mxu0 0.0
      %2825 = vmatpush1.msra.mxu0 %v1416
      %2826 = vmatprep.subr.mxu0 0.0
      %2827 = vmatpush1.msra.mxu0 %v1417
      %2828 = vmatprep.subr.mxu0 0.0
      %2829 = vmatpush1.msra.mxu0 %v1418
      %2830 = vmatprep.subr.mxu0 0.0
      %2831 = vmatpush1.msra.mxu0 %v1419
      %2832 = vmatprep.subr.mxu0 0.0
      %2833 = vmatpush1.msra.mxu0 %v1420
      %2834 = vmatprep.subr.mxu0 0.0
      %2835 = vmatpush1.msra.mxu0 %v1421
      %2836 = vmatprep.subr.mxu0 0.0
      %2837 = vmatpush1.msra.mxu0 %v1422
      %2838 = vmatprep.subr.mxu0 0.0
      %2839 = vmatpush1.msra.mxu0 %v1423
      %2840 = vmatprep.subr.mxu0 0.0
      %2841 = vmatpush1.msra.mxu0 %v1424
      %2842 = vmatprep.subr.mxu0 0.0
      %2843 = vmatpush1.msra.mxu0 %v1425
      %2844 = vmatprep.subr.mxu0 0.0
      %2845 = vmatpush1.msra.mxu0 %v1426
      %2846 = vmatprep.subr.mxu0 0.0
      %2847 = vmatpush1.msra.mxu0 %v1427
      %2848 = vmatprep.subr.mxu0 0.0
      %2849 = vmatpush1.msra.mxu0 %v1428
      %2850 = vmatprep.subr.mxu0 0.0
      %2851 = vmatpush1.msra.mxu0 %v1429
      %2852 = vmatprep.subr.mxu0 0.0
      %2853 = vmatpush1.msra.mxu0 %v1430
      %2854 = vmatprep.subr.mxu0 0.0
      %2855 = vmatpush1.msra.mxu0 %v1431
      %2856 = vmatprep.subr.mxu0 0.0
      %2857 = vmatpush1.msra.mxu0 %v1432
      %2858 = vmatprep.subr.mxu0 0.0
      %2859 = vmatpush1.msra.mxu0 %v1433
      %2860 = vmatprep.subr.mxu0 0.0
      %2861 = vmatpush1.msra.mxu0 %v1434
      %2862 = vmatprep.subr.mxu0 0.0
      %2863 = vmatpush1.msra.mxu0 %v1435
      %2864 = vmatprep.subr.mxu0 0.0
      %2865 = vmatpush1.msra.mxu0 %v1436
      %2866 = vmatprep.subr.mxu0 0.0
      %2867 = vmatpush1.msra.mxu0 %v1437
      %2868 = vmatprep.subr.mxu0 0.0
      %2869 = vmatpush1.msra.mxu0 %v1438
      %2870 = vmatprep.subr.mxu0 0.0
      %2871 = vmatpush1.msra.mxu0 %v1439
      %2872 = vmatprep.subr.mxu0 0.0
      %2873 = vmatpush1.msra.mxu0 %v1440
      %2874 = vmatprep.mubr.f32.mxu0 %v182
      %2875 = vmatmul.mubr.f32.gmra.mrb[0].mxu0 %v181
      %v2876 = vpop.f32.mrb[0].mxu0
      %v2877 = vadd.f32 %v2732, %v2876
      %v2878 = vpop.f32.mrb[0].mxu0
      %2879 = vmatprep.mubr.f32.mxu0 %v255
      %2880 = vmatmul.mubr.f32.gmra.mrb[0].mxu0 %v254
      %v2881 = vpop.f32.mrb[0].mxu0
      %v2882 = vadd.f32 %v2737, %v2881
      %v2883 = vpop.f32.mrb[0].mxu0
      %2884 = vmatprep.mubr.f32.mxu0 %v328
      %2885 = vmatmul.mubr.f32.gmra.mrb[0].mxu0 %v327
      %v2886 = vpop.f32.mrb[0].mxu0
      %v2887 = vadd.f32 %v2742, %v2886
      %v2888 = vpop.f32.mrb[0].mxu0
      %2889 = vmatprep.mubr.f32.mxu0 %v401
      %2890 = vmatmul.mubr.f32.gmra.mrb[0].mxu0 %v400
      %v2891 = vpop.f32.mrb[0].mxu0
      %v2892 = vadd.f32 %v2747, %v2891
      %v2893 = vpop.f32.mrb[0].mxu0
      %2894 = vmatprep.mubr.f32.mxu0 %v474
      %2895 = vmatmul.mubr.f32.gmra.mrb[0].mxu0 %v473
      %v2896 = vpop.f32.mrb[0].mxu0
      %v2897 = vadd.f32 %v2752, %v2896
      %v2898 = vpop.f32.mrb[0].mxu0
      %2899 = vmatprep.mubr.f32.mxu0 %v547
      %2900 = vmatmul.mubr.f32.gmra.mrb[0].mxu0 %v546
      %v2901 = vpop.f32.mrb[0].mxu0
      %v2902 = vadd.f32 %v2757, %v2901
      %v2903 = vpop.f32.mrb[0].mxu0
      %2904 = vmatprep.mubr.f32.mxu0 %v620
      %2905 = vmatmul.mubr.f32.gmra.mrb[0].mxu0 %v619
      %v2906 = vpop.f32.mrb[0].mxu0
      %v2907 = vadd.f32 %v2762, %v2906
      %v2908 = vpop.f32.mrb[0].mxu0
      %2909 = vmatprep.mubr.f32.mxu0 %v693
      %2910 = vmatmul.mubr.f32.gmra.mrb[0].mxu0 %v692
      %v2911 = vpop.f32.mrb[0].mxu0
      %v2912 = vadd.f32 %v2767, %v2911
      %v2913 = vpop.f32.mrb[0].mxu0
      %2914 = vmatprep.mubr.f32.mxu0 %v766
      %2915 = vmatmul.mubr.f32.gmra.mrb[0].mxu0 %v765
      %v2916 = vpop.f32.mrb[0].mxu0
      %v2917 = vadd.f32 %v2772, %v2916
      %v2918 = vpop.f32.mrb[0].mxu0
      %2919 = vmatprep.mubr.f32.mxu0 %v839
      %2920 = vmatmul.mubr.f32.gmra.mrb[0].mxu0 %v838
      %v2921 = vpop.f32.mrb[0].mxu0
      %v2922 = vadd.f32 %v2777, %v2921
      %v2923 = vpop.f32.mrb[0].mxu0
      %2924 = vmatprep.mubr.f32.mxu0 %v912
      %2925 = vmatmul.mubr.f32.gmra.mrb[0].mxu0 %v911
      %v2926 = vpop.f32.mrb[0].mxu0
      %v2927 = vadd.f32 %v2782, %v2926
      %v2928 = vpop.f32.mrb[0].mxu0
      %2929 = vmatprep.mubr.f32.mxu0 %v985
      %2930 = vmatmul.mubr.f32.gmra.mrb[0].mxu0 %v984
      %v2931 = vpop.f32.mrb[0].mxu0
      %v2932 = vadd.f32 %v2787, %v2931
      %v2933 = vpop.f32.mrb[0].mxu0
      %2934 = vmatprep.mubr.f32.mxu0 %v1058
      %2935 = vmatmul.mubr.f32.gmra.mrb[0].mxu0 %v1057
      %v2936 = vpop.f32.mrb[0].mxu0
      %v2937 = vadd.f32 %v2792, %v2936
      %v2938 = vpop.f32.mrb[0].mxu0
      %2939 = vmatprep.mubr.f32.mxu0 %v1131
      %2940 = vmatmul.mubr.f32.gmra.mrb[0].mxu0 %v1130
      %v2941 = vpop.f32.mrb[0].mxu0
      %v2942 = vadd.f32 %v2797, %v2941
      %v2943 = vpop.f32.mrb[0].mxu0
      %2944 = vmatprep.mubr.f32.mxu0 %v1204
      %2945 = vmatmul.mubr.f32.gmra.mrb[0].mxu0 %v1203
      %v2946 = vpop.f32.mrb[0].mxu0
      %v2947 = vadd.f32 %v2802, %v2946
      %v2948 = vpop.f32.mrb[0].mxu0
      %2949 = vmatprep.mubr.f32.mxu0 %v1277
      %2950 = vmatmul.mubr.f32.gmra.mrb[0].mxu0 %v1276
      %v2951 = vpop.f32.mrb[0].mxu0
      %v2952 = vadd.f32 %v2807, %v2951
      %v2953 = vpop.f32.mrb[0].mxu0
      %2954 = vdwg.mxu0
      %2955 = vmatprep.subr.mxu0 0.0
      %2956 = vmatpush1.msra.mxu0 %v1441
      %2957 = vmatprep.subr.mxu0 0.0
      %2958 = vmatpush1.msra.mxu0 %v1442
      %2959 = vmatprep.subr.mxu0 0.0
      %2960 = vmatpush1.msra.mxu0 %v1443
      %2961 = vmatprep.subr.mxu0 0.0
      %2962 = vmatpush1.msra.mxu0 %v1444
      %2963 = vmatprep.subr.mxu0 0.0
      %2964 = vmatpush1.msra.mxu0 %v1445
      %2965 = vmatprep.subr.mxu0 0.0
      %2966 = vmatpush1.msra.mxu0 %v1446
      %2967 = vmatprep.subr.mxu0 0.0
      %2968 = vmatpush1.msra.mxu0 %v1447
      %2969 = vmatprep.subr.mxu0 0.0
      %2970 = vmatpush1.msra.mxu0 %v1448
      %2971 = vmatprep.subr.mxu0 0.0
      %2972 = vmatpush1.msra.mxu0 %v1449
      %2973 = vmatprep.subr.mxu0 0.0
      %2974 = vmatpush1.msra.mxu0 %v1450
      %2975 = vmatprep.subr.mxu0 0.0
      %2976 = vmatpush1.msra.mxu0 %v1451
      %2977 = vmatprep.subr.mxu0 0.0
      %2978 = vmatpush1.msra.mxu0 %v1452
      %2979 = vmatprep.subr.mxu0 0.0
      %2980 = vmatpush1.msra.mxu0 %v1453
      %2981 = vmatprep.subr.mxu0 0.0
      %2982 = vmatpush1.msra.mxu0 %v1454
      %2983 = vmatprep.subr.mxu0 0.0
      %2984 = vmatpush1.msra.mxu0 %v1455
      %2985 = vmatprep.subr.mxu0 0.0
      %2986 = vmatpush1.msra.mxu0 %v1456
      %2987 = vmatprep.subr.mxu0 0.0
      %2988 = vmatpush1.msra.mxu0 %v1457
      %2989 = vmatprep.subr.mxu0 0.0
      %2990 = vmatpush1.msra.mxu0 %v1458
      %2991 = vmatprep.subr.mxu0 0.0
      %2992 = vmatpush1.msra.mxu0 %v1459
      %2993 = vmatprep.subr.mxu0 0.0
      %2994 = vmatpush1.msra.mxu0 %v1460
      %2995 = vmatprep.subr.mxu0 0.0
      %2996 = vmatpush1.msra.mxu0 %v1461
      %2997 = vmatprep.subr.mxu0 0.0
      %2998 = vmatpush1.msra.mxu0 %v1462
      %2999 = vmatprep.subr.mxu0 0.0
      %3000 = vmatpush1.msra.mxu0 %v1463
      %3001 = vmatprep.subr.mxu0 0.0
      %3002 = vmatpush1.msra.mxu0 %v1464
      %3003 = vmatprep.subr.mxu0 0.0
      %3004 = vmatpush1.msra.mxu0 %v1465
      %3005 = vmatprep.subr.mxu0 0.0
      %3006 = vmatpush1.msra.mxu0 %v1466
      %3007 = vmatprep.subr.mxu0 0.0
      %3008 = vmatpush1.msra.mxu0 %v1467
      %3009 = vmatprep.subr.mxu0 0.0
      %3010 = vmatpush1.msra.mxu0 %v1468
      %3011 = vmatprep.subr.mxu0 0.0
      %3012 = vmatpush1.msra.mxu0 %v1469
      %3013 = vmatprep.subr.mxu0 0.0
      %3014 = vmatpush1.msra.mxu0 %v1470
      %3015 = vmatprep.subr.mxu0 0.0
      %3016 = vmatpush1.msra.mxu0 %v1471
      %3017 = vmatprep.subr.mxu0 0.0
      %3018 = vmatpush1.msra.mxu0 %v1472
      %3019 = vmatprep.mubr.f32.mxu0 %v184
      %3020 = vmatmul.mubr.f32.gmra.mrb[0].mxu0 %v183
      %v3021 = vpop.f32.mrb[0].mxu0
      %v3022 = vadd.f32 %v2877, %v3021
      %v3023 = vpop.f32.mrb[0].mxu0
      %3024 = vmatprep.mubr.f32.mxu0 %v257
      %3025 = vmatmul.mubr.f32.gmra.mrb[0].mxu0 %v256
      %v3026 = vpop.f32.mrb[0].mxu0
      %v3027 = vadd.f32 %v2882, %v3026
      %v3028 = vpop.f32.mrb[0].mxu0
      %3029 = vmatprep.mubr.f32.mxu0 %v330
      %3030 = vmatmul.mubr.f32.gmra.mrb[0].mxu0 %v329
      %v3031 = vpop.f32.mrb[0].mxu0
      %v3032 = vadd.f32 %v2887, %v3031
      %v3033 = vpop.f32.mrb[0].mxu0
      %3034 = vmatprep.mubr.f32.mxu0 %v403
      %3035 = vmatmul.mubr.f32.gmra.mrb[0].mxu0 %v402
      %v3036 = vpop.f32.mrb[0].mxu0
      %v3037 = vadd.f32 %v2892, %v3036
      %v3038 = vpop.f32.mrb[0].mxu0
      %3039 = vmatprep.mubr.f32.mxu0 %v476
      %3040 = vmatmul.mubr.f32.gmra.mrb[0].mxu0 %v475
      %v3041 = vpop.f32.mrb[0].mxu0
      %v3042 = vadd.f32 %v2897, %v3041
      %v3043 = vpop.f32.mrb[0].mxu0
      %3044 = vmatprep.mubr.f32.mxu0 %v549
      %3045 = vmatmul.mubr.f32.gmra.mrb[0].mxu0 %v548
      %v3046 = vpop.f32.mrb[0].mxu0
      %v3047 = vadd.f32 %v2902, %v3046
      %v3048 = vpop.f32.mrb[0].mxu0
      %3049 = vmatprep.mubr.f32.mxu0 %v622
      %3050 = vmatmul.mubr.f32.gmra.mrb[0].mxu0 %v621
      %v3051 = vpop.f32.mrb[0].mxu0
      %v3052 = vadd.f32 %v2907, %v3051
      %v3053 = vpop.f32.mrb[0].mxu0
      %3054 = vmatprep.mubr.f32.mxu0 %v695
      %3055 = vmatmul.mubr.f32.gmra.mrb[0].mxu0 %v694
      %v3056 = vpop.f32.mrb[0].mxu0
      %v3057 = vadd.f32 %v2912, %v3056
      %v3058 = vpop.f32.mrb[0].mxu0
      %3059 = vmatprep.mubr.f32.mxu0 %v768
      %3060 = vmatmul.mubr.f32.gmra.mrb[0].mxu0 %v767
      %v3061 = vpop.f32.mrb[0].mxu0
      %v3062 = vadd.f32 %v2917, %v3061
      %v3063 = vpop.f32.mrb[0].mxu0
      %3064 = vmatprep.mubr.f32.mxu0 %v841
      %3065 = vmatmul.mubr.f32.gmra.mrb[0].mxu0 %v840
      %v3066 = vpop.f32.mrb[0].mxu0
      %v3067 = vadd.f32 %v2922, %v3066
      %v3068 = vpop.f32.mrb[0].mxu0
      %3069 = vmatprep.mubr.f32.mxu0 %v914
      %3070 = vmatmul.mubr.f32.gmra.mrb[0].mxu0 %v913
      %v3071 = vpop.f32.mrb[0].mxu0
      %v3072 = vadd.f32 %v2927, %v3071
      %v3073 = vpop.f32.mrb[0].mxu0
      %3074 = vmatprep.mubr.f32.mxu0 %v987
      %3075 = vmatmul.mubr.f32.gmra.mrb[0].mxu0 %v986
      %v3076 = vpop.f32.mrb[0].mxu0
      %v3077 = vadd.f32 %v2932, %v3076
      %v3078 = vpop.f32.mrb[0].mxu0
      %3079 = vmatprep.mubr.f32.mxu0 %v1060
      %3080 = vmatmul.mubr.f32.gmra.mrb[0].mxu0 %v1059
      %v3081 = vpop.f32.mrb[0].mxu0
      %v3082 = vadd.f32 %v2937, %v3081
      %v3083 = vpop.f32.mrb[0].mxu0
      %3084 = vmatprep.mubr.f32.mxu0 %v1133
      %3085 = vmatmul.mubr.f32.gmra.mrb[0].mxu0 %v1132
      %v3086 = vpop.f32.mrb[0].mxu0
      %v3087 = vadd.f32 %v2942, %v3086
      %v3088 = vpop.f32.mrb[0].mxu0
      %3089 = vmatprep.mubr.f32.mxu0 %v1206
      %3090 = vmatmul.mubr.f32.gmra.mrb[0].mxu0 %v1205
      %v3091 = vpop.f32.mrb[0].mxu0
      %v3092 = vadd.f32 %v2947, %v3091
      %v3093 = vpop.f32.mrb[0].mxu0
      %3094 = vmatprep.mubr.f32.mxu0 %v1279
      %3095 = vmatmul.mubr.f32.gmra.mrb[0].mxu0 %v1278
      %v3096 = vpop.f32.mrb[0].mxu0
      %v3097 = vadd.f32 %v2952, %v3096
      %v3098 = vpop.f32.mrb[0].mxu0
      %3099 = vdwg.mxu0
      %3100 = vmatprep.subr.mxu0 0.0
      %3101 = vmatpush1.msra.mxu0 %v1473
      %3102 = vmatprep.subr.mxu0 0.0
      %3103 = vmatpush1.msra.mxu0 %v1474
      %3104 = vmatprep.subr.mxu0 0.0
      %3105 = vmatpush1.msra.mxu0 %v1475
      %3106 = vmatprep.subr.mxu0 0.0
      %3107 = vmatpush1.msra.mxu0 %v1476
      %3108 = vmatprep.subr.mxu0 0.0
      %3109 = vmatpush1.msra.mxu0 %v1477
      %3110 = vmatprep.subr.mxu0 0.0
      %3111 = vmatpush1.msra.mxu0 %v1478
      %3112 = vmatprep.subr.mxu0 0.0
      %3113 = vmatpush1.msra.mxu0 %v1479
      %3114 = vmatprep.subr.mxu0 0.0
      %3115 = vmatpush1.msra.mxu0 %v1480
      %3116 = vmatprep.subr.mxu0 0.0
      %3117 = vmatpush1.msra.mxu0 %v1481
      %3118 = vmatprep.subr.mxu0 0.0
      %3119 = vmatpush1.msra.mxu0 %v1482
      %3120 = vmatprep.subr.mxu0 0.0
      %3121 = vmatpush1.msra.mxu0 %v1483
      %3122 = vmatprep.subr.mxu0 0.0
      %3123 = vmatpush1.msra.mxu0 %v1484
      %3124 = vmatprep.subr.mxu0 0.0
      %3125 = vmatpush1.msra.mxu0 %v1485
      %3126 = vmatprep.subr.mxu0 0.0
      %3127 = vmatpush1.msra.mxu0 %v1486
      %3128 = vmatprep.subr.mxu0 0.0
      %3129 = vmatpush1.msra.mxu0 %v1487
      %3130 = vmatprep.subr.mxu0 0.0
      %3131 = vmatpush1.msra.mxu0 %v1488
      %3132 = vmatprep.subr.mxu0 0.0
      %3133 = vmatpush1.msra.mxu0 %v1489
      %3134 = vmatprep.subr.mxu0 0.0
      %3135 = vmatpush1.msra.mxu0 %v1490
      %3136 = vmatprep.subr.mxu0 0.0
      %3137 = vmatpush1.msra.mxu0 %v1491
      %3138 = vmatprep.subr.mxu0 0.0
      %3139 = vmatpush1.msra.mxu0 %v1492
      %3140 = vmatprep.subr.mxu0 0.0
      %3141 = vmatpush1.msra.mxu0 %v1493
      %3142 = vmatprep.subr.mxu0 0.0
      %3143 = vmatpush1.msra.mxu0 %v1494
      %3144 = vmatprep.subr.mxu0 0.0
      %3145 = vmatpush1.msra.mxu0 %v1495
      %3146 = vmatprep.subr.mxu0 0.0
      %3147 = vmatpush1.msra.mxu0 %v1496
      %3148 = vmatprep.subr.mxu0 0.0
      %3149 = vmatpush1.msra.mxu0 %v1497
      %3150 = vmatprep.subr.mxu0 0.0
      %3151 = vmatpush1.msra.mxu0 %v1498
      %3152 = vmatprep.subr.mxu0 0.0
      %3153 = vmatpush1.msra.mxu0 %v1499
      %3154 = vmatprep.subr.mxu0 0.0
      %3155 = vmatpush1.msra.mxu0 %v1500
      %3156 = vmatprep.subr.mxu0 0.0
      %3157 = vmatpush1.msra.mxu0 %v1501
      %3158 = vmatprep.subr.mxu0 0.0
      %3159 = vmatpush1.msra.mxu0 %v1502
      %3160 = vmatprep.subr.mxu0 0.0
      %3161 = vmatpush1.msra.mxu0 %v1503
      %3162 = vmatprep.subr.mxu0 0.0
      %3163 = vmatpush1.msra.mxu0 %v1504
      %3164 = vmatprep.mubr.f32.mxu0 %v186
      %3165 = vmatmul.mubr.f32.gmra.mrb[0].mxu0 %v185
      %v3166 = vpop.f32.mrb[0].mxu0
      %v3167 = vadd.f32 %v3022, %v3166
      %v3168 = vpop.f32.mrb[0].mxu0
      %3169 = vmatprep.mubr.f32.mxu0 %v259
      %3170 = vmatmul.mubr.f32.gmra.mrb[0].mxu0 %v258
      %v3171 = vpop.f32.mrb[0].mxu0
      %v3172 = vadd.f32 %v3027, %v3171
      %v3173 = vpop.f32.mrb[0].mxu0
      %3174 = vmatprep.mubr.f32.mxu0 %v332
      %3175 = vmatmul.mubr.f32.gmra.mrb[0].mxu0 %v331
      %v3176 = vpop.f32.mrb[0].mxu0
      %v3177 = vadd.f32 %v3032, %v3176
      %v3178 = vpop.f32.mrb[0].mxu0
      %3179 = vmatprep.mubr.f32.mxu0 %v405
      %3180 = vmatmul.mubr.f32.gmra.mrb[0].mxu0 %v404
      %v3181 = vpop.f32.mrb[0].mxu0
      %v3182 = vadd.f32 %v3037, %v3181
      %v3183 = vpop.f32.mrb[0].mxu0
      %3184 = vmatprep.mubr.f32.mxu0 %v478
      %3185 = vmatmul.mubr.f32.gmra.mrb[0].mxu0 %v477
      %v3186 = vpop.f32.mrb[0].mxu0
      %v3187 = vadd.f32 %v3042, %v3186
      %v3188 = vpop.f32.mrb[0].mxu0
      %3189 = vmatprep.mubr.f32.mxu0 %v551
      %3190 = vmatmul.mubr.f32.gmra.mrb[0].mxu0 %v550
      %v3191 = vpop.f32.mrb[0].mxu0
      %v3192 = vadd.f32 %v3047, %v3191
      %v3193 = vpop.f32.mrb[0].mxu0
      %3194 = vmatprep.mubr.f32.mxu0 %v624
      %3195 = vmatmul.mubr.f32.gmra.mrb[0].mxu0 %v623
      %v3196 = vpop.f32.mrb[0].mxu0
      %v3197 = vadd.f32 %v3052, %v3196
      %v3198 = vpop.f32.mrb[0].mxu0
      %3199 = vmatprep.mubr.f32.mxu0 %v697
      %3200 = vmatmul.mubr.f32.gmra.mrb[0].mxu0 %v696
      %v3201 = vpop.f32.mrb[0].mxu0
      %v3202 = vadd.f32 %v3057, %v3201
      %v3203 = vpop.f32.mrb[0].mxu0
      %3204 = vmatprep.mubr.f32.mxu0 %v770
      %3205 = vmatmul.mubr.f32.gmra.mrb[0].mxu0 %v769
      %v3206 = vpop.f32.mrb[0].mxu0
      %v3207 = vadd.f32 %v3062, %v3206
      %v3208 = vpop.f32.mrb[0].mxu0
      %3209 = vmatprep.mubr.f32.mxu0 %v843
      %3210 = vmatmul.mubr.f32.gmra.mrb[0].mxu0 %v842
      %v3211 = vpop.f32.mrb[0].mxu0
      %v3212 = vadd.f32 %v3067, %v3211
      %v3213 = vpop.f32.mrb[0].mxu0
      %3214 = vmatprep.mubr.f32.mxu0 %v916
      %3215 = vmatmul.mubr.f32.gmra.mrb[0].mxu0 %v915
      %v3216 = vpop.f32.mrb[0].mxu0
      %v3217 = vadd.f32 %v3072, %v3216
      %v3218 = vpop.f32.mrb[0].mxu0
      %3219 = vmatprep.mubr.f32.mxu0 %v989
      %3220 = vmatmul.mubr.f32.gmra.mrb[0].mxu0 %v988
      %v3221 = vpop.f32.mrb[0].mxu0
      %v3222 = vadd.f32 %v3077, %v3221
      %v3223 = vpop.f32.mrb[0].mxu0
      %3224 = vmatprep.mubr.f32.mxu0 %v1062
      %3225 = vmatmul.mubr.f32.gmra.mrb[0].mxu0 %v1061
      %v3226 = vpop.f32.mrb[0].mxu0
      %v3227 = vadd.f32 %v3082, %v3226
      %v3228 = vpop.f32.mrb[0].mxu0
      %3229 = vmatprep.mubr.f32.mxu0 %v1135
      %3230 = vmatmul.mubr.f32.gmra.mrb[0].mxu0 %v1134
      %v3231 = vpop.f32.mrb[0].mxu0
      %v3232 = vadd.f32 %v3087, %v3231
      %v3233 = vpop.f32.mrb[0].mxu0
      %3234 = vmatprep.mubr.f32.mxu0 %v1208
      %3235 = vmatmul.mubr.f32.gmra.mrb[0].mxu0 %v1207
      %v3236 = vpop.f32.mrb[0].mxu0
      %v3237 = vadd.f32 %v3092, %v3236
      %v3238 = vpop.f32.mrb[0].mxu0
      %3239 = vmatprep.mubr.f32.mxu0 %v1281
      %3240 = vmatmul.mubr.f32.gmra.mrb[0].mxu0 %v1280
      %v3241 = vpop.f32.mrb[0].mxu0
      %v3242 = vadd.f32 %v3097, %v3241
      %v3243 = vpop.f32.mrb[0].mxu0
      %3244 = vdwg.mxu0
      %3245 = vmatprep.subr.mxu0 0.0
      %3246 = vmatpush1.msra.mxu0 %v1505
      %3247 = vmatprep.subr.mxu0 0.0
      %3248 = vmatpush1.msra.mxu0 %v1506
      %3249 = vmatprep.subr.mxu0 0.0
      %3250 = vmatpush1.msra.mxu0 %v1507
      %3251 = vmatprep.subr.mxu0 0.0
      %3252 = vmatpush1.msra.mxu0 %v1508
      %3253 = vmatprep.subr.mxu0 0.0
      %3254 = vmatpush1.msra.mxu0 %v1509
      %3255 = vmatprep.subr.mxu0 0.0
      %3256 = vmatpush1.msra.mxu0 %v1510
      %3257 = vmatprep.subr.mxu0 0.0
      %3258 = vmatpush1.msra.mxu0 %v1511
      %3259 = vmatprep.subr.mxu0 0.0
      %3260 = vmatpush1.msra.mxu0 %v1512
      %3261 = vmatprep.subr.mxu0 0.0
      %3262 = vmatpush1.msra.mxu0 %v1513
      %3263 = vmatprep.subr.mxu0 0.0
      %3264 = vmatpush1.msra.mxu0 %v1514
      %3265 = vmatprep.subr.mxu0 0.0
      %3266 = vmatpush1.msra.mxu0 %v1515
      %3267 = vmatprep.subr.mxu0 0.0
      %3268 = vmatpush1.msra.mxu0 %v1516
      %3269 = vmatprep.subr.mxu0 0.0
      %3270 = vmatpush1.msra.mxu0 %v1517
      %3271 = vmatprep.subr.mxu0 0.0
      %3272 = vmatpush1.msra.mxu0 %v1518
      %3273 = vmatprep.subr.mxu0 0.0
      %3274 = vmatpush1.msra.mxu0 %v1519
      %3275 = vmatprep.subr.mxu0 0.0
      %3276 = vmatpush1.msra.mxu0 %v1520
      %3277 = vmatprep.subr.mxu0 0.0
      %3278 = vmatpush1.msra.mxu0 %v1521
      %3279 = vmatprep.subr.mxu0 0.0
      %3280 = vmatpush1.msra.mxu0 %v1522
      %3281 = vmatprep.subr.mxu0 0.0
      %3282 = vmatpush1.msra.mxu0 %v1523
      %3283 = vmatprep.subr.mxu0 0.0
      %3284 = vmatpush1.msra.mxu0 %v1524
      %3285 = vmatprep.subr.mxu0 0.0
      %3286 = vmatpush1.msra.mxu0 %v1525
      %3287 = vmatprep.subr.mxu0 0.0
      %3288 = vmatpush1.msra.mxu0 %v1526
      %3289 = vmatprep.subr.mxu0 0.0
      %3290 = vmatpush1.msra.mxu0 %v1527
      %3291 = vmatprep.subr.mxu0 0.0
      %3292 = vmatpush1.msra.mxu0 %v1528
      %3293 = vmatprep.subr.mxu0 0.0
      %3294 = vmatpush1.msra.mxu0 %v1529
      %3295 = vmatprep.subr.mxu0 0.0
      %3296 = vmatpush1.msra.mxu0 %v1530
      %3297 = vmatprep.subr.mxu0 0.0
      %3298 = vmatpush1.msra.mxu0 %v1531
      %3299 = vmatprep.subr.mxu0 0.0
      %3300 = vmatpush1.msra.mxu0 %v1532
      %3301 = vmatprep.subr.mxu0 0.0
      %3302 = vmatpush1.msra.mxu0 %v1533
      %3303 = vmatprep.subr.mxu0 0.0
      %3304 = vmatpush1.msra.mxu0 %v1534
      %3305 = vmatprep.subr.mxu0 0.0
      %3306 = vmatpush1.msra.mxu0 %v1535
      %3307 = vmatprep.subr.mxu0 0.0
      %3308 = vmatpush1.msra.mxu0 %v1536
      %3309 = vmatprep.mubr.f32.mxu0 %v188
      %3310 = vmatmul.mubr.f32.gmra.mrb[0].mxu0 %v187
      %v3311 = vpop.f32.mrb[0].mxu0
      %v3312 = vadd.f32 %v3167, %v3311
      %v3313 = vpop.f32.mrb[0].mxu0
      %3314 = vmatprep.mubr.f32.mxu0 %v261
      %3315 = vmatmul.mubr.f32.gmra.mrb[0].mxu0 %v260
      %v3316 = vpop.f32.mrb[0].mxu0
      %v3317 = vadd.f32 %v3172, %v3316
      %v3318 = vpop.f32.mrb[0].mxu0
      %3319 = vmatprep.mubr.f32.mxu0 %v334
      %3320 = vmatmul.mubr.f32.gmra.mrb[0].mxu0 %v333
      %v3321 = vpop.f32.mrb[0].mxu0
      %v3322 = vadd.f32 %v3177, %v3321
      %v3323 = vpop.f32.mrb[0].mxu0
      %3324 = vmatprep.mubr.f32.mxu0 %v407
      %3325 = vmatmul.mubr.f32.gmra.mrb[0].mxu0 %v406
      %v3326 = vpop.f32.mrb[0].mxu0
      %v3327 = vadd.f32 %v3182, %v3326
      %v3328 = vpop.f32.mrb[0].mxu0
      %3329 = vmatprep.mubr.f32.mxu0 %v480
      %3330 = vmatmul.mubr.f32.gmra.mrb[0].mxu0 %v479
      %v3331 = vpop.f32.mrb[0].mxu0
      %v3332 = vadd.f32 %v3187, %v3331
      %v3333 = vpop.f32.mrb[0].mxu0
      %3334 = vmatprep.mubr.f32.mxu0 %v553
      %3335 = vmatmul.mubr.f32.gmra.mrb[0].mxu0 %v552
      %v3336 = vpop.f32.mrb[0].mxu0
      %v3337 = vadd.f32 %v3192, %v3336
      %v3338 = vpop.f32.mrb[0].mxu0
      %3339 = vmatprep.mubr.f32.mxu0 %v626
      %3340 = vmatmul.mubr.f32.gmra.mrb[0].mxu0 %v625
      %v3341 = vpop.f32.mrb[0].mxu0
      %v3342 = vadd.f32 %v3197, %v3341
      %v3343 = vpop.f32.mrb[0].mxu0
      %3344 = vmatprep.mubr.f32.mxu0 %v699
      %3345 = vmatmul.mubr.f32.gmra.mrb[0].mxu0 %v698
      %v3346 = vpop.f32.mrb[0].mxu0
      %v3347 = vadd.f32 %v3202, %v3346
      %v3348 = vpop.f32.mrb[0].mxu0
      %3349 = vmatprep.mubr.f32.mxu0 %v772
      %3350 = vmatmul.mubr.f32.gmra.mrb[0].mxu0 %v771
      %v3351 = vpop.f32.mrb[0].mxu0
      %v3352 = vadd.f32 %v3207, %v3351
      %v3353 = vpop.f32.mrb[0].mxu0
      %3354 = vmatprep.mubr.f32.mxu0 %v845
      %3355 = vmatmul.mubr.f32.gmra.mrb[0].mxu0 %v844
      %v3356 = vpop.f32.mrb[0].mxu0
      %v3357 = vadd.f32 %v3212, %v3356
      %v3358 = vpop.f32.mrb[0].mxu0
      %3359 = vmatprep.mubr.f32.mxu0 %v918
      %3360 = vmatmul.mubr.f32.gmra.mrb[0].mxu0 %v917
      %v3361 = vpop.f32.mrb[0].mxu0
      %v3362 = vadd.f32 %v3217, %v3361
      %v3363 = vpop.f32.mrb[0].mxu0
      %3364 = vmatprep.mubr.f32.mxu0 %v991
      %3365 = vmatmul.mubr.f32.gmra.mrb[0].mxu0 %v990
      %v3366 = vpop.f32.mrb[0].mxu0
      %v3367 = vadd.f32 %v3222, %v3366
      %v3368 = vpop.f32.mrb[0].mxu0
      %3369 = vmatprep.mubr.f32.mxu0 %v1064
      %3370 = vmatmul.mubr.f32.gmra.mrb[0].mxu0 %v1063
      %v3371 = vpop.f32.mrb[0].mxu0
      %v3372 = vadd.f32 %v3227, %v3371
      %v3373 = vpop.f32.mrb[0].mxu0
      %3374 = vmatprep.mubr.f32.mxu0 %v1137
      %3375 = vmatmul.mubr.f32.gmra.mrb[0].mxu0 %v1136
      %v3376 = vpop.f32.mrb[0].mxu0
      %v3377 = vadd.f32 %v3232, %v3376
      %v3378 = vpop.f32.mrb[0].mxu0
      %3379 = vmatprep.mubr.f32.mxu0 %v1210
      %3380 = vmatmul.mubr.f32.gmra.mrb[0].mxu0 %v1209
      %v3381 = vpop.f32.mrb[0].mxu0
      %v3382 = vadd.f32 %v3237, %v3381
      %v3383 = vpop.f32.mrb[0].mxu0
      %3384 = vmatprep.mubr.f32.mxu0 %v1283
      %3385 = vmatmul.mubr.f32.gmra.mrb[0].mxu0 %v1282
      %v3386 = vpop.f32.mrb[0].mxu0
      %v3387 = vadd.f32 %v3242, %v3386
      %v3388 = vpop.f32.mrb[0].mxu0
      %3389 = vdwg.mxu0
      %3390 = vmatprep.subr.mxu0 0.0
      %3391 = vmatpush1.msra.mxu0 %v1537
      %3392 = vmatprep.subr.mxu0 0.0
      %3393 = vmatpush1.msra.mxu0 %v1538
      %3394 = vmatprep.subr.mxu0 0.0
      %3395 = vmatpush1.msra.mxu0 %v1539
      %3396 = vmatprep.subr.mxu0 0.0
      %3397 = vmatpush1.msra.mxu0 %v1540
      %3398 = vmatprep.subr.mxu0 0.0
      %3399 = vmatpush1.msra.mxu0 %v1541
      %3400 = vmatprep.subr.mxu0 0.0
      %3401 = vmatpush1.msra.mxu0 %v1542
      %3402 = vmatprep.subr.mxu0 0.0
      %3403 = vmatpush1.msra.mxu0 %v1543
      %3404 = vmatprep.subr.mxu0 0.0
      %3405 = vmatpush1.msra.mxu0 %v1544
      %3406 = vmatprep.subr.mxu0 0.0
      %3407 = vmatpush1.msra.mxu0 %v1545
      %3408 = vmatprep.subr.mxu0 0.0
      %3409 = vmatpush1.msra.mxu0 %v1546
      %3410 = vmatprep.subr.mxu0 0.0
      %3411 = vmatpush1.msra.mxu0 %v1547
      %3412 = vmatprep.subr.mxu0 0.0
      %3413 = vmatpush1.msra.mxu0 %v1548
      %3414 = vmatprep.subr.mxu0 0.0
      %3415 = vmatpush1.msra.mxu0 %v1549
      %3416 = vmatprep.subr.mxu0 0.0
      %3417 = vmatpush1.msra.mxu0 %v1550
      %3418 = vmatprep.subr.mxu0 0.0
      %3419 = vmatpush1.msra.mxu0 %v1551
      %3420 = vmatprep.subr.mxu0 0.0
      %3421 = vmatpush1.msra.mxu0 %v1552
      %3422 = vmatprep.subr.mxu0 0.0
      %3423 = vmatpush1.msra.mxu0 %v1553
      %3424 = vmatprep.subr.mxu0 0.0
      %3425 = vmatpush1.msra.mxu0 %v1554
      %3426 = vmatprep.subr.mxu0 0.0
      %3427 = vmatpush1.msra.mxu0 %v1555
      %3428 = vmatprep.subr.mxu0 0.0
      %3429 = vmatpush1.msra.mxu0 %v1556
      %3430 = vmatprep.subr.mxu0 0.0
      %3431 = vmatpush1.msra.mxu0 %v1557
      %3432 = vmatprep.subr.mxu0 0.0
      %3433 = vmatpush1.msra.mxu0 %v1558
      %3434 = vmatprep.subr.mxu0 0.0
      %3435 = vmatpush1.msra.mxu0 %v1559
      %3436 = vmatprep.subr.mxu0 0.0
      %3437 = vmatpush1.msra.mxu0 %v1560
      %3438 = vmatprep.subr.mxu0 0.0
      %3439 = vmatpush1.msra.mxu0 %v1561
      %3440 = vmatprep.subr.mxu0 0.0
      %3441 = vmatpush1.msra.mxu0 %v1562
      %3442 = vmatprep.subr.mxu0 0.0
      %3443 = vmatpush1.msra.mxu0 %v1563
      %3444 = vmatprep.subr.mxu0 0.0
      %3445 = vmatpush1.msra.mxu0 %v1564
      %3446 = vmatprep.subr.mxu0 0.0
      %3447 = vmatpush1.msra.mxu0 %v1565
      %3448 = vmatprep.subr.mxu0 0.0
      %3449 = vmatpush1.msra.mxu0 %v1566
      %3450 = vmatprep.subr.mxu0 0.0
      %3451 = vmatpush1.msra.mxu0 %v1567
      %3452 = vmatprep.subr.mxu0 0.0
      %3453 = vmatpush1.msra.mxu0 %v1568
      %3454 = vmatprep.mubr.f32.mxu0 %v190
      %3455 = vmatmul.mubr.f32.gmra.mrb[0].mxu0 %v189
      %v3456 = vpop.f32.mrb[0].mxu0
      %v3457 = vadd.f32 %v3312, %v3456
      %v3458 = vpop.f32.mrb[0].mxu0
      %3459 = vmatprep.mubr.f32.mxu0 %v263
      %3460 = vmatmul.mubr.f32.gmra.mrb[0].mxu0 %v262
      %v3461 = vpop.f32.mrb[0].mxu0
      %v3462 = vadd.f32 %v3317, %v3461
      %v3463 = vpop.f32.mrb[0].mxu0
      %3464 = vmatprep.mubr.f32.mxu0 %v336
      %3465 = vmatmul.mubr.f32.gmra.mrb[0].mxu0 %v335
      %v3466 = vpop.f32.mrb[0].mxu0
      %v3467 = vadd.f32 %v3322, %v3466
      %v3468 = vpop.f32.mrb[0].mxu0
      %3469 = vmatprep.mubr.f32.mxu0 %v409
      %3470 = vmatmul.mubr.f32.gmra.mrb[0].mxu0 %v408
      %v3471 = vpop.f32.mrb[0].mxu0
      %v3472 = vadd.f32 %v3327, %v3471
      %v3473 = vpop.f32.mrb[0].mxu0
      %3474 = vmatprep.mubr.f32.mxu0 %v482
      %3475 = vmatmul.mubr.f32.gmra.mrb[0].mxu0 %v481
      %v3476 = vpop.f32.mrb[0].mxu0
      %v3477 = vadd.f32 %v3332, %v3476
      %v3478 = vpop.f32.mrb[0].mxu0
      %3479 = vmatprep.mubr.f32.mxu0 %v555
      %3480 = vmatmul.mubr.f32.gmra.mrb[0].mxu0 %v554
      %v3481 = vpop.f32.mrb[0].mxu0
      %v3482 = vadd.f32 %v3337, %v3481
      %v3483 = vpop.f32.mrb[0].mxu0
      %3484 = vmatprep.mubr.f32.mxu0 %v628
      %3485 = vmatmul.mubr.f32.gmra.mrb[0].mxu0 %v627
      %v3486 = vpop.f32.mrb[0].mxu0
      %v3487 = vadd.f32 %v3342, %v3486
      %v3488 = vpop.f32.mrb[0].mxu0
      %3489 = vmatprep.mubr.f32.mxu0 %v701
      %3490 = vmatmul.mubr.f32.gmra.mrb[0].mxu0 %v700
      %v3491 = vpop.f32.mrb[0].mxu0
      %v3492 = vadd.f32 %v3347, %v3491
      %v3493 = vpop.f32.mrb[0].mxu0
      %3494 = vmatprep.mubr.f32.mxu0 %v774
      %3495 = vmatmul.mubr.f32.gmra.mrb[0].mxu0 %v773
      %v3496 = vpop.f32.mrb[0].mxu0
      %v3497 = vadd.f32 %v3352, %v3496
      %v3498 = vpop.f32.mrb[0].mxu0
      %3499 = vmatprep.mubr.f32.mxu0 %v847
      %3500 = vmatmul.mubr.f32.gmra.mrb[0].mxu0 %v846
      %v3501 = vpop.f32.mrb[0].mxu0
      %v3502 = vadd.f32 %v3357, %v3501
      %v3503 = vpop.f32.mrb[0].mxu0
      %3504 = vmatprep.mubr.f32.mxu0 %v920
      %3505 = vmatmul.mubr.f32.gmra.mrb[0].mxu0 %v919
      %v3506 = vpop.f32.mrb[0].mxu0
      %v3507 = vadd.f32 %v3362, %v3506
      %v3508 = vpop.f32.mrb[0].mxu0
      %3509 = vmatprep.mubr.f32.mxu0 %v993
      %3510 = vmatmul.mubr.f32.gmra.mrb[0].mxu0 %v992
      %v3511 = vpop.f32.mrb[0].mxu0
      %v3512 = vadd.f32 %v3367, %v3511
      %v3513 = vpop.f32.mrb[0].mxu0
      %3514 = vmatprep.mubr.f32.mxu0 %v1066
      %3515 = vmatmul.mubr.f32.gmra.mrb[0].mxu0 %v1065
      %v3516 = vpop.f32.mrb[0].mxu0
      %v3517 = vadd.f32 %v3372, %v3516
      %v3518 = vpop.f32.mrb[0].mxu0
      %3519 = vmatprep.mubr.f32.mxu0 %v1139
      %3520 = vmatmul.mubr.f32.gmra.mrb[0].mxu0 %v1138
      %v3521 = vpop.f32.mrb[0].mxu0
      %v3522 = vadd.f32 %v3377, %v3521
      %v3523 = vpop.f32.mrb[0].mxu0
      %3524 = vmatprep.mubr.f32.mxu0 %v1212
      %3525 = vmatmul.mubr.f32.gmra.mrb[0].mxu0 %v1211
      %v3526 = vpop.f32.mrb[0].mxu0
      %v3527 = vadd.f32 %v3382, %v3526
      %v3528 = vpop.f32.mrb[0].mxu0
      %3529 = vmatprep.mubr.f32.mxu0 %v1285
      %3530 = vmatmul.mubr.f32.gmra.mrb[0].mxu0 %v1284
      %v3531 = vpop.f32.mrb[0].mxu0
      %v3532 = vadd.f32 %v3387, %v3531
      %v3533 = vpop.f32.mrb[0].mxu0
      %3534 = vdwg.mxu0
      %3535 = vmatprep.subr.mxu0 0.0
      %3536 = vmatpush1.msra.mxu0 %v1569
      %3537 = vmatprep.subr.mxu0 0.0
      %3538 = vmatpush1.msra.mxu0 %v1570
      %3539 = vmatprep.subr.mxu0 0.0
      %3540 = vmatpush1.msra.mxu0 %v1571
      %3541 = vmatprep.subr.mxu0 0.0
      %3542 = vmatpush1.msra.mxu0 %v1572
      %3543 = vmatprep.subr.mxu0 0.0
      %3544 = vmatpush1.msra.mxu0 %v1573
      %3545 = vmatprep.subr.mxu0 0.0
      %3546 = vmatpush1.msra.mxu0 %v1574
      %3547 = vmatprep.subr.mxu0 0.0
      %3548 = vmatpush1.msra.mxu0 %v1575
      %3549 = vmatprep.subr.mxu0 0.0
      %3550 = vmatpush1.msra.mxu0 %v1576
      %3551 = vmatprep.subr.mxu0 0.0
      %3552 = vmatpush1.msra.mxu0 %v1577
      %3553 = vmatprep.subr.mxu0 0.0
      %3554 = vmatpush1.msra.mxu0 %v1578
      %3555 = vmatprep.subr.mxu0 0.0
      %3556 = vmatpush1.msra.mxu0 %v1579
      %3557 = vmatprep.subr.mxu0 0.0
      %3558 = vmatpush1.msra.mxu0 %v1580
      %3559 = vmatprep.subr.mxu0 0.0
      %3560 = vmatpush1.msra.mxu0 %v1581
      %3561 = vmatprep.subr.mxu0 0.0
      %3562 = vmatpush1.msra.mxu0 %v1582
      %3563 = vmatprep.subr.mxu0 0.0
      %3564 = vmatpush1.msra.mxu0 %v1583
      %3565 = vmatprep.subr.mxu0 0.0
      %3566 = vmatpush1.msra.mxu0 %v1584
      %3567 = vmatprep.subr.mxu0 0.0
      %3568 = vmatpush1.msra.mxu0 %v1585
      %3569 = vmatprep.subr.mxu0 0.0
      %3570 = vmatpush1.msra.mxu0 %v1586
      %3571 = vmatprep.subr.mxu0 0.0
      %3572 = vmatpush1.msra.mxu0 %v1587
      %3573 = vmatprep.subr.mxu0 0.0
      %3574 = vmatpush1.msra.mxu0 %v1588
      %3575 = vmatprep.subr.mxu0 0.0
      %3576 = vmatpush1.msra.mxu0 %v1589
      %3577 = vmatprep.subr.mxu0 0.0
      %3578 = vmatpush1.msra.mxu0 %v1590
      %3579 = vmatprep.subr.mxu0 0.0
      %3580 = vmatpush1.msra.mxu0 %v1591
      %3581 = vmatprep.subr.mxu0 0.0
      %3582 = vmatpush1.msra.mxu0 %v1592
      %3583 = vmatprep.subr.mxu0 0.0
      %3584 = vmatpush1.msra.mxu0 %v1593
      %3585 = vmatprep.subr.mxu0 0.0
      %3586 = vmatpush1.msra.mxu0 %v1594
      %3587 = vmatprep.subr.mxu0 0.0
      %3588 = vmatpush1.msra.mxu0 %v1595
      %3589 = vmatprep.subr.mxu0 0.0
      %3590 = vmatpush1.msra.mxu0 %v1596
      %3591 = vmatprep.subr.mxu0 0.0
      %3592 = vmatpush1.msra.mxu0 %v1597
      %3593 = vmatprep.subr.mxu0 0.0
      %3594 = vmatpush1.msra.mxu0 %v1598
      %3595 = vmatprep.subr.mxu0 0.0
      %3596 = vmatpush1.msra.mxu0 %v1599
      %3597 = vmatprep.subr.mxu0 0.0
      %3598 = vmatpush1.msra.mxu0 %v1600
      %3599 = vmatprep.mubr.f32.mxu0 %v192
      %3600 = vmatmul.mubr.f32.gmra.mrb[0].mxu0 %v191
      %v3601 = vpop.f32.mrb[0].mxu0
      %v3602 = vadd.f32 %v3457, %v3601
      %v3603 = vpop.f32.mrb[0].mxu0
      %3604 = vmatprep.mubr.f32.mxu0 %v265
      %3605 = vmatmul.mubr.f32.gmra.mrb[0].mxu0 %v264
      %v3606 = vpop.f32.mrb[0].mxu0
      %v3607 = vadd.f32 %v3462, %v3606
      %v3608 = vpop.f32.mrb[0].mxu0
      %3609 = vmatprep.mubr.f32.mxu0 %v338
      %3610 = vmatmul.mubr.f32.gmra.mrb[0].mxu0 %v337
      %v3611 = vpop.f32.mrb[0].mxu0
      %v3612 = vadd.f32 %v3467, %v3611
      %v3613 = vpop.f32.mrb[0].mxu0
      %3614 = vmatprep.mubr.f32.mxu0 %v411
      %3615 = vmatmul.mubr.f32.gmra.mrb[0].mxu0 %v410
      %v3616 = vpop.f32.mrb[0].mxu0
      %v3617 = vadd.f32 %v3472, %v3616
      %v3618 = vpop.f32.mrb[0].mxu0
      %3619 = vmatprep.mubr.f32.mxu0 %v484
      %3620 = vmatmul.mubr.f32.gmra.mrb[0].mxu0 %v483
      %v3621 = vpop.f32.mrb[0].mxu0
      %v3622 = vadd.f32 %v3477, %v3621
      %v3623 = vpop.f32.mrb[0].mxu0
      %3624 = vmatprep.mubr.f32.mxu0 %v557
      %3625 = vmatmul.mubr.f32.gmra.mrb[0].mxu0 %v556
      %v3626 = vpop.f32.mrb[0].mxu0
      %v3627 = vadd.f32 %v3482, %v3626
      %v3628 = vpop.f32.mrb[0].mxu0
      %3629 = vmatprep.mubr.f32.mxu0 %v630
      %3630 = vmatmul.mubr.f32.gmra.mrb[0].mxu0 %v629
      %v3631 = vpop.f32.mrb[0].mxu0
      %v3632 = vadd.f32 %v3487, %v3631
      %v3633 = vpop.f32.mrb[0].mxu0
      %3634 = vmatprep.mubr.f32.mxu0 %v703
      %3635 = vmatmul.mubr.f32.gmra.mrb[0].mxu0 %v702
      %v3636 = vpop.f32.mrb[0].mxu0
      %v3637 = vadd.f32 %v3492, %v3636
      %v3638 = vpop.f32.mrb[0].mxu0
      %3639 = vmatprep.mubr.f32.mxu0 %v776
      %3640 = vmatmul.mubr.f32.gmra.mrb[0].mxu0 %v775
      %v3641 = vpop.f32.mrb[0].mxu0
      %v3642 = vadd.f32 %v3497, %v3641
      %v3643 = vpop.f32.mrb[0].mxu0
      %3644 = vmatprep.mubr.f32.mxu0 %v849
      %3645 = vmatmul.mubr.f32.gmra.mrb[0].mxu0 %v848
      %v3646 = vpop.f32.mrb[0].mxu0
      %v3647 = vadd.f32 %v3502, %v3646
      %v3648 = vpop.f32.mrb[0].mxu0
      %3649 = vmatprep.mubr.f32.mxu0 %v922
      %3650 = vmatmul.mubr.f32.gmra.mrb[0].mxu0 %v921
      %v3651 = vpop.f32.mrb[0].mxu0
      %v3652 = vadd.f32 %v3507, %v3651
      %v3653 = vpop.f32.mrb[0].mxu0
      %3654 = vmatprep.mubr.f32.mxu0 %v995
      %3655 = vmatmul.mubr.f32.gmra.mrb[0].mxu0 %v994
      %v3656 = vpop.f32.mrb[0].mxu0
      %v3657 = vadd.f32 %v3512, %v3656
      %v3658 = vpop.f32.mrb[0].mxu0
      %3659 = vmatprep.mubr.f32.mxu0 %v1068
      %3660 = vmatmul.mubr.f32.gmra.mrb[0].mxu0 %v1067
      %v3661 = vpop.f32.mrb[0].mxu0
      %v3662 = vadd.f32 %v3517, %v3661
      %v3663 = vpop.f32.mrb[0].mxu0
      %3664 = vmatprep.mubr.f32.mxu0 %v1141
      %3665 = vmatmul.mubr.f32.gmra.mrb[0].mxu0 %v1140
      %v3666 = vpop.f32.mrb[0].mxu0
      %v3667 = vadd.f32 %v3522, %v3666
      %v3668 = vpop.f32.mrb[0].mxu0
      %3669 = vmatprep.mubr.f32.mxu0 %v1214
      %3670 = vmatmul.mubr.f32.gmra.mrb[0].mxu0 %v1213
      %v3671 = vpop.f32.mrb[0].mxu0
      %v3672 = vadd.f32 %v3527, %v3671
      %v3673 = vpop.f32.mrb[0].mxu0
      %3674 = vmatprep.mubr.f32.mxu0 %v1287
      %3675 = vmatmul.mubr.f32.gmra.mrb[0].mxu0 %v1286
      %v3676 = vpop.f32.mrb[0].mxu0
      %v3677 = vadd.f32 %v3532, %v3676
      %v3678 = vpop.f32.mrb[0].mxu0
      %3679 = vdwg.mxu0
      %3680 = vmatprep.subr.mxu0 0.0
      %3681 = vmatpush1.msra.mxu0 %v1601
      %3682 = vmatprep.subr.mxu0 0.0
      %3683 = vmatpush1.msra.mxu0 %v1602
      %3684 = vmatprep.subr.mxu0 0.0
      %3685 = vmatpush1.msra.mxu0 %v1603
      %3686 = vmatprep.subr.mxu0 0.0
      %3687 = vmatpush1.msra.mxu0 %v1604
      %3688 = vmatprep.subr.mxu0 0.0
      %3689 = vmatpush1.msra.mxu0 %v1605
      %3690 = vmatprep.subr.mxu0 0.0
      %3691 = vmatpush1.msra.mxu0 %v1606
      %3692 = vmatprep.subr.mxu0 0.0
      %3693 = vmatpush1.msra.mxu0 %v1607
      %3694 = vmatprep.subr.mxu0 0.0
      %3695 = vmatpush1.msra.mxu0 %v1608
      %3696 = vmatprep.subr.mxu0 0.0
      %3697 = vmatpush1.msra.mxu0 %v1609
      %3698 = vmatprep.subr.mxu0 0.0
      %3699 = vmatpush1.msra.mxu0 %v1610
      %3700 = vmatprep.subr.mxu0 0.0
      %3701 = vmatpush1.msra.mxu0 %v1611
      %3702 = vmatprep.subr.mxu0 0.0
      %3703 = vmatpush1.msra.mxu0 %v1612
      %3704 = vmatprep.subr.mxu0 0.0
      %3705 = vmatpush1.msra.mxu0 %v1613
      %3706 = vmatprep.subr.mxu0 0.0
      %3707 = vmatpush1.msra.mxu0 %v1614
      %3708 = vmatprep.subr.mxu0 0.0
      %3709 = vmatpush1.msra.mxu0 %v1615
      %3710 = vmatprep.subr.mxu0 0.0
      %3711 = vmatpush1.msra.mxu0 %v1616
      %3712 = vmatprep.subr.mxu0 0.0
      %3713 = vmatpush1.msra.mxu0 %v1617
      %3714 = vmatprep.subr.mxu0 0.0
      %3715 = vmatpush1.msra.mxu0 %v1618
      %3716 = vmatprep.subr.mxu0 0.0
      %3717 = vmatpush1.msra.mxu0 %v1619
      %3718 = vmatprep.subr.mxu0 0.0
      %3719 = vmatpush1.msra.mxu0 %v1620
      %3720 = vmatprep.subr.mxu0 0.0
      %3721 = vmatpush1.msra.mxu0 %v1621
      %3722 = vmatprep.subr.mxu0 0.0
      %3723 = vmatpush1.msra.mxu0 %v1622
      %3724 = vmatprep.subr.mxu0 0.0
      %3725 = vmatpush1.msra.mxu0 %v1623
      %3726 = vmatprep.subr.mxu0 0.0
      %3727 = vmatpush1.msra.mxu0 %v1624
      %3728 = vmatprep.subr.mxu0 0.0
      %3729 = vmatpush1.msra.mxu0 %v1625
      %3730 = vmatprep.subr.mxu0 0.0
      %3731 = vmatpush1.msra.mxu0 %v1626
      %3732 = vmatprep.subr.mxu0 0.0
      %3733 = vmatpush1.msra.mxu0 %v1627
      %3734 = vmatprep.subr.mxu0 0.0
      %3735 = vmatpush1.msra.mxu0 %v1628
      %3736 = vmatprep.subr.mxu0 0.0
      %3737 = vmatpush1.msra.mxu0 %v1629
      %3738 = vmatprep.subr.mxu0 0.0
      %3739 = vmatpush1.msra.mxu0 %v1630
      %3740 = vmatprep.subr.mxu0 0.0
      %3741 = vmatpush1.msra.mxu0 %v1631
      %3742 = vmatprep.subr.mxu0 0.0
      %3743 = vmatpush1.msra.mxu0 %v1632
      %3744 = vmatprep.mubr.f32.mxu0 %v194
      %3745 = vmatmul.mubr.f32.gmra.mrb[0].mxu0 %v193
      %v3746 = vpop.f32.mrb[0].mxu0
      %v3747 = vadd.f32 %v3602, %v3746
      %v3748 = vpop.f32.mrb[0].mxu0
      %3749 = vmatprep.mubr.f32.mxu0 %v267
      %3750 = vmatmul.mubr.f32.gmra.mrb[0].mxu0 %v266
      %v3751 = vpop.f32.mrb[0].mxu0
      %v3752 = vadd.f32 %v3607, %v3751
      %v3753 = vpop.f32.mrb[0].mxu0
      %3754 = vmatprep.mubr.f32.mxu0 %v340
      %3755 = vmatmul.mubr.f32.gmra.mrb[0].mxu0 %v339
      %v3756 = vpop.f32.mrb[0].mxu0
      %v3757 = vadd.f32 %v3612, %v3756
      %v3758 = vpop.f32.mrb[0].mxu0
      %3759 = vmatprep.mubr.f32.mxu0 %v413
      %3760 = vmatmul.mubr.f32.gmra.mrb[0].mxu0 %v412
      %v3761 = vpop.f32.mrb[0].mxu0
      %v3762 = vadd.f32 %v3617, %v3761
      %v3763 = vpop.f32.mrb[0].mxu0
      %3764 = vmatprep.mubr.f32.mxu0 %v486
      %3765 = vmatmul.mubr.f32.gmra.mrb[0].mxu0 %v485
      %v3766 = vpop.f32.mrb[0].mxu0
      %v3767 = vadd.f32 %v3622, %v3766
      %v3768 = vpop.f32.mrb[0].mxu0
      %3769 = vmatprep.mubr.f32.mxu0 %v559
      %3770 = vmatmul.mubr.f32.gmra.mrb[0].mxu0 %v558
      %v3771 = vpop.f32.mrb[0].mxu0
      %v3772 = vadd.f32 %v3627, %v3771
      %v3773 = vpop.f32.mrb[0].mxu0
      %3774 = vmatprep.mubr.f32.mxu0 %v632
      %3775 = vmatmul.mubr.f32.gmra.mrb[0].mxu0 %v631
      %v3776 = vpop.f32.mrb[0].mxu0
      %v3777 = vadd.f32 %v3632, %v3776
      %v3778 = vpop.f32.mrb[0].mxu0
      %3779 = vmatprep.mubr.f32.mxu0 %v705
      %3780 = vmatmul.mubr.f32.gmra.mrb[0].mxu0 %v704
      %v3781 = vpop.f32.mrb[0].mxu0
      %v3782 = vadd.f32 %v3637, %v3781
      %v3783 = vpop.f32.mrb[0].mxu0
      %3784 = vmatprep.mubr.f32.mxu0 %v778
      %3785 = vmatmul.mubr.f32.gmra.mrb[0].mxu0 %v777
      %v3786 = vpop.f32.mrb[0].mxu0
      %v3787 = vadd.f32 %v3642, %v3786
      %v3788 = vpop.f32.mrb[0].mxu0
      %3789 = vmatprep.mubr.f32.mxu0 %v851
      %3790 = vmatmul.mubr.f32.gmra.mrb[0].mxu0 %v850
      %v3791 = vpop.f32.mrb[0].mxu0
      %v3792 = vadd.f32 %v3647, %v3791
      %v3793 = vpop.f32.mrb[0].mxu0
      %3794 = vmatprep.mubr.f32.mxu0 %v924
      %3795 = vmatmul.mubr.f32.gmra.mrb[0].mxu0 %v923
      %v3796 = vpop.f32.mrb[0].mxu0
      %v3797 = vadd.f32 %v3652, %v3796
      %v3798 = vpop.f32.mrb[0].mxu0
      %3799 = vmatprep.mubr.f32.mxu0 %v997
      %3800 = vmatmul.mubr.f32.gmra.mrb[0].mxu0 %v996
      %v3801 = vpop.f32.mrb[0].mxu0
      %v3802 = vadd.f32 %v3657, %v3801
      %v3803 = vpop.f32.mrb[0].mxu0
      %3804 = vmatprep.mubr.f32.mxu0 %v1070
      %3805 = vmatmul.mubr.f32.gmra.mrb[0].mxu0 %v1069
      %v3806 = vpop.f32.mrb[0].mxu0
      %v3807 = vadd.f32 %v3662, %v3806
      %v3808 = vpop.f32.mrb[0].mxu0
      %3809 = vmatprep.mubr.f32.mxu0 %v1143
      %3810 = vmatmul.mubr.f32.gmra.mrb[0].mxu0 %v1142
      %v3811 = vpop.f32.mrb[0].mxu0
      %v3812 = vadd.f32 %v3667, %v3811
      %v3813 = vpop.f32.mrb[0].mxu0
      %3814 = vmatprep.mubr.f32.mxu0 %v1216
      %3815 = vmatmul.mubr.f32.gmra.mrb[0].mxu0 %v1215
      %v3816 = vpop.f32.mrb[0].mxu0
      %v3817 = vadd.f32 %v3672, %v3816
      %v3818 = vpop.f32.mrb[0].mxu0
      %3819 = vmatprep.mubr.f32.mxu0 %v1289
      %3820 = vmatmul.mubr.f32.gmra.mrb[0].mxu0 %v1288
      %v3821 = vpop.f32.mrb[0].mxu0
      %v3822 = vadd.f32 %v3677, %v3821
      %v3823 = vpop.f32.mrb[0].mxu0
      %3824 = vdwg.mxu0
      %3825 = vmatprep.subr.mxu0 0.0
      %3826 = vmatpush1.msra.mxu0 %v1633
      %3827 = vmatprep.subr.mxu0 0.0
      %3828 = vmatpush1.msra.mxu0 %v1634
      %3829 = vmatprep.subr.mxu0 0.0
      %3830 = vmatpush1.msra.mxu0 %v1635
      %3831 = vmatprep.subr.mxu0 0.0
      %3832 = vmatpush1.msra.mxu0 %v1636
      %3833 = vmatprep.subr.mxu0 0.0
      %3834 = vmatpush1.msra.mxu0 %v1637
      %3835 = vmatprep.subr.mxu0 0.0
      %3836 = vmatpush1.msra.mxu0 %v1638
      %3837 = vmatprep.subr.mxu0 0.0
      %3838 = vmatpush1.msra.mxu0 %v1639
      %3839 = vmatprep.subr.mxu0 0.0
      %3840 = vmatpush1.msra.mxu0 %v1640
      %3841 = vmatprep.subr.mxu0 0.0
      %3842 = vmatpush1.msra.mxu0 %v1641
      %3843 = vmatprep.subr.mxu0 0.0
      %3844 = vmatpush1.msra.mxu0 %v1642
      %3845 = vmatprep.subr.mxu0 0.0
      %3846 = vmatpush1.msra.mxu0 %v1643
      %3847 = vmatprep.subr.mxu0 0.0
      %3848 = vmatpush1.msra.mxu0 %v1644
      %3849 = vmatprep.subr.mxu0 0.0
      %3850 = vmatpush1.msra.mxu0 %v1645
      %3851 = vmatprep.subr.mxu0 0.0
      %3852 = vmatpush1.msra.mxu0 %v1646
      %3853 = vmatprep.subr.mxu0 0.0
      %3854 = vmatpush1.msra.mxu0 %v1647
      %3855 = vmatprep.subr.mxu0 0.0
      %3856 = vmatpush1.msra.mxu0 %v1648
      %3857 = vmatprep.subr.mxu0 0.0
      %3858 = vmatpush1.msra.mxu0 %v1649
      %3859 = vmatprep.subr.mxu0 0.0
      %3860 = vmatpush1.msra.mxu0 %v1650
      %3861 = vmatprep.subr.mxu0 0.0
      %3862 = vmatpush1.msra.mxu0 %v1651
      %3863 = vmatprep.subr.mxu0 0.0
      %3864 = vmatpush1.msra.mxu0 %v1652
      %3865 = vmatprep.subr.mxu0 0.0
      %3866 = vmatpush1.msra.mxu0 %v1653
      %3867 = vmatprep.subr.mxu0 0.0
      %3868 = vmatpush1.msra.mxu0 %v1654
      %3869 = vmatprep.subr.mxu0 0.0
      %3870 = vmatpush1.msra.mxu0 %v1655
      %3871 = vmatprep.subr.mxu0 0.0
      %3872 = vmatpush1.msra.mxu0 %v1656
      %3873 = vmatprep.subr.mxu0 0.0
      %3874 = vmatpush1.msra.mxu0 %v1657
      %3875 = vmatprep.subr.mxu0 0.0
      %3876 = vmatpush1.msra.mxu0 %v1658
      %3877 = vmatprep.subr.mxu0 0.0
      %3878 = vmatpush1.msra.mxu0 %v1659
      %3879 = vmatprep.subr.mxu0 0.0
      %3880 = vmatpush1.msra.mxu0 %v1660
      %3881 = vmatprep.subr.mxu0 0.0
      %3882 = vmatpush1.msra.mxu0 %v1661
      %3883 = vmatprep.subr.mxu0 0.0
      %3884 = vmatpush1.msra.mxu0 %v1662
      %3885 = vmatprep.subr.mxu0 0.0
      %3886 = vmatpush1.msra.mxu0 %v1663
      %3887 = vmatprep.subr.mxu0 0.0
      %3888 = vmatpush1.msra.mxu0 %v1664
      %3889 = vmatprep.mubr.f32.mxu0 %v196
      %3890 = vmatmul.mubr.f32.gmra.mrb[0].mxu0 %v195
      %v3891 = vpop.f32.mrb[0].mxu0
      %v3892 = vadd.f32 %v3747, %v3891
      %v3893 = vpop.f32.mrb[0].mxu0
      %3894 = vmatprep.mubr.f32.mxu0 %v269
      %3895 = vmatmul.mubr.f32.gmra.mrb[0].mxu0 %v268
      %v3896 = vpop.f32.mrb[0].mxu0
      %v3897 = vadd.f32 %v3752, %v3896
      %v3898 = vpop.f32.mrb[0].mxu0
      %3899 = vmatprep.mubr.f32.mxu0 %v342
      %3900 = vmatmul.mubr.f32.gmra.mrb[0].mxu0 %v341
      %v3901 = vpop.f32.mrb[0].mxu0
      %v3902 = vadd.f32 %v3757, %v3901
      %v3903 = vpop.f32.mrb[0].mxu0
      %3904 = vmatprep.mubr.f32.mxu0 %v415
      %3905 = vmatmul.mubr.f32.gmra.mrb[0].mxu0 %v414
      %v3906 = vpop.f32.mrb[0].mxu0
      %v3907 = vadd.f32 %v3762, %v3906
      %v3908 = vpop.f32.mrb[0].mxu0
      %3909 = vmatprep.mubr.f32.mxu0 %v488
      %3910 = vmatmul.mubr.f32.gmra.mrb[0].mxu0 %v487
      %v3911 = vpop.f32.mrb[0].mxu0
      %v3912 = vadd.f32 %v3767, %v3911
      %v3913 = vpop.f32.mrb[0].mxu0
      %3914 = vmatprep.mubr.f32.mxu0 %v561
      %3915 = vmatmul.mubr.f32.gmra.mrb[0].mxu0 %v560
      %v3916 = vpop.f32.mrb[0].mxu0
      %v3917 = vadd.f32 %v3772, %v3916
      %v3918 = vpop.f32.mrb[0].mxu0
      %3919 = vmatprep.mubr.f32.mxu0 %v634
      %3920 = vmatmul.mubr.f32.gmra.mrb[0].mxu0 %v633
      %v3921 = vpop.f32.mrb[0].mxu0
      %v3922 = vadd.f32 %v3777, %v3921
      %v3923 = vpop.f32.mrb[0].mxu0
      %3924 = vmatprep.mubr.f32.mxu0 %v707
      %3925 = vmatmul.mubr.f32.gmra.mrb[0].mxu0 %v706
      %v3926 = vpop.f32.mrb[0].mxu0
      %v3927 = vadd.f32 %v3782, %v3926
      %v3928 = vpop.f32.mrb[0].mxu0
      %3929 = vmatprep.mubr.f32.mxu0 %v780
      %3930 = vmatmul.mubr.f32.gmra.mrb[0].mxu0 %v779
      %v3931 = vpop.f32.mrb[0].mxu0
      %v3932 = vadd.f32 %v3787, %v3931
      %v3933 = vpop.f32.mrb[0].mxu0
      %3934 = vmatprep.mubr.f32.mxu0 %v853
      %3935 = vmatmul.mubr.f32.gmra.mrb[0].mxu0 %v852
      %v3936 = vpop.f32.mrb[0].mxu0
      %v3937 = vadd.f32 %v3792, %v3936
      %v3938 = vpop.f32.mrb[0].mxu0
      %3939 = vmatprep.mubr.f32.mxu0 %v926
      %3940 = vmatmul.mubr.f32.gmra.mrb[0].mxu0 %v925
      %v3941 = vpop.f32.mrb[0].mxu0
      %v3942 = vadd.f32 %v3797, %v3941
      %v3943 = vpop.f32.mrb[0].mxu0
      %3944 = vmatprep.mubr.f32.mxu0 %v999
      %3945 = vmatmul.mubr.f32.gmra.mrb[0].mxu0 %v998
      %v3946 = vpop.f32.mrb[0].mxu0
      %v3947 = vadd.f32 %v3802, %v3946
      %v3948 = vpop.f32.mrb[0].mxu0
      %3949 = vmatprep.mubr.f32.mxu0 %v1072
      %3950 = vmatmul.mubr.f32.gmra.mrb[0].mxu0 %v1071
      %v3951 = vpop.f32.mrb[0].mxu0
      %v3952 = vadd.f32 %v3807, %v3951
      %v3953 = vpop.f32.mrb[0].mxu0
      %3954 = vmatprep.mubr.f32.mxu0 %v1145
      %3955 = vmatmul.mubr.f32.gmra.mrb[0].mxu0 %v1144
      %v3956 = vpop.f32.mrb[0].mxu0
      %v3957 = vadd.f32 %v3812, %v3956
      %v3958 = vpop.f32.mrb[0].mxu0
      %3959 = vmatprep.mubr.f32.mxu0 %v1218
      %3960 = vmatmul.mubr.f32.gmra.mrb[0].mxu0 %v1217
      %v3961 = vpop.f32.mrb[0].mxu0
      %v3962 = vadd.f32 %v3817, %v3961
      %v3963 = vpop.f32.mrb[0].mxu0
      %3964 = vmatprep.mubr.f32.mxu0 %v1291
      %3965 = vmatmul.mubr.f32.gmra.mrb[0].mxu0 %v1290
      %v3966 = vpop.f32.mrb[0].mxu0
      %v3967 = vadd.f32 %v3822, %v3966
      %v3968 = vpop.f32.mrb[0].mxu0
      %3969 = vdwg.mxu0
      %3970 = vmatprep.subr.mxu0 0.0
      %3971 = vmatpush1.msra.mxu0 %v1665
      %3972 = vmatprep.subr.mxu0 0.0
      %3973 = vmatpush1.msra.mxu0 %v1666
      %3974 = vmatprep.subr.mxu0 0.0
      %3975 = vmatpush1.msra.mxu0 %v1667
      %3976 = vmatprep.subr.mxu0 0.0
      %3977 = vmatpush1.msra.mxu0 %v1668
      %3978 = vmatprep.subr.mxu0 0.0
      %3979 = vmatpush1.msra.mxu0 %v1669
      %3980 = vmatprep.subr.mxu0 0.0
      %3981 = vmatpush1.msra.mxu0 %v1670
      %3982 = vmatprep.subr.mxu0 0.0
      %3983 = vmatpush1.msra.mxu0 %v1671
      %3984 = vmatprep.subr.mxu0 0.0
      %3985 = vmatpush1.msra.mxu0 %v1672
      %3986 = vmatprep.subr.mxu0 0.0
      %3987 = vmatpush1.msra.mxu0 %v1673
      %3988 = vmatprep.subr.mxu0 0.0
      %3989 = vmatpush1.msra.mxu0 %v1674
      %3990 = vmatprep.subr.mxu0 0.0
      %3991 = vmatpush1.msra.mxu0 %v1675
      %3992 = vmatprep.subr.mxu0 0.0
      %3993 = vmatpush1.msra.mxu0 %v1676
      %3994 = vmatprep.subr.mxu0 0.0
      %3995 = vmatpush1.msra.mxu0 %v1677
      %3996 = vmatprep.subr.mxu0 0.0
      %3997 = vmatpush1.msra.mxu0 %v1678
      %3998 = vmatprep.subr.mxu0 0.0
      %3999 = vmatpush1.msra.mxu0 %v1679
      %4000 = vmatprep.subr.mxu0 0.0
      %4001 = vmatpush1.msra.mxu0 %v1680
      %4002 = vmatprep.subr.mxu0 0.0
      %4003 = vmatpush1.msra.mxu0 %v1681
      %4004 = vmatprep.subr.mxu0 0.0
      %4005 = vmatpush1.msra.mxu0 %v1682
      %4006 = vmatprep.subr.mxu0 0.0
      %4007 = vmatpush1.msra.mxu0 %v1683
      %4008 = vmatprep.subr.mxu0 0.0
      %4009 = vmatpush1.msra.mxu0 %v1684
      %4010 = vmatprep.subr.mxu0 0.0
      %4011 = vmatpush1.msra.mxu0 %v1685
      %4012 = vmatprep.subr.mxu0 0.0
      %4013 = vmatpush1.msra.mxu0 %v1686
      %4014 = vmatprep.subr.mxu0 0.0
      %4015 = vmatpush1.msra.mxu0 %v1687
      %4016 = vmatprep.subr.mxu0 0.0
      %4017 = vmatpush1.msra.mxu0 %v1688
      %4018 = vmatprep.subr.mxu0 0.0
      %4019 = vmatpush1.msra.mxu0 %v1689
      %4020 = vmatprep.subr.mxu0 0.0
      %4021 = vmatpush1.msra.mxu0 %v1690
      %4022 = vmatprep.subr.mxu0 0.0
      %4023 = vmatpush1.msra.mxu0 %v1691
      %4024 = vmatprep.subr.mxu0 0.0
      %4025 = vmatpush1.msra.mxu0 %v1692
      %4026 = vmatprep.subr.mxu0 0.0
      %4027 = vmatpush1.msra.mxu0 %v1693
      %4028 = vmatprep.subr.mxu0 0.0
      %4029 = vmatpush1.msra.mxu0 %v1694
      %4030 = vmatprep.subr.mxu0 0.0
      %4031 = vmatpush1.msra.mxu0 %v1695
      %4032 = vmatprep.subr.mxu0 0.0
      %4033 = vmatpush1.msra.mxu0 %v1696
      %4034 = vmatprep.mubr.f32.mxu0 %v198
      %4035 = vmatmul.mubr.f32.gmra.mrb[0].mxu0 %v197
      %v4036 = vpop.f32.mrb[0].mxu0
      %v4037 = vadd.f32 %v3892, %v4036
      %v4038 = vpop.f32.mrb[0].mxu0
      %4039 = vmatprep.mubr.f32.mxu0 %v271
      %4040 = vmatmul.mubr.f32.gmra.mrb[0].mxu0 %v270
      %v4041 = vpop.f32.mrb[0].mxu0
      %v4042 = vadd.f32 %v3897, %v4041
      %v4043 = vpop.f32.mrb[0].mxu0
      %4044 = vmatprep.mubr.f32.mxu0 %v344
      %4045 = vmatmul.mubr.f32.gmra.mrb[0].mxu0 %v343
      %v4046 = vpop.f32.mrb[0].mxu0
      %v4047 = vadd.f32 %v3902, %v4046
      %v4048 = vpop.f32.mrb[0].mxu0
      %4049 = vmatprep.mubr.f32.mxu0 %v417
      %4050 = vmatmul.mubr.f32.gmra.mrb[0].mxu0 %v416
      %v4051 = vpop.f32.mrb[0].mxu0
      %v4052 = vadd.f32 %v3907, %v4051
      %v4053 = vpop.f32.mrb[0].mxu0
      %4054 = vmatprep.mubr.f32.mxu0 %v490
      %4055 = vmatmul.mubr.f32.gmra.mrb[0].mxu0 %v489
      %v4056 = vpop.f32.mrb[0].mxu0
      %v4057 = vadd.f32 %v3912, %v4056
      %v4058 = vpop.f32.mrb[0].mxu0
      %4059 = vmatprep.mubr.f32.mxu0 %v563
      %4060 = vmatmul.mubr.f32.gmra.mrb[0].mxu0 %v562
      %v4061 = vpop.f32.mrb[0].mxu0
      %v4062 = vadd.f32 %v3917, %v4061
      %v4063 = vpop.f32.mrb[0].mxu0
      %4064 = vmatprep.mubr.f32.mxu0 %v636
      %4065 = vmatmul.mubr.f32.gmra.mrb[0].mxu0 %v635
      %v4066 = vpop.f32.mrb[0].mxu0
      %v4067 = vadd.f32 %v3922, %v4066
      %v4068 = vpop.f32.mrb[0].mxu0
      %4069 = vmatprep.mubr.f32.mxu0 %v709
      %4070 = vmatmul.mubr.f32.gmra.mrb[0].mxu0 %v708
      %v4071 = vpop.f32.mrb[0].mxu0
      %v4072 = vadd.f32 %v3927, %v4071
      %v4073 = vpop.f32.mrb[0].mxu0
      %4074 = vmatprep.mubr.f32.mxu0 %v782
      %4075 = vmatmul.mubr.f32.gmra.mrb[0].mxu0 %v781
      %v4076 = vpop.f32.mrb[0].mxu0
      %v4077 = vadd.f32 %v3932, %v4076
      %v4078 = vpop.f32.mrb[0].mxu0
      %4079 = vmatprep.mubr.f32.mxu0 %v855
      %4080 = vmatmul.mubr.f32.gmra.mrb[0].mxu0 %v854
      %v4081 = vpop.f32.mrb[0].mxu0
      %v4082 = vadd.f32 %v3937, %v4081
      %v4083 = vpop.f32.mrb[0].mxu0
      %4084 = vmatprep.mubr.f32.mxu0 %v928
      %4085 = vmatmul.mubr.f32.gmra.mrb[0].mxu0 %v927
      %v4086 = vpop.f32.mrb[0].mxu0
      %v4087 = vadd.f32 %v3942, %v4086
      %v4088 = vpop.f32.mrb[0].mxu0
      %4089 = vmatprep.mubr.f32.mxu0 %v1001
      %4090 = vmatmul.mubr.f32.gmra.mrb[0].mxu0 %v1000
      %v4091 = vpop.f32.mrb[0].mxu0
      %v4092 = vadd.f32 %v3947, %v4091
      %v4093 = vpop.f32.mrb[0].mxu0
      %4094 = vmatprep.mubr.f32.mxu0 %v1074
      %4095 = vmatmul.mubr.f32.gmra.mrb[0].mxu0 %v1073
      %v4096 = vpop.f32.mrb[0].mxu0
      %v4097 = vadd.f32 %v3952, %v4096
      %v4098 = vpop.f32.mrb[0].mxu0
      %4099 = vmatprep.mubr.f32.mxu0 %v1147
      %4100 = vmatmul.mubr.f32.gmra.mrb[0].mxu0 %v1146
      %v4101 = vpop.f32.mrb[0].mxu0
      %v4102 = vadd.f32 %v3957, %v4101
      %v4103 = vpop.f32.mrb[0].mxu0
      %4104 = vmatprep.mubr.f32.mxu0 %v1220
      %4105 = vmatmul.mubr.f32.gmra.mrb[0].mxu0 %v1219
      %v4106 = vpop.f32.mrb[0].mxu0
      %v4107 = vadd.f32 %v3962, %v4106
      %v4108 = vpop.f32.mrb[0].mxu0
      %4109 = vmatprep.mubr.f32.mxu0 %v1293
      %4110 = vmatmul.mubr.f32.gmra.mrb[0].mxu0 %v1292
      %v4111 = vpop.f32.mrb[0].mxu0
      %v4112 = vadd.f32 %v3967, %v4111
      %v4113 = vpop.f32.mrb[0].mxu0
      %4114 = vdwg.mxu0
      %4115 = vmatprep.subr.mxu0 0.0
      %4116 = vmatpush1.msra.mxu0 %v1697
      %4117 = vmatprep.subr.mxu0 0.0
      %4118 = vmatpush1.msra.mxu0 %v1698
      %4119 = vmatprep.subr.mxu0 0.0
      %4120 = vmatpush1.msra.mxu0 %v1699
      %4121 = vmatprep.subr.mxu0 0.0
      %4122 = vmatpush1.msra.mxu0 %v1700
      %4123 = vmatprep.subr.mxu0 0.0
      %4124 = vmatpush1.msra.mxu0 %v1701
      %4125 = vmatprep.subr.mxu0 0.0
      %4126 = vmatpush1.msra.mxu0 %v1702
      %4127 = vmatprep.subr.mxu0 0.0
      %4128 = vmatpush1.msra.mxu0 %v1703
      %4129 = vmatprep.subr.mxu0 0.0
      %4130 = vmatpush1.msra.mxu0 %v1704
      %4131 = vmatprep.subr.mxu0 0.0
      %4132 = vmatpush1.msra.mxu0 %v1705
      %4133 = vmatprep.subr.mxu0 0.0
      %4134 = vmatpush1.msra.mxu0 %v1706
      %4135 = vmatprep.subr.mxu0 0.0
      %4136 = vmatpush1.msra.mxu0 %v1707
      %4137 = vmatprep.subr.mxu0 0.0
      %4138 = vmatpush1.msra.mxu0 %v1708
      %4139 = vmatprep.subr.mxu0 0.0
      %4140 = vmatpush1.msra.mxu0 %v1709
      %4141 = vmatprep.subr.mxu0 0.0
      %4142 = vmatpush1.msra.mxu0 %v1710
      %4143 = vmatprep.subr.mxu0 0.0
      %4144 = vmatpush1.msra.mxu0 %v1711
      %4145 = vmatprep.subr.mxu0 0.0
      %4146 = vmatpush1.msra.mxu0 %v1712
      %4147 = vmatprep.subr.mxu0 0.0
      %4148 = vmatpush1.msra.mxu0 %v1713
      %4149 = vmatprep.subr.mxu0 0.0
      %4150 = vmatpush1.msra.mxu0 %v1714
      %4151 = vmatprep.subr.mxu0 0.0
      %4152 = vmatpush1.msra.mxu0 %v1715
      %4153 = vmatprep.subr.mxu0 0.0
      %4154 = vmatpush1.msra.mxu0 %v1716
      %4155 = vmatprep.subr.mxu0 0.0
      %4156 = vmatpush1.msra.mxu0 %v1717
      %4157 = vmatprep.subr.mxu0 0.0
      %4158 = vmatpush1.msra.mxu0 %v1718
      %4159 = vmatprep.subr.mxu0 0.0
      %4160 = vmatpush1.msra.mxu0 %v1719
      %4161 = vmatprep.subr.mxu0 0.0
      %4162 = vmatpush1.msra.mxu0 %v1720
      %4163 = vmatprep.subr.mxu0 0.0
      %4164 = vmatpush1.msra.mxu0 %v1721
      %4165 = vmatprep.subr.mxu0 0.0
      %4166 = vmatpush1.msra.mxu0 %v1722
      %4167 = vmatprep.subr.mxu0 0.0
      %4168 = vmatpush1.msra.mxu0 %v1723
      %4169 = vmatprep.subr.mxu0 0.0
      %4170 = vmatpush1.msra.mxu0 %v1724
      %4171 = vmatprep.subr.mxu0 0.0
      %4172 = vmatpush1.msra.mxu0 %v1725
      %4173 = vmatprep.subr.mxu0 0.0
      %4174 = vmatpush1.msra.mxu0 %v1726
      %4175 = vmatprep.subr.mxu0 0.0
      %4176 = vmatpush1.msra.mxu0 %v1727
      %4177 = vmatprep.subr.mxu0 0.0
      %4178 = vmatpush1.msra.mxu0 %v1728
      %4179 = vmatprep.mubr.f32.mxu0 %v200
      %4180 = vmatmul.mubr.f32.gmra.mrb[0].mxu0 %v199
      %v4181 = vpop.f32.mrb[0].mxu0
      %v4182 = vadd.f32 %v4037, %v4181
      %v4183 = vpop.f32.mrb[0].mxu0
      %4184 = vmatprep.mubr.f32.mxu0 %v273
      %4185 = vmatmul.mubr.f32.gmra.mrb[0].mxu0 %v272
      %v4186 = vpop.f32.mrb[0].mxu0
      %v4187 = vadd.f32 %v4042, %v4186
      %v4188 = vpop.f32.mrb[0].mxu0
      %4189 = vmatprep.mubr.f32.mxu0 %v346
      %4190 = vmatmul.mubr.f32.gmra.mrb[0].mxu0 %v345
      %v4191 = vpop.f32.mrb[0].mxu0
      %v4192 = vadd.f32 %v4047, %v4191
      %v4193 = vpop.f32.mrb[0].mxu0
      %4194 = vmatprep.mubr.f32.mxu0 %v419
      %4195 = vmatmul.mubr.f32.gmra.mrb[0].mxu0 %v418
      %v4196 = vpop.f32.mrb[0].mxu0
      %v4197 = vadd.f32 %v4052, %v4196
      %v4198 = vpop.f32.mrb[0].mxu0
      %4199 = vmatprep.mubr.f32.mxu0 %v492
      %4200 = vmatmul.mubr.f32.gmra.mrb[0].mxu0 %v491
      %v4201 = vpop.f32.mrb[0].mxu0
      %v4202 = vadd.f32 %v4057, %v4201
      %v4203 = vpop.f32.mrb[0].mxu0
      %4204 = vmatprep.mubr.f32.mxu0 %v565
      %4205 = vmatmul.mubr.f32.gmra.mrb[0].mxu0 %v564
      %v4206 = vpop.f32.mrb[0].mxu0
      %v4207 = vadd.f32 %v4062, %v4206
      %v4208 = vpop.f32.mrb[0].mxu0
      %4209 = vmatprep.mubr.f32.mxu0 %v638
      %4210 = vmatmul.mubr.f32.gmra.mrb[0].mxu0 %v637
      %v4211 = vpop.f32.mrb[0].mxu0
      %v4212 = vadd.f32 %v4067, %v4211
      %v4213 = vpop.f32.mrb[0].mxu0
      %4214 = vmatprep.mubr.f32.mxu0 %v711
      %4215 = vmatmul.mubr.f32.gmra.mrb[0].mxu0 %v710
      %v4216 = vpop.f32.mrb[0].mxu0
      %v4217 = vadd.f32 %v4072, %v4216
      %v4218 = vpop.f32.mrb[0].mxu0
      %4219 = vmatprep.mubr.f32.mxu0 %v784
      %4220 = vmatmul.mubr.f32.gmra.mrb[0].mxu0 %v783
      %v4221 = vpop.f32.mrb[0].mxu0
      %v4222 = vadd.f32 %v4077, %v4221
      %v4223 = vpop.f32.mrb[0].mxu0
      %4224 = vmatprep.mubr.f32.mxu0 %v857
      %4225 = vmatmul.mubr.f32.gmra.mrb[0].mxu0 %v856
      %v4226 = vpop.f32.mrb[0].mxu0
      %v4227 = vadd.f32 %v4082, %v4226
      %v4228 = vpop.f32.mrb[0].mxu0
      %4229 = vmatprep.mubr.f32.mxu0 %v930
      %4230 = vmatmul.mubr.f32.gmra.mrb[0].mxu0 %v929
      %v4231 = vpop.f32.mrb[0].mxu0
      %v4232 = vadd.f32 %v4087, %v4231
      %v4233 = vpop.f32.mrb[0].mxu0
      %4234 = vmatprep.mubr.f32.mxu0 %v1003
      %4235 = vmatmul.mubr.f32.gmra.mrb[0].mxu0 %v1002
      %v4236 = vpop.f32.mrb[0].mxu0
      %v4237 = vadd.f32 %v4092, %v4236
      %v4238 = vpop.f32.mrb[0].mxu0
      %4239 = vmatprep.mubr.f32.mxu0 %v1076
      %4240 = vmatmul.mubr.f32.gmra.mrb[0].mxu0 %v1075
      %v4241 = vpop.f32.mrb[0].mxu0
      %v4242 = vadd.f32 %v4097, %v4241
      %v4243 = vpop.f32.mrb[0].mxu0
      %4244 = vmatprep.mubr.f32.mxu0 %v1149
      %4245 = vmatmul.mubr.f32.gmra.mrb[0].mxu0 %v1148
      %v4246 = vpop.f32.mrb[0].mxu0
      %v4247 = vadd.f32 %v4102, %v4246
      %v4248 = vpop.f32.mrb[0].mxu0
      %4249 = vmatprep.mubr.f32.mxu0 %v1222
      %4250 = vmatmul.mubr.f32.gmra.mrb[0].mxu0 %v1221
      %v4251 = vpop.f32.mrb[0].mxu0
      %v4252 = vadd.f32 %v4107, %v4251
      %v4253 = vpop.f32.mrb[0].mxu0
      %4254 = vmatprep.mubr.f32.mxu0 %v1295
      %4255 = vmatmul.mubr.f32.gmra.mrb[0].mxu0 %v1294
      %v4256 = vpop.f32.mrb[0].mxu0
      %v4257 = vadd.f32 %v4112, %v4256
      %v4258 = vpop.f32.mrb[0].mxu0
      %4259 = vdwg.mxu0
      %4260 = vmatprep.subr.mxu0 0.0
      %4261 = vmatpush1.msra.mxu0 %v1729
      %4262 = vmatprep.subr.mxu0 0.0
      %4263 = vmatpush1.msra.mxu0 %v1730
      %4264 = vmatprep.subr.mxu0 0.0
      %4265 = vmatpush1.msra.mxu0 %v1731
      %4266 = vmatprep.subr.mxu0 0.0
      %4267 = vmatpush1.msra.mxu0 %v1732
      %4268 = vmatprep.subr.mxu0 0.0
      %4269 = vmatpush1.msra.mxu0 %v1733
      %4270 = vmatprep.subr.mxu0 0.0
      %4271 = vmatpush1.msra.mxu0 %v1734
      %4272 = vmatprep.subr.mxu0 0.0
      %4273 = vmatpush1.msra.mxu0 %v1735
      %4274 = vmatprep.subr.mxu0 0.0
      %4275 = vmatpush1.msra.mxu0 %v1736
      %4276 = vmatprep.subr.mxu0 0.0
      %4277 = vmatpush1.msra.mxu0 %v1737
      %4278 = vmatprep.subr.mxu0 0.0
      %4279 = vmatpush1.msra.mxu0 %v1738
      %4280 = vmatprep.subr.mxu0 0.0
      %4281 = vmatpush1.msra.mxu0 %v1739
      %4282 = vmatprep.subr.mxu0 0.0
      %4283 = vmatpush1.msra.mxu0 %v1740
      %4284 = vmatprep.subr.mxu0 0.0
      %4285 = vmatpush1.msra.mxu0 %v1741
      %4286 = vmatprep.subr.mxu0 0.0
      %4287 = vmatpush1.msra.mxu0 %v1742
      %4288 = vmatprep.subr.mxu0 0.0
      %4289 = vmatpush1.msra.mxu0 %v1743
      %4290 = vmatprep.subr.mxu0 0.0
      %4291 = vmatpush1.msra.mxu0 %v1744
      %4292 = vmatprep.subr.mxu0 0.0
      %4293 = vmatpush1.msra.mxu0 %v1745
      %4294 = vmatprep.subr.mxu0 0.0
      %4295 = vmatpush1.msra.mxu0 %v1746
      %4296 = vmatprep.subr.mxu0 0.0
      %4297 = vmatpush1.msra.mxu0 %v1747
      %4298 = vmatprep.subr.mxu0 0.0
      %4299 = vmatpush1.msra.mxu0 %v1748
      %4300 = vmatprep.subr.mxu0 0.0
      %4301 = vmatpush1.msra.mxu0 %v1749
      %4302 = vmatprep.subr.mxu0 0.0
      %4303 = vmatpush1.msra.mxu0 %v1750
      %4304 = vmatprep.subr.mxu0 0.0
      %4305 = vmatpush1.msra.mxu0 %v1751
      %4306 = vmatprep.subr.mxu0 0.0
      %4307 = vmatpush1.msra.mxu0 %v1752
      %4308 = vmatprep.subr.mxu0 0.0
      %4309 = vmatpush1.msra.mxu0 %v1753
      %4310 = vmatprep.subr.mxu0 0.0
      %4311 = vmatpush1.msra.mxu0 %v1754
      %4312 = vmatprep.subr.mxu0 0.0
      %4313 = vmatpush1.msra.mxu0 %v1755
      %4314 = vmatprep.subr.mxu0 0.0
      %4315 = vmatpush1.msra.mxu0 %v1756
      %4316 = vmatprep.subr.mxu0 0.0
      %4317 = vmatpush1.msra.mxu0 %v1757
      %4318 = vmatprep.subr.mxu0 0.0
      %4319 = vmatpush1.msra.mxu0 %v1758
      %4320 = vmatprep.subr.mxu0 0.0
      %4321 = vmatpush1.msra.mxu0 %v1759
      %4322 = vmatprep.subr.mxu0 0.0
      %4323 = vmatpush1.msra.mxu0 %v1760
      %4324 = vmatprep.mubr.f32.mxu0 %v202
      %4325 = vmatmul.mubr.f32.gmra.mrb[0].mxu0 %v201
      %v4326 = vpop.f32.mrb[0].mxu0
      %v4327 = vadd.f32 %v4182, %v4326
      %v4328 = vpop.f32.mrb[0].mxu0
      %4329 = vmatprep.mubr.f32.mxu0 %v275
      %4330 = vmatmul.mubr.f32.gmra.mrb[0].mxu0 %v274
      %v4331 = vpop.f32.mrb[0].mxu0
      %v4332 = vadd.f32 %v4187, %v4331
      %v4333 = vpop.f32.mrb[0].mxu0
      %4334 = vmatprep.mubr.f32.mxu0 %v348
      %4335 = vmatmul.mubr.f32.gmra.mrb[0].mxu0 %v347
      %v4336 = vpop.f32.mrb[0].mxu0
      %v4337 = vadd.f32 %v4192, %v4336
      %v4338 = vpop.f32.mrb[0].mxu0
      %4339 = vmatprep.mubr.f32.mxu0 %v421
      %4340 = vmatmul.mubr.f32.gmra.mrb[0].mxu0 %v420
      %v4341 = vpop.f32.mrb[0].mxu0
      %v4342 = vadd.f32 %v4197, %v4341
      %v4343 = vpop.f32.mrb[0].mxu0
      %4344 = vmatprep.mubr.f32.mxu0 %v494
      %4345 = vmatmul.mubr.f32.gmra.mrb[0].mxu0 %v493
      %v4346 = vpop.f32.mrb[0].mxu0
      %v4347 = vadd.f32 %v4202, %v4346
      %v4348 = vpop.f32.mrb[0].mxu0
      %4349 = vmatprep.mubr.f32.mxu0 %v567
      %4350 = vmatmul.mubr.f32.gmra.mrb[0].mxu0 %v566
      %v4351 = vpop.f32.mrb[0].mxu0
      %v4352 = vadd.f32 %v4207, %v4351
      %v4353 = vpop.f32.mrb[0].mxu0
      %4354 = vmatprep.mubr.f32.mxu0 %v640
      %4355 = vmatmul.mubr.f32.gmra.mrb[0].mxu0 %v639
      %v4356 = vpop.f32.mrb[0].mxu0
      %v4357 = vadd.f32 %v4212, %v4356
      %v4358 = vpop.f32.mrb[0].mxu0
      %4359 = vmatprep.mubr.f32.mxu0 %v713
      %4360 = vmatmul.mubr.f32.gmra.mrb[0].mxu0 %v712
      %v4361 = vpop.f32.mrb[0].mxu0
      %v4362 = vadd.f32 %v4217, %v4361
      %v4363 = vpop.f32.mrb[0].mxu0
      %4364 = vmatprep.mubr.f32.mxu0 %v786
      %4365 = vmatmul.mubr.f32.gmra.mrb[0].mxu0 %v785
      %v4366 = vpop.f32.mrb[0].mxu0
      %v4367 = vadd.f32 %v4222, %v4366
      %v4368 = vpop.f32.mrb[0].mxu0
      %4369 = vmatprep.mubr.f32.mxu0 %v859
      %4370 = vmatmul.mubr.f32.gmra.mrb[0].mxu0 %v858
      %v4371 = vpop.f32.mrb[0].mxu0
      %v4372 = vadd.f32 %v4227, %v4371
      %v4373 = vpop.f32.mrb[0].mxu0
      %4374 = vmatprep.mubr.f32.mxu0 %v932
      %4375 = vmatmul.mubr.f32.gmra.mrb[0].mxu0 %v931
      %v4376 = vpop.f32.mrb[0].mxu0
      %v4377 = vadd.f32 %v4232, %v4376
      %v4378 = vpop.f32.mrb[0].mxu0
      %4379 = vmatprep.mubr.f32.mxu0 %v1005
      %4380 = vmatmul.mubr.f32.gmra.mrb[0].mxu0 %v1004
      %v4381 = vpop.f32.mrb[0].mxu0
      %v4382 = vadd.f32 %v4237, %v4381
      %v4383 = vpop.f32.mrb[0].mxu0
      %4384 = vmatprep.mubr.f32.mxu0 %v1078
      %4385 = vmatmul.mubr.f32.gmra.mrb[0].mxu0 %v1077
      %v4386 = vpop.f32.mrb[0].mxu0
      %v4387 = vadd.f32 %v4242, %v4386
      %v4388 = vpop.f32.mrb[0].mxu0
      %4389 = vmatprep.mubr.f32.mxu0 %v1151
      %4390 = vmatmul.mubr.f32.gmra.mrb[0].mxu0 %v1150
      %v4391 = vpop.f32.mrb[0].mxu0
      %v4392 = vadd.f32 %v4247, %v4391
      %v4393 = vpop.f32.mrb[0].mxu0
      %4394 = vmatprep.mubr.f32.mxu0 %v1224
      %4395 = vmatmul.mubr.f32.gmra.mrb[0].mxu0 %v1223
      %v4396 = vpop.f32.mrb[0].mxu0
      %v4397 = vadd.f32 %v4252, %v4396
      %v4398 = vpop.f32.mrb[0].mxu0
      %4399 = vmatprep.mubr.f32.mxu0 %v1297
      %4400 = vmatmul.mubr.f32.gmra.mrb[0].mxu0 %v1296
      %v4401 = vpop.f32.mrb[0].mxu0
      %v4402 = vadd.f32 %v4257, %v4401
      %v4403 = vpop.f32.mrb[0].mxu0
      %4404 = vdwg.mxu0
      %4405 = vmatprep.subr.mxu0 0.0
      %4406 = vmatpush1.msra.mxu0 %v1761
      %4407 = vmatprep.subr.mxu0 0.0
      %4408 = vmatpush1.msra.mxu0 %v1762
      %4409 = vmatprep.subr.mxu0 0.0
      %4410 = vmatpush1.msra.mxu0 %v1763
      %4411 = vmatprep.subr.mxu0 0.0
      %4412 = vmatpush1.msra.mxu0 %v1764
      %4413 = vmatprep.subr.mxu0 0.0
      %4414 = vmatpush1.msra.mxu0 %v1765
      %4415 = vmatprep.subr.mxu0 0.0
      %4416 = vmatpush1.msra.mxu0 %v1766
      %4417 = vmatprep.subr.mxu0 0.0
      %4418 = vmatpush1.msra.mxu0 %v1767
      %4419 = vmatprep.subr.mxu0 0.0
      %4420 = vmatpush1.msra.mxu0 %v1768
      %4421 = vmatprep.subr.mxu0 0.0
      %4422 = vmatpush1.msra.mxu0 %v1769
      %4423 = vmatprep.subr.mxu0 0.0
      %4424 = vmatpush1.msra.mxu0 %v1770
      %4425 = vmatprep.subr.mxu0 0.0
      %4426 = vmatpush1.msra.mxu0 %v1771
      %4427 = vmatprep.subr.mxu0 0.0
      %4428 = vmatpush1.msra.mxu0 %v1772
      %4429 = vmatprep.subr.mxu0 0.0
      %4430 = vmatpush1.msra.mxu0 %v1773
      %4431 = vmatprep.subr.mxu0 0.0
      %4432 = vmatpush1.msra.mxu0 %v1774
      %4433 = vmatprep.subr.mxu0 0.0
      %4434 = vmatpush1.msra.mxu0 %v1775
      %4435 = vmatprep.subr.mxu0 0.0
      %4436 = vmatpush1.msra.mxu0 %v1776
      %4437 = vmatprep.subr.mxu0 0.0
      %4438 = vmatpush1.msra.mxu0 %v1777
      %4439 = vmatprep.subr.mxu0 0.0
      %4440 = vmatpush1.msra.mxu0 %v1778
      %4441 = vmatprep.subr.mxu0 0.0
      %4442 = vmatpush1.msra.mxu0 %v1779
      %4443 = vmatprep.subr.mxu0 0.0
      %4444 = vmatpush1.msra.mxu0 %v1780
      %4445 = vmatprep.subr.mxu0 0.0
      %4446 = vmatpush1.msra.mxu0 %v1781
      %4447 = vmatprep.subr.mxu0 0.0
      %4448 = vmatpush1.msra.mxu0 %v1782
      %4449 = vmatprep.subr.mxu0 0.0
      %4450 = vmatpush1.msra.mxu0 %v1783
      %4451 = vmatprep.subr.mxu0 0.0
      %4452 = vmatpush1.msra.mxu0 %v1784
      %4453 = vmatprep.subr.mxu0 0.0
      %4454 = vmatpush1.msra.mxu0 %v1785
      %4455 = vmatprep.subr.mxu0 0.0
      %4456 = vmatpush1.msra.mxu0 %v1786
      %4457 = vmatprep.subr.mxu0 0.0
      %4458 = vmatpush1.msra.mxu0 %v1787
      %4459 = vmatprep.subr.mxu0 0.0
      %4460 = vmatpush1.msra.mxu0 %v1788
      %4461 = vmatprep.subr.mxu0 0.0
      %4462 = vmatpush1.msra.mxu0 %v1789
      %4463 = vmatprep.subr.mxu0 0.0
      %4464 = vmatpush1.msra.mxu0 %v1790
      %4465 = vmatprep.subr.mxu0 0.0
      %4466 = vmatpush1.msra.mxu0 %v1791
      %4467 = vmatprep.subr.mxu0 0.0
      %4468 = vmatpush1.msra.mxu0 %v1792
      %4469 = vmatprep.mubr.f32.mxu0 %v204
      %4470 = vmatmul.mubr.f32.gmra.mrb[0].mxu0 %v203
      %v4471 = vpop.f32.mrb[0].mxu0
      %v4472 = vadd.f32 %v4327, %v4471
      %v4473 = vpop.f32.mrb[0].mxu0
      %4474 = vmatprep.mubr.f32.mxu0 %v277
      %4475 = vmatmul.mubr.f32.gmra.mrb[0].mxu0 %v276
      %v4476 = vpop.f32.mrb[0].mxu0
      %v4477 = vadd.f32 %v4332, %v4476
      %v4478 = vpop.f32.mrb[0].mxu0
      %4479 = vmatprep.mubr.f32.mxu0 %v350
      %4480 = vmatmul.mubr.f32.gmra.mrb[0].mxu0 %v349
      %v4481 = vpop.f32.mrb[0].mxu0
      %v4482 = vadd.f32 %v4337, %v4481
      %v4483 = vpop.f32.mrb[0].mxu0
      %4484 = vmatprep.mubr.f32.mxu0 %v423
      %4485 = vmatmul.mubr.f32.gmra.mrb[0].mxu0 %v422
      %v4486 = vpop.f32.mrb[0].mxu0
      %v4487 = vadd.f32 %v4342, %v4486
      %v4488 = vpop.f32.mrb[0].mxu0
      %4489 = vmatprep.mubr.f32.mxu0 %v496
      %4490 = vmatmul.mubr.f32.gmra.mrb[0].mxu0 %v495
      %v4491 = vpop.f32.mrb[0].mxu0
      %v4492 = vadd.f32 %v4347, %v4491
      %v4493 = vpop.f32.mrb[0].mxu0
      %4494 = vmatprep.mubr.f32.mxu0 %v569
      %4495 = vmatmul.mubr.f32.gmra.mrb[0].mxu0 %v568
      %v4496 = vpop.f32.mrb[0].mxu0
      %v4497 = vadd.f32 %v4352, %v4496
      %v4498 = vpop.f32.mrb[0].mxu0
      %4499 = vmatprep.mubr.f32.mxu0 %v642
      %4500 = vmatmul.mubr.f32.gmra.mrb[0].mxu0 %v641
      %v4501 = vpop.f32.mrb[0].mxu0
      %v4502 = vadd.f32 %v4357, %v4501
      %v4503 = vpop.f32.mrb[0].mxu0
      %4504 = vmatprep.mubr.f32.mxu0 %v715
      %4505 = vmatmul.mubr.f32.gmra.mrb[0].mxu0 %v714
      %v4506 = vpop.f32.mrb[0].mxu0
      %v4507 = vadd.f32 %v4362, %v4506
      %v4508 = vpop.f32.mrb[0].mxu0
      %4509 = vmatprep.mubr.f32.mxu0 %v788
      %4510 = vmatmul.mubr.f32.gmra.mrb[0].mxu0 %v787
      %v4511 = vpop.f32.mrb[0].mxu0
      %v4512 = vadd.f32 %v4367, %v4511
      %v4513 = vpop.f32.mrb[0].mxu0
      %4514 = vmatprep.mubr.f32.mxu0 %v861
      %4515 = vmatmul.mubr.f32.gmra.mrb[0].mxu0 %v860
      %v4516 = vpop.f32.mrb[0].mxu0
      %v4517 = vadd.f32 %v4372, %v4516
      %v4518 = vpop.f32.mrb[0].mxu0
      %4519 = vmatprep.mubr.f32.mxu0 %v934
      %4520 = vmatmul.mubr.f32.gmra.mrb[0].mxu0 %v933
      %v4521 = vpop.f32.mrb[0].mxu0
      %v4522 = vadd.f32 %v4377, %v4521
      %v4523 = vpop.f32.mrb[0].mxu0
      %4524 = vmatprep.mubr.f32.mxu0 %v1007
      %4525 = vmatmul.mubr.f32.gmra.mrb[0].mxu0 %v1006
      %v4526 = vpop.f32.mrb[0].mxu0
      %v4527 = vadd.f32 %v4382, %v4526
      %v4528 = vpop.f32.mrb[0].mxu0
      %4529 = vmatprep.mubr.f32.mxu0 %v1080
      %4530 = vmatmul.mubr.f32.gmra.mrb[0].mxu0 %v1079
      %v4531 = vpop.f32.mrb[0].mxu0
      %v4532 = vadd.f32 %v4387, %v4531
      %v4533 = vpop.f32.mrb[0].mxu0
      %4534 = vmatprep.mubr.f32.mxu0 %v1153
      %4535 = vmatmul.mubr.f32.gmra.mrb[0].mxu0 %v1152
      %v4536 = vpop.f32.mrb[0].mxu0
      %v4537 = vadd.f32 %v4392, %v4536
      %v4538 = vpop.f32.mrb[0].mxu0
      %4539 = vmatprep.mubr.f32.mxu0 %v1226
      %4540 = vmatmul.mubr.f32.gmra.mrb[0].mxu0 %v1225
      %v4541 = vpop.f32.mrb[0].mxu0
      %v4542 = vadd.f32 %v4397, %v4541
      %v4543 = vpop.f32.mrb[0].mxu0
      %4544 = vmatprep.mubr.f32.mxu0 %v1299
      %4545 = vmatmul.mubr.f32.gmra.mrb[0].mxu0 %v1298
      %v4546 = vpop.f32.mrb[0].mxu0
      %v4547 = vadd.f32 %v4402, %v4546
      %v4548 = vpop.f32.mrb[0].mxu0
      %4549 = vdwg.mxu0
      %4550 = vmatprep.subr.mxu0 0.0
      %4551 = vmatpush1.msra.mxu0 %v1793
      %4552 = vmatprep.subr.mxu0 0.0
      %4553 = vmatpush1.msra.mxu0 %v1794
      %4554 = vmatprep.subr.mxu0 0.0
      %4555 = vmatpush1.msra.mxu0 %v1795
      %4556 = vmatprep.subr.mxu0 0.0
      %4557 = vmatpush1.msra.mxu0 %v1796
      %4558 = vmatprep.subr.mxu0 0.0
      %4559 = vmatpush1.msra.mxu0 %v1797
      %4560 = vmatprep.subr.mxu0 0.0
      %4561 = vmatpush1.msra.mxu0 %v1798
      %4562 = vmatprep.subr.mxu0 0.0
      %4563 = vmatpush1.msra.mxu0 %v1799
      %4564 = vmatprep.subr.mxu0 0.0
      %4565 = vmatpush1.msra.mxu0 %v1800
      %4566 = vmatprep.subr.mxu0 0.0
      %4567 = vmatpush1.msra.mxu0 %v1801
      %4568 = vmatprep.subr.mxu0 0.0
      %4569 = vmatpush1.msra.mxu0 %v1802
      %4570 = vmatprep.subr.mxu0 0.0
      %4571 = vmatpush1.msra.mxu0 %v1803
      %4572 = vmatprep.subr.mxu0 0.0
      %4573 = vmatpush1.msra.mxu0 %v1804
      %4574 = vmatprep.subr.mxu0 0.0
      %4575 = vmatpush1.msra.mxu0 %v1805
      %4576 = vmatprep.subr.mxu0 0.0
      %4577 = vmatpush1.msra.mxu0 %v1806
      %4578 = vmatprep.subr.mxu0 0.0
      %4579 = vmatpush1.msra.mxu0 %v1807
      %4580 = vmatprep.subr.mxu0 0.0
      %4581 = vmatpush1.msra.mxu0 %v1808
      %4582 = vmatprep.subr.mxu0 0.0
      %4583 = vmatpush1.msra.mxu0 %v1809
      %4584 = vmatprep.subr.mxu0 0.0
      %4585 = vmatpush1.msra.mxu0 %v1810
      %4586 = vmatprep.subr.mxu0 0.0
      %4587 = vmatpush1.msra.mxu0 %v1811
      %4588 = vmatprep.subr.mxu0 0.0
      %4589 = vmatpush1.msra.mxu0 %v1812
      %4590 = vmatprep.subr.mxu0 0.0
      %4591 = vmatpush1.msra.mxu0 %v1813
      %4592 = vmatprep.subr.mxu0 0.0
      %4593 = vmatpush1.msra.mxu0 %v1814
      %4594 = vmatprep.subr.mxu0 0.0
      %4595 = vmatpush1.msra.mxu0 %v1815
      %4596 = vmatprep.subr.mxu0 0.0
      %4597 = vmatpush1.msra.mxu0 %v1816
      %4598 = vmatprep.subr.mxu0 0.0
      %4599 = vmatpush1.msra.mxu0 %v1817
      %4600 = vmatprep.subr.mxu0 0.0
      %4601 = vmatpush1.msra.mxu0 %v1818
      %4602 = vmatprep.subr.mxu0 0.0
      %4603 = vmatpush1.msra.mxu0 %v1819
      %4604 = vmatprep.subr.mxu0 0.0
      %4605 = vmatpush1.msra.mxu0 %v1820
      %4606 = vmatprep.subr.mxu0 0.0
      %4607 = vmatpush1.msra.mxu0 %v1821
      %4608 = vmatprep.subr.mxu0 0.0
      %4609 = vmatpush1.msra.mxu0 %v1822
      %4610 = vmatprep.subr.mxu0 0.0
      %4611 = vmatpush1.msra.mxu0 %v1823
      %4612 = vmatprep.subr.mxu0 0.0
      %4613 = vmatpush1.msra.mxu0 %v1824
      %4614 = vmatprep.mubr.f32.mxu0 %v206
      %4615 = vmatmul.mubr.f32.gmra.mrb[0].mxu0 %v205
      %v4616 = vpop.f32.mrb[0].mxu0
      %v4617 = vadd.f32 %v4472, %v4616
      %v4618 = vpop.f32.mrb[0].mxu0
      %4619 = vmatprep.mubr.f32.mxu0 %v279
      %4620 = vmatmul.mubr.f32.gmra.mrb[0].mxu0 %v278
      %v4621 = vpop.f32.mrb[0].mxu0
      %v4622 = vadd.f32 %v4477, %v4621
      %v4623 = vpop.f32.mrb[0].mxu0
      %4624 = vmatprep.mubr.f32.mxu0 %v352
      %4625 = vmatmul.mubr.f32.gmra.mrb[0].mxu0 %v351
      %v4626 = vpop.f32.mrb[0].mxu0
      %v4627 = vadd.f32 %v4482, %v4626
      %v4628 = vpop.f32.mrb[0].mxu0
      %4629 = vmatprep.mubr.f32.mxu0 %v425
      %4630 = vmatmul.mubr.f32.gmra.mrb[0].mxu0 %v424
      %v4631 = vpop.f32.mrb[0].mxu0
      %v4632 = vadd.f32 %v4487, %v4631
      %v4633 = vpop.f32.mrb[0].mxu0
      %4634 = vmatprep.mubr.f32.mxu0 %v498
      %4635 = vmatmul.mubr.f32.gmra.mrb[0].mxu0 %v497
      %v4636 = vpop.f32.mrb[0].mxu0
      %v4637 = vadd.f32 %v4492, %v4636
      %v4638 = vpop.f32.mrb[0].mxu0
      %4639 = vmatprep.mubr.f32.mxu0 %v571
      %4640 = vmatmul.mubr.f32.gmra.mrb[0].mxu0 %v570
      %v4641 = vpop.f32.mrb[0].mxu0
      %v4642 = vadd.f32 %v4497, %v4641
      %v4643 = vpop.f32.mrb[0].mxu0
      %4644 = vmatprep.mubr.f32.mxu0 %v644
      %4645 = vmatmul.mubr.f32.gmra.mrb[0].mxu0 %v643
      %v4646 = vpop.f32.mrb[0].mxu0
      %v4647 = vadd.f32 %v4502, %v4646
      %v4648 = vpop.f32.mrb[0].mxu0
      %4649 = vmatprep.mubr.f32.mxu0 %v717
      %4650 = vmatmul.mubr.f32.gmra.mrb[0].mxu0 %v716
      %v4651 = vpop.f32.mrb[0].mxu0
      %v4652 = vadd.f32 %v4507, %v4651
      %v4653 = vpop.f32.mrb[0].mxu0
      %4654 = vmatprep.mubr.f32.mxu0 %v790
      %4655 = vmatmul.mubr.f32.gmra.mrb[0].mxu0 %v789
      %v4656 = vpop.f32.mrb[0].mxu0
      %v4657 = vadd.f32 %v4512, %v4656
      %v4658 = vpop.f32.mrb[0].mxu0
      %4659 = vmatprep.mubr.f32.mxu0 %v863
      %4660 = vmatmul.mubr.f32.gmra.mrb[0].mxu0 %v862
      %v4661 = vpop.f32.mrb[0].mxu0
      %v4662 = vadd.f32 %v4517, %v4661
      %v4663 = vpop.f32.mrb[0].mxu0
      %4664 = vmatprep.mubr.f32.mxu0 %v936
      %4665 = vmatmul.mubr.f32.gmra.mrb[0].mxu0 %v935
      %v4666 = vpop.f32.mrb[0].mxu0
      %v4667 = vadd.f32 %v4522, %v4666
      %v4668 = vpop.f32.mrb[0].mxu0
      %4669 = vmatprep.mubr.f32.mxu0 %v1009
      %4670 = vmatmul.mubr.f32.gmra.mrb[0].mxu0 %v1008
      %v4671 = vpop.f32.mrb[0].mxu0
      %v4672 = vadd.f32 %v4527, %v4671
      %v4673 = vpop.f32.mrb[0].mxu0
      %4674 = vmatprep.mubr.f32.mxu0 %v1082
      %4675 = vmatmul.mubr.f32.gmra.mrb[0].mxu0 %v1081
      %v4676 = vpop.f32.mrb[0].mxu0
      %v4677 = vadd.f32 %v4532, %v4676
      %v4678 = vpop.f32.mrb[0].mxu0
      %4679 = vmatprep.mubr.f32.mxu0 %v1155
      %4680 = vmatmul.mubr.f32.gmra.mrb[0].mxu0 %v1154
      %v4681 = vpop.f32.mrb[0].mxu0
      %v4682 = vadd.f32 %v4537, %v4681
      %v4683 = vpop.f32.mrb[0].mxu0
      %4684 = vmatprep.mubr.f32.mxu0 %v1228
      %4685 = vmatmul.mubr.f32.gmra.mrb[0].mxu0 %v1227
      %v4686 = vpop.f32.mrb[0].mxu0
      %v4687 = vadd.f32 %v4542, %v4686
      %v4688 = vpop.f32.mrb[0].mxu0
      %4689 = vmatprep.mubr.f32.mxu0 %v1301
      %4690 = vmatmul.mubr.f32.gmra.mrb[0].mxu0 %v1300
      %v4691 = vpop.f32.mrb[0].mxu0
      %v4692 = vadd.f32 %v4547, %v4691
      %v4693 = vpop.f32.mrb[0].mxu0
      %4694 = vdwg.mxu0
      %4695 = vmatprep.subr.mxu0 0.0
      %4696 = vmatpush1.msra.mxu0 %v1825
      %4697 = vmatprep.subr.mxu0 0.0
      %4698 = vmatpush1.msra.mxu0 %v1826
      %4699 = vmatprep.subr.mxu0 0.0
      %4700 = vmatpush1.msra.mxu0 %v1827
      %4701 = vmatprep.subr.mxu0 0.0
      %4702 = vmatpush1.msra.mxu0 %v1828
      %4703 = vmatprep.subr.mxu0 0.0
      %4704 = vmatpush1.msra.mxu0 %v1829
      %4705 = vmatprep.subr.mxu0 0.0
      %4706 = vmatpush1.msra.mxu0 %v1830
      %4707 = vmatprep.subr.mxu0 0.0
      %4708 = vmatpush1.msra.mxu0 %v1831
      %4709 = vmatprep.subr.mxu0 0.0
      %4710 = vmatpush1.msra.mxu0 %v1832
      %4711 = vmatprep.subr.mxu0 0.0
      %4712 = vmatpush1.msra.mxu0 %v1833
      %4713 = vmatprep.subr.mxu0 0.0
      %4714 = vmatpush1.msra.mxu0 %v1834
      %4715 = vmatprep.subr.mxu0 0.0
      %4716 = vmatpush1.msra.mxu0 %v1835
      %4717 = vmatprep.subr.mxu0 0.0
      %4718 = vmatpush1.msra.mxu0 %v1836
      %4719 = vmatprep.subr.mxu0 0.0
      %4720 = vmatpush1.msra.mxu0 %v1837
      %4721 = vmatprep.subr.mxu0 0.0
      %4722 = vmatpush1.msra.mxu0 %v1838
      %4723 = vmatprep.subr.mxu0 0.0
      %4724 = vmatpush1.msra.mxu0 %v1839
      %4725 = vmatprep.subr.mxu0 0.0
      %4726 = vmatpush1.msra.mxu0 %v1840
      %4727 = vmatprep.subr.mxu0 0.0
      %4728 = vmatpush1.msra.mxu0 %v1841
      %4729 = vmatprep.subr.mxu0 0.0
      %4730 = vmatpush1.msra.mxu0 %v1842
      %4731 = vmatprep.subr.mxu0 0.0
      %4732 = vmatpush1.msra.mxu0 %v1843
      %4733 = vmatprep.subr.mxu0 0.0
      %4734 = vmatpush1.msra.mxu0 %v1844
      %4735 = vmatprep.subr.mxu0 0.0
      %4736 = vmatpush1.msra.mxu0 %v1845
      %4737 = vmatprep.subr.mxu0 0.0
      %4738 = vmatpush1.msra.mxu0 %v1846
      %4739 = vmatprep.subr.mxu0 0.0
      %4740 = vmatpush1.msra.mxu0 %v1847
      %4741 = vmatprep.subr.mxu0 0.0
      %4742 = vmatpush1.msra.mxu0 %v1848
      %4743 = vmatprep.subr.mxu0 0.0
      %4744 = vmatpush1.msra.mxu0 %v1849
      %4745 = vmatprep.subr.mxu0 0.0
      %4746 = vmatpush1.msra.mxu0 %v1850
      %4747 = vmatprep.subr.mxu0 0.0
      %4748 = vmatpush1.msra.mxu0 %v1851
      %4749 = vmatprep.subr.mxu0 0.0
      %4750 = vmatpush1.msra.mxu0 %v1852
      %4751 = vmatprep.subr.mxu0 0.0
      %4752 = vmatpush1.msra.mxu0 %v1853
      %4753 = vmatprep.subr.mxu0 0.0
      %4754 = vmatpush1.msra.mxu0 %v1854
      %4755 = vmatprep.subr.mxu0 0.0
      %4756 = vmatpush1.msra.mxu0 %v1855
      %4757 = vmatprep.subr.mxu0 0.0
      %4758 = vmatpush1.msra.mxu0 %v1856
      %4759 = vmatprep.mubr.f32.mxu0 %v208
      %4760 = vmatmul.mubr.f32.gmra.mrb[0].mxu0 %v207
      %v4761 = vpop.f32.mrb[0].mxu0
      %v4762 = vadd.f32 %v4617, %v4761
      %v4763 = vpop.f32.mrb[0].mxu0
      %4764 = vmatprep.mubr.f32.mxu0 %v281
      %4765 = vmatmul.mubr.f32.gmra.mrb[0].mxu0 %v280
      %v4766 = vpop.f32.mrb[0].mxu0
      %v4767 = vadd.f32 %v4622, %v4766
      %v4768 = vpop.f32.mrb[0].mxu0
      %4769 = vmatprep.mubr.f32.mxu0 %v354
      %4770 = vmatmul.mubr.f32.gmra.mrb[0].mxu0 %v353
      %v4771 = vpop.f32.mrb[0].mxu0
      %v4772 = vadd.f32 %v4627, %v4771
      %v4773 = vpop.f32.mrb[0].mxu0
      %4774 = vmatprep.mubr.f32.mxu0 %v427
      %4775 = vmatmul.mubr.f32.gmra.mrb[0].mxu0 %v426
      %v4776 = vpop.f32.mrb[0].mxu0
      %v4777 = vadd.f32 %v4632, %v4776
      %v4778 = vpop.f32.mrb[0].mxu0
      %4779 = vmatprep.mubr.f32.mxu0 %v500
      %4780 = vmatmul.mubr.f32.gmra.mrb[0].mxu0 %v499
      %v4781 = vpop.f32.mrb[0].mxu0
      %v4782 = vadd.f32 %v4637, %v4781
      %v4783 = vpop.f32.mrb[0].mxu0
      %4784 = vmatprep.mubr.f32.mxu0 %v573
      %4785 = vmatmul.mubr.f32.gmra.mrb[0].mxu0 %v572
      %v4786 = vpop.f32.mrb[0].mxu0
      %v4787 = vadd.f32 %v4642, %v4786
      %v4788 = vpop.f32.mrb[0].mxu0
      %4789 = vmatprep.mubr.f32.mxu0 %v646
      %4790 = vmatmul.mubr.f32.gmra.mrb[0].mxu0 %v645
      %v4791 = vpop.f32.mrb[0].mxu0
      %v4792 = vadd.f32 %v4647, %v4791
      %v4793 = vpop.f32.mrb[0].mxu0
      %4794 = vmatprep.mubr.f32.mxu0 %v719
      %4795 = vmatmul.mubr.f32.gmra.mrb[0].mxu0 %v718
      %v4796 = vpop.f32.mrb[0].mxu0
      %v4797 = vadd.f32 %v4652, %v4796
      %v4798 = vpop.f32.mrb[0].mxu0
      %4799 = vmatprep.mubr.f32.mxu0 %v792
      %4800 = vmatmul.mubr.f32.gmra.mrb[0].mxu0 %v791
      %v4801 = vpop.f32.mrb[0].mxu0
      %v4802 = vadd.f32 %v4657, %v4801
      %v4803 = vpop.f32.mrb[0].mxu0
      %4804 = vmatprep.mubr.f32.mxu0 %v865
      %4805 = vmatmul.mubr.f32.gmra.mrb[0].mxu0 %v864
      %v4806 = vpop.f32.mrb[0].mxu0
      %v4807 = vadd.f32 %v4662, %v4806
      %v4808 = vpop.f32.mrb[0].mxu0
      %4809 = vmatprep.mubr.f32.mxu0 %v938
      %4810 = vmatmul.mubr.f32.gmra.mrb[0].mxu0 %v937
      %v4811 = vpop.f32.mrb[0].mxu0
      %v4812 = vadd.f32 %v4667, %v4811
      %v4813 = vpop.f32.mrb[0].mxu0
      %4814 = vmatprep.mubr.f32.mxu0 %v1011
      %4815 = vmatmul.mubr.f32.gmra.mrb[0].mxu0 %v1010
      %v4816 = vpop.f32.mrb[0].mxu0
      %v4817 = vadd.f32 %v4672, %v4816
      %v4818 = vpop.f32.mrb[0].mxu0
      %4819 = vmatprep.mubr.f32.mxu0 %v1084
      %4820 = vmatmul.mubr.f32.gmra.mrb[0].mxu0 %v1083
      %v4821 = vpop.f32.mrb[0].mxu0
      %v4822 = vadd.f32 %v4677, %v4821
      %v4823 = vpop.f32.mrb[0].mxu0
      %4824 = vmatprep.mubr.f32.mxu0 %v1157
      %4825 = vmatmul.mubr.f32.gmra.mrb[0].mxu0 %v1156
      %v4826 = vpop.f32.mrb[0].mxu0
      %v4827 = vadd.f32 %v4682, %v4826
      %v4828 = vpop.f32.mrb[0].mxu0
      %4829 = vmatprep.mubr.f32.mxu0 %v1230
      %4830 = vmatmul.mubr.f32.gmra.mrb[0].mxu0 %v1229
      %v4831 = vpop.f32.mrb[0].mxu0
      %v4832 = vadd.f32 %v4687, %v4831
      %v4833 = vpop.f32.mrb[0].mxu0
      %4834 = vmatprep.mubr.f32.mxu0 %v1303
      %4835 = vmatmul.mubr.f32.gmra.mrb[0].mxu0 %v1302
      %v4836 = vpop.f32.mrb[0].mxu0
      %v4837 = vadd.f32 %v4692, %v4836
      %v4838 = vpop.f32.mrb[0].mxu0
      %4839 = vdwg.mxu0
      %4840 = vmatprep.subr.mxu0 0.0
      %4841 = vmatpush1.msra.mxu0 %v1857
      %4842 = vmatprep.subr.mxu0 0.0
      %4843 = vmatpush1.msra.mxu0 %v1858
      %4844 = vmatprep.subr.mxu0 0.0
      %4845 = vmatpush1.msra.mxu0 %v1859
      %4846 = vmatprep.subr.mxu0 0.0
      %4847 = vmatpush1.msra.mxu0 %v1860
      %4848 = vmatprep.subr.mxu0 0.0
      %4849 = vmatpush1.msra.mxu0 %v1861
      %4850 = vmatprep.subr.mxu0 0.0
      %4851 = vmatpush1.msra.mxu0 %v1862
      %4852 = vmatprep.subr.mxu0 0.0
      %4853 = vmatpush1.msra.mxu0 %v1863
      %4854 = vmatprep.subr.mxu0 0.0
      %4855 = vmatpush1.msra.mxu0 %v1864
      %4856 = vmatprep.subr.mxu0 0.0
      %4857 = vmatpush1.msra.mxu0 %v1865
      %4858 = vmatprep.subr.mxu0 0.0
      %4859 = vmatpush1.msra.mxu0 %v1866
      %4860 = vmatprep.subr.mxu0 0.0
      %4861 = vmatpush1.msra.mxu0 %v1867
      %4862 = vmatprep.subr.mxu0 0.0
      %4863 = vmatpush1.msra.mxu0 %v1868
      %4864 = vmatprep.subr.mxu0 0.0
      %4865 = vmatpush1.msra.mxu0 %v1869
      %4866 = vmatprep.subr.mxu0 0.0
      %4867 = vmatpush1.msra.mxu0 %v1870
      %4868 = vmatprep.subr.mxu0 0.0
      %4869 = vmatpush1.msra.mxu0 %v1871
      %4870 = vmatprep.subr.mxu0 0.0
      %4871 = vmatpush1.msra.mxu0 %v1872
      %4872 = vmatprep.subr.mxu0 0.0
      %4873 = vmatpush1.msra.mxu0 %v1873
      %4874 = vmatprep.subr.mxu0 0.0
      %4875 = vmatpush1.msra.mxu0 %v1874
      %4876 = vmatprep.subr.mxu0 0.0
      %4877 = vmatpush1.msra.mxu0 %v1875
      %4878 = vmatprep.subr.mxu0 0.0
      %4879 = vmatpush1.msra.mxu0 %v1876
      %4880 = vmatprep.subr.mxu0 0.0
      %4881 = vmatpush1.msra.mxu0 %v1877
      %4882 = vmatprep.subr.mxu0 0.0
      %4883 = vmatpush1.msra.mxu0 %v1878
      %4884 = vmatprep.subr.mxu0 0.0
      %4885 = vmatpush1.msra.mxu0 %v1879
      %4886 = vmatprep.subr.mxu0 0.0
      %4887 = vmatpush1.msra.mxu0 %v1880
      %4888 = vmatprep.subr.mxu0 0.0
      %4889 = vmatpush1.msra.mxu0 %v1881
      %4890 = vmatprep.subr.mxu0 0.0
      %4891 = vmatpush1.msra.mxu0 %v1882
      %4892 = vmatprep.subr.mxu0 0.0
      %4893 = vmatpush1.msra.mxu0 %v1883
      %4894 = vmatprep.subr.mxu0 0.0
      %4895 = vmatpush1.msra.mxu0 %v1884
      %4896 = vmatprep.subr.mxu0 0.0
      %4897 = vmatpush1.msra.mxu0 %v1885
      %4898 = vmatprep.subr.mxu0 0.0
      %4899 = vmatpush1.msra.mxu0 %v1886
      %4900 = vmatprep.subr.mxu0 0.0
      %4901 = vmatpush1.msra.mxu0 %v1887
      %4902 = vmatprep.subr.mxu0 0.0
      %4903 = vmatpush1.msra.mxu0 %v1888
      %4904 = vmatprep.mubr.f32.mxu0 %v210
      %4905 = vmatmul.mubr.f32.gmra.mrb[0].mxu0 %v209
      %v4906 = vpop.f32.mrb[0].mxu0
      %v4907 = vadd.f32 %v4762, %v4906
      %v4908 = vpop.f32.mrb[0].mxu0
      %4909 = vmatprep.mubr.f32.mxu0 %v283
      %4910 = vmatmul.mubr.f32.gmra.mrb[0].mxu0 %v282
      %v4911 = vpop.f32.mrb[0].mxu0
      %v4912 = vadd.f32 %v4767, %v4911
      %v4913 = vpop.f32.mrb[0].mxu0
      %4914 = vmatprep.mubr.f32.mxu0 %v356
      %4915 = vmatmul.mubr.f32.gmra.mrb[0].mxu0 %v355
      %v4916 = vpop.f32.mrb[0].mxu0
      %v4917 = vadd.f32 %v4772, %v4916
      %v4918 = vpop.f32.mrb[0].mxu0
      %4919 = vmatprep.mubr.f32.mxu0 %v429
      %4920 = vmatmul.mubr.f32.gmra.mrb[0].mxu0 %v428
      %v4921 = vpop.f32.mrb[0].mxu0
      %v4922 = vadd.f32 %v4777, %v4921
      %v4923 = vpop.f32.mrb[0].mxu0
      %4924 = vmatprep.mubr.f32.mxu0 %v502
      %4925 = vmatmul.mubr.f32.gmra.mrb[0].mxu0 %v501
      %v4926 = vpop.f32.mrb[0].mxu0
      %v4927 = vadd.f32 %v4782, %v4926
      %v4928 = vpop.f32.mrb[0].mxu0
      %4929 = vmatprep.mubr.f32.mxu0 %v575
      %4930 = vmatmul.mubr.f32.gmra.mrb[0].mxu0 %v574
      %v4931 = vpop.f32.mrb[0].mxu0
      %v4932 = vadd.f32 %v4787, %v4931
      %v4933 = vpop.f32.mrb[0].mxu0
      %4934 = vmatprep.mubr.f32.mxu0 %v648
      %4935 = vmatmul.mubr.f32.gmra.mrb[0].mxu0 %v647
      %v4936 = vpop.f32.mrb[0].mxu0
      %v4937 = vadd.f32 %v4792, %v4936
      %v4938 = vpop.f32.mrb[0].mxu0
      %4939 = vmatprep.mubr.f32.mxu0 %v721
      %4940 = vmatmul.mubr.f32.gmra.mrb[0].mxu0 %v720
      %v4941 = vpop.f32.mrb[0].mxu0
      %v4942 = vadd.f32 %v4797, %v4941
      %v4943 = vpop.f32.mrb[0].mxu0
      %4944 = vmatprep.mubr.f32.mxu0 %v794
      %4945 = vmatmul.mubr.f32.gmra.mrb[0].mxu0 %v793
      %v4946 = vpop.f32.mrb[0].mxu0
      %v4947 = vadd.f32 %v4802, %v4946
      %v4948 = vpop.f32.mrb[0].mxu0
      %4949 = vmatprep.mubr.f32.mxu0 %v867
      %4950 = vmatmul.mubr.f32.gmra.mrb[0].mxu0 %v866
      %v4951 = vpop.f32.mrb[0].mxu0
      %v4952 = vadd.f32 %v4807, %v4951
      %v4953 = vpop.f32.mrb[0].mxu0
      %4954 = vmatprep.mubr.f32.mxu0 %v940
      %4955 = vmatmul.mubr.f32.gmra.mrb[0].mxu0 %v939
      %v4956 = vpop.f32.mrb[0].mxu0
      %v4957 = vadd.f32 %v4812, %v4956
      %v4958 = vpop.f32.mrb[0].mxu0
      %4959 = vmatprep.mubr.f32.mxu0 %v1013
      %4960 = vmatmul.mubr.f32.gmra.mrb[0].mxu0 %v1012
      %v4961 = vpop.f32.mrb[0].mxu0
      %v4962 = vadd.f32 %v4817, %v4961
      %v4963 = vpop.f32.mrb[0].mxu0
      %4964 = vmatprep.mubr.f32.mxu0 %v1086
      %4965 = vmatmul.mubr.f32.gmra.mrb[0].mxu0 %v1085
      %v4966 = vpop.f32.mrb[0].mxu0
      %v4967 = vadd.f32 %v4822, %v4966
      %v4968 = vpop.f32.mrb[0].mxu0
      %4969 = vmatprep.mubr.f32.mxu0 %v1159
      %4970 = vmatmul.mubr.f32.gmra.mrb[0].mxu0 %v1158
      %v4971 = vpop.f32.mrb[0].mxu0
      %v4972 = vadd.f32 %v4827, %v4971
      %v4973 = vpop.f32.mrb[0].mxu0
      %4974 = vmatprep.mubr.f32.mxu0 %v1232
      %4975 = vmatmul.mubr.f32.gmra.mrb[0].mxu0 %v1231
      %v4976 = vpop.f32.mrb[0].mxu0
      %v4977 = vadd.f32 %v4832, %v4976
      %v4978 = vpop.f32.mrb[0].mxu0
      %4979 = vmatprep.mubr.f32.mxu0 %v1305
      %4980 = vmatmul.mubr.f32.gmra.mrb[0].mxu0 %v1304
      %v4981 = vpop.f32.mrb[0].mxu0
      %v4982 = vadd.f32 %v4837, %v4981
      %v4983 = vpop.f32.mrb[0].mxu0
      %4984 = vdwg.mxu0
      %4985 = vmatprep.subr.mxu0 0.0
      %4986 = vmatpush1.msra.mxu0 %v1889
      %4987 = vmatprep.subr.mxu0 0.0
      %4988 = vmatpush1.msra.mxu0 %v1890
      %4989 = vmatprep.subr.mxu0 0.0
      %4990 = vmatpush1.msra.mxu0 %v1891
      %4991 = vmatprep.subr.mxu0 0.0
      %4992 = vmatpush1.msra.mxu0 %v1892
      %4993 = vmatprep.subr.mxu0 0.0
      %4994 = vmatpush1.msra.mxu0 %v1893
      %4995 = vmatprep.subr.mxu0 0.0
      %4996 = vmatpush1.msra.mxu0 %v1894
      %4997 = vmatprep.subr.mxu0 0.0
      %4998 = vmatpush1.msra.mxu0 %v1895
      %4999 = vmatprep.subr.mxu0 0.0
      %5000 = vmatpush1.msra.mxu0 %v1896
      %5001 = vmatprep.subr.mxu0 0.0
      %5002 = vmatpush1.msra.mxu0 %v1897
      %5003 = vmatprep.subr.mxu0 0.0
      %5004 = vmatpush1.msra.mxu0 %v1898
      %5005 = vmatprep.subr.mxu0 0.0
      %5006 = vmatpush1.msra.mxu0 %v1899
      %5007 = vmatprep.subr.mxu0 0.0
      %5008 = vmatpush1.msra.mxu0 %v1900
      %5009 = vmatprep.subr.mxu0 0.0
      %5010 = vmatpush1.msra.mxu0 %v1901
      %5011 = vmatprep.subr.mxu0 0.0
      %5012 = vmatpush1.msra.mxu0 %v1902
      %5013 = vmatprep.subr.mxu0 0.0
      %5014 = vmatpush1.msra.mxu0 %v1903
      %5015 = vmatprep.subr.mxu0 0.0
      %5016 = vmatpush1.msra.mxu0 %v1904
      %5017 = vmatprep.subr.mxu0 0.0
      %5018 = vmatpush1.msra.mxu0 %v1905
      %5019 = vmatprep.subr.mxu0 0.0
      %5020 = vmatpush1.msra.mxu0 %v1906
      %5021 = vmatprep.subr.mxu0 0.0
      %5022 = vmatpush1.msra.mxu0 %v1907
      %5023 = vmatprep.subr.mxu0 0.0
      %5024 = vmatpush1.msra.mxu0 %v1908
      %5025 = vmatprep.subr.mxu0 0.0
      %5026 = vmatpush1.msra.mxu0 %v1909
      %5027 = vmatprep.subr.mxu0 0.0
      %5028 = vmatpush1.msra.mxu0 %v1910
      %5029 = vmatprep.subr.mxu0 0.0
      %5030 = vmatpush1.msra.mxu0 %v1911
      %5031 = vmatprep.subr.mxu0 0.0
      %5032 = vmatpush1.msra.mxu0 %v1912
      %5033 = vmatprep.subr.mxu0 0.0
      %5034 = vmatpush1.msra.mxu0 %v1913
      %5035 = vmatprep.subr.mxu0 0.0
      %5036 = vmatpush1.msra.mxu0 %v1914
      %5037 = vmatprep.subr.mxu0 0.0
      %5038 = vmatpush1.msra.mxu0 %v1915
      %5039 = vmatprep.subr.mxu0 0.0
      %5040 = vmatpush1.msra.mxu0 %v1916
      %5041 = vmatprep.subr.mxu0 0.0
      %5042 = vmatpush1.msra.mxu0 %v1917
      %5043 = vmatprep.subr.mxu0 0.0
      %5044 = vmatpush1.msra.mxu0 %v1918
      %5045 = vmatprep.subr.mxu0 0.0
      %5046 = vmatpush1.msra.mxu0 %v1919
      %5047 = vmatprep.subr.mxu0 0.0
      %5048 = vmatpush1.msra.mxu0 %v1920
      %5049 = vmatprep.mubr.f32.mxu0 %v212
      %5050 = vmatmul.mubr.f32.gmra.mrb[0].mxu0 %v211
      %v5051 = vpop.f32.mrb[0].mxu0
      %v5052 = vadd.f32 %v4907, %v5051
      %v5053 = vpop.f32.mrb[0].mxu0
      %5054 = vmatprep.mubr.f32.mxu0 %v285
      %5055 = vmatmul.mubr.f32.gmra.mrb[0].mxu0 %v284
      %v5056 = vpop.f32.mrb[0].mxu0
      %v5057 = vadd.f32 %v4912, %v5056
      %v5058 = vpop.f32.mrb[0].mxu0
      %5059 = vmatprep.mubr.f32.mxu0 %v358
      %5060 = vmatmul.mubr.f32.gmra.mrb[0].mxu0 %v357
      %v5061 = vpop.f32.mrb[0].mxu0
      %v5062 = vadd.f32 %v4917, %v5061
      %v5063 = vpop.f32.mrb[0].mxu0
      %5064 = vmatprep.mubr.f32.mxu0 %v431
      %5065 = vmatmul.mubr.f32.gmra.mrb[0].mxu0 %v430
      %v5066 = vpop.f32.mrb[0].mxu0
      %v5067 = vadd.f32 %v4922, %v5066
      %v5068 = vpop.f32.mrb[0].mxu0
      %5069 = vmatprep.mubr.f32.mxu0 %v504
      %5070 = vmatmul.mubr.f32.gmra.mrb[0].mxu0 %v503
      %v5071 = vpop.f32.mrb[0].mxu0
      %v5072 = vadd.f32 %v4927, %v5071
      %v5073 = vpop.f32.mrb[0].mxu0
      %5074 = vmatprep.mubr.f32.mxu0 %v577
      %5075 = vmatmul.mubr.f32.gmra.mrb[0].mxu0 %v576
      %v5076 = vpop.f32.mrb[0].mxu0
      %v5077 = vadd.f32 %v4932, %v5076
      %v5078 = vpop.f32.mrb[0].mxu0
      %5079 = vmatprep.mubr.f32.mxu0 %v650
      %5080 = vmatmul.mubr.f32.gmra.mrb[0].mxu0 %v649
      %v5081 = vpop.f32.mrb[0].mxu0
      %v5082 = vadd.f32 %v4937, %v5081
      %v5083 = vpop.f32.mrb[0].mxu0
      %5084 = vmatprep.mubr.f32.mxu0 %v723
      %5085 = vmatmul.mubr.f32.gmra.mrb[0].mxu0 %v722
      %v5086 = vpop.f32.mrb[0].mxu0
      %v5087 = vadd.f32 %v4942, %v5086
      %v5088 = vpop.f32.mrb[0].mxu0
      %5089 = vmatprep.mubr.f32.mxu0 %v796
      %5090 = vmatmul.mubr.f32.gmra.mrb[0].mxu0 %v795
      %v5091 = vpop.f32.mrb[0].mxu0
      %v5092 = vadd.f32 %v4947, %v5091
      %v5093 = vpop.f32.mrb[0].mxu0
      %5094 = vmatprep.mubr.f32.mxu0 %v869
      %5095 = vmatmul.mubr.f32.gmra.mrb[0].mxu0 %v868
      %v5096 = vpop.f32.mrb[0].mxu0
      %v5097 = vadd.f32 %v4952, %v5096
      %v5098 = vpop.f32.mrb[0].mxu0
      %5099 = vmatprep.mubr.f32.mxu0 %v942
      %5100 = vmatmul.mubr.f32.gmra.mrb[0].mxu0 %v941
      %v5101 = vpop.f32.mrb[0].mxu0
      %v5102 = vadd.f32 %v4957, %v5101
      %v5103 = vpop.f32.mrb[0].mxu0
      %5104 = vmatprep.mubr.f32.mxu0 %v1015
      %5105 = vmatmul.mubr.f32.gmra.mrb[0].mxu0 %v1014
      %v5106 = vpop.f32.mrb[0].mxu0
      %v5107 = vadd.f32 %v4962, %v5106
      %v5108 = vpop.f32.mrb[0].mxu0
      %5109 = vmatprep.mubr.f32.mxu0 %v1088
      %5110 = vmatmul.mubr.f32.gmra.mrb[0].mxu0 %v1087
      %v5111 = vpop.f32.mrb[0].mxu0
      %v5112 = vadd.f32 %v4967, %v5111
      %v5113 = vpop.f32.mrb[0].mxu0
      %5114 = vmatprep.mubr.f32.mxu0 %v1161
      %5115 = vmatmul.mubr.f32.gmra.mrb[0].mxu0 %v1160
      %v5116 = vpop.f32.mrb[0].mxu0
      %v5117 = vadd.f32 %v4972, %v5116
      %v5118 = vpop.f32.mrb[0].mxu0
      %5119 = vmatprep.mubr.f32.mxu0 %v1234
      %5120 = vmatmul.mubr.f32.gmra.mrb[0].mxu0 %v1233
      %v5121 = vpop.f32.mrb[0].mxu0
      %v5122 = vadd.f32 %v4977, %v5121
      %v5123 = vpop.f32.mrb[0].mxu0
      %5124 = vmatprep.mubr.f32.mxu0 %v1307
      %5125 = vmatmul.mubr.f32.gmra.mrb[0].mxu0 %v1306
      %v5126 = vpop.f32.mrb[0].mxu0
      %v5127 = vadd.f32 %v4982, %v5126
      %v5128 = vpop.f32.mrb[0].mxu0
      %5129 = vdwg.mxu0
      %5130 = vmatprep.subr.mxu0 0.0
      %5131 = vmatpush1.msra.mxu0 %v1921
      %5132 = vmatprep.subr.mxu0 0.0
      %5133 = vmatpush1.msra.mxu0 %v1922
      %5134 = vmatprep.subr.mxu0 0.0
      %5135 = vmatpush1.msra.mxu0 %v1923
      %5136 = vmatprep.subr.mxu0 0.0
      %5137 = vmatpush1.msra.mxu0 %v1924
      %5138 = vmatprep.subr.mxu0 0.0
      %5139 = vmatpush1.msra.mxu0 %v1925
      %5140 = vmatprep.subr.mxu0 0.0
      %5141 = vmatpush1.msra.mxu0 %v1926
      %5142 = vmatprep.subr.mxu0 0.0
      %5143 = vmatpush1.msra.mxu0 %v1927
      %5144 = vmatprep.subr.mxu0 0.0
      %5145 = vmatpush1.msra.mxu0 %v1928
      %5146 = vmatprep.subr.mxu0 0.0
      %5147 = vmatpush1.msra.mxu0 %v1929
      %5148 = vmatprep.subr.mxu0 0.0
      %5149 = vmatpush1.msra.mxu0 %v1930
      %5150 = vmatprep.subr.mxu0 0.0
      %5151 = vmatpush1.msra.mxu0 %v1931
      %5152 = vmatprep.subr.mxu0 0.0
      %5153 = vmatpush1.msra.mxu0 %v1932
      %5154 = vmatprep.subr.mxu0 0.0
      %5155 = vmatpush1.msra.mxu0 %v1933
      %5156 = vmatprep.subr.mxu0 0.0
      %5157 = vmatpush1.msra.mxu0 %v1934
      %5158 = vmatprep.subr.mxu0 0.0
      %5159 = vmatpush1.msra.mxu0 %v1935
      %5160 = vmatprep.subr.mxu0 0.0
      %5161 = vmatpush1.msra.mxu0 %v1936
      %5162 = vmatprep.subr.mxu0 0.0
      %5163 = vmatpush1.msra.mxu0 %v1937
      %5164 = vmatprep.subr.mxu0 0.0
      %5165 = vmatpush1.msra.mxu0 %v1938
      %5166 = vmatprep.subr.mxu0 0.0
      %5167 = vmatpush1.msra.mxu0 %v1939
      %5168 = vmatprep.subr.mxu0 0.0
      %5169 = vmatpush1.msra.mxu0 %v1940
      %5170 = vmatprep.subr.mxu0 0.0
      %5171 = vmatpush1.msra.mxu0 %v1941
      %5172 = vmatprep.subr.mxu0 0.0
      %5173 = vmatpush1.msra.mxu0 %v1942
      %5174 = vmatprep.subr.mxu0 0.0
      %5175 = vmatpush1.msra.mxu0 %v1943
      %5176 = vmatprep.subr.mxu0 0.0
      %5177 = vmatpush1.msra.mxu0 %v1944
      %5178 = vmatprep.subr.mxu0 0.0
      %5179 = vmatpush1.msra.mxu0 %v1945
      %5180 = vmatprep.subr.mxu0 0.0
      %5181 = vmatpush1.msra.mxu0 %v1946
      %5182 = vmatprep.subr.mxu0 0.0
      %5183 = vmatpush1.msra.mxu0 %v1947
      %5184 = vmatprep.subr.mxu0 0.0
      %5185 = vmatpush1.msra.mxu0 %v1948
      %5186 = vmatprep.subr.mxu0 0.0
      %5187 = vmatpush1.msra.mxu0 %v1949
      %5188 = vmatprep.subr.mxu0 0.0
      %5189 = vmatpush1.msra.mxu0 %v1950
      %5190 = vmatprep.subr.mxu0 0.0
      %5191 = vmatpush1.msra.mxu0 %v1951
      %5192 = vmatprep.subr.mxu0 0.0
      %5193 = vmatpush1.msra.mxu0 %v1952
      %5194 = vmatprep.mubr.f32.mxu0 %v214
      %5195 = vmatmul.mubr.f32.gmra.mrb[0].mxu0 %v213
      %v5196 = vpop.f32.mrb[0].mxu0
      %v5197 = vadd.f32 %v5052, %v5196
      %v5198 = vpop.f32.mrb[0].mxu0
      %5199 = vmatprep.mubr.f32.mxu0 %v287
      %5200 = vmatmul.mubr.f32.gmra.mrb[0].mxu0 %v286
      %v5201 = vpop.f32.mrb[0].mxu0
      %v5202 = vadd.f32 %v5057, %v5201
      %v5203 = vpop.f32.mrb[0].mxu0
      %5204 = vmatprep.mubr.f32.mxu0 %v360
      %5205 = vmatmul.mubr.f32.gmra.mrb[0].mxu0 %v359
      %v5206 = vpop.f32.mrb[0].mxu0
      %v5207 = vadd.f32 %v5062, %v5206
      %v5208 = vpop.f32.mrb[0].mxu0
      %5209 = vmatprep.mubr.f32.mxu0 %v433
      %5210 = vmatmul.mubr.f32.gmra.mrb[0].mxu0 %v432
      %v5211 = vpop.f32.mrb[0].mxu0
      %v5212 = vadd.f32 %v5067, %v5211
      %v5213 = vpop.f32.mrb[0].mxu0
      %5214 = vmatprep.mubr.f32.mxu0 %v506
      %5215 = vmatmul.mubr.f32.gmra.mrb[0].mxu0 %v505
      %v5216 = vpop.f32.mrb[0].mxu0
      %v5217 = vadd.f32 %v5072, %v5216
      %v5218 = vpop.f32.mrb[0].mxu0
      %5219 = vmatprep.mubr.f32.mxu0 %v579
      %5220 = vmatmul.mubr.f32.gmra.mrb[0].mxu0 %v578
      %v5221 = vpop.f32.mrb[0].mxu0
      %v5222 = vadd.f32 %v5077, %v5221
      %v5223 = vpop.f32.mrb[0].mxu0
      %5224 = vmatprep.mubr.f32.mxu0 %v652
      %5225 = vmatmul.mubr.f32.gmra.mrb[0].mxu0 %v651
      %v5226 = vpop.f32.mrb[0].mxu0
      %v5227 = vadd.f32 %v5082, %v5226
      %v5228 = vpop.f32.mrb[0].mxu0
      %5229 = vmatprep.mubr.f32.mxu0 %v725
      %5230 = vmatmul.mubr.f32.gmra.mrb[0].mxu0 %v724
      %v5231 = vpop.f32.mrb[0].mxu0
      %v5232 = vadd.f32 %v5087, %v5231
      %v5233 = vpop.f32.mrb[0].mxu0
      %5234 = vmatprep.mubr.f32.mxu0 %v798
      %5235 = vmatmul.mubr.f32.gmra.mrb[0].mxu0 %v797
      %v5236 = vpop.f32.mrb[0].mxu0
      %v5237 = vadd.f32 %v5092, %v5236
      %v5238 = vpop.f32.mrb[0].mxu0
      %5239 = vmatprep.mubr.f32.mxu0 %v871
      %5240 = vmatmul.mubr.f32.gmra.mrb[0].mxu0 %v870
      %v5241 = vpop.f32.mrb[0].mxu0
      %v5242 = vadd.f32 %v5097, %v5241
      %v5243 = vpop.f32.mrb[0].mxu0
      %5244 = vmatprep.mubr.f32.mxu0 %v944
      %5245 = vmatmul.mubr.f32.gmra.mrb[0].mxu0 %v943
      %v5246 = vpop.f32.mrb[0].mxu0
      %v5247 = vadd.f32 %v5102, %v5246
      %v5248 = vpop.f32.mrb[0].mxu0
      %5249 = vmatprep.mubr.f32.mxu0 %v1017
      %5250 = vmatmul.mubr.f32.gmra.mrb[0].mxu0 %v1016
      %v5251 = vpop.f32.mrb[0].mxu0
      %v5252 = vadd.f32 %v5107, %v5251
      %v5253 = vpop.f32.mrb[0].mxu0
      %5254 = vmatprep.mubr.f32.mxu0 %v1090
      %5255 = vmatmul.mubr.f32.gmra.mrb[0].mxu0 %v1089
      %v5256 = vpop.f32.mrb[0].mxu0
      %v5257 = vadd.f32 %v5112, %v5256
      %v5258 = vpop.f32.mrb[0].mxu0
      %5259 = vmatprep.mubr.f32.mxu0 %v1163
      %5260 = vmatmul.mubr.f32.gmra.mrb[0].mxu0 %v1162
      %v5261 = vpop.f32.mrb[0].mxu0
      %v5262 = vadd.f32 %v5117, %v5261
      %v5263 = vpop.f32.mrb[0].mxu0
      %5264 = vmatprep.mubr.f32.mxu0 %v1236
      %5265 = vmatmul.mubr.f32.gmra.mrb[0].mxu0 %v1235
      %v5266 = vpop.f32.mrb[0].mxu0
      %v5267 = vadd.f32 %v5122, %v5266
      %v5268 = vpop.f32.mrb[0].mxu0
      %5269 = vmatprep.mubr.f32.mxu0 %v1309
      %5270 = vmatmul.mubr.f32.gmra.mrb[0].mxu0 %v1308
      %v5271 = vpop.f32.mrb[0].mxu0
      %v5272 = vadd.f32 %v5127, %v5271
      %v5273 = vpop.f32.mrb[0].mxu0
      %5274 = vdwg.mxu0
      %5275 = vmatprep.subr.mxu0 0.0
      %5276 = vmatpush1.msra.mxu0 %v1953
      %5277 = vmatprep.subr.mxu0 0.0
      %5278 = vmatpush1.msra.mxu0 %v1954
      %5279 = vmatprep.subr.mxu0 0.0
      %5280 = vmatpush1.msra.mxu0 %v1955
      %5281 = vmatprep.subr.mxu0 0.0
      %5282 = vmatpush1.msra.mxu0 %v1956
      %5283 = vmatprep.subr.mxu0 0.0
      %5284 = vmatpush1.msra.mxu0 %v1957
      %5285 = vmatprep.subr.mxu0 0.0
      %5286 = vmatpush1.msra.mxu0 %v1958
      %5287 = vmatprep.subr.mxu0 0.0
      %5288 = vmatpush1.msra.mxu0 %v1959
      %5289 = vmatprep.subr.mxu0 0.0
      %5290 = vmatpush1.msra.mxu0 %v1960
      %5291 = vmatprep.subr.mxu0 0.0
      %5292 = vmatpush1.msra.mxu0 %v1961
      %5293 = vmatprep.subr.mxu0 0.0
      %5294 = vmatpush1.msra.mxu0 %v1962
      %5295 = vmatprep.subr.mxu0 0.0
      %5296 = vmatpush1.msra.mxu0 %v1963
      %5297 = vmatprep.subr.mxu0 0.0
      %5298 = vmatpush1.msra.mxu0 %v1964
      %5299 = vmatprep.subr.mxu0 0.0
      %5300 = vmatpush1.msra.mxu0 %v1965
      %5301 = vmatprep.subr.mxu0 0.0
      %5302 = vmatpush1.msra.mxu0 %v1966
      %5303 = vmatprep.subr.mxu0 0.0
      %5304 = vmatpush1.msra.mxu0 %v1967
      %5305 = vmatprep.subr.mxu0 0.0
      %5306 = vmatpush1.msra.mxu0 %v1968
      %5307 = vmatprep.subr.mxu0 0.0
      %5308 = vmatpush1.msra.mxu0 %v1969
      %5309 = vmatprep.subr.mxu0 0.0
      %5310 = vmatpush1.msra.mxu0 %v1970
      %5311 = vmatprep.subr.mxu0 0.0
      %5312 = vmatpush1.msra.mxu0 %v1971
      %5313 = vmatprep.subr.mxu0 0.0
      %5314 = vmatpush1.msra.mxu0 %v1972
      %5315 = vmatprep.subr.mxu0 0.0
      %5316 = vmatpush1.msra.mxu0 %v1973
      %5317 = vmatprep.subr.mxu0 0.0
      %5318 = vmatpush1.msra.mxu0 %v1974
      %5319 = vmatprep.subr.mxu0 0.0
      %5320 = vmatpush1.msra.mxu0 %v1975
      %5321 = vmatprep.subr.mxu0 0.0
      %5322 = vmatpush1.msra.mxu0 %v1976
      %5323 = vmatprep.subr.mxu0 0.0
      %5324 = vmatpush1.msra.mxu0 %v1977
      %5325 = vmatprep.subr.mxu0 0.0
      %5326 = vmatpush1.msra.mxu0 %v1978
      %5327 = vmatprep.subr.mxu0 0.0
      %5328 = vmatpush1.msra.mxu0 %v1979
      %5329 = vmatprep.subr.mxu0 0.0
      %5330 = vmatpush1.msra.mxu0 %v1980
      %5331 = vmatprep.subr.mxu0 0.0
      %5332 = vmatpush1.msra.mxu0 %v1981
      %5333 = vmatprep.subr.mxu0 0.0
      %5334 = vmatpush1.msra.mxu0 %v1982
      %5335 = vmatprep.subr.mxu0 0.0
      %5336 = vmatpush1.msra.mxu0 %v1983
      %5337 = vmatprep.subr.mxu0 0.0
      %5338 = vmatpush1.msra.mxu0 %v1984
      %5339 = vmatprep.mubr.f32.mxu0 %v216
      %5340 = vmatmul.mubr.f32.gmra.mrb[0].mxu0 %v215
      %v5341 = vpop.f32.mrb[0].mxu0
      %v5342 = vadd.f32 %v5197, %v5341
      %v5343 = vpop.f32.mrb[0].mxu0
      %5344 = vmatprep.mubr.f32.mxu0 %v289
      %5345 = vmatmul.mubr.f32.gmra.mrb[0].mxu0 %v288
      %v5346 = vpop.f32.mrb[0].mxu0
      %v5347 = vadd.f32 %v5202, %v5346
      %v5348 = vpop.f32.mrb[0].mxu0
      %5349 = vmatprep.mubr.f32.mxu0 %v362
      %5350 = vmatmul.mubr.f32.gmra.mrb[0].mxu0 %v361
      %v5351 = vpop.f32.mrb[0].mxu0
      %v5352 = vadd.f32 %v5207, %v5351
      %v5353 = vpop.f32.mrb[0].mxu0
      %5354 = vmatprep.mubr.f32.mxu0 %v435
      %5355 = vmatmul.mubr.f32.gmra.mrb[0].mxu0 %v434
      %v5356 = vpop.f32.mrb[0].mxu0
      %v5357 = vadd.f32 %v5212, %v5356
      %v5358 = vpop.f32.mrb[0].mxu0
      %5359 = vmatprep.mubr.f32.mxu0 %v508
      %5360 = vmatmul.mubr.f32.gmra.mrb[0].mxu0 %v507
      %v5361 = vpop.f32.mrb[0].mxu0
      %v5362 = vadd.f32 %v5217, %v5361
      %v5363 = vpop.f32.mrb[0].mxu0
      %5364 = vmatprep.mubr.f32.mxu0 %v581
      %5365 = vmatmul.mubr.f32.gmra.mrb[0].mxu0 %v580
      %v5366 = vpop.f32.mrb[0].mxu0
      %v5367 = vadd.f32 %v5222, %v5366
      %v5368 = vpop.f32.mrb[0].mxu0
      %5369 = vmatprep.mubr.f32.mxu0 %v654
      %5370 = vmatmul.mubr.f32.gmra.mrb[0].mxu0 %v653
      %v5371 = vpop.f32.mrb[0].mxu0
      %v5372 = vadd.f32 %v5227, %v5371
      %v5373 = vpop.f32.mrb[0].mxu0
      %5374 = vmatprep.mubr.f32.mxu0 %v727
      %5375 = vmatmul.mubr.f32.gmra.mrb[0].mxu0 %v726
      %v5376 = vpop.f32.mrb[0].mxu0
      %v5377 = vadd.f32 %v5232, %v5376
      %v5378 = vpop.f32.mrb[0].mxu0
      %5379 = vmatprep.mubr.f32.mxu0 %v800
      %5380 = vmatmul.mubr.f32.gmra.mrb[0].mxu0 %v799
      %v5381 = vpop.f32.mrb[0].mxu0
      %v5382 = vadd.f32 %v5237, %v5381
      %v5383 = vpop.f32.mrb[0].mxu0
      %5384 = vmatprep.mubr.f32.mxu0 %v873
      %5385 = vmatmul.mubr.f32.gmra.mrb[0].mxu0 %v872
      %v5386 = vpop.f32.mrb[0].mxu0
      %v5387 = vadd.f32 %v5242, %v5386
      %v5388 = vpop.f32.mrb[0].mxu0
      %5389 = vmatprep.mubr.f32.mxu0 %v946
      %5390 = vmatmul.mubr.f32.gmra.mrb[0].mxu0 %v945
      %v5391 = vpop.f32.mrb[0].mxu0
      %v5392 = vadd.f32 %v5247, %v5391
      %v5393 = vpop.f32.mrb[0].mxu0
      %5394 = vmatprep.mubr.f32.mxu0 %v1019
      %5395 = vmatmul.mubr.f32.gmra.mrb[0].mxu0 %v1018
      %v5396 = vpop.f32.mrb[0].mxu0
      %v5397 = vadd.f32 %v5252, %v5396
      %v5398 = vpop.f32.mrb[0].mxu0
      %5399 = vmatprep.mubr.f32.mxu0 %v1092
      %5400 = vmatmul.mubr.f32.gmra.mrb[0].mxu0 %v1091
      %v5401 = vpop.f32.mrb[0].mxu0
      %v5402 = vadd.f32 %v5257, %v5401
      %v5403 = vpop.f32.mrb[0].mxu0
      %5404 = vmatprep.mubr.f32.mxu0 %v1165
      %5405 = vmatmul.mubr.f32.gmra.mrb[0].mxu0 %v1164
      %v5406 = vpop.f32.mrb[0].mxu0
      %v5407 = vadd.f32 %v5262, %v5406
      %v5408 = vpop.f32.mrb[0].mxu0
      %5409 = vmatprep.mubr.f32.mxu0 %v1238
      %5410 = vmatmul.mubr.f32.gmra.mrb[0].mxu0 %v1237
      %v5411 = vpop.f32.mrb[0].mxu0
      %v5412 = vadd.f32 %v5267, %v5411
      %v5413 = vpop.f32.mrb[0].mxu0
      %5414 = vmatprep.mubr.f32.mxu0 %v1311
      %5415 = vmatmul.mubr.f32.gmra.mrb[0].mxu0 %v1310
      %v5416 = vpop.f32.mrb[0].mxu0
      %v5417 = vadd.f32 %v5272, %v5416
      %v5418 = vpop.f32.mrb[0].mxu0
      %5419 = vdwg.mxu0
      %5420 = vmatprep.subr.mxu0 0.0
      %5421 = vmatpush1.msra.mxu0 %v1985
      %5422 = vmatprep.subr.mxu0 0.0
      %5423 = vmatpush1.msra.mxu0 %v1986
      %5424 = vmatprep.subr.mxu0 0.0
      %5425 = vmatpush1.msra.mxu0 %v1987
      %5426 = vmatprep.subr.mxu0 0.0
      %5427 = vmatpush1.msra.mxu0 %v1988
      %5428 = vmatprep.subr.mxu0 0.0
      %5429 = vmatpush1.msra.mxu0 %v1989
      %5430 = vmatprep.subr.mxu0 0.0
      %5431 = vmatpush1.msra.mxu0 %v1990
      %5432 = vmatprep.subr.mxu0 0.0
      %5433 = vmatpush1.msra.mxu0 %v1991
      %5434 = vmatprep.subr.mxu0 0.0
      %5435 = vmatpush1.msra.mxu0 %v1992
      %5436 = vmatprep.subr.mxu0 0.0
      %5437 = vmatpush1.msra.mxu0 %v1993
      %5438 = vmatprep.subr.mxu0 0.0
      %5439 = vmatpush1.msra.mxu0 %v1994
      %5440 = vmatprep.subr.mxu0 0.0
      %5441 = vmatpush1.msra.mxu0 %v1995
      %5442 = vmatprep.subr.mxu0 0.0
      %5443 = vmatpush1.msra.mxu0 %v1996
      %5444 = vmatprep.subr.mxu0 0.0
      %5445 = vmatpush1.msra.mxu0 %v1997
      %5446 = vmatprep.subr.mxu0 0.0
      %5447 = vmatpush1.msra.mxu0 %v1998
      %5448 = vmatprep.subr.mxu0 0.0
      %5449 = vmatpush1.msra.mxu0 %v1999
      %5450 = vmatprep.subr.mxu0 0.0
      %5451 = vmatpush1.msra.mxu0 %v2000
      %5452 = vmatprep.subr.mxu0 0.0
      %5453 = vmatpush1.msra.mxu0 %v2001
      %5454 = vmatprep.subr.mxu0 0.0
      %5455 = vmatpush1.msra.mxu0 %v2002
      %5456 = vmatprep.subr.mxu0 0.0
      %5457 = vmatpush1.msra.mxu0 %v2003
      %5458 = vmatprep.subr.mxu0 0.0
      %5459 = vmatpush1.msra.mxu0 %v2004
      %5460 = vmatprep.subr.mxu0 0.0
      %5461 = vmatpush1.msra.mxu0 %v2005
      %5462 = vmatprep.subr.mxu0 0.0
      %5463 = vmatpush1.msra.mxu0 %v2006
      %5464 = vmatprep.subr.mxu0 0.0
      %5465 = vmatpush1.msra.mxu0 %v2007
      %5466 = vmatprep.subr.mxu0 0.0
      %5467 = vmatpush1.msra.mxu0 %v2008
      %5468 = vmatprep.subr.mxu0 0.0
      %5469 = vmatpush1.msra.mxu0 %v2009
      %5470 = vmatprep.subr.mxu0 0.0
      %5471 = vmatpush1.msra.mxu0 %v2010
      %5472 = vmatprep.subr.mxu0 0.0
      %5473 = vmatpush1.msra.mxu0 %v2011
      %5474 = vmatprep.subr.mxu0 0.0
      %5475 = vmatpush1.msra.mxu0 %v2012
      %5476 = vmatprep.subr.mxu0 0.0
      %5477 = vmatpush1.msra.mxu0 %v2013
      %5478 = vmatprep.subr.mxu0 0.0
      %5479 = vmatpush1.msra.mxu0 %v2014
      %5480 = vmatprep.subr.mxu0 0.0
      %5481 = vmatpush1.msra.mxu0 %v2015
      %5482 = vmatprep.subr.mxu0 0.0
      %5483 = vmatpush1.msra.mxu0 %v2016
      %5484 = vmatprep.mubr.f32.mxu0 %v218
      %5485 = vmatmul.mubr.f32.gmra.mrb[0].mxu0 %v217
      %v5486 = vpop.f32.mrb[0].mxu0
      %v5487 = vadd.f32 %v5342, %v5486
      %v5488 = vpop.f32.mrb[0].mxu0
      %5489 = vmatprep.mubr.f32.mxu0 %v291
      %5490 = vmatmul.mubr.f32.gmra.mrb[0].mxu0 %v290
      %v5491 = vpop.f32.mrb[0].mxu0
      %v5492 = vadd.f32 %v5347, %v5491
      %v5493 = vpop.f32.mrb[0].mxu0
      %5494 = vmatprep.mubr.f32.mxu0 %v364
      %5495 = vmatmul.mubr.f32.gmra.mrb[0].mxu0 %v363
      %v5496 = vpop.f32.mrb[0].mxu0
      %v5497 = vadd.f32 %v5352, %v5496
      %v5498 = vpop.f32.mrb[0].mxu0
      %5499 = vmatprep.mubr.f32.mxu0 %v437
      %5500 = vmatmul.mubr.f32.gmra.mrb[0].mxu0 %v436
      %v5501 = vpop.f32.mrb[0].mxu0
      %v5502 = vadd.f32 %v5357, %v5501
      %v5503 = vpop.f32.mrb[0].mxu0
      %5504 = vmatprep.mubr.f32.mxu0 %v510
      %5505 = vmatmul.mubr.f32.gmra.mrb[0].mxu0 %v509
      %v5506 = vpop.f32.mrb[0].mxu0
      %v5507 = vadd.f32 %v5362, %v5506
      %v5508 = vpop.f32.mrb[0].mxu0
      %5509 = vmatprep.mubr.f32.mxu0 %v583
      %5510 = vmatmul.mubr.f32.gmra.mrb[0].mxu0 %v582
      %v5511 = vpop.f32.mrb[0].mxu0
      %v5512 = vadd.f32 %v5367, %v5511
      %v5513 = vpop.f32.mrb[0].mxu0
      %5514 = vmatprep.mubr.f32.mxu0 %v656
      %5515 = vmatmul.mubr.f32.gmra.mrb[0].mxu0 %v655
      %v5516 = vpop.f32.mrb[0].mxu0
      %v5517 = vadd.f32 %v5372, %v5516
      %v5518 = vpop.f32.mrb[0].mxu0
      %5519 = vmatprep.mubr.f32.mxu0 %v729
      %5520 = vmatmul.mubr.f32.gmra.mrb[0].mxu0 %v728
      %v5521 = vpop.f32.mrb[0].mxu0
      %v5522 = vadd.f32 %v5377, %v5521
      %v5523 = vpop.f32.mrb[0].mxu0
      %5524 = vmatprep.mubr.f32.mxu0 %v802
      %5525 = vmatmul.mubr.f32.gmra.mrb[0].mxu0 %v801
      %v5526 = vpop.f32.mrb[0].mxu0
      %v5527 = vadd.f32 %v5382, %v5526
      %v5528 = vpop.f32.mrb[0].mxu0
      %5529 = vmatprep.mubr.f32.mxu0 %v875
      %5530 = vmatmul.mubr.f32.gmra.mrb[0].mxu0 %v874
      %v5531 = vpop.f32.mrb[0].mxu0
      %v5532 = vadd.f32 %v5387, %v5531
      %v5533 = vpop.f32.mrb[0].mxu0
      %5534 = vmatprep.mubr.f32.mxu0 %v948
      %5535 = vmatmul.mubr.f32.gmra.mrb[0].mxu0 %v947
      %v5536 = vpop.f32.mrb[0].mxu0
      %v5537 = vadd.f32 %v5392, %v5536
      %v5538 = vpop.f32.mrb[0].mxu0
      %5539 = vmatprep.mubr.f32.mxu0 %v1021
      %5540 = vmatmul.mubr.f32.gmra.mrb[0].mxu0 %v1020
      %v5541 = vpop.f32.mrb[0].mxu0
      %v5542 = vadd.f32 %v5397, %v5541
      %v5543 = vpop.f32.mrb[0].mxu0
      %5544 = vmatprep.mubr.f32.mxu0 %v1094
      %5545 = vmatmul.mubr.f32.gmra.mrb[0].mxu0 %v1093
      %v5546 = vpop.f32.mrb[0].mxu0
      %v5547 = vadd.f32 %v5402, %v5546
      %v5548 = vpop.f32.mrb[0].mxu0
      %5549 = vmatprep.mubr.f32.mxu0 %v1167
      %5550 = vmatmul.mubr.f32.gmra.mrb[0].mxu0 %v1166
      %v5551 = vpop.f32.mrb[0].mxu0
      %v5552 = vadd.f32 %v5407, %v5551
      %v5553 = vpop.f32.mrb[0].mxu0
      %5554 = vmatprep.mubr.f32.mxu0 %v1240
      %5555 = vmatmul.mubr.f32.gmra.mrb[0].mxu0 %v1239
      %v5556 = vpop.f32.mrb[0].mxu0
      %v5557 = vadd.f32 %v5412, %v5556
      %v5558 = vpop.f32.mrb[0].mxu0
      %5559 = vmatprep.mubr.f32.mxu0 %v1313
      %5560 = vmatmul.mubr.f32.gmra.mrb[0].mxu0 %v1312
      %v5561 = vpop.f32.mrb[0].mxu0
      %v5562 = vadd.f32 %v5417, %v5561
      %v5563 = vpop.f32.mrb[0].mxu0
      %5564 = vdwg.mxu0
      %5565 = vmatprep.subr.mxu0 0.0
      %5566 = vmatpush1.msra.mxu0 %v2017
      %5567 = vmatprep.subr.mxu0 0.0
      %5568 = vmatpush1.msra.mxu0 %v2018
      %5569 = vmatprep.subr.mxu0 0.0
      %5570 = vmatpush1.msra.mxu0 %v2019
      %5571 = vmatprep.subr.mxu0 0.0
      %5572 = vmatpush1.msra.mxu0 %v2020
      %5573 = vmatprep.subr.mxu0 0.0
      %5574 = vmatpush1.msra.mxu0 %v2021
      %5575 = vmatprep.subr.mxu0 0.0
      %5576 = vmatpush1.msra.mxu0 %v2022
      %5577 = vmatprep.subr.mxu0 0.0
      %5578 = vmatpush1.msra.mxu0 %v2023
      %5579 = vmatprep.subr.mxu0 0.0
      %5580 = vmatpush1.msra.mxu0 %v2024
      %5581 = vmatprep.subr.mxu0 0.0
      %5582 = vmatpush1.msra.mxu0 %v2025
      %5583 = vmatprep.subr.mxu0 0.0
      %5584 = vmatpush1.msra.mxu0 %v2026
      %5585 = vmatprep.subr.mxu0 0.0
      %5586 = vmatpush1.msra.mxu0 %v2027
      %5587 = vmatprep.subr.mxu0 0.0
      %5588 = vmatpush1.msra.mxu0 %v2028
      %5589 = vmatprep.subr.mxu0 0.0
      %5590 = vmatpush1.msra.mxu0 %v2029
      %5591 = vmatprep.subr.mxu0 0.0
      %5592 = vmatpush1.msra.mxu0 %v2030
      %5593 = vmatprep.subr.mxu0 0.0
      %5594 = vmatpush1.msra.mxu0 %v2031
      %5595 = vmatprep.subr.mxu0 0.0
      %5596 = vmatpush1.msra.mxu0 %v2032
      %5597 = vmatprep.subr.mxu0 0.0
      %5598 = vmatpush1.msra.mxu0 %v2033
      %5599 = vmatprep.subr.mxu0 0.0
      %5600 = vmatpush1.msra.mxu0 %v2034
      %5601 = vmatprep.subr.mxu0 0.0
      %5602 = vmatpush1.msra.mxu0 %v2035
      %5603 = vmatprep.subr.mxu0 0.0
      %5604 = vmatpush1.msra.mxu0 %v2036
      %5605 = vmatprep.subr.mxu0 0.0
      %5606 = vmatpush1.msra.mxu0 %v2037
      %5607 = vmatprep.subr.mxu0 0.0
      %5608 = vmatpush1.msra.mxu0 %v2038
      %5609 = vmatprep.subr.mxu0 0.0
      %5610 = vmatpush1.msra.mxu0 %v2039
      %5611 = vmatprep.subr.mxu0 0.0
      %5612 = vmatpush1.msra.mxu0 %v2040
      %5613 = vmatprep.subr.mxu0 0.0
      %5614 = vmatpush1.msra.mxu0 %v2041
      %5615 = vmatprep.subr.mxu0 0.0
      %5616 = vmatpush1.msra.mxu0 %v2042
      %5617 = vmatprep.subr.mxu0 0.0
      %5618 = vmatpush1.msra.mxu0 %v2043
      %5619 = vmatprep.subr.mxu0 0.0
      %5620 = vmatpush1.msra.mxu0 %v2044
      %5621 = vmatprep.subr.mxu0 0.0
      %5622 = vmatpush1.msra.mxu0 %v2045
      %5623 = vmatprep.subr.mxu0 0.0
      %5624 = vmatpush1.msra.mxu0 %v2046
      %5625 = vmatprep.subr.mxu0 0.0
      %5626 = vmatpush1.msra.mxu0 %v2047
      %5627 = vmatprep.subr.mxu0 0.0
      %5628 = vmatpush1.msra.mxu0 %v2048
      %5629 = vmatprep.mubr.f32.mxu0 %v220
      %5630 = vmatmul.mubr.f32.gmra.mrb[0].mxu0 %v219
      %v5631 = vpop.f32.mrb[0].mxu0
      %v5632 = vadd.f32 %v5487, %v5631
      %v5633 = vpop.f32.mrb[0].mxu0
      %5634 = vmatprep.mubr.f32.mxu0 %v293
      %5635 = vmatmul.mubr.f32.gmra.mrb[0].mxu0 %v292
      %v5636 = vpop.f32.mrb[0].mxu0
      %v5637 = vadd.f32 %v5492, %v5636
      %v5638 = vpop.f32.mrb[0].mxu0
      %5639 = vmatprep.mubr.f32.mxu0 %v366
      %5640 = vmatmul.mubr.f32.gmra.mrb[0].mxu0 %v365
      %v5641 = vpop.f32.mrb[0].mxu0
      %v5642 = vadd.f32 %v5497, %v5641
      %v5643 = vpop.f32.mrb[0].mxu0
      %5644 = vmatprep.mubr.f32.mxu0 %v439
      %5645 = vmatmul.mubr.f32.gmra.mrb[0].mxu0 %v438
      %v5646 = vpop.f32.mrb[0].mxu0
      %v5647 = vadd.f32 %v5502, %v5646
      %v5648 = vpop.f32.mrb[0].mxu0
      %5649 = vmatprep.mubr.f32.mxu0 %v512
      %5650 = vmatmul.mubr.f32.gmra.mrb[0].mxu0 %v511
      %v5651 = vpop.f32.mrb[0].mxu0
      %v5652 = vadd.f32 %v5507, %v5651
      %v5653 = vpop.f32.mrb[0].mxu0
      %5654 = vmatprep.mubr.f32.mxu0 %v585
      %5655 = vmatmul.mubr.f32.gmra.mrb[0].mxu0 %v584
      %v5656 = vpop.f32.mrb[0].mxu0
      %v5657 = vadd.f32 %v5512, %v5656
      %v5658 = vpop.f32.mrb[0].mxu0
      %5659 = vmatprep.mubr.f32.mxu0 %v658
      %5660 = vmatmul.mubr.f32.gmra.mrb[0].mxu0 %v657
      %v5661 = vpop.f32.mrb[0].mxu0
      %v5662 = vadd.f32 %v5517, %v5661
      %v5663 = vpop.f32.mrb[0].mxu0
      %5664 = vmatprep.mubr.f32.mxu0 %v731
      %5665 = vmatmul.mubr.f32.gmra.mrb[0].mxu0 %v730
      %v5666 = vpop.f32.mrb[0].mxu0
      %v5667 = vadd.f32 %v5522, %v5666
      %v5668 = vpop.f32.mrb[0].mxu0
      %5669 = vmatprep.mubr.f32.mxu0 %v804
      %5670 = vmatmul.mubr.f32.gmra.mrb[0].mxu0 %v803
      %v5671 = vpop.f32.mrb[0].mxu0
      %v5672 = vadd.f32 %v5527, %v5671
      %v5673 = vpop.f32.mrb[0].mxu0
      %5674 = vmatprep.mubr.f32.mxu0 %v877
      %5675 = vmatmul.mubr.f32.gmra.mrb[0].mxu0 %v876
      %v5676 = vpop.f32.mrb[0].mxu0
      %v5677 = vadd.f32 %v5532, %v5676
      %v5678 = vpop.f32.mrb[0].mxu0
      %5679 = vmatprep.mubr.f32.mxu0 %v950
      %5680 = vmatmul.mubr.f32.gmra.mrb[0].mxu0 %v949
      %v5681 = vpop.f32.mrb[0].mxu0
      %v5682 = vadd.f32 %v5537, %v5681
      %v5683 = vpop.f32.mrb[0].mxu0
      %5684 = vmatprep.mubr.f32.mxu0 %v1023
      %5685 = vmatmul.mubr.f32.gmra.mrb[0].mxu0 %v1022
      %v5686 = vpop.f32.mrb[0].mxu0
      %v5687 = vadd.f32 %v5542, %v5686
      %v5688 = vpop.f32.mrb[0].mxu0
      %5689 = vmatprep.mubr.f32.mxu0 %v1096
      %5690 = vmatmul.mubr.f32.gmra.mrb[0].mxu0 %v1095
      %v5691 = vpop.f32.mrb[0].mxu0
      %v5692 = vadd.f32 %v5547, %v5691
      %v5693 = vpop.f32.mrb[0].mxu0
      %5694 = vmatprep.mubr.f32.mxu0 %v1169
      %5695 = vmatmul.mubr.f32.gmra.mrb[0].mxu0 %v1168
      %v5696 = vpop.f32.mrb[0].mxu0
      %v5697 = vadd.f32 %v5552, %v5696
      %v5698 = vpop.f32.mrb[0].mxu0
      %5699 = vmatprep.mubr.f32.mxu0 %v1242
      %5700 = vmatmul.mubr.f32.gmra.mrb[0].mxu0 %v1241
      %v5701 = vpop.f32.mrb[0].mxu0
      %v5702 = vadd.f32 %v5557, %v5701
      %v5703 = vpop.f32.mrb[0].mxu0
      %5704 = vmatprep.mubr.f32.mxu0 %v1315
      %5705 = vmatmul.mubr.f32.gmra.mrb[0].mxu0 %v1314
      %v5706 = vpop.f32.mrb[0].mxu0
      %v5707 = vadd.f32 %v5562, %v5706
      %v5708 = vpop.f32.mrb[0].mxu0
      %5709 = vdwg.mxu0
      %5710 = vmatprep.subr.mxu0 0.0
      %5711 = vmatpush1.msra.mxu0 %v2049
      %5712 = vmatprep.subr.mxu0 0.0
      %5713 = vmatpush1.msra.mxu0 %v2050
      %5714 = vmatprep.subr.mxu0 0.0
      %5715 = vmatpush1.msra.mxu0 %v2051
      %5716 = vmatprep.subr.mxu0 0.0
      %5717 = vmatpush1.msra.mxu0 %v2052
      %5718 = vmatprep.subr.mxu0 0.0
      %5719 = vmatpush1.msra.mxu0 %v2053
      %5720 = vmatprep.subr.mxu0 0.0
      %5721 = vmatpush1.msra.mxu0 %v2054
      %5722 = vmatprep.subr.mxu0 0.0
      %5723 = vmatpush1.msra.mxu0 %v2055
      %5724 = vmatprep.subr.mxu0 0.0
      %5725 = vmatpush1.msra.mxu0 %v2056
      %5726 = vmatprep.subr.mxu0 0.0
      %5727 = vmatpush1.msra.mxu0 %v2057
      %5728 = vmatprep.subr.mxu0 0.0
      %5729 = vmatpush1.msra.mxu0 %v2058
      %5730 = vmatprep.subr.mxu0 0.0
      %5731 = vmatpush1.msra.mxu0 %v2059
      %5732 = vmatprep.subr.mxu0 0.0
      %5733 = vmatpush1.msra.mxu0 %v2060
      %5734 = vmatprep.subr.mxu0 0.0
      %5735 = vmatpush1.msra.mxu0 %v2061
      %5736 = vmatprep.subr.mxu0 0.0
      %5737 = vmatpush1.msra.mxu0 %v2062
      %5738 = vmatprep.subr.mxu0 0.0
      %5739 = vmatpush1.msra.mxu0 %v2063
      %5740 = vmatprep.subr.mxu0 0.0
      %5741 = vmatpush1.msra.mxu0 %v2064
      %5742 = vmatprep.subr.mxu0 0.0
      %5743 = vmatpush1.msra.mxu0 %v2065
      %5744 = vmatprep.subr.mxu0 0.0
      %5745 = vmatpush1.msra.mxu0 %v2066
      %5746 = vmatprep.subr.mxu0 0.0
      %5747 = vmatpush1.msra.mxu0 %v2067
      %5748 = vmatprep.subr.mxu0 0.0
      %5749 = vmatpush1.msra.mxu0 %v2068
      %5750 = vmatprep.subr.mxu0 0.0
      %5751 = vmatpush1.msra.mxu0 %v2069
      %5752 = vmatprep.subr.mxu0 0.0
      %5753 = vmatpush1.msra.mxu0 %v2070
      %5754 = vmatprep.subr.mxu0 0.0
      %5755 = vmatpush1.msra.mxu0 %v2071
      %5756 = vmatprep.subr.mxu0 0.0
      %5757 = vmatpush1.msra.mxu0 %v2072
      %5758 = vmatprep.subr.mxu0 0.0
      %5759 = vmatpush1.msra.mxu0 %v2073
      %5760 = vmatprep.subr.mxu0 0.0
      %5761 = vmatpush1.msra.mxu0 %v2074
      %5762 = vmatprep.subr.mxu0 0.0
      %5763 = vmatpush1.msra.mxu0 %v2075
      %5764 = vmatprep.subr.mxu0 0.0
      %5765 = vmatpush1.msra.mxu0 %v2076
      %5766 = vmatprep.subr.mxu0 0.0
      %5767 = vmatpush1.msra.mxu0 %v2077
      %5768 = vmatprep.subr.mxu0 0.0
      %5769 = vmatpush1.msra.mxu0 %v2078
      %5770 = vmatprep.subr.mxu0 0.0
      %5771 = vmatpush1.msra.mxu0 %v2079
      %5772 = vmatprep.subr.mxu0 0.0
      %5773 = vmatpush1.msra.mxu0 %v2080
      %5774 = vmatprep.mubr.f32.mxu0 %v222
      %5775 = vmatmul.mubr.f32.gmra.mrb[0].mxu0 %v221
      %v5776 = vpop.f32.mrb[0].mxu0
      %v5777 = vadd.f32 %v5632, %v5776
      %v5778 = vpop.f32.mrb[0].mxu0
      %5779 = vmatprep.mubr.f32.mxu0 %v295
      %5780 = vmatmul.mubr.f32.gmra.mrb[0].mxu0 %v294
      %v5781 = vpop.f32.mrb[0].mxu0
      %v5782 = vadd.f32 %v5637, %v5781
      %v5783 = vpop.f32.mrb[0].mxu0
      %5784 = vmatprep.mubr.f32.mxu0 %v368
      %5785 = vmatmul.mubr.f32.gmra.mrb[0].mxu0 %v367
      %v5786 = vpop.f32.mrb[0].mxu0
      %v5787 = vadd.f32 %v5642, %v5786
      %v5788 = vpop.f32.mrb[0].mxu0
      %5789 = vmatprep.mubr.f32.mxu0 %v441
      %5790 = vmatmul.mubr.f32.gmra.mrb[0].mxu0 %v440
      %v5791 = vpop.f32.mrb[0].mxu0
      %v5792 = vadd.f32 %v5647, %v5791
      %v5793 = vpop.f32.mrb[0].mxu0
      %5794 = vmatprep.mubr.f32.mxu0 %v514
      %5795 = vmatmul.mubr.f32.gmra.mrb[0].mxu0 %v513
      %v5796 = vpop.f32.mrb[0].mxu0
      %v5797 = vadd.f32 %v5652, %v5796
      %v5798 = vpop.f32.mrb[0].mxu0
      %5799 = vmatprep.mubr.f32.mxu0 %v587
      %5800 = vmatmul.mubr.f32.gmra.mrb[0].mxu0 %v586
      %v5801 = vpop.f32.mrb[0].mxu0
      %v5802 = vadd.f32 %v5657, %v5801
      %v5803 = vpop.f32.mrb[0].mxu0
      %5804 = vmatprep.mubr.f32.mxu0 %v660
      %5805 = vmatmul.mubr.f32.gmra.mrb[0].mxu0 %v659
      %v5806 = vpop.f32.mrb[0].mxu0
      %v5807 = vadd.f32 %v5662, %v5806
      %v5808 = vpop.f32.mrb[0].mxu0
      %5809 = vmatprep.mubr.f32.mxu0 %v733
      %5810 = vmatmul.mubr.f32.gmra.mrb[0].mxu0 %v732
      %v5811 = vpop.f32.mrb[0].mxu0
      %v5812 = vadd.f32 %v5667, %v5811
      %v5813 = vpop.f32.mrb[0].mxu0
      %5814 = vmatprep.mubr.f32.mxu0 %v806
      %5815 = vmatmul.mubr.f32.gmra.mrb[0].mxu0 %v805
      %v5816 = vpop.f32.mrb[0].mxu0
      %v5817 = vadd.f32 %v5672, %v5816
      %v5818 = vpop.f32.mrb[0].mxu0
      %5819 = vmatprep.mubr.f32.mxu0 %v879
      %5820 = vmatmul.mubr.f32.gmra.mrb[0].mxu0 %v878
      %v5821 = vpop.f32.mrb[0].mxu0
      %v5822 = vadd.f32 %v5677, %v5821
      %v5823 = vpop.f32.mrb[0].mxu0
      %5824 = vmatprep.mubr.f32.mxu0 %v952
      %5825 = vmatmul.mubr.f32.gmra.mrb[0].mxu0 %v951
      %v5826 = vpop.f32.mrb[0].mxu0
      %v5827 = vadd.f32 %v5682, %v5826
      %v5828 = vpop.f32.mrb[0].mxu0
      %5829 = vmatprep.mubr.f32.mxu0 %v1025
      %5830 = vmatmul.mubr.f32.gmra.mrb[0].mxu0 %v1024
      %v5831 = vpop.f32.mrb[0].mxu0
      %v5832 = vadd.f32 %v5687, %v5831
      %v5833 = vpop.f32.mrb[0].mxu0
      %5834 = vmatprep.mubr.f32.mxu0 %v1098
      %5835 = vmatmul.mubr.f32.gmra.mrb[0].mxu0 %v1097
      %v5836 = vpop.f32.mrb[0].mxu0
      %v5837 = vadd.f32 %v5692, %v5836
      %v5838 = vpop.f32.mrb[0].mxu0
      %5839 = vmatprep.mubr.f32.mxu0 %v1171
      %5840 = vmatmul.mubr.f32.gmra.mrb[0].mxu0 %v1170
      %v5841 = vpop.f32.mrb[0].mxu0
      %v5842 = vadd.f32 %v5697, %v5841
      %v5843 = vpop.f32.mrb[0].mxu0
      %5844 = vmatprep.mubr.f32.mxu0 %v1244
      %5845 = vmatmul.mubr.f32.gmra.mrb[0].mxu0 %v1243
      %v5846 = vpop.f32.mrb[0].mxu0
      %v5847 = vadd.f32 %v5702, %v5846
      %v5848 = vpop.f32.mrb[0].mxu0
      %5849 = vmatprep.mubr.f32.mxu0 %v1317
      %5850 = vmatmul.mubr.f32.gmra.mrb[0].mxu0 %v1316
      %v5851 = vpop.f32.mrb[0].mxu0
      %v5852 = vadd.f32 %v5707, %v5851
      %v5853 = vpop.f32.mrb[0].mxu0
      %5854 = vdwg.mxu0
      %5855 = vmatprep.subr.mxu0 0.0
      %5856 = vmatpush1.msra.mxu0 %v2081
      %5857 = vmatprep.subr.mxu0 0.0
      %5858 = vmatpush1.msra.mxu0 %v2082
      %5859 = vmatprep.subr.mxu0 0.0
      %5860 = vmatpush1.msra.mxu0 %v2083
      %5861 = vmatprep.subr.mxu0 0.0
      %5862 = vmatpush1.msra.mxu0 %v2084
      %5863 = vmatprep.subr.mxu0 0.0
      %5864 = vmatpush1.msra.mxu0 %v2085
      %5865 = vmatprep.subr.mxu0 0.0
      %5866 = vmatpush1.msra.mxu0 %v2086
      %5867 = vmatprep.subr.mxu0 0.0
      %5868 = vmatpush1.msra.mxu0 %v2087
      %5869 = vmatprep.subr.mxu0 0.0
      %5870 = vmatpush1.msra.mxu0 %v2088
      %5871 = vmatprep.subr.mxu0 0.0
      %5872 = vmatpush1.msra.mxu0 %v2089
      %5873 = vmatprep.subr.mxu0 0.0
      %5874 = vmatpush1.msra.mxu0 %v2090
      %5875 = vmatprep.subr.mxu0 0.0
      %5876 = vmatpush1.msra.mxu0 %v2091
      %5877 = vmatprep.subr.mxu0 0.0
      %5878 = vmatpush1.msra.mxu0 %v2092
      %5879 = vmatprep.subr.mxu0 0.0
      %5880 = vmatpush1.msra.mxu0 %v2093
      %5881 = vmatprep.subr.mxu0 0.0
      %5882 = vmatpush1.msra.mxu0 %v2094
      %5883 = vmatprep.subr.mxu0 0.0
      %5884 = vmatpush1.msra.mxu0 %v2095
      %5885 = vmatprep.subr.mxu0 0.0
      %5886 = vmatpush1.msra.mxu0 %v2096
      %5887 = vmatprep.subr.mxu0 0.0
      %5888 = vmatpush1.msra.mxu0 %v2097
      %5889 = vmatprep.subr.mxu0 0.0
      %5890 = vmatpush1.msra.mxu0 %v2098
      %5891 = vmatprep.subr.mxu0 0.0
      %5892 = vmatpush1.msra.mxu0 %v2099
      %5893 = vmatprep.subr.mxu0 0.0
      %5894 = vmatpush1.msra.mxu0 %v2100
      %5895 = vmatprep.subr.mxu0 0.0
      %5896 = vmatpush1.msra.mxu0 %v2101
      %5897 = vmatprep.subr.mxu0 0.0
      %5898 = vmatpush1.msra.mxu0 %v2102
      %5899 = vmatprep.subr.mxu0 0.0
      %5900 = vmatpush1.msra.mxu0 %v2103
      %5901 = vmatprep.subr.mxu0 0.0
      %5902 = vmatpush1.msra.mxu0 %v2104
      %5903 = vmatprep.subr.mxu0 0.0
      %5904 = vmatpush1.msra.mxu0 %v2105
      %5905 = vmatprep.subr.mxu0 0.0
      %5906 = vmatpush1.msra.mxu0 %v2106
      %5907 = vmatprep.subr.mxu0 0.0
      %5908 = vmatpush1.msra.mxu0 %v2107
      %5909 = vmatprep.subr.mxu0 0.0
      %5910 = vmatpush1.msra.mxu0 %v2108
      %5911 = vmatprep.subr.mxu0 0.0
      %5912 = vmatpush1.msra.mxu0 %v2109
      %5913 = vmatprep.subr.mxu0 0.0
      %5914 = vmatpush1.msra.mxu0 %v2110
      %5915 = vmatprep.subr.mxu0 0.0
      %5916 = vmatpush1.msra.mxu0 %v2111
      %5917 = vmatprep.subr.mxu0 0.0
      %5918 = vmatpush1.msra.mxu0 %v2112
      %5919 = vmatprep.mubr.f32.mxu0 %v224
      %5920 = vmatmul.mubr.f32.gmra.mrb[0].mxu0 %v223
      %v5921 = vpop.f32.mrb[0].mxu0
      %v5922 = vadd.f32 %v5777, %v5921
      %v5923 = vpop.f32.mrb[0].mxu0
      %5924 = vmatprep.mubr.f32.mxu0 %v297
      %5925 = vmatmul.mubr.f32.gmra.mrb[0].mxu0 %v296
      %v5926 = vpop.f32.mrb[0].mxu0
      %v5927 = vadd.f32 %v5782, %v5926
      %v5928 = vpop.f32.mrb[0].mxu0
      %5929 = vmatprep.mubr.f32.mxu0 %v370
      %5930 = vmatmul.mubr.f32.gmra.mrb[0].mxu0 %v369
      %v5931 = vpop.f32.mrb[0].mxu0
      %v5932 = vadd.f32 %v5787, %v5931
      %v5933 = vpop.f32.mrb[0].mxu0
      %5934 = vmatprep.mubr.f32.mxu0 %v443
      %5935 = vmatmul.mubr.f32.gmra.mrb[0].mxu0 %v442
      %v5936 = vpop.f32.mrb[0].mxu0
      %v5937 = vadd.f32 %v5792, %v5936
      %v5938 = vpop.f32.mrb[0].mxu0
      %5939 = vmatprep.mubr.f32.mxu0 %v516
      %5940 = vmatmul.mubr.f32.gmra.mrb[0].mxu0 %v515
      %v5941 = vpop.f32.mrb[0].mxu0
      %v5942 = vadd.f32 %v5797, %v5941
      %v5943 = vpop.f32.mrb[0].mxu0
      %5944 = vmatprep.mubr.f32.mxu0 %v589
      %5945 = vmatmul.mubr.f32.gmra.mrb[0].mxu0 %v588
      %v5946 = vpop.f32.mrb[0].mxu0
      %v5947 = vadd.f32 %v5802, %v5946
      %v5948 = vpop.f32.mrb[0].mxu0
      %5949 = vmatprep.mubr.f32.mxu0 %v662
      %5950 = vmatmul.mubr.f32.gmra.mrb[0].mxu0 %v661
      %v5951 = vpop.f32.mrb[0].mxu0
      %v5952 = vadd.f32 %v5807, %v5951
      %v5953 = vpop.f32.mrb[0].mxu0
      %5954 = vmatprep.mubr.f32.mxu0 %v735
      %5955 = vmatmul.mubr.f32.gmra.mrb[0].mxu0 %v734
      %v5956 = vpop.f32.mrb[0].mxu0
      %v5957 = vadd.f32 %v5812, %v5956
      %v5958 = vpop.f32.mrb[0].mxu0
      %5959 = vmatprep.mubr.f32.mxu0 %v808
      %5960 = vmatmul.mubr.f32.gmra.mrb[0].mxu0 %v807
      %v5961 = vpop.f32.mrb[0].mxu0
      %v5962 = vadd.f32 %v5817, %v5961
      %v5963 = vpop.f32.mrb[0].mxu0
      %5964 = vmatprep.mubr.f32.mxu0 %v881
      %5965 = vmatmul.mubr.f32.gmra.mrb[0].mxu0 %v880
      %v5966 = vpop.f32.mrb[0].mxu0
      %v5967 = vadd.f32 %v5822, %v5966
      %v5968 = vpop.f32.mrb[0].mxu0
      %5969 = vmatprep.mubr.f32.mxu0 %v954
      %5970 = vmatmul.mubr.f32.gmra.mrb[0].mxu0 %v953
      %v5971 = vpop.f32.mrb[0].mxu0
      %v5972 = vadd.f32 %v5827, %v5971
      %v5973 = vpop.f32.mrb[0].mxu0
      %5974 = vmatprep.mubr.f32.mxu0 %v1027
      %5975 = vmatmul.mubr.f32.gmra.mrb[0].mxu0 %v1026
      %v5976 = vpop.f32.mrb[0].mxu0
      %v5977 = vadd.f32 %v5832, %v5976
      %v5978 = vpop.f32.mrb[0].mxu0
      %5979 = vmatprep.mubr.f32.mxu0 %v1100
      %5980 = vmatmul.mubr.f32.gmra.mrb[0].mxu0 %v1099
      %v5981 = vpop.f32.mrb[0].mxu0
      %v5982 = vadd.f32 %v5837, %v5981
      %v5983 = vpop.f32.mrb[0].mxu0
      %5984 = vmatprep.mubr.f32.mxu0 %v1173
      %5985 = vmatmul.mubr.f32.gmra.mrb[0].mxu0 %v1172
      %v5986 = vpop.f32.mrb[0].mxu0
      %v5987 = vadd.f32 %v5842, %v5986
      %v5988 = vpop.f32.mrb[0].mxu0
      %5989 = vmatprep.mubr.f32.mxu0 %v1246
      %5990 = vmatmul.mubr.f32.gmra.mrb[0].mxu0 %v1245
      %v5991 = vpop.f32.mrb[0].mxu0
      %v5992 = vadd.f32 %v5847, %v5991
      %v5993 = vpop.f32.mrb[0].mxu0
      %5994 = vmatprep.mubr.f32.mxu0 %v1319
      %5995 = vmatmul.mubr.f32.gmra.mrb[0].mxu0 %v1318
      %v5996 = vpop.f32.mrb[0].mxu0
      %v5997 = vadd.f32 %v5852, %v5996
      %v5998 = vpop.f32.mrb[0].mxu0
      %5999 = vdwg.mxu0
      %6000 = vmatprep.subr.mxu0 0.0
      %6001 = vmatpush1.msra.mxu0 %v2113
      %6002 = vmatprep.subr.mxu0 0.0
      %6003 = vmatpush1.msra.mxu0 %v2114
      %6004 = vmatprep.subr.mxu0 0.0
      %6005 = vmatpush1.msra.mxu0 %v2115
      %6006 = vmatprep.subr.mxu0 0.0
      %6007 = vmatpush1.msra.mxu0 %v2116
      %6008 = vmatprep.subr.mxu0 0.0
      %6009 = vmatpush1.msra.mxu0 %v2117
      %6010 = vmatprep.subr.mxu0 0.0
      %6011 = vmatpush1.msra.mxu0 %v2118
      %6012 = vmatprep.subr.mxu0 0.0
      %6013 = vmatpush1.msra.mxu0 %v2119
      %6014 = vmatprep.subr.mxu0 0.0
      %6015 = vmatpush1.msra.mxu0 %v2120
      %6016 = vmatprep.subr.mxu0 0.0
      %6017 = vmatpush1.msra.mxu0 %v2121
      %6018 = vmatprep.subr.mxu0 0.0
      %6019 = vmatpush1.msra.mxu0 %v2122
      %6020 = vmatprep.subr.mxu0 0.0
      %6021 = vmatpush1.msra.mxu0 %v2123
      %6022 = vmatprep.subr.mxu0 0.0
      %6023 = vmatpush1.msra.mxu0 %v2124
      %6024 = vmatprep.subr.mxu0 0.0
      %6025 = vmatpush1.msra.mxu0 %v2125
      %6026 = vmatprep.subr.mxu0 0.0
      %6027 = vmatpush1.msra.mxu0 %v2126
      %6028 = vmatprep.subr.mxu0 0.0
      %6029 = vmatpush1.msra.mxu0 %v2127
      %6030 = vmatprep.subr.mxu0 0.0
      %6031 = vmatpush1.msra.mxu0 %v2128
      %6032 = vmatprep.subr.mxu0 0.0
      %6033 = vmatpush1.msra.mxu0 %v2129
      %6034 = vmatprep.subr.mxu0 0.0
      %6035 = vmatpush1.msra.mxu0 %v2130
      %6036 = vmatprep.subr.mxu0 0.0
      %6037 = vmatpush1.msra.mxu0 %v2131
      %6038 = vmatprep.subr.mxu0 0.0
      %6039 = vmatpush1.msra.mxu0 %v2132
      %6040 = vmatprep.subr.mxu0 0.0
      %6041 = vmatpush1.msra.mxu0 %v2133
      %6042 = vmatprep.subr.mxu0 0.0
      %6043 = vmatpush1.msra.mxu0 %v2134
      %6044 = vmatprep.subr.mxu0 0.0
      %6045 = vmatpush1.msra.mxu0 %v2135
      %6046 = vmatprep.subr.mxu0 0.0
      %6047 = vmatpush1.msra.mxu0 %v2136
      %6048 = vmatprep.subr.mxu0 0.0
      %6049 = vmatpush1.msra.mxu0 %v2137
      %6050 = vmatprep.subr.mxu0 0.0
      %6051 = vmatpush1.msra.mxu0 %v2138
      %6052 = vmatprep.subr.mxu0 0.0
      %6053 = vmatpush1.msra.mxu0 %v2139
      %6054 = vmatprep.subr.mxu0 0.0
      %6055 = vmatpush1.msra.mxu0 %v2140
      %6056 = vmatprep.subr.mxu0 0.0
      %6057 = vmatpush1.msra.mxu0 %v2141
      %6058 = vmatprep.subr.mxu0 0.0
      %6059 = vmatpush1.msra.mxu0 %v2142
      %6060 = vmatprep.subr.mxu0 0.0
      %6061 = vmatpush1.msra.mxu0 %v2143
      %6062 = vmatprep.subr.mxu0 0.0
      %6063 = vmatpush1.msra.mxu0 %v2144
      %6064 = vmatprep.mubr.f32.mxu0 %v226
      %6065 = vmatmul.mubr.f32.gmra.mrb[0].mxu0 %v225
      %v6066 = vpop.f32.mrb[0].mxu0
      %v6067 = vadd.f32 %v5922, %v6066
      %v6068 = vpop.f32.mrb[0].mxu0
      %6069 = vmatprep.mubr.f32.mxu0 %v299
      %6070 = vmatmul.mubr.f32.gmra.mrb[0].mxu0 %v298
      %v6071 = vpop.f32.mrb[0].mxu0
      %v6072 = vadd.f32 %v5927, %v6071
      %v6073 = vpop.f32.mrb[0].mxu0
      %6074 = vmatprep.mubr.f32.mxu0 %v372
      %6075 = vmatmul.mubr.f32.gmra.mrb[0].mxu0 %v371
      %v6076 = vpop.f32.mrb[0].mxu0
      %v6077 = vadd.f32 %v5932, %v6076
      %v6078 = vpop.f32.mrb[0].mxu0
      %6079 = vmatprep.mubr.f32.mxu0 %v445
      %6080 = vmatmul.mubr.f32.gmra.mrb[0].mxu0 %v444
      %v6081 = vpop.f32.mrb[0].mxu0
      %v6082 = vadd.f32 %v5937, %v6081
      %v6083 = vpop.f32.mrb[0].mxu0
      %6084 = vmatprep.mubr.f32.mxu0 %v518
      %6085 = vmatmul.mubr.f32.gmra.mrb[0].mxu0 %v517
      %v6086 = vpop.f32.mrb[0].mxu0
      %v6087 = vadd.f32 %v5942, %v6086
      %v6088 = vpop.f32.mrb[0].mxu0
      %6089 = vmatprep.mubr.f32.mxu0 %v591
      %6090 = vmatmul.mubr.f32.gmra.mrb[0].mxu0 %v590
      %v6091 = vpop.f32.mrb[0].mxu0
      %v6092 = vadd.f32 %v5947, %v6091
      %v6093 = vpop.f32.mrb[0].mxu0
      %6094 = vmatprep.mubr.f32.mxu0 %v664
      %6095 = vmatmul.mubr.f32.gmra.mrb[0].mxu0 %v663
      %v6096 = vpop.f32.mrb[0].mxu0
      %v6097 = vadd.f32 %v5952, %v6096
      %v6098 = vpop.f32.mrb[0].mxu0
      %6099 = vmatprep.mubr.f32.mxu0 %v737
      %6100 = vmatmul.mubr.f32.gmra.mrb[0].mxu0 %v736
      %v6101 = vpop.f32.mrb[0].mxu0
      %v6102 = vadd.f32 %v5957, %v6101
      %v6103 = vpop.f32.mrb[0].mxu0
      %6104 = vmatprep.mubr.f32.mxu0 %v810
      %6105 = vmatmul.mubr.f32.gmra.mrb[0].mxu0 %v809
      %v6106 = vpop.f32.mrb[0].mxu0
      %v6107 = vadd.f32 %v5962, %v6106
      %v6108 = vpop.f32.mrb[0].mxu0
      %6109 = vmatprep.mubr.f32.mxu0 %v883
      %6110 = vmatmul.mubr.f32.gmra.mrb[0].mxu0 %v882
      %v6111 = vpop.f32.mrb[0].mxu0
      %v6112 = vadd.f32 %v5967, %v6111
      %v6113 = vpop.f32.mrb[0].mxu0
      %6114 = vmatprep.mubr.f32.mxu0 %v956
      %6115 = vmatmul.mubr.f32.gmra.mrb[0].mxu0 %v955
      %v6116 = vpop.f32.mrb[0].mxu0
      %v6117 = vadd.f32 %v5972, %v6116
      %v6118 = vpop.f32.mrb[0].mxu0
      %6119 = vmatprep.mubr.f32.mxu0 %v1029
      %6120 = vmatmul.mubr.f32.gmra.mrb[0].mxu0 %v1028
      %v6121 = vpop.f32.mrb[0].mxu0
      %v6122 = vadd.f32 %v5977, %v6121
      %v6123 = vpop.f32.mrb[0].mxu0
      %6124 = vmatprep.mubr.f32.mxu0 %v1102
      %6125 = vmatmul.mubr.f32.gmra.mrb[0].mxu0 %v1101
      %v6126 = vpop.f32.mrb[0].mxu0
      %v6127 = vadd.f32 %v5982, %v6126
      %v6128 = vpop.f32.mrb[0].mxu0
      %6129 = vmatprep.mubr.f32.mxu0 %v1175
      %6130 = vmatmul.mubr.f32.gmra.mrb[0].mxu0 %v1174
      %v6131 = vpop.f32.mrb[0].mxu0
      %v6132 = vadd.f32 %v5987, %v6131
      %v6133 = vpop.f32.mrb[0].mxu0
      %6134 = vmatprep.mubr.f32.mxu0 %v1248
      %6135 = vmatmul.mubr.f32.gmra.mrb[0].mxu0 %v1247
      %v6136 = vpop.f32.mrb[0].mxu0
      %v6137 = vadd.f32 %v5992, %v6136
      %v6138 = vpop.f32.mrb[0].mxu0
      %6139 = vmatprep.mubr.f32.mxu0 %v1321
      %6140 = vmatmul.mubr.f32.gmra.mrb[0].mxu0 %v1320
      %v6141 = vpop.f32.mrb[0].mxu0
      %v6142 = vadd.f32 %v5997, %v6141
      %v6143 = vpop.f32.mrb[0].mxu0
      %6144 = vdwg.mxu0
      %6145 = vmatprep.subr.mxu0 0.0
      %6146 = vmatpush1.msra.mxu0 %v2145
      %6147 = vmatprep.subr.mxu0 0.0
      %6148 = vmatpush1.msra.mxu0 %v2146
      %6149 = vmatprep.subr.mxu0 0.0
      %6150 = vmatpush1.msra.mxu0 %v2147
      %6151 = vmatprep.subr.mxu0 0.0
      %6152 = vmatpush1.msra.mxu0 %v2148
      %6153 = vmatprep.subr.mxu0 0.0
      %6154 = vmatpush1.msra.mxu0 %v2149
      %6155 = vmatprep.subr.mxu0 0.0
      %6156 = vmatpush1.msra.mxu0 %v2150
      %6157 = vmatprep.subr.mxu0 0.0
      %6158 = vmatpush1.msra.mxu0 %v2151
      %6159 = vmatprep.subr.mxu0 0.0
      %6160 = vmatpush1.msra.mxu0 %v2152
      %6161 = vmatprep.subr.mxu0 0.0
      %6162 = vmatpush1.msra.mxu0 %v2153
      %6163 = vmatprep.subr.mxu0 0.0
      %6164 = vmatpush1.msra.mxu0 %v2154
      %6165 = vmatprep.subr.mxu0 0.0
      %6166 = vmatpush1.msra.mxu0 %v2155
      %6167 = vmatprep.subr.mxu0 0.0
      %6168 = vmatpush1.msra.mxu0 %v2156
      %6169 = vmatprep.subr.mxu0 0.0
      %6170 = vmatpush1.msra.mxu0 %v2157
      %6171 = vmatprep.subr.mxu0 0.0
      %6172 = vmatpush1.msra.mxu0 %v2158
      %6173 = vmatprep.subr.mxu0 0.0
      %6174 = vmatpush1.msra.mxu0 %v2159
      %6175 = vmatprep.subr.mxu0 0.0
      %6176 = vmatpush1.msra.mxu0 %v2160
      %6177 = vmatprep.subr.mxu0 0.0
      %6178 = vmatpush1.msra.mxu0 %v2161
      %6179 = vmatprep.subr.mxu0 0.0
      %6180 = vmatpush1.msra.mxu0 %v2162
      %6181 = vmatprep.subr.mxu0 0.0
      %6182 = vmatpush1.msra.mxu0 %v2163
      %6183 = vmatprep.subr.mxu0 0.0
      %6184 = vmatpush1.msra.mxu0 %v2164
      %6185 = vmatprep.subr.mxu0 0.0
      %6186 = vmatpush1.msra.mxu0 %v2165
      %6187 = vmatprep.subr.mxu0 0.0
      %6188 = vmatpush1.msra.mxu0 %v2166
      %6189 = vmatprep.subr.mxu0 0.0
      %6190 = vmatpush1.msra.mxu0 %v2167
      %6191 = vmatprep.subr.mxu0 0.0
      %6192 = vmatpush1.msra.mxu0 %v2168
      %6193 = vmatprep.subr.mxu0 0.0
      %6194 = vmatpush1.msra.mxu0 %v2169
      %6195 = vmatprep.subr.mxu0 0.0
      %6196 = vmatpush1.msra.mxu0 %v2170
      %6197 = vmatprep.subr.mxu0 0.0
      %6198 = vmatpush1.msra.mxu0 %v2171
      %6199 = vmatprep.subr.mxu0 0.0
      %6200 = vmatpush1.msra.mxu0 %v2172
      %6201 = vmatprep.subr.mxu0 0.0
      %6202 = vmatpush1.msra.mxu0 %v2173
      %6203 = vmatprep.subr.mxu0 0.0
      %6204 = vmatpush1.msra.mxu0 %v2174
      %6205 = vmatprep.subr.mxu0 0.0
      %6206 = vmatpush1.msra.mxu0 %v2175
      %6207 = vmatprep.subr.mxu0 0.0
      %6208 = vmatpush1.msra.mxu0 %v2176
      %6209 = vmatprep.mubr.f32.mxu0 %v228
      %6210 = vmatmul.mubr.f32.gmra.mrb[0].mxu0 %v227
      %v6211 = vpop.f32.mrb[0].mxu0
      %v6212 = vadd.f32 %v6067, %v6211
      %v6213 = vpop.f32.mrb[0].mxu0
      %6214 = vmatprep.mubr.f32.mxu0 %v301
      %6215 = vmatmul.mubr.f32.gmra.mrb[0].mxu0 %v300
      %v6216 = vpop.f32.mrb[0].mxu0
      %v6217 = vadd.f32 %v6072, %v6216
      %v6218 = vpop.f32.mrb[0].mxu0
      %6219 = vmatprep.mubr.f32.mxu0 %v374
      %6220 = vmatmul.mubr.f32.gmra.mrb[0].mxu0 %v373
      %v6221 = vpop.f32.mrb[0].mxu0
      %v6222 = vadd.f32 %v6077, %v6221
      %v6223 = vpop.f32.mrb[0].mxu0
      %6224 = vmatprep.mubr.f32.mxu0 %v447
      %6225 = vmatmul.mubr.f32.gmra.mrb[0].mxu0 %v446
      %v6226 = vpop.f32.mrb[0].mxu0
      %v6227 = vadd.f32 %v6082, %v6226
      %v6228 = vpop.f32.mrb[0].mxu0
      %6229 = vmatprep.mubr.f32.mxu0 %v520
      %6230 = vmatmul.mubr.f32.gmra.mrb[0].mxu0 %v519
      %v6231 = vpop.f32.mrb[0].mxu0
      %v6232 = vadd.f32 %v6087, %v6231
      %v6233 = vpop.f32.mrb[0].mxu0
      %6234 = vmatprep.mubr.f32.mxu0 %v593
      %6235 = vmatmul.mubr.f32.gmra.mrb[0].mxu0 %v592
      %v6236 = vpop.f32.mrb[0].mxu0
      %v6237 = vadd.f32 %v6092, %v6236
      %v6238 = vpop.f32.mrb[0].mxu0
      %6239 = vmatprep.mubr.f32.mxu0 %v666
      %6240 = vmatmul.mubr.f32.gmra.mrb[0].mxu0 %v665
      %v6241 = vpop.f32.mrb[0].mxu0
      %v6242 = vadd.f32 %v6097, %v6241
      %v6243 = vpop.f32.mrb[0].mxu0
      %6244 = vmatprep.mubr.f32.mxu0 %v739
      %6245 = vmatmul.mubr.f32.gmra.mrb[0].mxu0 %v738
      %v6246 = vpop.f32.mrb[0].mxu0
      %v6247 = vadd.f32 %v6102, %v6246
      %v6248 = vpop.f32.mrb[0].mxu0
      %6249 = vmatprep.mubr.f32.mxu0 %v812
      %6250 = vmatmul.mubr.f32.gmra.mrb[0].mxu0 %v811
      %v6251 = vpop.f32.mrb[0].mxu0
      %v6252 = vadd.f32 %v6107, %v6251
      %v6253 = vpop.f32.mrb[0].mxu0
      %6254 = vmatprep.mubr.f32.mxu0 %v885
      %6255 = vmatmul.mubr.f32.gmra.mrb[0].mxu0 %v884
      %v6256 = vpop.f32.mrb[0].mxu0
      %v6257 = vadd.f32 %v6112, %v6256
      %v6258 = vpop.f32.mrb[0].mxu0
      %6259 = vmatprep.mubr.f32.mxu0 %v958
      %6260 = vmatmul.mubr.f32.gmra.mrb[0].mxu0 %v957
      %v6261 = vpop.f32.mrb[0].mxu0
      %v6262 = vadd.f32 %v6117, %v6261
      %v6263 = vpop.f32.mrb[0].mxu0
      %6264 = vmatprep.mubr.f32.mxu0 %v1031
      %6265 = vmatmul.mubr.f32.gmra.mrb[0].mxu0 %v1030
      %v6266 = vpop.f32.mrb[0].mxu0
      %v6267 = vadd.f32 %v6122, %v6266
      %v6268 = vpop.f32.mrb[0].mxu0
      %6269 = vmatprep.mubr.f32.mxu0 %v1104
      %6270 = vmatmul.mubr.f32.gmra.mrb[0].mxu0 %v1103
      %v6271 = vpop.f32.mrb[0].mxu0
      %v6272 = vadd.f32 %v6127, %v6271
      %v6273 = vpop.f32.mrb[0].mxu0
      %6274 = vmatprep.mubr.f32.mxu0 %v1177
      %6275 = vmatmul.mubr.f32.gmra.mrb[0].mxu0 %v1176
      %v6276 = vpop.f32.mrb[0].mxu0
      %v6277 = vadd.f32 %v6132, %v6276
      %v6278 = vpop.f32.mrb[0].mxu0
      %6279 = vmatprep.mubr.f32.mxu0 %v1250
      %6280 = vmatmul.mubr.f32.gmra.mrb[0].mxu0 %v1249
      %v6281 = vpop.f32.mrb[0].mxu0
      %v6282 = vadd.f32 %v6137, %v6281
      %v6283 = vpop.f32.mrb[0].mxu0
      %6284 = vmatprep.mubr.f32.mxu0 %v1323
      %6285 = vmatmul.mubr.f32.gmra.mrb[0].mxu0 %v1322
      %v6286 = vpop.f32.mrb[0].mxu0
      %v6287 = vadd.f32 %v6142, %v6286
      %v6288 = vpop.f32.mrb[0].mxu0
      %6289 = vdwg.mxu0
      %6290 = vmatprep.subr.mxu0 0.0
      %6291 = vmatpush1.msra.mxu0 %v2177
      %6292 = vmatprep.subr.mxu0 0.0
      %6293 = vmatpush1.msra.mxu0 %v2178
      %6294 = vmatprep.subr.mxu0 0.0
      %6295 = vmatpush1.msra.mxu0 %v2179
      %6296 = vmatprep.subr.mxu0 0.0
      %6297 = vmatpush1.msra.mxu0 %v2180
      %6298 = vmatprep.subr.mxu0 0.0
      %6299 = vmatpush1.msra.mxu0 %v2181
      %6300 = vmatprep.subr.mxu0 0.0
      %6301 = vmatpush1.msra.mxu0 %v2182
      %6302 = vmatprep.subr.mxu0 0.0
      %6303 = vmatpush1.msra.mxu0 %v2183
      %6304 = vmatprep.subr.mxu0 0.0
      %6305 = vmatpush1.msra.mxu0 %v2184
      %6306 = vmatprep.subr.mxu0 0.0
      %6307 = vmatpush1.msra.mxu0 %v2185
      %6308 = vmatprep.subr.mxu0 0.0
      %6309 = vmatpush1.msra.mxu0 %v2186
      %6310 = vmatprep.subr.mxu0 0.0
      %6311 = vmatpush1.msra.mxu0 %v2187
      %6312 = vmatprep.subr.mxu0 0.0
      %6313 = vmatpush1.msra.mxu0 %v2188
      %6314 = vmatprep.subr.mxu0 0.0
      %6315 = vmatpush1.msra.mxu0 %v2189
      %6316 = vmatprep.subr.mxu0 0.0
      %6317 = vmatpush1.msra.mxu0 %v2190
      %6318 = vmatprep.subr.mxu0 0.0
      %6319 = vmatpush1.msra.mxu0 %v2191
      %6320 = vmatprep.subr.mxu0 0.0
      %6321 = vmatpush1.msra.mxu0 %v2192
      %6322 = vmatprep.subr.mxu0 0.0
      %6323 = vmatpush1.msra.mxu0 %v2193
      %6324 = vmatprep.subr.mxu0 0.0
      %6325 = vmatpush1.msra.mxu0 %v2194
      %6326 = vmatprep.subr.mxu0 0.0
      %6327 = vmatpush1.msra.mxu0 %v2195
      %6328 = vmatprep.subr.mxu0 0.0
      %6329 = vmatpush1.msra.mxu0 %v2196
      %6330 = vmatprep.subr.mxu0 0.0
      %6331 = vmatpush1.msra.mxu0 %v2197
      %6332 = vmatprep.subr.mxu0 0.0
      %6333 = vmatpush1.msra.mxu0 %v2198
      %6334 = vmatprep.subr.mxu0 0.0
      %6335 = vmatpush1.msra.mxu0 %v2199
      %6336 = vmatprep.subr.mxu0 0.0
      %6337 = vmatpush1.msra.mxu0 %v2200
      %6338 = vmatprep.subr.mxu0 0.0
      %6339 = vmatpush1.msra.mxu0 %v2201
      %6340 = vmatprep.subr.mxu0 0.0
      %6341 = vmatpush1.msra.mxu0 %v2202
      %6342 = vmatprep.subr.mxu0 0.0
      %6343 = vmatpush1.msra.mxu0 %v2203
      %6344 = vmatprep.subr.mxu0 0.0
      %6345 = vmatpush1.msra.mxu0 %v2204
      %6346 = vmatprep.subr.mxu0 0.0
      %6347 = vmatpush1.msra.mxu0 %v2205
      %6348 = vmatprep.subr.mxu0 0.0
      %6349 = vmatpush1.msra.mxu0 %v2206
      %6350 = vmatprep.subr.mxu0 0.0
      %6351 = vmatpush1.msra.mxu0 %v2207
      %6352 = vmatprep.subr.mxu0 0.0
      %6353 = vmatpush1.msra.mxu0 %v2208
      %6354 = vmatprep.mubr.f32.mxu0 %v230
      %6355 = vmatmul.mubr.f32.gmra.mrb[0].mxu0 %v229
      %v6356 = vpop.f32.mrb[0].mxu0
      %v6357 = vadd.f32 %v6212, %v6356
      %v6358 = vpop.f32.mrb[0].mxu0
      %6359 = vmatprep.mubr.f32.mxu0 %v303
      %6360 = vmatmul.mubr.f32.gmra.mrb[0].mxu0 %v302
      %v6361 = vpop.f32.mrb[0].mxu0
      %v6362 = vadd.f32 %v6217, %v6361
      %v6363 = vpop.f32.mrb[0].mxu0
      %6364 = vmatprep.mubr.f32.mxu0 %v376
      %6365 = vmatmul.mubr.f32.gmra.mrb[0].mxu0 %v375
      %v6366 = vpop.f32.mrb[0].mxu0
      %v6367 = vadd.f32 %v6222, %v6366
      %v6368 = vpop.f32.mrb[0].mxu0
      %6369 = vmatprep.mubr.f32.mxu0 %v449
      %6370 = vmatmul.mubr.f32.gmra.mrb[0].mxu0 %v448
      %v6371 = vpop.f32.mrb[0].mxu0
      %v6372 = vadd.f32 %v6227, %v6371
      %v6373 = vpop.f32.mrb[0].mxu0
      %6374 = vmatprep.mubr.f32.mxu0 %v522
      %6375 = vmatmul.mubr.f32.gmra.mrb[0].mxu0 %v521
      %v6376 = vpop.f32.mrb[0].mxu0
      %v6377 = vadd.f32 %v6232, %v6376
      %v6378 = vpop.f32.mrb[0].mxu0
      %6379 = vmatprep.mubr.f32.mxu0 %v595
      %6380 = vmatmul.mubr.f32.gmra.mrb[0].mxu0 %v594
      %v6381 = vpop.f32.mrb[0].mxu0
      %v6382 = vadd.f32 %v6237, %v6381
      %v6383 = vpop.f32.mrb[0].mxu0
      %6384 = vmatprep.mubr.f32.mxu0 %v668
      %6385 = vmatmul.mubr.f32.gmra.mrb[0].mxu0 %v667
      %v6386 = vpop.f32.mrb[0].mxu0
      %v6387 = vadd.f32 %v6242, %v6386
      %v6388 = vpop.f32.mrb[0].mxu0
      %6389 = vmatprep.mubr.f32.mxu0 %v741
      %6390 = vmatmul.mubr.f32.gmra.mrb[0].mxu0 %v740
      %v6391 = vpop.f32.mrb[0].mxu0
      %v6392 = vadd.f32 %v6247, %v6391
      %v6393 = vpop.f32.mrb[0].mxu0
      %6394 = vmatprep.mubr.f32.mxu0 %v814
      %6395 = vmatmul.mubr.f32.gmra.mrb[0].mxu0 %v813
      %v6396 = vpop.f32.mrb[0].mxu0
      %v6397 = vadd.f32 %v6252, %v6396
      %v6398 = vpop.f32.mrb[0].mxu0
      %6399 = vmatprep.mubr.f32.mxu0 %v887
      %6400 = vmatmul.mubr.f32.gmra.mrb[0].mxu0 %v886
      %v6401 = vpop.f32.mrb[0].mxu0
      %v6402 = vadd.f32 %v6257, %v6401
      %v6403 = vpop.f32.mrb[0].mxu0
      %6404 = vmatprep.mubr.f32.mxu0 %v960
      %6405 = vmatmul.mubr.f32.gmra.mrb[0].mxu0 %v959
      %v6406 = vpop.f32.mrb[0].mxu0
      %v6407 = vadd.f32 %v6262, %v6406
      %v6408 = vpop.f32.mrb[0].mxu0
      %6409 = vmatprep.mubr.f32.mxu0 %v1033
      %6410 = vmatmul.mubr.f32.gmra.mrb[0].mxu0 %v1032
      %v6411 = vpop.f32.mrb[0].mxu0
      %v6412 = vadd.f32 %v6267, %v6411
      %v6413 = vpop.f32.mrb[0].mxu0
      %6414 = vmatprep.mubr.f32.mxu0 %v1106
      %6415 = vmatmul.mubr.f32.gmra.mrb[0].mxu0 %v1105
      %v6416 = vpop.f32.mrb[0].mxu0
      %v6417 = vadd.f32 %v6272, %v6416
      %v6418 = vpop.f32.mrb[0].mxu0
      %6419 = vmatprep.mubr.f32.mxu0 %v1179
      %6420 = vmatmul.mubr.f32.gmra.mrb[0].mxu0 %v1178
      %v6421 = vpop.f32.mrb[0].mxu0
      %v6422 = vadd.f32 %v6277, %v6421
      %v6423 = vpop.f32.mrb[0].mxu0
      %6424 = vmatprep.mubr.f32.mxu0 %v1252
      %6425 = vmatmul.mubr.f32.gmra.mrb[0].mxu0 %v1251
      %v6426 = vpop.f32.mrb[0].mxu0
      %v6427 = vadd.f32 %v6282, %v6426
      %v6428 = vpop.f32.mrb[0].mxu0
      %6429 = vmatprep.mubr.f32.mxu0 %v1325
      %6430 = vmatmul.mubr.f32.gmra.mrb[0].mxu0 %v1324
      %v6431 = vpop.f32.mrb[0].mxu0
      %v6432 = vadd.f32 %v6287, %v6431
      %v6433 = vpop.f32.mrb[0].mxu0
      %6434 = vdwg.mxu0
      %6435 = vmatprep.subr.mxu0 0.0
      %6436 = vmatpush1.msra.mxu0 %v2209
      %6437 = vmatprep.subr.mxu0 0.0
      %6438 = vmatpush1.msra.mxu0 %v2210
      %6439 = vmatprep.subr.mxu0 0.0
      %6440 = vmatpush1.msra.mxu0 %v2211
      %6441 = vmatprep.subr.mxu0 0.0
      %6442 = vmatpush1.msra.mxu0 %v2212
      %6443 = vmatprep.subr.mxu0 0.0
      %6444 = vmatpush1.msra.mxu0 %v2213
      %6445 = vmatprep.subr.mxu0 0.0
      %6446 = vmatpush1.msra.mxu0 %v2214
      %6447 = vmatprep.subr.mxu0 0.0
      %6448 = vmatpush1.msra.mxu0 %v2215
      %6449 = vmatprep.subr.mxu0 0.0
      %6450 = vmatpush1.msra.mxu0 %v2216
      %6451 = vmatprep.subr.mxu0 0.0
      %6452 = vmatpush1.msra.mxu0 %v2217
      %6453 = vmatprep.subr.mxu0 0.0
      %6454 = vmatpush1.msra.mxu0 %v2218
      %6455 = vmatprep.subr.mxu0 0.0
      %6456 = vmatpush1.msra.mxu0 %v2219
      %6457 = vmatprep.subr.mxu0 0.0
      %6458 = vmatpush1.msra.mxu0 %v2220
      %6459 = vmatprep.subr.mxu0 0.0
      %6460 = vmatpush1.msra.mxu0 %v2221
      %6461 = vmatprep.subr.mxu0 0.0
      %6462 = vmatpush1.msra.mxu0 %v2222
      %6463 = vmatprep.subr.mxu0 0.0
      %6464 = vmatpush1.msra.mxu0 %v2223
      %6465 = vmatprep.subr.mxu0 0.0
      %6466 = vmatpush1.msra.mxu0 %v2224
      %6467 = vmatprep.subr.mxu0 0.0
      %6468 = vmatpush1.msra.mxu0 %v2225
      %6469 = vmatprep.subr.mxu0 0.0
      %6470 = vmatpush1.msra.mxu0 %v2226
      %6471 = vmatprep.subr.mxu0 0.0
      %6472 = vmatpush1.msra.mxu0 %v2227
      %6473 = vmatprep.subr.mxu0 0.0
      %6474 = vmatpush1.msra.mxu0 %v2228
      %6475 = vmatprep.subr.mxu0 0.0
      %6476 = vmatpush1.msra.mxu0 %v2229
      %6477 = vmatprep.subr.mxu0 0.0
      %6478 = vmatpush1.msra.mxu0 %v2230
      %6479 = vmatprep.subr.mxu0 0.0
      %6480 = vmatpush1.msra.mxu0 %v2231
      %6481 = vmatprep.subr.mxu0 0.0
      %6482 = vmatpush1.msra.mxu0 %v2232
      %6483 = vmatprep.subr.mxu0 0.0
      %6484 = vmatpush1.msra.mxu0 %v2233
      %6485 = vmatprep.subr.mxu0 0.0
      %6486 = vmatpush1.msra.mxu0 %v2234
      %6487 = vmatprep.subr.mxu0 0.0
      %6488 = vmatpush1.msra.mxu0 %v2235
      %6489 = vmatprep.subr.mxu0 0.0
      %6490 = vmatpush1.msra.mxu0 %v2236
      %6491 = vmatprep.subr.mxu0 0.0
      %6492 = vmatpush1.msra.mxu0 %v2237
      %6493 = vmatprep.subr.mxu0 0.0
      %6494 = vmatpush1.msra.mxu0 %v2238
      %6495 = vmatprep.subr.mxu0 0.0
      %6496 = vmatpush1.msra.mxu0 %v2239
      %6497 = vmatprep.subr.mxu0 0.0
      %6498 = vmatpush1.msra.mxu0 %v2240
      %6499 = vmatprep.mubr.f32.mxu0 %v232
      %6500 = vmatmul.mubr.f32.gmra.mrb[0].mxu0 %v231
      %v6501 = vpop.f32.mrb[0].mxu0
      %v6502 = vadd.f32 %v6357, %v6501
      %v6503 = vpop.f32.mrb[0].mxu0
      %6504 = vmatprep.mubr.f32.mxu0 %v305
      %6505 = vmatmul.mubr.f32.gmra.mrb[0].mxu0 %v304
      %v6506 = vpop.f32.mrb[0].mxu0
      %v6507 = vadd.f32 %v6362, %v6506
      %v6508 = vpop.f32.mrb[0].mxu0
      %6509 = vmatprep.mubr.f32.mxu0 %v378
      %6510 = vmatmul.mubr.f32.gmra.mrb[0].mxu0 %v377
      %v6511 = vpop.f32.mrb[0].mxu0
      %v6512 = vadd.f32 %v6367, %v6511
      %v6513 = vpop.f32.mrb[0].mxu0
      %6514 = vmatprep.mubr.f32.mxu0 %v451
      %6515 = vmatmul.mubr.f32.gmra.mrb[0].mxu0 %v450
      %v6516 = vpop.f32.mrb[0].mxu0
      %v6517 = vadd.f32 %v6372, %v6516
      %v6518 = vpop.f32.mrb[0].mxu0
      %6519 = vmatprep.mubr.f32.mxu0 %v524
      %6520 = vmatmul.mubr.f32.gmra.mrb[0].mxu0 %v523
      %v6521 = vpop.f32.mrb[0].mxu0
      %v6522 = vadd.f32 %v6377, %v6521
      %v6523 = vpop.f32.mrb[0].mxu0
      %6524 = vmatprep.mubr.f32.mxu0 %v597
      %6525 = vmatmul.mubr.f32.gmra.mrb[0].mxu0 %v596
      %v6526 = vpop.f32.mrb[0].mxu0
      %v6527 = vadd.f32 %v6382, %v6526
      %v6528 = vpop.f32.mrb[0].mxu0
      %6529 = vmatprep.mubr.f32.mxu0 %v670
      %6530 = vmatmul.mubr.f32.gmra.mrb[0].mxu0 %v669
      %v6531 = vpop.f32.mrb[0].mxu0
      %v6532 = vadd.f32 %v6387, %v6531
      %v6533 = vpop.f32.mrb[0].mxu0
      %6534 = vmatprep.mubr.f32.mxu0 %v743
      %6535 = vmatmul.mubr.f32.gmra.mrb[0].mxu0 %v742
      %v6536 = vpop.f32.mrb[0].mxu0
      %v6537 = vadd.f32 %v6392, %v6536
      %v6538 = vpop.f32.mrb[0].mxu0
      %6539 = vmatprep.mubr.f32.mxu0 %v816
      %6540 = vmatmul.mubr.f32.gmra.mrb[0].mxu0 %v815
      %v6541 = vpop.f32.mrb[0].mxu0
      %v6542 = vadd.f32 %v6397, %v6541
      %v6543 = vpop.f32.mrb[0].mxu0
      %6544 = vmatprep.mubr.f32.mxu0 %v889
      %6545 = vmatmul.mubr.f32.gmra.mrb[0].mxu0 %v888
      %v6546 = vpop.f32.mrb[0].mxu0
      %v6547 = vadd.f32 %v6402, %v6546
      %v6548 = vpop.f32.mrb[0].mxu0
      %6549 = vmatprep.mubr.f32.mxu0 %v962
      %6550 = vmatmul.mubr.f32.gmra.mrb[0].mxu0 %v961
      %v6551 = vpop.f32.mrb[0].mxu0
      %v6552 = vadd.f32 %v6407, %v6551
      %v6553 = vpop.f32.mrb[0].mxu0
      %6554 = vmatprep.mubr.f32.mxu0 %v1035
      %6555 = vmatmul.mubr.f32.gmra.mrb[0].mxu0 %v1034
      %v6556 = vpop.f32.mrb[0].mxu0
      %v6557 = vadd.f32 %v6412, %v6556
      %v6558 = vpop.f32.mrb[0].mxu0
      %6559 = vmatprep.mubr.f32.mxu0 %v1108
      %6560 = vmatmul.mubr.f32.gmra.mrb[0].mxu0 %v1107
      %v6561 = vpop.f32.mrb[0].mxu0
      %v6562 = vadd.f32 %v6417, %v6561
      %v6563 = vpop.f32.mrb[0].mxu0
      %6564 = vmatprep.mubr.f32.mxu0 %v1181
      %6565 = vmatmul.mubr.f32.gmra.mrb[0].mxu0 %v1180
      %v6566 = vpop.f32.mrb[0].mxu0
      %v6567 = vadd.f32 %v6422, %v6566
      %v6568 = vpop.f32.mrb[0].mxu0
      %6569 = vmatprep.mubr.f32.mxu0 %v1254
      %6570 = vmatmul.mubr.f32.gmra.mrb[0].mxu0 %v1253
      %v6571 = vpop.f32.mrb[0].mxu0
      %v6572 = vadd.f32 %v6427, %v6571
      %v6573 = vpop.f32.mrb[0].mxu0
      %6574 = vmatprep.mubr.f32.mxu0 %v1327
      %6575 = vmatmul.mubr.f32.gmra.mrb[0].mxu0 %v1326
      %v6576 = vpop.f32.mrb[0].mxu0
      %v6577 = vadd.f32 %v6432, %v6576
      %v6578 = vpop.f32.mrb[0].mxu0
      %6579 = vdwg.mxu0
      %6580 = vmatprep.subr.mxu0 0.0
      %6581 = vmatpush1.msra.mxu0 %v2241
      %6582 = vmatprep.subr.mxu0 0.0
      %6583 = vmatpush1.msra.mxu0 %v2242
      %6584 = vmatprep.subr.mxu0 0.0
      %6585 = vmatpush1.msra.mxu0 %v2243
      %6586 = vmatprep.subr.mxu0 0.0
      %6587 = vmatpush1.msra.mxu0 %v2244
      %6588 = vmatprep.subr.mxu0 0.0
      %6589 = vmatpush1.msra.mxu0 %v2245
      %6590 = vmatprep.subr.mxu0 0.0
      %6591 = vmatpush1.msra.mxu0 %v2246
      %6592 = vmatprep.subr.mxu0 0.0
      %6593 = vmatpush1.msra.mxu0 %v2247
      %6594 = vmatprep.subr.mxu0 0.0
      %6595 = vmatpush1.msra.mxu0 %v2248
      %6596 = vmatprep.subr.mxu0 0.0
      %6597 = vmatpush1.msra.mxu0 %v2249
      %6598 = vmatprep.subr.mxu0 0.0
      %6599 = vmatpush1.msra.mxu0 %v2250
      %6600 = vmatprep.subr.mxu0 0.0
      %6601 = vmatpush1.msra.mxu0 %v2251
      %6602 = vmatprep.subr.mxu0 0.0
      %6603 = vmatpush1.msra.mxu0 %v2252
      %6604 = vmatprep.subr.mxu0 0.0
      %6605 = vmatpush1.msra.mxu0 %v2253
      %6606 = vmatprep.subr.mxu0 0.0
      %6607 = vmatpush1.msra.mxu0 %v2254
      %6608 = vmatprep.subr.mxu0 0.0
      %6609 = vmatpush1.msra.mxu0 %v2255
      %6610 = vmatprep.subr.mxu0 0.0
      %6611 = vmatpush1.msra.mxu0 %v2256
      %6612 = vmatprep.subr.mxu0 0.0
      %6613 = vmatpush1.msra.mxu0 %v2257
      %6614 = vmatprep.subr.mxu0 0.0
      %6615 = vmatpush1.msra.mxu0 %v2258
      %6616 = vmatprep.subr.mxu0 0.0
      %6617 = vmatpush1.msra.mxu0 %v2259
      %6618 = vmatprep.subr.mxu0 0.0
      %6619 = vmatpush1.msra.mxu0 %v2260
      %6620 = vmatprep.subr.mxu0 0.0
      %6621 = vmatpush1.msra.mxu0 %v2261
      %6622 = vmatprep.subr.mxu0 0.0
      %6623 = vmatpush1.msra.mxu0 %v2262
      %6624 = vmatprep.subr.mxu0 0.0
      %6625 = vmatpush1.msra.mxu0 %v2263
      %6626 = vmatprep.subr.mxu0 0.0
      %6627 = vmatpush1.msra.mxu0 %v2264
      %6628 = vmatprep.subr.mxu0 0.0
      %6629 = vmatpush1.msra.mxu0 %v2265
      %6630 = vmatprep.subr.mxu0 0.0
      %6631 = vmatpush1.msra.mxu0 %v2266
      %6632 = vmatprep.subr.mxu0 0.0
      %6633 = vmatpush1.msra.mxu0 %v2267
      %6634 = vmatprep.subr.mxu0 0.0
      %6635 = vmatpush1.msra.mxu0 %v2268
      %6636 = vmatprep.subr.mxu0 0.0
      %6637 = vmatpush1.msra.mxu0 %v2269
      %6638 = vmatprep.subr.mxu0 0.0
      %6639 = vmatpush1.msra.mxu0 %v2270
      %6640 = vmatprep.subr.mxu0 0.0
      %6641 = vmatpush1.msra.mxu0 %v2271
      %6642 = vmatprep.subr.mxu0 0.0
      %6643 = vmatpush1.msra.mxu0 %v2272
      %6644 = vmatprep.mubr.f32.mxu0 %v234
      %6645 = vmatmul.mubr.f32.gmra.mrb[0].mxu0 %v233
      %v6646 = vpop.f32.mrb[0].mxu0
      %v6647 = vadd.f32 %v6502, %v6646
      %v6648 = vpop.f32.mrb[0].mxu0
      %6649 = vmatprep.mubr.f32.mxu0 %v307
      %6650 = vmatmul.mubr.f32.gmra.mrb[0].mxu0 %v306
      %v6651 = vpop.f32.mrb[0].mxu0
      %v6652 = vadd.f32 %v6507, %v6651
      %v6653 = vpop.f32.mrb[0].mxu0
      %6654 = vmatprep.mubr.f32.mxu0 %v380
      %6655 = vmatmul.mubr.f32.gmra.mrb[0].mxu0 %v379
      %v6656 = vpop.f32.mrb[0].mxu0
      %v6657 = vadd.f32 %v6512, %v6656
      %v6658 = vpop.f32.mrb[0].mxu0
      %6659 = vmatprep.mubr.f32.mxu0 %v453
      %6660 = vmatmul.mubr.f32.gmra.mrb[0].mxu0 %v452
      %v6661 = vpop.f32.mrb[0].mxu0
      %v6662 = vadd.f32 %v6517, %v6661
      %v6663 = vpop.f32.mrb[0].mxu0
      %6664 = vmatprep.mubr.f32.mxu0 %v526
      %6665 = vmatmul.mubr.f32.gmra.mrb[0].mxu0 %v525
      %v6666 = vpop.f32.mrb[0].mxu0
      %v6667 = vadd.f32 %v6522, %v6666
      %v6668 = vpop.f32.mrb[0].mxu0
      %6669 = vmatprep.mubr.f32.mxu0 %v599
      %6670 = vmatmul.mubr.f32.gmra.mrb[0].mxu0 %v598
      %v6671 = vpop.f32.mrb[0].mxu0
      %v6672 = vadd.f32 %v6527, %v6671
      %v6673 = vpop.f32.mrb[0].mxu0
      %6674 = vmatprep.mubr.f32.mxu0 %v672
      %6675 = vmatmul.mubr.f32.gmra.mrb[0].mxu0 %v671
      %v6676 = vpop.f32.mrb[0].mxu0
      %v6677 = vadd.f32 %v6532, %v6676
      %v6678 = vpop.f32.mrb[0].mxu0
      %6679 = vmatprep.mubr.f32.mxu0 %v745
      %6680 = vmatmul.mubr.f32.gmra.mrb[0].mxu0 %v744
      %v6681 = vpop.f32.mrb[0].mxu0
      %v6682 = vadd.f32 %v6537, %v6681
      %v6683 = vpop.f32.mrb[0].mxu0
      %6684 = vmatprep.mubr.f32.mxu0 %v818
      %6685 = vmatmul.mubr.f32.gmra.mrb[0].mxu0 %v817
      %v6686 = vpop.f32.mrb[0].mxu0
      %v6687 = vadd.f32 %v6542, %v6686
      %v6688 = vpop.f32.mrb[0].mxu0
      %6689 = vmatprep.mubr.f32.mxu0 %v891
      %6690 = vmatmul.mubr.f32.gmra.mrb[0].mxu0 %v890
      %v6691 = vpop.f32.mrb[0].mxu0
      %v6692 = vadd.f32 %v6547, %v6691
      %v6693 = vpop.f32.mrb[0].mxu0
      %6694 = vmatprep.mubr.f32.mxu0 %v964
      %6695 = vmatmul.mubr.f32.gmra.mrb[0].mxu0 %v963
      %v6696 = vpop.f32.mrb[0].mxu0
      %v6697 = vadd.f32 %v6552, %v6696
      %v6698 = vpop.f32.mrb[0].mxu0
      %6699 = vmatprep.mubr.f32.mxu0 %v1037
      %6700 = vmatmul.mubr.f32.gmra.mrb[0].mxu0 %v1036
      %v6701 = vpop.f32.mrb[0].mxu0
      %v6702 = vadd.f32 %v6557, %v6701
      %v6703 = vpop.f32.mrb[0].mxu0
      %6704 = vmatprep.mubr.f32.mxu0 %v1110
      %6705 = vmatmul.mubr.f32.gmra.mrb[0].mxu0 %v1109
      %v6706 = vpop.f32.mrb[0].mxu0
      %v6707 = vadd.f32 %v6562, %v6706
      %v6708 = vpop.f32.mrb[0].mxu0
      %6709 = vmatprep.mubr.f32.mxu0 %v1183
      %6710 = vmatmul.mubr.f32.gmra.mrb[0].mxu0 %v1182
      %v6711 = vpop.f32.mrb[0].mxu0
      %v6712 = vadd.f32 %v6567, %v6711
      %v6713 = vpop.f32.mrb[0].mxu0
      %6714 = vmatprep.mubr.f32.mxu0 %v1256
      %6715 = vmatmul.mubr.f32.gmra.mrb[0].mxu0 %v1255
      %v6716 = vpop.f32.mrb[0].mxu0
      %v6717 = vadd.f32 %v6572, %v6716
      %v6718 = vpop.f32.mrb[0].mxu0
      %6719 = vmatprep.mubr.f32.mxu0 %v1329
      %6720 = vmatmul.mubr.f32.gmra.mrb[0].mxu0 %v1328
      %v6721 = vpop.f32.mrb[0].mxu0
      %v6722 = vadd.f32 %v6577, %v6721
      %v6723 = vpop.f32.mrb[0].mxu0
      %6724 = vdwg.mxu0
      %6725 = vmatprep.subr.mxu0 0.0
      %6726 = vmatpush1.msra.mxu0 %v2273
      %6727 = vmatprep.subr.mxu0 0.0
      %6728 = vmatpush1.msra.mxu0 %v2274
      %6729 = vmatprep.subr.mxu0 0.0
      %6730 = vmatpush1.msra.mxu0 %v2275
      %6731 = vmatprep.subr.mxu0 0.0
      %6732 = vmatpush1.msra.mxu0 %v2276
      %6733 = vmatprep.subr.mxu0 0.0
      %6734 = vmatpush1.msra.mxu0 %v2277
      %6735 = vmatprep.subr.mxu0 0.0
      %6736 = vmatpush1.msra.mxu0 %v2278
      %6737 = vmatprep.subr.mxu0 0.0
      %6738 = vmatpush1.msra.mxu0 %v2279
      %6739 = vmatprep.subr.mxu0 0.0
      %6740 = vmatpush1.msra.mxu0 %v2280
      %6741 = vmatprep.subr.mxu0 0.0
      %6742 = vmatpush1.msra.mxu0 %v2281
      %6743 = vmatprep.subr.mxu0 0.0
      %6744 = vmatpush1.msra.mxu0 %v2282
      %6745 = vmatprep.subr.mxu0 0.0
      %6746 = vmatpush1.msra.mxu0 %v2283
      %6747 = vmatprep.subr.mxu0 0.0
      %6748 = vmatpush1.msra.mxu0 %v2284
      %6749 = vmatprep.subr.mxu0 0.0
      %6750 = vmatpush1.msra.mxu0 %v2285
      %6751 = vmatprep.subr.mxu0 0.0
      %6752 = vmatpush1.msra.mxu0 %v2286
      %6753 = vmatprep.subr.mxu0 0.0
      %6754 = vmatpush1.msra.mxu0 %v2287
      %6755 = vmatprep.subr.mxu0 0.0
      %6756 = vmatpush1.msra.mxu0 %v2288
      %6757 = vmatprep.subr.mxu0 0.0
      %6758 = vmatpush1.msra.mxu0 %v2289
      %6759 = vmatprep.subr.mxu0 0.0
      %6760 = vmatpush1.msra.mxu0 %v2290
      %6761 = vmatprep.subr.mxu0 0.0
      %6762 = vmatpush1.msra.mxu0 %v2291
      %6763 = vmatprep.subr.mxu0 0.0
      %6764 = vmatpush1.msra.mxu0 %v2292
      %6765 = vmatprep.subr.mxu0 0.0
      %6766 = vmatpush1.msra.mxu0 %v2293
      %6767 = vmatprep.subr.mxu0 0.0
      %6768 = vmatpush1.msra.mxu0 %v2294
      %6769 = vmatprep.subr.mxu0 0.0
      %6770 = vmatpush1.msra.mxu0 %v2295
      %6771 = vmatprep.subr.mxu0 0.0
      %6772 = vmatpush1.msra.mxu0 %v2296
      %6773 = vmatprep.subr.mxu0 0.0
      %6774 = vmatpush1.msra.mxu0 %v2297
      %6775 = vmatprep.subr.mxu0 0.0
      %6776 = vmatpush1.msra.mxu0 %v2298
      %6777 = vmatprep.subr.mxu0 0.0
      %6778 = vmatpush1.msra.mxu0 %v2299
      %6779 = vmatprep.subr.mxu0 0.0
      %6780 = vmatpush1.msra.mxu0 %v2300
      %6781 = vmatprep.subr.mxu0 0.0
      %6782 = vmatpush1.msra.mxu0 %v2301
      %6783 = vmatprep.subr.mxu0 0.0
      %6784 = vmatpush1.msra.mxu0 %v2302
      %6785 = vmatprep.subr.mxu0 0.0
      %6786 = vmatpush1.msra.mxu0 %v2303
      %6787 = vmatprep.subr.mxu0 0.0
      %6788 = vmatpush1.msra.mxu0 %v2304
      %6789 = vmatprep.mubr.f32.mxu0 %v236
      %6790 = vmatmul.mubr.f32.gmra.mrb[0].mxu0 %v235
      %v6791 = vpop.f32.mrb[0].mxu0
      %v6792 = vadd.f32 %v6647, %v6791
      %v6793 = vpop.f32.mrb[0].mxu0
      %6794 = vmatprep.mubr.f32.mxu0 %v309
      %6795 = vmatmul.mubr.f32.gmra.mrb[0].mxu0 %v308
      %v6796 = vpop.f32.mrb[0].mxu0
      %v6797 = vadd.f32 %v6652, %v6796
      %v6798 = vpop.f32.mrb[0].mxu0
      %6799 = vmatprep.mubr.f32.mxu0 %v382
      %6800 = vmatmul.mubr.f32.gmra.mrb[0].mxu0 %v381
      %v6801 = vpop.f32.mrb[0].mxu0
      %v6802 = vadd.f32 %v6657, %v6801
      %v6803 = vpop.f32.mrb[0].mxu0
      %6804 = vmatprep.mubr.f32.mxu0 %v455
      %6805 = vmatmul.mubr.f32.gmra.mrb[0].mxu0 %v454
      %v6806 = vpop.f32.mrb[0].mxu0
      %v6807 = vadd.f32 %v6662, %v6806
      %v6808 = vpop.f32.mrb[0].mxu0
      %6809 = vmatprep.mubr.f32.mxu0 %v528
      %6810 = vmatmul.mubr.f32.gmra.mrb[0].mxu0 %v527
      %v6811 = vpop.f32.mrb[0].mxu0
      %v6812 = vadd.f32 %v6667, %v6811
      %v6813 = vpop.f32.mrb[0].mxu0
      %6814 = vmatprep.mubr.f32.mxu0 %v601
      %6815 = vmatmul.mubr.f32.gmra.mrb[0].mxu0 %v600
      %v6816 = vpop.f32.mrb[0].mxu0
      %v6817 = vadd.f32 %v6672, %v6816
      %v6818 = vpop.f32.mrb[0].mxu0
      %6819 = vmatprep.mubr.f32.mxu0 %v674
      %6820 = vmatmul.mubr.f32.gmra.mrb[0].mxu0 %v673
      %v6821 = vpop.f32.mrb[0].mxu0
      %v6822 = vadd.f32 %v6677, %v6821
      %v6823 = vpop.f32.mrb[0].mxu0
      %6824 = vmatprep.mubr.f32.mxu0 %v747
      %6825 = vmatmul.mubr.f32.gmra.mrb[0].mxu0 %v746
      %v6826 = vpop.f32.mrb[0].mxu0
      %v6827 = vadd.f32 %v6682, %v6826
      %v6828 = vpop.f32.mrb[0].mxu0
      %6829 = vmatprep.mubr.f32.mxu0 %v820
      %6830 = vmatmul.mubr.f32.gmra.mrb[0].mxu0 %v819
      %v6831 = vpop.f32.mrb[0].mxu0
      %v6832 = vadd.f32 %v6687, %v6831
      %v6833 = vpop.f32.mrb[0].mxu0
      %6834 = vmatprep.mubr.f32.mxu0 %v893
      %6835 = vmatmul.mubr.f32.gmra.mrb[0].mxu0 %v892
      %v6836 = vpop.f32.mrb[0].mxu0
      %v6837 = vadd.f32 %v6692, %v6836
      %v6838 = vpop.f32.mrb[0].mxu0
      %6839 = vmatprep.mubr.f32.mxu0 %v966
      %6840 = vmatmul.mubr.f32.gmra.mrb[0].mxu0 %v965
      %v6841 = vpop.f32.mrb[0].mxu0
      %v6842 = vadd.f32 %v6697, %v6841
      %v6843 = vpop.f32.mrb[0].mxu0
      %6844 = vmatprep.mubr.f32.mxu0 %v1039
      %6845 = vmatmul.mubr.f32.gmra.mrb[0].mxu0 %v1038
      %v6846 = vpop.f32.mrb[0].mxu0
      %v6847 = vadd.f32 %v6702, %v6846
      %v6848 = vpop.f32.mrb[0].mxu0
      %6849 = vmatprep.mubr.f32.mxu0 %v1112
      %6850 = vmatmul.mubr.f32.gmra.mrb[0].mxu0 %v1111
      %v6851 = vpop.f32.mrb[0].mxu0
      %v6852 = vadd.f32 %v6707, %v6851
      %v6853 = vpop.f32.mrb[0].mxu0
      %6854 = vmatprep.mubr.f32.mxu0 %v1185
      %6855 = vmatmul.mubr.f32.gmra.mrb[0].mxu0 %v1184
      %v6856 = vpop.f32.mrb[0].mxu0
      %v6857 = vadd.f32 %v6712, %v6856
      %v6858 = vpop.f32.mrb[0].mxu0
      %6859 = vmatprep.mubr.f32.mxu0 %v1258
      %6860 = vmatmul.mubr.f32.gmra.mrb[0].mxu0 %v1257
      %v6861 = vpop.f32.mrb[0].mxu0
      %v6862 = vadd.f32 %v6717, %v6861
      %v6863 = vpop.f32.mrb[0].mxu0
      %6864 = vmatprep.mubr.f32.mxu0 %v1331
      %6865 = vmatmul.mubr.f32.gmra.mrb[0].mxu0 %v1330
      %v6866 = vpop.f32.mrb[0].mxu0
      %v6867 = vadd.f32 %v6722, %v6866
      %v6868 = vpop.f32.mrb[0].mxu0
      %6869 = vdwg.mxu0
      %6870 = vmatprep.subr.mxu0 0.0
      %6871 = vmatpush1.msra.mxu0 %v2305
      %6872 = vmatprep.subr.mxu0 0.0
      %6873 = vmatpush1.msra.mxu0 %v2306
      %6874 = vmatprep.subr.mxu0 0.0
      %6875 = vmatpush1.msra.mxu0 %v2307
      %6876 = vmatprep.subr.mxu0 0.0
      %6877 = vmatpush1.msra.mxu0 %v2308
      %6878 = vmatprep.subr.mxu0 0.0
      %6879 = vmatpush1.msra.mxu0 %v2309
      %6880 = vmatprep.subr.mxu0 0.0
      %6881 = vmatpush1.msra.mxu0 %v2310
      %6882 = vmatprep.subr.mxu0 0.0
      %6883 = vmatpush1.msra.mxu0 %v2311
      %6884 = vmatprep.subr.mxu0 0.0
      %6885 = vmatpush1.msra.mxu0 %v2312
      %6886 = vmatprep.subr.mxu0 0.0
      %6887 = vmatpush1.msra.mxu0 %v2313
      %6888 = vmatprep.subr.mxu0 0.0
      %6889 = vmatpush1.msra.mxu0 %v2314
      %6890 = vmatprep.subr.mxu0 0.0
      %6891 = vmatpush1.msra.mxu0 %v2315
      %6892 = vmatprep.subr.mxu0 0.0
      %6893 = vmatpush1.msra.mxu0 %v2316
      %6894 = vmatprep.subr.mxu0 0.0
      %6895 = vmatpush1.msra.mxu0 %v2317
      %6896 = vmatprep.subr.mxu0 0.0
      %6897 = vmatpush1.msra.mxu0 %v2318
      %6898 = vmatprep.subr.mxu0 0.0
      %6899 = vmatpush1.msra.mxu0 %v2319
      %6900 = vmatprep.subr.mxu0 0.0
      %6901 = vmatpush1.msra.mxu0 %v2320
      %6902 = vmatprep.subr.mxu0 0.0
      %6903 = vmatpush1.msra.mxu0 %v2321
      %6904 = vmatprep.subr.mxu0 0.0
      %6905 = vmatpush1.msra.mxu0 %v2322
      %6906 = vmatprep.subr.mxu0 0.0
      %6907 = vmatpush1.msra.mxu0 %v2323
      %6908 = vmatprep.subr.mxu0 0.0
      %6909 = vmatpush1.msra.mxu0 %v2324
      %6910 = vmatprep.subr.mxu0 0.0
      %6911 = vmatpush1.msra.mxu0 %v2325
      %6912 = vmatprep.subr.mxu0 0.0
      %6913 = vmatpush1.msra.mxu0 %v2326
      %6914 = vmatprep.subr.mxu0 0.0
      %6915 = vmatpush1.msra.mxu0 %v2327
      %6916 = vmatprep.subr.mxu0 0.0
      %6917 = vmatpush1.msra.mxu0 %v2328
      %6918 = vmatprep.subr.mxu0 0.0
      %6919 = vmatpush1.msra.mxu0 %v2329
      %6920 = vmatprep.subr.mxu0 0.0
      %6921 = vmatpush1.msra.mxu0 %v2330
      %6922 = vmatprep.subr.mxu0 0.0
      %6923 = vmatpush1.msra.mxu0 %v2331
      %6924 = vmatprep.subr.mxu0 0.0
      %6925 = vmatpush1.msra.mxu0 %v2332
      %6926 = vmatprep.subr.mxu0 0.0
      %6927 = vmatpush1.msra.mxu0 %v2333
      %6928 = vmatprep.subr.mxu0 0.0
      %6929 = vmatpush1.msra.mxu0 %v2334
      %6930 = vmatprep.subr.mxu0 0.0
      %6931 = vmatpush1.msra.mxu0 %v2335
      %6932 = vmatprep.subr.mxu0 0.0
      %6933 = vmatpush1.msra.mxu0 %v2336
      %6934 = vmatprep.mubr.f32.mxu0 %v238
      %6935 = vmatmul.mubr.f32.gmra.mrb[0].mxu0 %v237
      %v6936 = vpop.f32.mrb[0].mxu0
      %v6937 = vadd.f32 %v6792, %v6936
      %v6938 = vpop.f32.mrb[0].mxu0
      %6939 = vmatprep.mubr.f32.mxu0 %v311
      %6940 = vmatmul.mubr.f32.gmra.mrb[0].mxu0 %v310
      %v6941 = vpop.f32.mrb[0].mxu0
      %v6942 = vadd.f32 %v6797, %v6941
      %v6943 = vpop.f32.mrb[0].mxu0
      %6944 = vmatprep.mubr.f32.mxu0 %v384
      %6945 = vmatmul.mubr.f32.gmra.mrb[0].mxu0 %v383
      %v6946 = vpop.f32.mrb[0].mxu0
      %v6947 = vadd.f32 %v6802, %v6946
      %v6948 = vpop.f32.mrb[0].mxu0
      %6949 = vmatprep.mubr.f32.mxu0 %v457
      %6950 = vmatmul.mubr.f32.gmra.mrb[0].mxu0 %v456
      %v6951 = vpop.f32.mrb[0].mxu0
      %v6952 = vadd.f32 %v6807, %v6951
      %v6953 = vpop.f32.mrb[0].mxu0
      %6954 = vmatprep.mubr.f32.mxu0 %v530
      %6955 = vmatmul.mubr.f32.gmra.mrb[0].mxu0 %v529
      %v6956 = vpop.f32.mrb[0].mxu0
      %v6957 = vadd.f32 %v6812, %v6956
      %v6958 = vpop.f32.mrb[0].mxu0
      %6959 = vmatprep.mubr.f32.mxu0 %v603
      %6960 = vmatmul.mubr.f32.gmra.mrb[0].mxu0 %v602
      %v6961 = vpop.f32.mrb[0].mxu0
      %v6962 = vadd.f32 %v6817, %v6961
      %v6963 = vpop.f32.mrb[0].mxu0
      %6964 = vmatprep.mubr.f32.mxu0 %v676
      %6965 = vmatmul.mubr.f32.gmra.mrb[0].mxu0 %v675
      %v6966 = vpop.f32.mrb[0].mxu0
      %v6967 = vadd.f32 %v6822, %v6966
      %v6968 = vpop.f32.mrb[0].mxu0
      %6969 = vmatprep.mubr.f32.mxu0 %v749
      %6970 = vmatmul.mubr.f32.gmra.mrb[0].mxu0 %v748
      %v6971 = vpop.f32.mrb[0].mxu0
      %v6972 = vadd.f32 %v6827, %v6971
      %v6973 = vpop.f32.mrb[0].mxu0
      %6974 = vmatprep.mubr.f32.mxu0 %v822
      %6975 = vmatmul.mubr.f32.gmra.mrb[0].mxu0 %v821
      %v6976 = vpop.f32.mrb[0].mxu0
      %v6977 = vadd.f32 %v6832, %v6976
      %v6978 = vpop.f32.mrb[0].mxu0
      %6979 = vmatprep.mubr.f32.mxu0 %v895
      %6980 = vmatmul.mubr.f32.gmra.mrb[0].mxu0 %v894
      %v6981 = vpop.f32.mrb[0].mxu0
      %v6982 = vadd.f32 %v6837, %v6981
      %v6983 = vpop.f32.mrb[0].mxu0
      %6984 = vmatprep.mubr.f32.mxu0 %v968
      %6985 = vmatmul.mubr.f32.gmra.mrb[0].mxu0 %v967
      %v6986 = vpop.f32.mrb[0].mxu0
      %v6987 = vadd.f32 %v6842, %v6986
      %v6988 = vpop.f32.mrb[0].mxu0
      %6989 = vmatprep.mubr.f32.mxu0 %v1041
      %6990 = vmatmul.mubr.f32.gmra.mrb[0].mxu0 %v1040
      %v6991 = vpop.f32.mrb[0].mxu0
      %v6992 = vadd.f32 %v6847, %v6991
      %v6993 = vpop.f32.mrb[0].mxu0
      %6994 = vmatprep.mubr.f32.mxu0 %v1114
      %6995 = vmatmul.mubr.f32.gmra.mrb[0].mxu0 %v1113
      %v6996 = vpop.f32.mrb[0].mxu0
      %v6997 = vadd.f32 %v6852, %v6996
      %v6998 = vpop.f32.mrb[0].mxu0
      %6999 = vmatprep.mubr.f32.mxu0 %v1187
      %7000 = vmatmul.mubr.f32.gmra.mrb[0].mxu0 %v1186
      %v7001 = vpop.f32.mrb[0].mxu0
      %v7002 = vadd.f32 %v6857, %v7001
      %v7003 = vpop.f32.mrb[0].mxu0
      %7004 = vmatprep.mubr.f32.mxu0 %v1260
      %7005 = vmatmul.mubr.f32.gmra.mrb[0].mxu0 %v1259
      %v7006 = vpop.f32.mrb[0].mxu0
      %v7007 = vadd.f32 %v6862, %v7006
      %v7008 = vpop.f32.mrb[0].mxu0
      %7009 = vmatprep.mubr.f32.mxu0 %v1333
      %7010 = vmatmul.mubr.f32.gmra.mrb[0].mxu0 %v1332
      %v7011 = vpop.f32.mrb[0].mxu0
      %v7012 = vadd.f32 %v6867, %v7011
      %v7013 = vpop.f32.mrb[0].mxu0
      %7014 = vdwg.mxu0
      %7015 = vmatprep.subr.mxu0 0.0
      %7016 = vmatpush1.msra.mxu0 %v2337
      %7017 = vmatprep.subr.mxu0 0.0
      %7018 = vmatpush1.msra.mxu0 %v2338
      %7019 = vmatprep.subr.mxu0 0.0
      %7020 = vmatpush1.msra.mxu0 %v2339
      %7021 = vmatprep.subr.mxu0 0.0
      %7022 = vmatpush1.msra.mxu0 %v2340
      %7023 = vmatprep.subr.mxu0 0.0
      %7024 = vmatpush1.msra.mxu0 %v2341
      %7025 = vmatprep.subr.mxu0 0.0
      %7026 = vmatpush1.msra.mxu0 %v2342
      %7027 = vmatprep.subr.mxu0 0.0
      %7028 = vmatpush1.msra.mxu0 %v2343
      %7029 = vmatprep.subr.mxu0 0.0
      %7030 = vmatpush1.msra.mxu0 %v2344
      %7031 = vmatprep.subr.mxu0 0.0
      %7032 = vmatpush1.msra.mxu0 %v2345
      %7033 = vmatprep.subr.mxu0 0.0
      %7034 = vmatpush1.msra.mxu0 %v2346
      %7035 = vmatprep.subr.mxu0 0.0
      %7036 = vmatpush1.msra.mxu0 %v2347
      %7037 = vmatprep.subr.mxu0 0.0
      %7038 = vmatpush1.msra.mxu0 %v2348
      %7039 = vmatprep.subr.mxu0 0.0
      %7040 = vmatpush1.msra.mxu0 %v2349
      %7041 = vmatprep.subr.mxu0 0.0
      %7042 = vmatpush1.msra.mxu0 %v2350
      %7043 = vmatprep.subr.mxu0 0.0
      %7044 = vmatpush1.msra.mxu0 %v2351
      %7045 = vmatprep.subr.mxu0 0.0
      %7046 = vmatpush1.msra.mxu0 %v2352
      %7047 = vmatprep.subr.mxu0 0.0
      %7048 = vmatpush1.msra.mxu0 %v2353
      %7049 = vmatprep.subr.mxu0 0.0
      %7050 = vmatpush1.msra.mxu0 %v2354
      %7051 = vmatprep.subr.mxu0 0.0
      %7052 = vmatpush1.msra.mxu0 %v2355
      %7053 = vmatprep.subr.mxu0 0.0
      %7054 = vmatpush1.msra.mxu0 %v2356
      %7055 = vmatprep.subr.mxu0 0.0
      %7056 = vmatpush1.msra.mxu0 %v2357
      %7057 = vmatprep.subr.mxu0 0.0
      %7058 = vmatpush1.msra.mxu0 %v2358
      %7059 = vmatprep.subr.mxu0 0.0
      %7060 = vmatpush1.msra.mxu0 %v2359
      %7061 = vmatprep.subr.mxu0 0.0
      %7062 = vmatpush1.msra.mxu0 %v2360
      %7063 = vmatprep.subr.mxu0 0.0
      %7064 = vmatpush1.msra.mxu0 %v2361
      %7065 = vmatprep.subr.mxu0 0.0
      %7066 = vmatpush1.msra.mxu0 %v2362
      %7067 = vmatprep.subr.mxu0 0.0
      %7068 = vmatpush1.msra.mxu0 %v2363
      %7069 = vmatprep.subr.mxu0 0.0
      %7070 = vmatpush1.msra.mxu0 %v2364
      %7071 = vmatprep.subr.mxu0 0.0
      %7072 = vmatpush1.msra.mxu0 %v2365
      %7073 = vmatprep.subr.mxu0 0.0
      %7074 = vmatpush1.msra.mxu0 %v2366
      %7075 = vmatprep.subr.mxu0 0.0
      %7076 = vmatpush1.msra.mxu0 %v2367
      %7077 = vmatprep.subr.mxu0 0.0
      %7078 = vmatpush1.msra.mxu0 %v2368
      %7079 = vmatprep.mubr.f32.mxu0 %v240
      %7080 = vmatmul.mubr.f32.gmra.mrb[0].mxu0 %v239
      %v7081 = vpop.f32.mrb[0].mxu0
      %v7082 = vadd.f32 %v6937, %v7081
      %v7083 = vpop.f32.mrb[0].mxu0
      %7084 = vmatprep.mubr.f32.mxu0 %v313
      %7085 = vmatmul.mubr.f32.gmra.mrb[0].mxu0 %v312
      %v7086 = vpop.f32.mrb[0].mxu0
      %v7087 = vadd.f32 %v6942, %v7086
      %v7088 = vpop.f32.mrb[0].mxu0
      %7089 = vmatprep.mubr.f32.mxu0 %v386
      %7090 = vmatmul.mubr.f32.gmra.mrb[0].mxu0 %v385
      %v7091 = vpop.f32.mrb[0].mxu0
      %v7092 = vadd.f32 %v6947, %v7091
      %v7093 = vpop.f32.mrb[0].mxu0
      %7094 = vmatprep.mubr.f32.mxu0 %v459
      %7095 = vmatmul.mubr.f32.gmra.mrb[0].mxu0 %v458
      %v7096 = vpop.f32.mrb[0].mxu0
      %v7097 = vadd.f32 %v6952, %v7096
      %v7098 = vpop.f32.mrb[0].mxu0
      %7099 = vmatprep.mubr.f32.mxu0 %v532
      %7100 = vmatmul.mubr.f32.gmra.mrb[0].mxu0 %v531
      %v7101 = vpop.f32.mrb[0].mxu0
      %v7102 = vadd.f32 %v6957, %v7101
      %v7103 = vpop.f32.mrb[0].mxu0
      %7104 = vmatprep.mubr.f32.mxu0 %v605
      %7105 = vmatmul.mubr.f32.gmra.mrb[0].mxu0 %v604
      %v7106 = vpop.f32.mrb[0].mxu0
      %v7107 = vadd.f32 %v6962, %v7106
      %v7108 = vpop.f32.mrb[0].mxu0
      %7109 = vmatprep.mubr.f32.mxu0 %v678
      %7110 = vmatmul.mubr.f32.gmra.mrb[0].mxu0 %v677
      %v7111 = vpop.f32.mrb[0].mxu0
      %v7112 = vadd.f32 %v6967, %v7111
      %v7113 = vpop.f32.mrb[0].mxu0
      %7114 = vmatprep.mubr.f32.mxu0 %v751
      %7115 = vmatmul.mubr.f32.gmra.mrb[0].mxu0 %v750
      %v7116 = vpop.f32.mrb[0].mxu0
      %v7117 = vadd.f32 %v6972, %v7116
      %v7118 = vpop.f32.mrb[0].mxu0
      %7119 = vmatprep.mubr.f32.mxu0 %v824
      %7120 = vmatmul.mubr.f32.gmra.mrb[0].mxu0 %v823
      %v7121 = vpop.f32.mrb[0].mxu0
      %v7122 = vadd.f32 %v6977, %v7121
      %v7123 = vpop.f32.mrb[0].mxu0
      %7124 = vmatprep.mubr.f32.mxu0 %v897
      %7125 = vmatmul.mubr.f32.gmra.mrb[0].mxu0 %v896
      %v7126 = vpop.f32.mrb[0].mxu0
      %v7127 = vadd.f32 %v6982, %v7126
      %v7128 = vpop.f32.mrb[0].mxu0
      %7129 = vmatprep.mubr.f32.mxu0 %v970
      %7130 = vmatmul.mubr.f32.gmra.mrb[0].mxu0 %v969
      %v7131 = vpop.f32.mrb[0].mxu0
      %v7132 = vadd.f32 %v6987, %v7131
      %v7133 = vpop.f32.mrb[0].mxu0
      %7134 = vmatprep.mubr.f32.mxu0 %v1043
      %7135 = vmatmul.mubr.f32.gmra.mrb[0].mxu0 %v1042
      %v7136 = vpop.f32.mrb[0].mxu0
      %v7137 = vadd.f32 %v6992, %v7136
      %v7138 = vpop.f32.mrb[0].mxu0
      %7139 = vmatprep.mubr.f32.mxu0 %v1116
      %7140 = vmatmul.mubr.f32.gmra.mrb[0].mxu0 %v1115
      %v7141 = vpop.f32.mrb[0].mxu0
      %v7142 = vadd.f32 %v6997, %v7141
      %v7143 = vpop.f32.mrb[0].mxu0
      %7144 = vmatprep.mubr.f32.mxu0 %v1189
      %7145 = vmatmul.mubr.f32.gmra.mrb[0].mxu0 %v1188
      %v7146 = vpop.f32.mrb[0].mxu0
      %v7147 = vadd.f32 %v7002, %v7146
      %v7148 = vpop.f32.mrb[0].mxu0
      %7149 = vmatprep.mubr.f32.mxu0 %v1262
      %7150 = vmatmul.mubr.f32.gmra.mrb[0].mxu0 %v1261
      %v7151 = vpop.f32.mrb[0].mxu0
      %v7152 = vadd.f32 %v7007, %v7151
      %v7153 = vpop.f32.mrb[0].mxu0
      %7154 = vmatprep.mubr.f32.mxu0 %v1335
      %7155 = vmatmul.mubr.f32.gmra.mrb[0].mxu0 %v1334
      %v7156 = vpop.f32.mrb[0].mxu0
      %v7157 = vadd.f32 %v7012, %v7156
      %v7158 = vpop.f32.mrb[0].mxu0
      %7159 = vdwg.mxu0
      %7160 = vmatprep.subr.mxu0 0.0
      %7161 = vmatpush1.msra.mxu0 %v2369
      %7162 = vmatprep.subr.mxu0 0.0
      %7163 = vmatpush1.msra.mxu0 %v2370
      %7164 = vmatprep.subr.mxu0 0.0
      %7165 = vmatpush1.msra.mxu0 %v2371
      %7166 = vmatprep.subr.mxu0 0.0
      %7167 = vmatpush1.msra.mxu0 %v2372
      %7168 = vmatprep.subr.mxu0 0.0
      %7169 = vmatpush1.msra.mxu0 %v2373
      %7170 = vmatprep.subr.mxu0 0.0
      %7171 = vmatpush1.msra.mxu0 %v2374
      %7172 = vmatprep.subr.mxu0 0.0
      %7173 = vmatpush1.msra.mxu0 %v2375
      %7174 = vmatprep.subr.mxu0 0.0
      %7175 = vmatpush1.msra.mxu0 %v2376
      %7176 = vmatprep.subr.mxu0 0.0
      %7177 = vmatpush1.msra.mxu0 %v2377
      %7178 = vmatprep.subr.mxu0 0.0
      %7179 = vmatpush1.msra.mxu0 %v2378
      %7180 = vmatprep.subr.mxu0 0.0
      %7181 = vmatpush1.msra.mxu0 %v2379
      %7182 = vmatprep.subr.mxu0 0.0
      %7183 = vmatpush1.msra.mxu0 %v2380
      %7184 = vmatprep.subr.mxu0 0.0
      %7185 = vmatpush1.msra.mxu0 %v2381
      %7186 = vmatprep.subr.mxu0 0.0
      %7187 = vmatpush1.msra.mxu0 %v2382
      %7188 = vmatprep.subr.mxu0 0.0
      %7189 = vmatpush1.msra.mxu0 %v2383
      %7190 = vmatprep.subr.mxu0 0.0
      %7191 = vmatpush1.msra.mxu0 %v2384
      %7192 = vmatprep.subr.mxu0 0.0
      %7193 = vmatpush1.msra.mxu0 %v2385
      %7194 = vmatprep.subr.mxu0 0.0
      %7195 = vmatpush1.msra.mxu0 %v2386
      %7196 = vmatprep.subr.mxu0 0.0
      %7197 = vmatpush1.msra.mxu0 %v2387
      %7198 = vmatprep.subr.mxu0 0.0
      %7199 = vmatpush1.msra.mxu0 %v2388
      %7200 = vmatprep.subr.mxu0 0.0
      %7201 = vmatpush1.msra.mxu0 %v2389
      %7202 = vmatprep.subr.mxu0 0.0
      %7203 = vmatpush1.msra.mxu0 %v2390
      %7204 = vmatprep.subr.mxu0 0.0
      %7205 = vmatpush1.msra.mxu0 %v2391
      %7206 = vmatprep.subr.mxu0 0.0
      %7207 = vmatpush1.msra.mxu0 %v2392
      %7208 = vmatprep.subr.mxu0 0.0
      %7209 = vmatpush1.msra.mxu0 %v2393
      %7210 = vmatprep.subr.mxu0 0.0
      %7211 = vmatpush1.msra.mxu0 %v2394
      %7212 = vmatprep.subr.mxu0 0.0
      %7213 = vmatpush1.msra.mxu0 %v2395
      %7214 = vmatprep.subr.mxu0 0.0
      %7215 = vmatpush1.msra.mxu0 %v2396
      %7216 = vmatprep.subr.mxu0 0.0
      %7217 = vmatpush1.msra.mxu0 %v2397
      %7218 = vmatprep.subr.mxu0 0.0
      %7219 = vmatpush1.msra.mxu0 %v2398
      %7220 = vmatprep.subr.mxu0 0.0
      %7221 = vmatpush1.msra.mxu0 %v2399
      %7222 = vmatprep.subr.mxu0 0.0
      %7223 = vmatpush1.msra.mxu0 %v2400
      %7224 = vmatprep.mubr.f32.mxu0 %v242
      %7225 = vmatmul.mubr.f32.gmra.mrb[0].mxu0 %v241
      %v7226 = vpop.f32.mrb[0].mxu0
      %v7227 = vadd.f32 %v7082, %v7226
      %v7228 = vpop.f32.mrb[0].mxu0
      %7229 = vmatprep.mubr.f32.mxu0 %v315
      %7230 = vmatmul.mubr.f32.gmra.mrb[0].mxu0 %v314
      %v7231 = vpop.f32.mrb[0].mxu0
      %v7232 = vadd.f32 %v7087, %v7231
      %v7233 = vpop.f32.mrb[0].mxu0
      %7234 = vmatprep.mubr.f32.mxu0 %v388
      %7235 = vmatmul.mubr.f32.gmra.mrb[0].mxu0 %v387
      %v7236 = vpop.f32.mrb[0].mxu0
      %v7237 = vadd.f32 %v7092, %v7236
      %v7238 = vpop.f32.mrb[0].mxu0
      %7239 = vmatprep.mubr.f32.mxu0 %v461
      %7240 = vmatmul.mubr.f32.gmra.mrb[0].mxu0 %v460
      %v7241 = vpop.f32.mrb[0].mxu0
      %v7242 = vadd.f32 %v7097, %v7241
      %v7243 = vpop.f32.mrb[0].mxu0
      %7244 = vmatprep.mubr.f32.mxu0 %v534
      %7245 = vmatmul.mubr.f32.gmra.mrb[0].mxu0 %v533
      %v7246 = vpop.f32.mrb[0].mxu0
      %v7247 = vadd.f32 %v7102, %v7246
      %v7248 = vpop.f32.mrb[0].mxu0
      %7249 = vmatprep.mubr.f32.mxu0 %v607
      %7250 = vmatmul.mubr.f32.gmra.mrb[0].mxu0 %v606
      %v7251 = vpop.f32.mrb[0].mxu0
      %v7252 = vadd.f32 %v7107, %v7251
      %v7253 = vpop.f32.mrb[0].mxu0
      %7254 = vmatprep.mubr.f32.mxu0 %v680
      %7255 = vmatmul.mubr.f32.gmra.mrb[0].mxu0 %v679
      %v7256 = vpop.f32.mrb[0].mxu0
      %v7257 = vadd.f32 %v7112, %v7256
      %v7258 = vpop.f32.mrb[0].mxu0
      %7259 = vmatprep.mubr.f32.mxu0 %v753
      %7260 = vmatmul.mubr.f32.gmra.mrb[0].mxu0 %v752
      %v7261 = vpop.f32.mrb[0].mxu0
      %v7262 = vadd.f32 %v7117, %v7261
      %v7263 = vpop.f32.mrb[0].mxu0
      %7264 = vmatprep.mubr.f32.mxu0 %v826
      %7265 = vmatmul.mubr.f32.gmra.mrb[0].mxu0 %v825
      %v7266 = vpop.f32.mrb[0].mxu0
      %v7267 = vadd.f32 %v7122, %v7266
      %v7268 = vpop.f32.mrb[0].mxu0
      %7269 = vmatprep.mubr.f32.mxu0 %v899
      %7270 = vmatmul.mubr.f32.gmra.mrb[0].mxu0 %v898
      %v7271 = vpop.f32.mrb[0].mxu0
      %v7272 = vadd.f32 %v7127, %v7271
      %v7273 = vpop.f32.mrb[0].mxu0
      %7274 = vmatprep.mubr.f32.mxu0 %v972
      %7275 = vmatmul.mubr.f32.gmra.mrb[0].mxu0 %v971
      %v7276 = vpop.f32.mrb[0].mxu0
      %v7277 = vadd.f32 %v7132, %v7276
      %v7278 = vpop.f32.mrb[0].mxu0
      %7279 = vmatprep.mubr.f32.mxu0 %v1045
      %7280 = vmatmul.mubr.f32.gmra.mrb[0].mxu0 %v1044
      %v7281 = vpop.f32.mrb[0].mxu0
      %v7282 = vadd.f32 %v7137, %v7281
      %v7283 = vpop.f32.mrb[0].mxu0
      %7284 = vmatprep.mubr.f32.mxu0 %v1118
      %7285 = vmatmul.mubr.f32.gmra.mrb[0].mxu0 %v1117
      %v7286 = vpop.f32.mrb[0].mxu0
      %v7287 = vadd.f32 %v7142, %v7286
      %v7288 = vpop.f32.mrb[0].mxu0
      %7289 = vmatprep.mubr.f32.mxu0 %v1191
      %7290 = vmatmul.mubr.f32.gmra.mrb[0].mxu0 %v1190
      %v7291 = vpop.f32.mrb[0].mxu0
      %v7292 = vadd.f32 %v7147, %v7291
      %v7293 = vpop.f32.mrb[0].mxu0
      %7294 = vmatprep.mubr.f32.mxu0 %v1264
      %7295 = vmatmul.mubr.f32.gmra.mrb[0].mxu0 %v1263
      %v7296 = vpop.f32.mrb[0].mxu0
      %v7297 = vadd.f32 %v7152, %v7296
      %v7298 = vpop.f32.mrb[0].mxu0
      %7299 = vmatprep.mubr.f32.mxu0 %v1337
      %7300 = vmatmul.mubr.f32.gmra.mrb[0].mxu0 %v1336
      %v7301 = vpop.f32.mrb[0].mxu0
      %v7302 = vadd.f32 %v7157, %v7301
      %v7303 = vpop.f32.mrb[0].mxu0
      %7304 = vdwg.mxu0
      %7305 = vmatprep.subr.mxu0 0.0
      %7306 = vmatpush1.msra.mxu0 %v2401
      %7307 = vmatprep.subr.mxu0 0.0
      %7308 = vmatpush1.msra.mxu0 %v2402
      %7309 = vmatprep.subr.mxu0 0.0
      %7310 = vmatpush1.msra.mxu0 %v2403
      %7311 = vmatprep.subr.mxu0 0.0
      %7312 = vmatpush1.msra.mxu0 %v2404
      %7313 = vmatprep.subr.mxu0 0.0
      %7314 = vmatpush1.msra.mxu0 %v2405
      %7315 = vmatprep.subr.mxu0 0.0
      %7316 = vmatpush1.msra.mxu0 %v2406
      %7317 = vmatprep.subr.mxu0 0.0
      %7318 = vmatpush1.msra.mxu0 %v2407
      %7319 = vmatprep.subr.mxu0 0.0
      %7320 = vmatpush1.msra.mxu0 %v2408
      %7321 = vmatprep.subr.mxu0 0.0
      %7322 = vmatpush1.msra.mxu0 %v2409
      %7323 = vmatprep.subr.mxu0 0.0
      %7324 = vmatpush1.msra.mxu0 %v2410
      %7325 = vmatprep.subr.mxu0 0.0
      %7326 = vmatpush1.msra.mxu0 %v2411
      %7327 = vmatprep.subr.mxu0 0.0
      %7328 = vmatpush1.msra.mxu0 %v2412
      %7329 = vmatprep.subr.mxu0 0.0
      %7330 = vmatpush1.msra.mxu0 %v2413
      %7331 = vmatprep.subr.mxu0 0.0
      %7332 = vmatpush1.msra.mxu0 %v2414
      %7333 = vmatprep.subr.mxu0 0.0
      %7334 = vmatpush1.msra.mxu0 %v2415
      %7335 = vmatprep.subr.mxu0 0.0
      %7336 = vmatpush1.msra.mxu0 %v2416
      %7337 = vmatprep.subr.mxu0 0.0
      %7338 = vmatpush1.msra.mxu0 %v2417
      %7339 = vmatprep.subr.mxu0 0.0
      %7340 = vmatpush1.msra.mxu0 %v2418
      %7341 = vmatprep.subr.mxu0 0.0
      %7342 = vmatpush1.msra.mxu0 %v2419
      %7343 = vmatprep.subr.mxu0 0.0
      %7344 = vmatpush1.msra.mxu0 %v2420
      %7345 = vmatprep.subr.mxu0 0.0
      %7346 = vmatpush1.msra.mxu0 %v2421
      %7347 = vmatprep.subr.mxu0 0.0
      %7348 = vmatpush1.msra.mxu0 %v2422
      %7349 = vmatprep.subr.mxu0 0.0
      %7350 = vmatpush1.msra.mxu0 %v2423
      %7351 = vmatprep.subr.mxu0 0.0
      %7352 = vmatpush1.msra.mxu0 %v2424
      %7353 = vmatprep.subr.mxu0 0.0
      %7354 = vmatpush1.msra.mxu0 %v2425
      %7355 = vmatprep.subr.mxu0 0.0
      %7356 = vmatpush1.msra.mxu0 %v2426
      %7357 = vmatprep.subr.mxu0 0.0
      %7358 = vmatpush1.msra.mxu0 %v2427
      %7359 = vmatprep.subr.mxu0 0.0
      %7360 = vmatpush1.msra.mxu0 %v2428
      %7361 = vmatprep.subr.mxu0 0.0
      %7362 = vmatpush1.msra.mxu0 %v2429
      %7363 = vmatprep.subr.mxu0 0.0
      %7364 = vmatpush1.msra.mxu0 %v2430
      %7365 = vmatprep.subr.mxu0 0.0
      %7366 = vmatpush1.msra.mxu0 %v2431
      %7367 = vmatprep.subr.mxu0 0.0
      %7368 = vmatpush1.msra.mxu0 %v2432
      %7369 = vmatprep.mubr.f32.mxu0 %v244
      %7370 = vmatmul.mubr.f32.gmra.mrb[0].mxu0 %v243
      %v7371 = vpop.f32.mrb[0].mxu0
      %v7372 = vadd.f32 %v7227, %v7371
      %v7373 = vpop.f32.mrb[0].mxu0
      %7374 = vmatprep.mubr.f32.mxu0 %v317
      %7375 = vmatmul.mubr.f32.gmra.mrb[0].mxu0 %v316
      %v7376 = vpop.f32.mrb[0].mxu0
      %v7377 = vadd.f32 %v7232, %v7376
      %v7378 = vpop.f32.mrb[0].mxu0
      %7379 = vmatprep.mubr.f32.mxu0 %v390
      %7380 = vmatmul.mubr.f32.gmra.mrb[0].mxu0 %v389
      %v7381 = vpop.f32.mrb[0].mxu0
      %v7382 = vadd.f32 %v7237, %v7381
      %v7383 = vpop.f32.mrb[0].mxu0
      %7384 = vmatprep.mubr.f32.mxu0 %v463
      %7385 = vmatmul.mubr.f32.gmra.mrb[0].mxu0 %v462
      %v7386 = vpop.f32.mrb[0].mxu0
      %v7387 = vadd.f32 %v7242, %v7386
      %v7388 = vpop.f32.mrb[0].mxu0
      %7389 = vmatprep.mubr.f32.mxu0 %v536
      %7390 = vmatmul.mubr.f32.gmra.mrb[0].mxu0 %v535
      %v7391 = vpop.f32.mrb[0].mxu0
      %v7392 = vadd.f32 %v7247, %v7391
      %v7393 = vpop.f32.mrb[0].mxu0
      %7394 = vmatprep.mubr.f32.mxu0 %v609
      %7395 = vmatmul.mubr.f32.gmra.mrb[0].mxu0 %v608
      %v7396 = vpop.f32.mrb[0].mxu0
      %v7397 = vadd.f32 %v7252, %v7396
      %v7398 = vpop.f32.mrb[0].mxu0
      %7399 = vmatprep.mubr.f32.mxu0 %v682
      %7400 = vmatmul.mubr.f32.gmra.mrb[0].mxu0 %v681
      %v7401 = vpop.f32.mrb[0].mxu0
      %v7402 = vadd.f32 %v7257, %v7401
      %v7403 = vpop.f32.mrb[0].mxu0
      %7404 = vmatprep.mubr.f32.mxu0 %v755
      %7405 = vmatmul.mubr.f32.gmra.mrb[0].mxu0 %v754
      %v7406 = vpop.f32.mrb[0].mxu0
      %v7407 = vadd.f32 %v7262, %v7406
      %v7408 = vpop.f32.mrb[0].mxu0
      %7409 = vmatprep.mubr.f32.mxu0 %v828
      %7410 = vmatmul.mubr.f32.gmra.mrb[0].mxu0 %v827
      %v7411 = vpop.f32.mrb[0].mxu0
      %v7412 = vadd.f32 %v7267, %v7411
      %v7413 = vpop.f32.mrb[0].mxu0
      %7414 = vmatprep.mubr.f32.mxu0 %v901
      %7415 = vmatmul.mubr.f32.gmra.mrb[0].mxu0 %v900
      %v7416 = vpop.f32.mrb[0].mxu0
      %v7417 = vadd.f32 %v7272, %v7416
      %v7418 = vpop.f32.mrb[0].mxu0
      %7419 = vmatprep.mubr.f32.mxu0 %v974
      %7420 = vmatmul.mubr.f32.gmra.mrb[0].mxu0 %v973
      %v7421 = vpop.f32.mrb[0].mxu0
      %v7422 = vadd.f32 %v7277, %v7421
      %v7423 = vpop.f32.mrb[0].mxu0
      %7424 = vmatprep.mubr.f32.mxu0 %v1047
      %7425 = vmatmul.mubr.f32.gmra.mrb[0].mxu0 %v1046
      %v7426 = vpop.f32.mrb[0].mxu0
      %v7427 = vadd.f32 %v7282, %v7426
      %v7428 = vpop.f32.mrb[0].mxu0
      %7429 = vmatprep.mubr.f32.mxu0 %v1120
      %7430 = vmatmul.mubr.f32.gmra.mrb[0].mxu0 %v1119
      %v7431 = vpop.f32.mrb[0].mxu0
      %v7432 = vadd.f32 %v7287, %v7431
      %v7433 = vpop.f32.mrb[0].mxu0
      %7434 = vmatprep.mubr.f32.mxu0 %v1193
      %7435 = vmatmul.mubr.f32.gmra.mrb[0].mxu0 %v1192
      %v7436 = vpop.f32.mrb[0].mxu0
      %v7437 = vadd.f32 %v7292, %v7436
      %v7438 = vpop.f32.mrb[0].mxu0
      %7439 = vmatprep.mubr.f32.mxu0 %v1266
      %7440 = vmatmul.mubr.f32.gmra.mrb[0].mxu0 %v1265
      %v7441 = vpop.f32.mrb[0].mxu0
      %v7442 = vadd.f32 %v7297, %v7441
      %v7443 = vpop.f32.mrb[0].mxu0
      %7444 = vmatprep.mubr.f32.mxu0 %v1339
      %7445 = vmatmul.mubr.f32.gmra.mrb[0].mxu0 %v1338
      %v7446 = vpop.f32.mrb[0].mxu0
      %v7447 = vadd.f32 %v7302, %v7446
      %v7448 = vpop.f32.mrb[0].mxu0
      %7449 = vdwg.mxu0
      %7450 = vmatprep.subr.mxu0 0.0
      %7451 = vmatpush1.msra.mxu0 %v2433
      %7452 = vmatprep.subr.mxu0 0.0
      %7453 = vmatpush1.msra.mxu0 %v2434
      %7454 = vmatprep.subr.mxu0 0.0
      %7455 = vmatpush1.msra.mxu0 %v2435
      %7456 = vmatprep.subr.mxu0 0.0
      %7457 = vmatpush1.msra.mxu0 %v2436
      %7458 = vmatprep.subr.mxu0 0.0
      %7459 = vmatpush1.msra.mxu0 %v2437
      %7460 = vmatprep.subr.mxu0 0.0
      %7461 = vmatpush1.msra.mxu0 %v2438
      %7462 = vmatprep.subr.mxu0 0.0
      %7463 = vmatpush1.msra.mxu0 %v2439
      %7464 = vmatprep.subr.mxu0 0.0
      %7465 = vmatpush1.msra.mxu0 %v2440
      %7466 = vmatprep.subr.mxu0 0.0
      %7467 = vmatpush1.msra.mxu0 %v2441
      %7468 = vmatprep.subr.mxu0 0.0
      %7469 = vmatpush1.msra.mxu0 %v2442
      %7470 = vmatprep.subr.mxu0 0.0
      %7471 = vmatpush1.msra.mxu0 %v2443
      %7472 = vmatprep.subr.mxu0 0.0
      %7473 = vmatpush1.msra.mxu0 %v2444
      %7474 = vmatprep.subr.mxu0 0.0
      %7475 = vmatpush1.msra.mxu0 %v2445
      %7476 = vmatprep.subr.mxu0 0.0
      %7477 = vmatpush1.msra.mxu0 %v2446
      %7478 = vmatprep.subr.mxu0 0.0
      %7479 = vmatpush1.msra.mxu0 %v2447
      %7480 = vmatprep.subr.mxu0 0.0
      %7481 = vmatpush1.msra.mxu0 %v2448
      %7482 = vmatprep.subr.mxu0 0.0
      %7483 = vmatpush1.msra.mxu0 %v2449
      %7484 = vmatprep.subr.mxu0 0.0
      %7485 = vmatpush1.msra.mxu0 %v2450
      %7486 = vmatprep.subr.mxu0 0.0
      %7487 = vmatpush1.msra.mxu0 %v2451
      %7488 = vmatprep.subr.mxu0 0.0
      %7489 = vmatpush1.msra.mxu0 %v2452
      %7490 = vmatprep.subr.mxu0 0.0
      %7491 = vmatpush1.msra.mxu0 %v2453
      %7492 = vmatprep.subr.mxu0 0.0
      %7493 = vmatpush1.msra.mxu0 %v2454
      %7494 = vmatprep.subr.mxu0 0.0
      %7495 = vmatpush1.msra.mxu0 %v2455
      %7496 = vmatprep.subr.mxu0 0.0
      %7497 = vmatpush1.msra.mxu0 %v2456
      %7498 = vmatprep.subr.mxu0 0.0
      %7499 = vmatpush1.msra.mxu0 %v2457
      %7500 = vmatprep.subr.mxu0 0.0
      %7501 = vmatpush1.msra.mxu0 %v2458
      %7502 = vmatprep.subr.mxu0 0.0
      %7503 = vmatpush1.msra.mxu0 %v2459
      %7504 = vmatprep.subr.mxu0 0.0
      %7505 = vmatpush1.msra.mxu0 %v2460
      %7506 = vmatprep.subr.mxu0 0.0
      %7507 = vmatpush1.msra.mxu0 %v2461
      %7508 = vmatprep.subr.mxu0 0.0
      %7509 = vmatpush1.msra.mxu0 %v2462
      %7510 = vmatprep.subr.mxu0 0.0
      %7511 = vmatpush1.msra.mxu0 %v2463
      %7512 = vmatprep.subr.mxu0 0.0
      %7513 = vmatpush1.msra.mxu0 %v2464
      %7514 = vmatprep.mubr.f32.mxu0 %v246
      %7515 = vmatmul.mubr.f32.gmra.mrb[0].mxu0 %v245
      %v7516 = vpop.f32.mrb[0].mxu0
      %v7517 = vadd.f32 %v7372, %v7516
      %v7518 = vpop.f32.mrb[0].mxu0
      %7519 = vmatprep.mubr.f32.mxu0 %v319
      %7520 = vmatmul.mubr.f32.gmra.mrb[0].mxu0 %v318
      %v7521 = vpop.f32.mrb[0].mxu0
      %v7522 = vadd.f32 %v7377, %v7521
      %v7523 = vpop.f32.mrb[0].mxu0
      %7524 = vmatprep.mubr.f32.mxu0 %v392
      %7525 = vmatmul.mubr.f32.gmra.mrb[0].mxu0 %v391
      %v7526 = vpop.f32.mrb[0].mxu0
      %v7527 = vadd.f32 %v7382, %v7526
      %v7528 = vpop.f32.mrb[0].mxu0
      %7529 = vmatprep.mubr.f32.mxu0 %v465
      %7530 = vmatmul.mubr.f32.gmra.mrb[0].mxu0 %v464
      %v7531 = vpop.f32.mrb[0].mxu0
      %v7532 = vadd.f32 %v7387, %v7531
      %v7533 = vpop.f32.mrb[0].mxu0
      %7534 = vmatprep.mubr.f32.mxu0 %v538
      %7535 = vmatmul.mubr.f32.gmra.mrb[0].mxu0 %v537
      %v7536 = vpop.f32.mrb[0].mxu0
      %v7537 = vadd.f32 %v7392, %v7536
      %v7538 = vpop.f32.mrb[0].mxu0
      %7539 = vmatprep.mubr.f32.mxu0 %v611
      %7540 = vmatmul.mubr.f32.gmra.mrb[0].mxu0 %v610
      %v7541 = vpop.f32.mrb[0].mxu0
      %v7542 = vadd.f32 %v7397, %v7541
      %v7543 = vpop.f32.mrb[0].mxu0
      %7544 = vmatprep.mubr.f32.mxu0 %v684
      %7545 = vmatmul.mubr.f32.gmra.mrb[0].mxu0 %v683
      %v7546 = vpop.f32.mrb[0].mxu0
      %v7547 = vadd.f32 %v7402, %v7546
      %v7548 = vpop.f32.mrb[0].mxu0
      %7549 = vmatprep.mubr.f32.mxu0 %v757
      %7550 = vmatmul.mubr.f32.gmra.mrb[0].mxu0 %v756
      %v7551 = vpop.f32.mrb[0].mxu0
      %v7552 = vadd.f32 %v7407, %v7551
      %v7553 = vpop.f32.mrb[0].mxu0
      %7554 = vmatprep.mubr.f32.mxu0 %v830
      %7555 = vmatmul.mubr.f32.gmra.mrb[0].mxu0 %v829
      %v7556 = vpop.f32.mrb[0].mxu0
      %v7557 = vadd.f32 %v7412, %v7556
      %v7558 = vpop.f32.mrb[0].mxu0
      %7559 = vmatprep.mubr.f32.mxu0 %v903
      %7560 = vmatmul.mubr.f32.gmra.mrb[0].mxu0 %v902
      %v7561 = vpop.f32.mrb[0].mxu0
      %v7562 = vadd.f32 %v7417, %v7561
      %v7563 = vpop.f32.mrb[0].mxu0
      %7564 = vmatprep.mubr.f32.mxu0 %v976
      %7565 = vmatmul.mubr.f32.gmra.mrb[0].mxu0 %v975
      %v7566 = vpop.f32.mrb[0].mxu0
      %v7567 = vadd.f32 %v7422, %v7566
      %v7568 = vpop.f32.mrb[0].mxu0
      %7569 = vmatprep.mubr.f32.mxu0 %v1049
      %7570 = vmatmul.mubr.f32.gmra.mrb[0].mxu0 %v1048
      %v7571 = vpop.f32.mrb[0].mxu0
      %v7572 = vadd.f32 %v7427, %v7571
      %v7573 = vpop.f32.mrb[0].mxu0
      %7574 = vmatprep.mubr.f32.mxu0 %v1122
      %7575 = vmatmul.mubr.f32.gmra.mrb[0].mxu0 %v1121
      %v7576 = vpop.f32.mrb[0].mxu0
      %v7577 = vadd.f32 %v7432, %v7576
      %v7578 = vpop.f32.mrb[0].mxu0
      %7579 = vmatprep.mubr.f32.mxu0 %v1195
      %7580 = vmatmul.mubr.f32.gmra.mrb[0].mxu0 %v1194
      %v7581 = vpop.f32.mrb[0].mxu0
      %v7582 = vadd.f32 %v7437, %v7581
      %v7583 = vpop.f32.mrb[0].mxu0
      %7584 = vmatprep.mubr.f32.mxu0 %v1268
      %7585 = vmatmul.mubr.f32.gmra.mrb[0].mxu0 %v1267
      %v7586 = vpop.f32.mrb[0].mxu0
      %v7587 = vadd.f32 %v7442, %v7586
      %v7588 = vpop.f32.mrb[0].mxu0
      %7589 = vmatprep.mubr.f32.mxu0 %v1341
      %7590 = vmatmul.mubr.f32.gmra.mrb[0].mxu0 %v1340
      %v7591 = vpop.f32.mrb[0].mxu0
      %v7592 = vadd.f32 %v7447, %v7591
      %v7593 = vpop.f32.mrb[0].mxu0
      %7594 = vdwg.mxu0
      %7595 = vmatprep.subr.mxu0 0.0
      %7596 = vmatpush1.msra.mxu0 %v2465
      %7597 = vmatprep.subr.mxu0 0.0
      %7598 = vmatpush1.msra.mxu0 %v2466
      %7599 = vmatprep.subr.mxu0 0.0
      %7600 = vmatpush1.msra.mxu0 %v2467
      %7601 = vmatprep.subr.mxu0 0.0
      %7602 = vmatpush1.msra.mxu0 %v2468
      %7603 = vmatprep.subr.mxu0 0.0
      %7604 = vmatpush1.msra.mxu0 %v2469
      %7605 = vmatprep.subr.mxu0 0.0
      %7606 = vmatpush1.msra.mxu0 %v2470
      %7607 = vmatprep.subr.mxu0 0.0
      %7608 = vmatpush1.msra.mxu0 %v2471
      %7609 = vmatprep.subr.mxu0 0.0
      %7610 = vmatpush1.msra.mxu0 %v2472
      %7611 = vmatprep.subr.mxu0 0.0
      %7612 = vmatpush1.msra.mxu0 %v2473
      %7613 = vmatprep.subr.mxu0 0.0
      %7614 = vmatpush1.msra.mxu0 %v2474
      %7615 = vmatprep.subr.mxu0 0.0
      %7616 = vmatpush1.msra.mxu0 %v2475
      %7617 = vmatprep.subr.mxu0 0.0
      %7618 = vmatpush1.msra.mxu0 %v2476
      %7619 = vmatprep.subr.mxu0 0.0
      %7620 = vmatpush1.msra.mxu0 %v2477
      %7621 = vmatprep.subr.mxu0 0.0
      %7622 = vmatpush1.msra.mxu0 %v2478
      %7623 = vmatprep.subr.mxu0 0.0
      %7624 = vmatpush1.msra.mxu0 %v2479
      %7625 = vmatprep.subr.mxu0 0.0
      %7626 = vmatpush1.msra.mxu0 %v2480
      %7627 = vmatprep.subr.mxu0 0.0
      %7628 = vmatpush1.msra.mxu0 %v2481
      %7629 = vmatprep.subr.mxu0 0.0
      %7630 = vmatpush1.msra.mxu0 %v2482
      %7631 = vmatprep.subr.mxu0 0.0
      %7632 = vmatpush1.msra.mxu0 %v2483
      %7633 = vmatprep.subr.mxu0 0.0
      %7634 = vmatpush1.msra.mxu0 %v2484
      %7635 = vmatprep.subr.mxu0 0.0
      %7636 = vmatpush1.msra.mxu0 %v2485
      %7637 = vmatprep.subr.mxu0 0.0
      %7638 = vmatpush1.msra.mxu0 %v2486
      %7639 = vmatprep.subr.mxu0 0.0
      %7640 = vmatpush1.msra.mxu0 %v2487
      %7641 = vmatprep.subr.mxu0 0.0
      %7642 = vmatpush1.msra.mxu0 %v2488
      %7643 = vmatprep.subr.mxu0 0.0
      %7644 = vmatpush1.msra.mxu0 %v2489
      %7645 = vmatprep.subr.mxu0 0.0
      %7646 = vmatpush1.msra.mxu0 %v2490
      %7647 = vmatprep.subr.mxu0 0.0
      %7648 = vmatpush1.msra.mxu0 %v2491
      %7649 = vmatprep.subr.mxu0 0.0
      %7650 = vmatpush1.msra.mxu0 %v2492
      %7651 = vmatprep.subr.mxu0 0.0
      %7652 = vmatpush1.msra.mxu0 %v2493
      %7653 = vmatprep.subr.mxu0 0.0
      %7654 = vmatpush1.msra.mxu0 %v2494
      %7655 = vmatprep.subr.mxu0 0.0
      %7656 = vmatpush1.msra.mxu0 %v2495
      %7657 = vmatprep.subr.mxu0 0.0
      %7658 = vmatpush1.msra.mxu0 %v2496
      %7659 = vmatprep.mubr.f32.mxu0 %v248
      %7660 = vmatmul.mubr.f32.gmra.mrb[0].mxu0 %v247
      %v7661 = vpop.f32.mrb[0].mxu0
      %v7662 = vadd.f32 %v7517, %v7661
      %v7663 = vpop.f32.mrb[0].mxu0
      %7664 = vmatprep.mubr.f32.mxu0 %v321
      %7665 = vmatmul.mubr.f32.gmra.mrb[0].mxu0 %v320
      %v7666 = vpop.f32.mrb[0].mxu0
      %v7667 = vadd.f32 %v7522, %v7666
      %v7668 = vpop.f32.mrb[0].mxu0
      %7669 = vmatprep.mubr.f32.mxu0 %v394
      %7670 = vmatmul.mubr.f32.gmra.mrb[0].mxu0 %v393
      %v7671 = vpop.f32.mrb[0].mxu0
      %v7672 = vadd.f32 %v7527, %v7671
      %v7673 = vpop.f32.mrb[0].mxu0
      %7674 = vmatprep.mubr.f32.mxu0 %v467
      %7675 = vmatmul.mubr.f32.gmra.mrb[0].mxu0 %v466
      %v7676 = vpop.f32.mrb[0].mxu0
      %v7677 = vadd.f32 %v7532, %v7676
      %v7678 = vpop.f32.mrb[0].mxu0
      %7679 = vmatprep.mubr.f32.mxu0 %v540
      %7680 = vmatmul.mubr.f32.gmra.mrb[0].mxu0 %v539
      %v7681 = vpop.f32.mrb[0].mxu0
      %v7682 = vadd.f32 %v7537, %v7681
      %v7683 = vpop.f32.mrb[0].mxu0
      %7684 = vmatprep.mubr.f32.mxu0 %v613
      %7685 = vmatmul.mubr.f32.gmra.mrb[0].mxu0 %v612
      %v7686 = vpop.f32.mrb[0].mxu0
      %v7687 = vadd.f32 %v7542, %v7686
      %v7688 = vpop.f32.mrb[0].mxu0
      %7689 = vmatprep.mubr.f32.mxu0 %v686
      %7690 = vmatmul.mubr.f32.gmra.mrb[0].mxu0 %v685
      %v7691 = vpop.f32.mrb[0].mxu0
      %v7692 = vadd.f32 %v7547, %v7691
      %v7693 = vpop.f32.mrb[0].mxu0
      %7694 = vmatprep.mubr.f32.mxu0 %v759
      %7695 = vmatmul.mubr.f32.gmra.mrb[0].mxu0 %v758
      %v7696 = vpop.f32.mrb[0].mxu0
      %v7697 = vadd.f32 %v7552, %v7696
      %v7698 = vpop.f32.mrb[0].mxu0
      %7699 = vmatprep.mubr.f32.mxu0 %v832
      %7700 = vmatmul.mubr.f32.gmra.mrb[0].mxu0 %v831
      %v7701 = vpop.f32.mrb[0].mxu0
      %v7702 = vadd.f32 %v7557, %v7701
      %v7703 = vpop.f32.mrb[0].mxu0
      %7704 = vmatprep.mubr.f32.mxu0 %v905
      %7705 = vmatmul.mubr.f32.gmra.mrb[0].mxu0 %v904
      %v7706 = vpop.f32.mrb[0].mxu0
      %v7707 = vadd.f32 %v7562, %v7706
      %v7708 = vpop.f32.mrb[0].mxu0
      %7709 = vmatprep.mubr.f32.mxu0 %v978
      %7710 = vmatmul.mubr.f32.gmra.mrb[0].mxu0 %v977
      %v7711 = vpop.f32.mrb[0].mxu0
      %v7712 = vadd.f32 %v7567, %v7711
      %v7713 = vpop.f32.mrb[0].mxu0
      %7714 = vmatprep.mubr.f32.mxu0 %v1051
      %7715 = vmatmul.mubr.f32.gmra.mrb[0].mxu0 %v1050
      %v7716 = vpop.f32.mrb[0].mxu0
      %v7717 = vadd.f32 %v7572, %v7716
      %v7718 = vpop.f32.mrb[0].mxu0
      %7719 = vmatprep.mubr.f32.mxu0 %v1124
      %7720 = vmatmul.mubr.f32.gmra.mrb[0].mxu0 %v1123
      %v7721 = vpop.f32.mrb[0].mxu0
      %v7722 = vadd.f32 %v7577, %v7721
      %v7723 = vpop.f32.mrb[0].mxu0
      %7724 = vmatprep.mubr.f32.mxu0 %v1197
      %7725 = vmatmul.mubr.f32.gmra.mrb[0].mxu0 %v1196
      %v7726 = vpop.f32.mrb[0].mxu0
      %v7727 = vadd.f32 %v7582, %v7726
      %v7728 = vpop.f32.mrb[0].mxu0
      %7729 = vmatprep.mubr.f32.mxu0 %v1270
      %7730 = vmatmul.mubr.f32.gmra.mrb[0].mxu0 %v1269
      %v7731 = vpop.f32.mrb[0].mxu0
      %v7732 = vadd.f32 %v7587, %v7731
      %v7733 = vpop.f32.mrb[0].mxu0
      %7734 = vmatprep.mubr.f32.mxu0 %v1343
      %7735 = vmatmul.mubr.f32.gmra.mrb[0].mxu0 %v1342
      %v7736 = vpop.f32.mrb[0].mxu0
      %v7737 = vadd.f32 %v7592, %v7736
      %v7738 = vpop.f32.mrb[0].mxu0
      %7739 = vdwg.mxu0
      %7740 = vmatprep.subr.mxu0 0.0
      %7741 = vmatpush1.msra.mxu0 %v2497
      %7742 = vmatprep.subr.mxu0 0.0
      %7743 = vmatpush1.msra.mxu0 %v2498
      %7744 = vmatprep.subr.mxu0 0.0
      %7745 = vmatpush1.msra.mxu0 %v2499
      %7746 = vmatprep.subr.mxu0 0.0
      %7747 = vmatpush1.msra.mxu0 %v2500
      %7748 = vmatprep.subr.mxu0 0.0
      %7749 = vmatpush1.msra.mxu0 %v2501
      %7750 = vmatprep.subr.mxu0 0.0
      %7751 = vmatpush1.msra.mxu0 %v2502
      %7752 = vmatprep.subr.mxu0 0.0
      %7753 = vmatpush1.msra.mxu0 %v2503
      %7754 = vmatprep.subr.mxu0 0.0
      %7755 = vmatpush1.msra.mxu0 %v2504
      %7756 = vmatprep.subr.mxu0 0.0
      %7757 = vmatpush1.msra.mxu0 %v2505
      %7758 = vmatprep.subr.mxu0 0.0
      %7759 = vmatpush1.msra.mxu0 %v2506
      %7760 = vmatprep.subr.mxu0 0.0
      %7761 = vmatpush1.msra.mxu0 %v2507
      %7762 = vmatprep.subr.mxu0 0.0
      %7763 = vmatpush1.msra.mxu0 %v2508
      %7764 = vmatprep.subr.mxu0 0.0
      %7765 = vmatpush1.msra.mxu0 %v2509
      %7766 = vmatprep.subr.mxu0 0.0
      %7767 = vmatpush1.msra.mxu0 %v2510
      %7768 = vmatprep.subr.mxu0 0.0
      %7769 = vmatpush1.msra.mxu0 %v2511
      %7770 = vmatprep.subr.mxu0 0.0
      %7771 = vmatpush1.msra.mxu0 %v2512
      %7772 = vmatprep.subr.mxu0 0.0
      %7773 = vmatpush1.msra.mxu0 0.0
      %7774 = vmatprep.subr.mxu0 0.0
      %7775 = vmatpush1.msra.mxu0 0.0
      %7776 = vmatprep.subr.mxu0 0.0
      %7777 = vmatpush1.msra.mxu0 0.0
      %7778 = vmatprep.subr.mxu0 0.0
      %7779 = vmatpush1.msra.mxu0 0.0
      %7780 = vmatprep.subr.mxu0 0.0
      %7781 = vmatpush1.msra.mxu0 0.0
      %7782 = vmatprep.subr.mxu0 0.0
      %7783 = vmatpush1.msra.mxu0 0.0
      %7784 = vmatprep.subr.mxu0 0.0
      %7785 = vmatpush1.msra.mxu0 0.0
      %7786 = vmatprep.subr.mxu0 0.0
      %7787 = vmatpush1.msra.mxu0 0.0
      %7788 = vmatprep.subr.mxu0 0.0
      %7789 = vmatpush1.msra.mxu0 0.0
      %7790 = vmatprep.subr.mxu0 0.0
      %7791 = vmatpush1.msra.mxu0 0.0
      %7792 = vmatprep.subr.mxu0 0.0
      %7793 = vmatpush1.msra.mxu0 0.0
      %7794 = vmatprep.subr.mxu0 0.0
      %7795 = vmatpush1.msra.mxu0 0.0
      %7796 = vmatprep.subr.mxu0 0.0
      %7797 = vmatpush1.msra.mxu0 0.0
      %7798 = vmatprep.subr.mxu0 0.0
      %7799 = vmatpush1.msra.mxu0 0.0
      %7800 = vmatprep.subr.mxu0 0.0
      %7801 = vmatpush1.msra.mxu0 0.0
      %7802 = vmatprep.subr.mxu0 0.0
      %7803 = vmatpush1.msra.mxu0 0.0
      %7804 = vmatprep.mubr.f32.mxu0 0.0
      %7805 = vmatmul.mubr.f32.gmra.mrb[0].mxu0 %v249
      %v7806 = vpop.f32.mrb[0].mxu0
      %v7807 = vadd.f32 %v7662, %v7806
      %v7808 = vpop.f32.mrb[0].mxu0
      %7809 = vmatprep.mubr.f32.mxu0 0.0
      %7810 = vmatmul.mubr.f32.gmra.mrb[0].mxu0 %v322
      %v7811 = vpop.f32.mrb[0].mxu0
      %v7812 = vadd.f32 %v7667, %v7811
      %v7813 = vpop.f32.mrb[0].mxu0
      %7814 = vmatprep.mubr.f32.mxu0 0.0
      %7815 = vmatmul.mubr.f32.gmra.mrb[0].mxu0 %v395
      %v7816 = vpop.f32.mrb[0].mxu0
      %v7817 = vadd.f32 %v7672, %v7816
      %v7818 = vpop.f32.mrb[0].mxu0
      %7819 = vmatprep.mubr.f32.mxu0 0.0
      %7820 = vmatmul.mubr.f32.gmra.mrb[0].mxu0 %v468
      %v7821 = vpop.f32.mrb[0].mxu0
      %v7822 = vadd.f32 %v7677, %v7821
      %v7823 = vpop.f32.mrb[0].mxu0
      %7824 = vmatprep.mubr.f32.mxu0 0.0
      %7825 = vmatmul.mubr.f32.gmra.mrb[0].mxu0 %v541
      %v7826 = vpop.f32.mrb[0].mxu0
      %v7827 = vadd.f32 %v7682, %v7826
      %v7828 = vpop.f32.mrb[0].mxu0
      %7829 = vmatprep.mubr.f32.mxu0 0.0
      %7830 = vmatmul.mubr.f32.gmra.mrb[0].mxu0 %v614
      %v7831 = vpop.f32.mrb[0].mxu0
      %v7832 = vadd.f32 %v7687, %v7831
      %v7833 = vpop.f32.mrb[0].mxu0
      %7834 = vmatprep.mubr.f32.mxu0 0.0
      %7835 = vmatmul.mubr.f32.gmra.mrb[0].mxu0 %v687
      %v7836 = vpop.f32.mrb[0].mxu0
      %v7837 = vadd.f32 %v7692, %v7836
      %v7838 = vpop.f32.mrb[0].mxu0
      %7839 = vmatprep.mubr.f32.mxu0 0.0
      %7840 = vmatmul.mubr.f32.gmra.mrb[0].mxu0 %v760
      %v7841 = vpop.f32.mrb[0].mxu0
      %v7842 = vadd.f32 %v7697, %v7841
      %v7843 = vpop.f32.mrb[0].mxu0
      %7844 = vmatprep.mubr.f32.mxu0 0.0
      %7845 = vmatmul.mubr.f32.gmra.mrb[0].mxu0 %v833
      %v7846 = vpop.f32.mrb[0].mxu0
      %v7847 = vadd.f32 %v7702, %v7846
      %v7848 = vpop.f32.mrb[0].mxu0
      %7849 = vmatprep.mubr.f32.mxu0 0.0
      %7850 = vmatmul.mubr.f32.gmra.mrb[0].mxu0 %v906
      %v7851 = vpop.f32.mrb[0].mxu0
      %v7852 = vadd.f32 %v7707, %v7851
      %v7853 = vpop.f32.mrb[0].mxu0
      %7854 = vmatprep.mubr.f32.mxu0 0.0
      %7855 = vmatmul.mubr.f32.gmra.mrb[0].mxu0 %v979
      %v7856 = vpop.f32.mrb[0].mxu0
      %v7857 = vadd.f32 %v7712, %v7856
      %v7858 = vpop.f32.mrb[0].mxu0
      %7859 = vmatprep.mubr.f32.mxu0 0.0
      %7860 = vmatmul.mubr.f32.gmra.mrb[0].mxu0 %v1052
      %v7861 = vpop.f32.mrb[0].mxu0
      %v7862 = vadd.f32 %v7717, %v7861
      %v7863 = vpop.f32.mrb[0].mxu0
      %7864 = vmatprep.mubr.f32.mxu0 0.0
      %7865 = vmatmul.mubr.f32.gmra.mrb[0].mxu0 %v1125
      %v7866 = vpop.f32.mrb[0].mxu0
      %v7867 = vadd.f32 %v7722, %v7866
      %v7868 = vpop.f32.mrb[0].mxu0
      %7869 = vmatprep.mubr.f32.mxu0 0.0
      %7870 = vmatmul.mubr.f32.gmra.mrb[0].mxu0 %v1198
      %v7871 = vpop.f32.mrb[0].mxu0
      %v7872 = vadd.f32 %v7727, %v7871
      %v7873 = vpop.f32.mrb[0].mxu0
      %7874 = vmatprep.mubr.f32.mxu0 0.0
      %7875 = vmatmul.mubr.f32.gmra.mrb[0].mxu0 %v1271
      %v7876 = vpop.f32.mrb[0].mxu0
      %v7877 = vadd.f32 %v7732, %v7876
      %v7878 = vpop.f32.mrb[0].mxu0
      %7879 = vmatprep.mubr.f32.mxu0 0.0
      %7880 = vmatmul.mubr.f32.gmra.mrb[0].mxu0 %v1344
      %v7881 = vpop.f32.mrb[0].mxu0
      %v7882 = vadd.f32 %v7737, %v7881
      %v7883 = vpop.f32.mrb[0].mxu0
      %7884 = vdwg.mxu0
      %vm7885 = vcmask 39936
      %7886 = vst.msk [vmem:[%s175] sm:$0xff] %vm7885, %v7807
      %7887 = vst.msk [vmem:[%s175 + $0x8] sm:$0xff] %vm7885, %v7812
      %7888 = vst.msk [vmem:[%s175 + $0x10] sm:$0xff] %vm7885, %v7817
      %7889 = vst.msk [vmem:[%s175 + $0x18] sm:$0xff] %vm7885, %v7822
      %7890 = vst.msk [vmem:[%s175 + $0x20] sm:$0xff] %vm7885, %v7827
      %7891 = vst.msk [vmem:[%s175 + $0x28] sm:$0xff] %vm7885, %v7832
      %7892 = vst.msk [vmem:[%s175 + $0x30] sm:$0xff] %vm7885, %v7837
      %7893 = vst.msk [vmem:[%s175 + $0x38] sm:$0xff] %vm7885, %v7842
      %7894 = vst.msk [vmem:[%s175 + $0x40] sm:$0xff] %vm7885, %v7847
      %7895 = vst.msk [vmem:[%s175 + $0x48] sm:$0xff] %vm7885, %v7852
      %7896 = vst.msk [vmem:[%s175 + $0x50] sm:$0xff] %vm7885, %v7857
      %7897 = vst.msk [vmem:[%s175 + $0x58] sm:$0xff] %vm7885, %v7862
      %7898 = vst.msk [vmem:[%s175 + $0x60] sm:$0xff] %vm7885, %v7867
      %7899 = vst.msk [vmem:[%s175 + $0x68] sm:$0xff] %vm7885, %v7872
      %7900 = vst.msk [vmem:[%s175 + $0x70] sm:$0xff] %vm7885, %v7877
      %7901 = vst.msk [vmem:[%s175 + $0x78] sm:$0xff] %vm7885, %v7882
      %s7902 = smul.u32 16, %s14
      %p7903 = scmp.lt.s32.totalorder %s7902, 31
      %s7904 = scalar_select %p7903, %s7902, 31
      %s7905 = smul.addr %s7904, 8
      %s7906 = scalar_lea.vmem %s3, %s7905
      // Predicated region
      $region33: #{deep_sleep_net_forward.1} parent=31 // pred_check
        %p7907 = pneg %p100
      $region34: #{deep_sleep_net_forward.1} parent=31 // pred_check_branch
        %7909 = sbr.rel (%p7907) target = $region36
      $region35: #{deep_sleep_net_forward.1} parent=31 // pred_region
        %s7910 = smul.u32 16, %s14
      $region36: #{deep_sleep_net_forward.1} parent=31 // pred_fallthru
        _
    $region32: #{deep_sleep_net_forward.1} parent=5 // pred_fallthru
      _
    %p7911 = scmp.le.s32.totalorder 2, %s9
    // Predicated region
    $region37: #{deep_sleep_net_forward.1} parent=5 // pred_check
      %p7912 = pneg %p7911
    $region38: #{deep_sleep_net_forward.1} parent=5 // pred_check_branch
      %7914 = sbr.rel (%p7912) target = $region40
    $region39: #{deep_sleep_net_forward.1} parent=5 // pred_region
      %s7915 = ssub.s32 %s9, 2
      // Predicated region
      $region41: #{deep_sleep_net_forward.1} parent=39 // pred_check
        %p7916 = pneg %p106
      $region42: #{deep_sleep_net_forward.1} parent=39 // pred_check_branch
        %7918 = sbr.rel (%p7916) target = $region44
      $region43: #{deep_sleep_net_forward.1} parent=39 // pred_region
        %s7919 = smul.u32 16, %s15
        %p7920 = scmp.lt.s32.totalorder %s7919, 31
        %s7921 = scalar_select %p7920, %s7919, 31
        %s7922 = smul.addr %s7921, 8
        %s7923 = scalar_lea.vmem %s3, %s7922
      $region44: #{deep_sleep_net_forward.1} parent=39 // pred_fallthru
        _
    $region40: #{deep_sleep_net_forward.1} parent=5 // pred_fallthru
      _
  $region6: #{deep_sleep_net_forward.1} parent=0 // loop_footer
    %s13 = sadd.s32 1, %s9
  $region7: #{deep_sleep_net_forward.1} parent=0 // loop_footer_branch
    %8 = sbr.rel target = $region3
  $region8: #{deep_sleep_net_forward.1} parent=0 // loop_exit
    _

</llo_original>
